<compile_context>
chip_gen: v7x
topology: tpu7x:2x2x1
jax: 0.10.0
libtpu: 0.0.40
codegen_flags: <defaults>
</compile_context>

<pallas_src>
import jax
import jax.numpy as jnp
from jax.experimental import pallas as pl
from jax.experimental.pallas import tpu as pltpu

H = 32  # GRU hidden size (fixed by the PyTorch module)


def bigru_kernel(x_ref,       # (T*B, H)   time-major embedded input
                 wih0_ref,    # (H, 6H)    layer-0 W_ih^T, cols = [fwd r,z,n | bwd r,z,n]
                 bgi0_ref,    # (1, 6H)    b_ih + [b_hh_r, b_hh_z, 0] for both directions
                 wih1_ref,    # (2, H, 6H) layer-1 W_ih^T split by input half (l0f / l0b)
                 bgi1_ref,    # (1, 6H)
                 whh_ref,     # (12, H, H) [l0f,l0b,l1f,l1b] x [r,z,n], each W_hh_gate^T
                 bhhn_ref,    # (4, B, H)  n-gate hidden bias per direction (pre-broadcast)
                 wfc1_ref,    # (2, H, 2H) fc1 W^T split by input half
                 bfc1_ref,    # (1, 2H)
                 wfc2_ref,    # (2H, Vpad)
                 bfc2_ref,    # (1, Vpad)
                 out_ref,     # (B, Vpad)
                 l0f_s,       # (T*B, H) scratch: layer-0 forward outputs (time order)
                 l0b_s):      # (T*B, H) scratch: layer-0 backward outputs (time order)
    f32 = jnp.float32
    TB = x_ref.shape[0]
    B = out_ref.shape[0]
    T = TB // B

    # Hoist all small recurrent weights/biases out of the unrolled loops
    # (single vld each; nothing re-read on the serial chain).
    whh = [whh_ref[i] for i in range(12)]                     # each (H, H)
    bn = [bhhn_ref[d] for d in range(4)]                      # each (B, H)

    def gru_step(h, gir, giz, gin, wr, wz, wn, bhh_n):
        # PyTorch GRU cell; gi already contains b_ih (+ b_hh for r,z).
        # Per-gate W_hh blocks keep every operand lane-aligned (no in-loop rotates).
        ghr = jnp.dot(h, wr, preferred_element_type=f32)
        ghz = jnp.dot(h, wz, preferred_element_type=f32)
        ghn = jnp.dot(h, wn, preferred_element_type=f32)
        r = jax.nn.sigmoid(gir + ghr)
        z = jax.nn.sigmoid(giz + ghz)
        n = jnp.tanh(gin + r * (ghn + bhh_n))
        return (1.0 - z) * n + z * h

    def gate_slices(gi):
        # -> [f_r, f_z, f_n, b_r, b_z, b_n], each (T*B, H); done once, off the chain.
        return [gi[:, g * H:(g + 1) * H] for g in range(6)]

    h0 = jnp.zeros((B, H), f32)

    # ---- layer 0: batched input projection (both directions in one matmul) ----
    gi0 = jnp.dot(x_ref[...], wih0_ref[...], preferred_element_type=f32) + bgi0_ref[...]
    g0 = gate_slices(gi0)

    # fused fwd/bwd recurrence, fully unrolled (T is static).
    hf, hb = h0, h0
    for i in range(T):
        t_b = T - 1 - i
        rf = slice(i * B, (i + 1) * B)
        rb = slice(t_b * B, (t_b + 1) * B)
        hf = gru_step(hf, g0[0][rf], g0[1][rf], g0[2][rf], whh[0], whh[1], whh[2], bn[0])
        hb = gru_step(hb, g0[3][rb], g0[4][rb], g0[5][rb], whh[3], whh[4], whh[5], bn[1])
        l0f_s[pl.ds(i * B, B), :] = hf
        l0b_s[pl.ds(t_b * B, B), :] = hb

    # ---- layer 1: batched input projection from the stored layer-0 outputs ----
    gi1 = (jnp.dot(l0f_s[...], wih1_ref[0], preferred_element_type=f32)
           + jnp.dot(l0b_s[...], wih1_ref[1], preferred_element_type=f32)
           + bgi1_ref[...])
    g1 = gate_slices(gi1)

    # Layer-1 backward state at the last time step is just one cell evaluation
    # (its recurrence starts at t = T-1 from h0); nothing else of it is consumed.
    rb = slice((T - 1) * B, T * B)
    hb_last = gru_step(h0, g1[3][rb], g1[4][rb], g1[5][rb], whh[9], whh[10], whh[11], bn[3])

    # Layer-1 forward chain (full T steps), fully unrolled; no per-time storage.
    hf = h0
    for i in range(T):
        rf = slice(i * B, (i + 1) * B)
        hf = gru_step(hf, g1[0][rf], g1[1][rf], g1[2][rf], whh[6], whh[7], whh[8], bn[2])

    # ---- head: x[:, -1, :] -> relu(fc1) -> fc2 (vocab padded to lane-dense width) ----
    a = (jnp.dot(hf, wfc1_ref[0], preferred_element_type=f32)
         + jnp.dot(hb_last, wfc1_ref[1], preferred_element_type=f32)
         + bfc1_ref[...])
    a = jnp.maximum(a, 0.0)
    out_ref[...] = (jnp.dot(a, wfc2_ref[...], preferred_element_type=f32)
                    + bfc2_ref[...])


def leonard_bigru_forward(tokens, params):
    """tokens: (B, T) int32.  Returns logits (B, n_vocab) float32."""
    f32 = jnp.float32
    n_vocab = params['emb'].shape[0]
    B, T = tokens.shape
    VPAD = ((n_vocab + 127) // 128) * 128          # lane-dense fc2 / output width

    # glue: embedding gather + time-major flatten -> (T*B, 32)
    xemb = params['emb'][tokens].astype(f32)                          # (B, T, H)
    x2d = jnp.transpose(xemb, (1, 0, 2)).reshape(T * B, H)            # (T*B, H)

    def prep_dir(wih, whh, bih, bhh):
        wih = jnp.asarray(wih, f32); whh = jnp.asarray(whh, f32)
        bih = jnp.asarray(bih, f32); bhh = jnp.asarray(bhh, f32)
        wihT = wih.T                                                  # (in, 3H), cols r|z|n
        bgi = bih + jnp.concatenate([bhh[:2 * H], jnp.zeros((H,), f32)])
        whh_g = jnp.stack([whh[g * H:(g + 1) * H, :].T for g in range(3)])  # (3, H, H)
        return wihT, bgi, whh_g, bhh[2 * H:]

    dirs = []
    for layer in (0, 1):
        for d in ('f', 'b'):
            dirs.append(prep_dir(params[f'w_ih_l{layer}{d}'], params[f'w_hh_l{layer}{d}'],
                                 params[f'b_ih_l{layer}{d}'], params[f'b_hh_l{layer}{d}']))
    (w0f, bg0f, whh0f, bn0f), (w0b, bg0b, whh0b, bn0b), \
        (w1f, bg1f, whh1f, bn1f), (w1b, bg1b, whh1b, bn1b) = dirs

    wih0 = jnp.concatenate([w0f, w0b], axis=1)                        # (H, 6H)
    bgi0 = jnp.concatenate([bg0f, bg0b]).reshape(1, 6 * H)
    w1 = jnp.concatenate([w1f, w1b], axis=1)                          # (2H, 6H)
    wih1 = jnp.stack([w1[:H, :], w1[H:, :]])                          # (2, H, 6H)
    bgi1 = jnp.concatenate([bg1f, bg1b]).reshape(1, 6 * H)
    whh = jnp.concatenate([whh0f, whh0b, whh1f, whh1b], axis=0)       # (12, H, H)
    bhhn = jnp.tile(jnp.stack([bn0f, bn0b, bn1f, bn1b])[:, None, :], (1, B, 1))  # (4, B, H)

    wfc1t = jnp.asarray(params['fc1_w'], f32).T                       # (2H, 2H)
    wfc1 = jnp.stack([wfc1t[:H, :], wfc1t[H:, :]])                    # (2, H, 2H)
    bfc1 = jnp.asarray(params['fc1_b'], f32).reshape(1, 2 * H)
    wfc2 = jnp.zeros((2 * H, VPAD), f32).at[:, :n_vocab].set(jnp.asarray(params['fc2_w'], f32).T)
    bfc2 = jnp.zeros((1, VPAD), f32).at[0, :n_vocab].set(jnp.asarray(params['fc2_b'], f32))

    args = [x2d, wih0, bgi0, wih1, bgi1, whh, bhhn, wfc1, bfc1, wfc2, bfc2]
    vmem = pl.BlockSpec(memory_space=pltpu.MemorySpace.VMEM)
    out_pad = pl.pallas_call(
        bigru_kernel,
        out_shape=jax.ShapeDtypeStruct((B, VPAD), f32),
        in_specs=[vmem] * len(args),
        out_specs=vmem,
        scratch_shapes=[pltpu.VMEM((T * B, H), f32),
                        pltpu.VMEM((T * B, H), f32)],
    )(*args)
    return out_pad[:, :n_vocab]


def init_params(key, n_vocab):
    """Deterministic synthetic parameters, PyTorch shape conventions."""
    keys = iter(jax.random.split(key, 32))
    u = lambda k, shape, b: jax.random.uniform(k, shape, jnp.float32, -b, b)
    p = {'emb': jax.random.normal(next(keys), (n_vocab, H), jnp.float32)}
    kg = 1.0 / float(jnp.sqrt(H))
    for d in ('f', 'b'):
        p[f'w_ih_l0{d}'] = u(next(keys), (3 * H, H), kg)
        p[f'w_hh_l0{d}'] = u(next(keys), (3 * H, H), kg)
        p[f'b_ih_l0{d}'] = u(next(keys), (3 * H,), kg)
        p[f'b_hh_l0{d}'] = u(next(keys), (3 * H,), kg)
    for d in ('f', 'b'):
        p[f'w_ih_l1{d}'] = u(next(keys), (3 * H, 2 * H), kg)
        p[f'w_hh_l1{d}'] = u(next(keys), (3 * H, H), kg)
        p[f'b_ih_l1{d}'] = u(next(keys), (3 * H,), kg)
        p[f'b_hh_l1{d}'] = u(next(keys), (3 * H,), kg)
    kf = 1.0 / float(jnp.sqrt(2 * H))
    p['fc1_w'] = u(next(keys), (2 * H, 2 * H), kf)
    p['fc1_b'] = u(next(keys), (2 * H,), kf)
    p['fc2_w'] = u(next(keys), (n_vocab, 2 * H), kf)
    p['fc2_b'] = u(next(keys), (n_vocab,), kf)
    return p


def ref_forward(tokens, p):
    """Pure-JAX reference with PyTorch GRU semantics (for correctness check)."""
    x = p['emb'][tokens].astype(jnp.float32)                          # (B, T, 32)

    def run_dir(xs, wih, whh, bih, bhh, reverse):
        B, T, _ = xs.shape
        h = jnp.zeros((B, H), jnp.float32)
        outs = [None] * T
        order = range(T - 1, -1, -1) if reverse else range(T)
        for t in order:
            gi = xs[:, t, :] @ wih.T + bih
            gh = h @ whh.T + bhh
            r = jax.nn.sigmoid(gi[:, :H] + gh[:, :H])
            z = jax.nn.sigmoid(gi[:, H:2 * H] + gh[:, H:2 * H])
            n = jnp.tanh(gi[:, 2 * H:] + r * gh[:, 2 * H:])
            h = (1.0 - z) * n + z * h
            outs[t] = h
        return jnp.stack(outs, axis=1)                                # (B, T, 32)

    y0 = jnp.concatenate([
        run_dir(x, p['w_ih_l0f'], p['w_hh_l0f'], p['b_ih_l0f'], p['b_hh_l0f'], False),
        run_dir(x, p['w_ih_l0b'], p['w_hh_l0b'], p['b_ih_l0b'], p['b_hh_l0b'], True)],
        axis=-1)
    y1 = jnp.concatenate([
        run_dir(y0, p['w_ih_l1f'], p['w_hh_l1f'], p['b_ih_l1f'], p['b_hh_l1f'], False),
        run_dir(y0, p['w_ih_l1b'], p['w_hh_l1b'], p['b_ih_l1b'], p['b_hh_l1b'], True)],
        axis=-1)
    last = y1[:, -1, :]
    a = jax.nn.relu(last @ p['fc1_w'].T + p['fc1_b'])
    return a @ p['fc2_w'].T + p['fc2_b']


if __name__ == "__main__":
    n_vocab, B, T = 50, 2, 8
    key = jax.random.PRNGKey(0)
    pkey, xkey = jax.random.split(key)
    params = init_params(pkey, n_vocab)
    tokens = jax.random.randint(xkey, (B, T), 0, n_vocab, dtype=jnp.int32)

    fwd = jax.jit(leonard_bigru_forward)
    out = jax.block_until_ready(fwd(tokens, params))
    assert out.shape == (B, n_vocab) and out.dtype == jnp.float32

    ref = ref_forward(tokens, params)
    max_err = float(jnp.max(jnp.abs(out - ref)))
    assert jnp.allclose(out, ref, rtol=2e-2, atol=2e-2), f"max abs err {max_err}"

    print("KERNEL_OK")
</pallas_src>

<mosaic_0001>
module attributes {stable_mosaic.version = 11 : i64} {
  func.func @bigru_kernel(%arg0: memref<16x32xf32, #tpu.memory_space<vmem>>, %arg1: memref<32x192xf32, #tpu.memory_space<vmem>>, %arg2: memref<1x192xf32, #tpu.memory_space<vmem>>, %arg3: memref<2x32x192xf32, #tpu.memory_space<vmem>>, %arg4: memref<1x192xf32, #tpu.memory_space<vmem>>, %arg5: memref<12x32x32xf32, #tpu.memory_space<vmem>>, %arg6: memref<4x2x32xf32, #tpu.memory_space<vmem>>, %arg7: memref<2x32x64xf32, #tpu.memory_space<vmem>>, %arg8: memref<1x64xf32, #tpu.memory_space<vmem>>, %arg9: memref<64x128xf32, #tpu.memory_space<vmem>>, %arg10: memref<1x128xf32, #tpu.memory_space<vmem>>, %arg11: memref<2x128xf32, #tpu.memory_space<vmem>>, %arg12: memref<16x32xf32, #tpu.memory_space<vmem>>, %arg13: memref<16x32xf32, #tpu.memory_space<vmem>>) attributes {dimension_semantics = [], scalar_prefetch = 0 : i64, scratch_operands = 2 : i64, tpu.core_type = #tpu.core_type<tc>} {
    %c0 = arith.constant 0 : index
    %c0_0 = arith.constant 0 : index
    %c0_1 = arith.constant 0 : index
    %0 = vector.load %arg5[%c0, %c0_0, %c0_1] : memref<12x32x32xf32, #tpu.memory_space<vmem>>, vector<1x32x32xf32>
    %1 = vector.shape_cast %0 : vector<1x32x32xf32> to vector<32x32xf32>
    %c1 = arith.constant 1 : index
    %c0_2 = arith.constant 0 : index
    %c0_3 = arith.constant 0 : index
    %2 = vector.load %arg5[%c1, %c0_2, %c0_3] : memref<12x32x32xf32, #tpu.memory_space<vmem>>, vector<1x32x32xf32>
    %3 = vector.shape_cast %2 : vector<1x32x32xf32> to vector<32x32xf32>
    %c2 = arith.constant 2 : index
    %c0_4 = arith.constant 0 : index
    %c0_5 = arith.constant 0 : index
    %4 = vector.load %arg5[%c2, %c0_4, %c0_5] : memref<12x32x32xf32, #tpu.memory_space<vmem>>, vector<1x32x32xf32>
    %5 = vector.shape_cast %4 : vector<1x32x32xf32> to vector<32x32xf32>
    %c3 = arith.constant 3 : index
    %c0_6 = arith.constant 0 : index
    %c0_7 = arith.constant 0 : index
    %6 = vector.load %arg5[%c3, %c0_6, %c0_7] : memref<12x32x32xf32, #tpu.memory_space<vmem>>, vector<1x32x32xf32>
    %7 = vector.shape_cast %6 : vector<1x32x32xf32> to vector<32x32xf32>
    %c4 = arith.constant 4 : index
    %c0_8 = arith.constant 0 : index
    %c0_9 = arith.constant 0 : index
    %8 = vector.load %arg5[%c4, %c0_8, %c0_9] : memref<12x32x32xf32, #tpu.memory_space<vmem>>, vector<1x32x32xf32>
    %9 = vector.shape_cast %8 : vector<1x32x32xf32> to vector<32x32xf32>
    %c5 = arith.constant 5 : index
    %c0_10 = arith.constant 0 : index
    %c0_11 = arith.constant 0 : index
    %10 = vector.load %arg5[%c5, %c0_10, %c0_11] : memref<12x32x32xf32, #tpu.memory_space<vmem>>, vector<1x32x32xf32>
    %11 = vector.shape_cast %10 : vector<1x32x32xf32> to vector<32x32xf32>
    %c6 = arith.constant 6 : index
    %c0_12 = arith.constant 0 : index
    %c0_13 = arith.constant 0 : index
    %12 = vector.load %arg5[%c6, %c0_12, %c0_13] : memref<12x32x32xf32, #tpu.memory_space<vmem>>, vector<1x32x32xf32>
    %13 = vector.shape_cast %12 : vector<1x32x32xf32> to vector<32x32xf32>
    %c7 = arith.constant 7 : index
    %c0_14 = arith.constant 0 : index
    %c0_15 = arith.constant 0 : index
    %14 = vector.load %arg5[%c7, %c0_14, %c0_15] : memref<12x32x32xf32, #tpu.memory_space<vmem>>, vector<1x32x32xf32>
    %15 = vector.shape_cast %14 : vector<1x32x32xf32> to vector<32x32xf32>
    %c8 = arith.constant 8 : index
    %c0_16 = arith.constant 0 : index
    %c0_17 = arith.constant 0 : index
    %16 = vector.load %arg5[%c8, %c0_16, %c0_17] : memref<12x32x32xf32, #tpu.memory_space<vmem>>, vector<1x32x32xf32>
    %17 = vector.shape_cast %16 : vector<1x32x32xf32> to vector<32x32xf32>
    %c9 = arith.constant 9 : index
    %c0_18 = arith.constant 0 : index
    %c0_19 = arith.constant 0 : index
    %18 = vector.load %arg5[%c9, %c0_18, %c0_19] : memref<12x32x32xf32, #tpu.memory_space<vmem>>, vector<1x32x32xf32>
    %19 = vector.shape_cast %18 : vector<1x32x32xf32> to vector<32x32xf32>
    %c10 = arith.constant 10 : index
    %c0_20 = arith.constant 0 : index
    %c0_21 = arith.constant 0 : index
    %20 = vector.load %arg5[%c10, %c0_20, %c0_21] : memref<12x32x32xf32, #tpu.memory_space<vmem>>, vector<1x32x32xf32>
    %21 = vector.shape_cast %20 : vector<1x32x32xf32> to vector<32x32xf32>
    %c11 = arith.constant 11 : index
    %c0_22 = arith.constant 0 : index
    %c0_23 = arith.constant 0 : index
    %22 = vector.load %arg5[%c11, %c0_22, %c0_23] : memref<12x32x32xf32, #tpu.memory_space<vmem>>, vector<1x32x32xf32>
    %23 = vector.shape_cast %22 : vector<1x32x32xf32> to vector<32x32xf32>
    %c0_24 = arith.constant 0 : index
    %c0_25 = arith.constant 0 : index
    %c0_26 = arith.constant 0 : index
    %24 = vector.load %arg6[%c0_24, %c0_25, %c0_26] : memref<4x2x32xf32, #tpu.memory_space<vmem>>, vector<1x2x32xf32>
    %25 = vector.shape_cast %24 : vector<1x2x32xf32> to vector<2x32xf32>
    %c1_27 = arith.constant 1 : index
    %c0_28 = arith.constant 0 : index
    %c0_29 = arith.constant 0 : index
    %26 = vector.load %arg6[%c1_27, %c0_28, %c0_29] : memref<4x2x32xf32, #tpu.memory_space<vmem>>, vector<1x2x32xf32>
    %27 = vector.shape_cast %26 : vector<1x2x32xf32> to vector<2x32xf32>
    %c2_30 = arith.constant 2 : index
    %c0_31 = arith.constant 0 : index
    %c0_32 = arith.constant 0 : index
    %28 = vector.load %arg6[%c2_30, %c0_31, %c0_32] : memref<4x2x32xf32, #tpu.memory_space<vmem>>, vector<1x2x32xf32>
    %29 = vector.shape_cast %28 : vector<1x2x32xf32> to vector<2x32xf32>
    %c3_33 = arith.constant 3 : index
    %c0_34 = arith.constant 0 : index
    %c0_35 = arith.constant 0 : index
    %30 = vector.load %arg6[%c3_33, %c0_34, %c0_35] : memref<4x2x32xf32, #tpu.memory_space<vmem>>, vector<1x2x32xf32>
    %31 = vector.shape_cast %30 : vector<1x2x32xf32> to vector<2x32xf32>
    %cst = arith.constant 0.000000e+00 : f32
    %32 = vector.broadcast %cst : f32 to vector<2x32xf32>
    %c0_36 = arith.constant 0 : index
    %c0_37 = arith.constant 0 : index
    %33 = vector.load %arg0[%c0_36, %c0_37] : memref<16x32xf32, #tpu.memory_space<vmem>>, vector<16x32xf32>
    %c0_38 = arith.constant 0 : index
    %c0_39 = arith.constant 0 : index
    %34 = vector.load %arg1[%c0_38, %c0_39] : memref<32x192xf32, #tpu.memory_space<vmem>>, vector<32x192xf32>
    %cst_40 = arith.constant dense<0.000000e+00> : vector<16x192xf32>
    %35 = tpu.matmul %33, %34, %cst_40 {dimension_numbers = #tpu.dot_dimension_numbers<[1], [0], [0], [1], [0, 0, 1, 1], [], []>} : vector<16x32xf32>, vector<32x192xf32>, vector<16x192xf32> -> vector<16x192xf32>
    %c0_41 = arith.constant 0 : index
    %c0_42 = arith.constant 0 : index
    %36 = vector.load %arg2[%c0_41, %c0_42] : memref<1x192xf32, #tpu.memory_space<vmem>>, vector<1x192xf32>
    %37 = vector.broadcast %36 : vector<1x192xf32> to vector<16x192xf32>
    %38 = arith.addf %35, %37 : vector<16x192xf32>
    %39 = vector.extract_strided_slice %38 {offsets = [0, 0], sizes = [16, 32], strides = [1, 1]} : vector<16x192xf32> to vector<16x32xf32>
    %40 = vector.extract_strided_slice %38 {offsets = [0, 32], sizes = [16, 32], strides = [1, 1]} : vector<16x192xf32> to vector<16x32xf32>
    %41 = vector.extract_strided_slice %38 {offsets = [0, 64], sizes = [16, 32], strides = [1, 1]} : vector<16x192xf32> to vector<16x32xf32>
    %42 = vector.extract_strided_slice %38 {offsets = [0, 96], sizes = [16, 32], strides = [1, 1]} : vector<16x192xf32> to vector<16x32xf32>
    %43 = vector.extract_strided_slice %38 {offsets = [0, 128], sizes = [16, 32], strides = [1, 1]} : vector<16x192xf32> to vector<16x32xf32>
    %44 = vector.extract_strided_slice %38 {offsets = [0, 160], sizes = [16, 32], strides = [1, 1]} : vector<16x192xf32> to vector<16x32xf32>
    %45 = vector.extract_strided_slice %39 {offsets = [0, 0], sizes = [2, 32], strides = [1, 1]} : vector<16x32xf32> to vector<2x32xf32>
    %46 = vector.extract_strided_slice %40 {offsets = [0, 0], sizes = [2, 32], strides = [1, 1]} : vector<16x32xf32> to vector<2x32xf32>
    %47 = vector.extract_strided_slice %41 {offsets = [0, 0], sizes = [2, 32], strides = [1, 1]} : vector<16x32xf32> to vector<2x32xf32>
    %cst_43 = arith.constant dense<0.000000e+00> : vector<2x32xf32>
    %48 = tpu.matmul %32, %1, %cst_43 {dimension_numbers = #tpu.dot_dimension_numbers<[1], [0], [0], [1], [0, 0, 1, 1], [], []>} : vector<2x32xf32>, vector<32x32xf32>, vector<2x32xf32> -> vector<2x32xf32>
    %cst_44 = arith.constant dense<0.000000e+00> : vector<2x32xf32>
    %49 = tpu.matmul %32, %3, %cst_44 {dimension_numbers = #tpu.dot_dimension_numbers<[1], [0], [0], [1], [0, 0, 1, 1], [], []>} : vector<2x32xf32>, vector<32x32xf32>, vector<2x32xf32> -> vector<2x32xf32>
    %cst_45 = arith.constant dense<0.000000e+00> : vector<2x32xf32>
    %50 = tpu.matmul %32, %5, %cst_45 {dimension_numbers = #tpu.dot_dimension_numbers<[1], [0], [0], [1], [0, 0, 1, 1], [], []>} : vector<2x32xf32>, vector<32x32xf32>, vector<2x32xf32> -> vector<2x32xf32>
    %51 = arith.addf %45, %48 : vector<2x32xf32>
    %52 = arith.negf %51 : vector<2x32xf32>
    %53 = math.exp %52 : vector<2x32xf32>
    %cst_46 = arith.constant 1.000000e+00 : f32
    %54 = vector.broadcast %cst_46 : f32 to vector<2x32xf32>
    %55 = arith.addf %54, %53 : vector<2x32xf32>
    %56 = arith.divf %54, %55 : vector<2x32xf32>
    %57 = arith.addf %46, %49 : vector<2x32xf32>
    %58 = arith.negf %57 : vector<2x32xf32>
    %59 = math.exp %58 : vector<2x32xf32>
    %cst_47 = arith.constant 1.000000e+00 : f32
    %60 = vector.broadcast %cst_47 : f32 to vector<2x32xf32>
    %61 = arith.addf %60, %59 : vector<2x32xf32>
    %62 = arith.divf %60, %61 : vector<2x32xf32>
    %63 = arith.addf %50, %25 : vector<2x32xf32>
    %64 = arith.mulf %56, %63 : vector<2x32xf32>
    %65 = arith.addf %47, %64 : vector<2x32xf32>
    %66 = math.tanh %65 : vector<2x32xf32>
    %cst_48 = arith.constant 1.000000e+00 : f32
    %67 = vector.broadcast %cst_48 : f32 to vector<2x32xf32>
    %68 = arith.subf %67, %62 : vector<2x32xf32>
    %69 = arith.mulf %68, %66 : vector<2x32xf32>
    %70 = arith.mulf %62, %32 : vector<2x32xf32>
    %71 = arith.addf %69, %70 : vector<2x32xf32>
    %72 = vector.extract_strided_slice %42 {offsets = [14, 0], sizes = [2, 32], strides = [1, 1]} : vector<16x32xf32> to vector<2x32xf32>
    %73 = vector.extract_strided_slice %43 {offsets = [14, 0], sizes = [2, 32], strides = [1, 1]} : vector<16x32xf32> to vector<2x32xf32>
    %74 = vector.extract_strided_slice %44 {offsets = [14, 0], sizes = [2, 32], strides = [1, 1]} : vector<16x32xf32> to vector<2x32xf32>
    %cst_49 = arith.constant dense<0.000000e+00> : vector<2x32xf32>
    %75 = tpu.matmul %32, %7, %cst_49 {dimension_numbers = #tpu.dot_dimension_numbers<[1], [0], [0], [1], [0, 0, 1, 1], [], []>} : vector<2x32xf32>, vector<32x32xf32>, vector<2x32xf32> -> vector<2x32xf32>
    %cst_50 = arith.constant dense<0.000000e+00> : vector<2x32xf32>
    %76 = tpu.matmul %32, %9, %cst_50 {dimension_numbers = #tpu.dot_dimension_numbers<[1], [0], [0], [1], [0, 0, 1, 1], [], []>} : vector<2x32xf32>, vector<32x32xf32>, vector<2x32xf32> -> vector<2x32xf32>
    %cst_51 = arith.constant dense<0.000000e+00> : vector<2x32xf32>
    %77 = tpu.matmul %32, %11, %cst_51 {dimension_numbers = #tpu.dot_dimension_numbers<[1], [0], [0], [1], [0, 0, 1, 1], [], []>} : vector<2x32xf32>, vector<32x32xf32>, vector<2x32xf32> -> vector<2x32xf32>
    %78 = arith.addf %72, %75 : vector<2x32xf32>
    %79 = arith.negf %78 : vector<2x32xf32>
    %80 = math.exp %79 : vector<2x32xf32>
    %cst_52 = arith.constant 1.000000e+00 : f32
    %81 = vector.broadcast %cst_52 : f32 to vector<2x32xf32>
    %82 = arith.addf %81, %80 : vector<2x32xf32>
    %83 = arith.divf %81, %82 : vector<2x32xf32>
    %84 = arith.addf %73, %76 : vector<2x32xf32>
    %85 = arith.negf %84 : vector<2x32xf32>
    %86 = math.exp %85 : vector<2x32xf32>
    %cst_53 = arith.constant 1.000000e+00 : f32
    %87 = vector.broadcast %cst_53 : f32 to vector<2x32xf32>
    %88 = arith.addf %87, %86 : vector<2x32xf32>
    %89 = arith.divf %87, %88 : vector<2x32xf32>
    %90 = arith.addf %77, %27 : vector<2x32xf32>
    %91 = arith.mulf %83, %90 : vector<2x32xf32>
    %92 = arith.addf %74, %91 : vector<2x32xf32>
    %93 = math.tanh %92 : vector<2x32xf32>
    %cst_54 = arith.constant 1.000000e+00 : f32
    %94 = vector.broadcast %cst_54 : f32 to vector<2x32xf32>
    %95 = arith.subf %94, %89 : vector<2x32xf32>
    %96 = arith.mulf %95, %93 : vector<2x32xf32>
    %97 = arith.mulf %89, %32 : vector<2x32xf32>
    %98 = arith.addf %96, %97 : vector<2x32xf32>
    %c0_55 = arith.constant 0 : index
    %c0_56 = arith.constant 0 : index
    %99 = vector.load %arg12[%c0_55, %c0_56] : memref<16x32xf32, #tpu.memory_space<vmem>>, vector<2x32xf32>
    tpu.vector_store %arg12[%c0_55, %c0_56], %71 {strides = array<i32>} : memref<16x32xf32, #tpu.memory_space<vmem>>, vector<2x32xf32>,
    %c14 = arith.constant 14 : index
    %c0_57 = arith.constant 0 : index
    %100 = vector.load %arg13[%c14, %c0_57] : memref<16x32xf32, #tpu.memory_space<vmem>>, vector<2x32xf32>
    tpu.vector_store %arg13[%c14, %c0_57], %98 {strides = array<i32>} : memref<16x32xf32, #tpu.memory_space<vmem>>, vector<2x32xf32>,
    %101 = vector.extract_strided_slice %39 {offsets = [2, 0], sizes = [2, 32], strides = [1, 1]} : vector<16x32xf32> to vector<2x32xf32>
    %102 = vector.extract_strided_slice %40 {offsets = [2, 0], sizes = [2, 32], strides = [1, 1]} : vector<16x32xf32> to vector<2x32xf32>
    %103 = vector.extract_strided_slice %41 {offsets = [2, 0], sizes = [2, 32], strides = [1, 1]} : vector<16x32xf32> to vector<2x32xf32>
    %cst_58 = arith.constant dense<0.000000e+00> : vector<2x32xf32>
    %104 = tpu.matmul %71, %1, %cst_58 {dimension_numbers = #tpu.dot_dimension_numbers<[1], [0], [0], [1], [0, 0, 1, 1], [], []>} : vector<2x32xf32>, vector<32x32xf32>, vector<2x32xf32> -> vector<2x32xf32>
    %cst_59 = arith.constant dense<0.000000e+00> : vector<2x32xf32>
    %105 = tpu.matmul %71, %3, %cst_59 {dimension_numbers = #tpu.dot_dimension_numbers<[1], [0], [0], [1], [0, 0, 1, 1], [], []>} : vector<2x32xf32>, vector<32x32xf32>, vector<2x32xf32> -> vector<2x32xf32>
    %cst_60 = arith.constant dense<0.000000e+00> : vector<2x32xf32>
    %106 = tpu.matmul %71, %5, %cst_60 {dimension_numbers = #tpu.dot_dimension_numbers<[1], [0], [0], [1], [0, 0, 1, 1], [], []>} : vector<2x32xf32>, vector<32x32xf32>, vector<2x32xf32> -> vector<2x32xf32>
    %107 = arith.addf %101, %104 : vector<2x32xf32>
    %108 = arith.negf %107 : vector<2x32xf32>
    %109 = math.exp %108 : vector<2x32xf32>
    %cst_61 = arith.constant 1.000000e+00 : f32
    %110 = vector.broadcast %cst_61 : f32 to vector<2x32xf32>
    %111 = arith.addf %110, %109 : vector<2x32xf32>
    %112 = arith.divf %110, %111 : vector<2x32xf32>
    %113 = arith.addf %102, %105 : vector<2x32xf32>
    %114 = arith.negf %113 : vector<2x32xf32>
    %115 = math.exp %114 : vector<2x32xf32>
    %cst_62 = arith.constant 1.000000e+00 : f32
    %116 = vector.broadcast %cst_62 : f32 to vector<2x32xf32>
    %117 = arith.addf %116, %115 : vector<2x32xf32>
    %118 = arith.divf %116, %117 : vector<2x32xf32>
    %119 = arith.addf %106, %25 : vector<2x32xf32>
    %120 = arith.mulf %112, %119 : vector<2x32xf32>
    %121 = arith.addf %103, %120 : vector<2x32xf32>
    %122 = math.tanh %121 : vector<2x32xf32>
    %cst_63 = arith.constant 1.000000e+00 : f32
    %123 = vector.broadcast %cst_63 : f32 to vector<2x32xf32>
    %124 = arith.subf %123, %118 : vector<2x32xf32>
    %125 = arith.mulf %124, %122 : vector<2x32xf32>
    %126 = arith.mulf %118, %71 : vector<2x32xf32>
    %127 = arith.addf %125, %126 : vector<2x32xf32>
    %128 = vector.extract_strided_slice %42 {offsets = [12, 0], sizes = [2, 32], strides = [1, 1]} : vector<16x32xf32> to vector<2x32xf32>
    %129 = vector.extract_strided_slice %43 {offsets = [12, 0], sizes = [2, 32], strides = [1, 1]} : vector<16x32xf32> to vector<2x32xf32>
    %130 = vector.extract_strided_slice %44 {offsets = [12, 0], sizes = [2, 32], strides = [1, 1]} : vector<16x32xf32> to vector<2x32xf32>
    %cst_64 = arith.constant dense<0.000000e+00> : vector<2x32xf32>
    %131 = tpu.matmul %98, %7, %cst_64 {dimension_numbers = #tpu.dot_dimension_numbers<[1], [0], [0], [1], [0, 0, 1, 1], [], []>} : vector<2x32xf32>, vector<32x32xf32>, vector<2x32xf32> -> vector<2x32xf32>
    %cst_65 = arith.constant dense<0.000000e+00> : vector<2x32xf32>
    %132 = tpu.matmul %98, %9, %cst_65 {dimension_numbers = #tpu.dot_dimension_numbers<[1], [0], [0], [1], [0, 0, 1, 1], [], []>} : vector<2x32xf32>, vector<32x32xf32>, vector<2x32xf32> -> vector<2x32xf32>
    %cst_66 = arith.constant dense<0.000000e+00> : vector<2x32xf32>
    %133 = tpu.matmul %98, %11, %cst_66 {dimension_numbers = #tpu.dot_dimension_numbers<[1], [0], [0], [1], [0, 0, 1, 1], [], []>} : vector<2x32xf32>, vector<32x32xf32>, vector<2x32xf32> -> vector<2x32xf32>
    %134 = arith.addf %128, %131 : vector<2x32xf32>
    %135 = arith.negf %134 : vector<2x32xf32>
    %136 = math.exp %135 : vector<2x32xf32>
    %cst_67 = arith.constant 1.000000e+00 : f32
    %137 = vector.broadcast %cst_67 : f32 to vector<2x32xf32>
    %138 = arith.addf %137, %136 : vector<2x32xf32>
    %139 = arith.divf %137, %138 : vector<2x32xf32>
    %140 = arith.addf %129, %132 : vector<2x32xf32>
    %141 = arith.negf %140 : vector<2x32xf32>
    %142 = math.exp %141 : vector<2x32xf32>
    %cst_68 = arith.constant 1.000000e+00 : f32
    %143 = vector.broadcast %cst_68 : f32 to vector<2x32xf32>
    %144 = arith.addf %143, %142 : vector<2x32xf32>
    %145 = arith.divf %143, %144 : vector<2x32xf32>
    %146 = arith.addf %133, %27 : vector<2x32xf32>
    %147 = arith.mulf %139, %146 : vector<2x32xf32>
    %148 = arith.addf %130, %147 : vector<2x32xf32>
    %149 = math.tanh %148 : vector<2x32xf32>
    %cst_69 = arith.constant 1.000000e+00 : f32
    %150 = vector.broadcast %cst_69 : f32 to vector<2x32xf32>
    %151 = arith.subf %150, %145 : vector<2x32xf32>
    %152 = arith.mulf %151, %149 : vector<2x32xf32>
    %153 = arith.mulf %145, %98 : vector<2x32xf32>
    %154 = arith.addf %152, %153 : vector<2x32xf32>
    %c2_70 = arith.constant 2 : index
    %c0_71 = arith.constant 0 : index
    %155 = vector.load %arg12[%c2_70, %c0_71] : memref<16x32xf32, #tpu.memory_space<vmem>>, vector<2x32xf32>
    tpu.vector_store %arg12[%c2_70, %c0_71], %127 {strides = array<i32>} : memref<16x32xf32, #tpu.memory_space<vmem>>, vector<2x32xf32>,
    %c12 = arith.constant 12 : index
    %c0_72 = arith.constant 0 : index
    %156 = vector.load %arg13[%c12, %c0_72] : memref<16x32xf32, #tpu.memory_space<vmem>>, vector<2x32xf32>
    tpu.vector_store %arg13[%c12, %c0_72], %154 {strides = array<i32>} : memref<16x32xf32, #tpu.memory_space<vmem>>, vector<2x32xf32>,
    %157 = vector.extract_strided_slice %39 {offsets = [4, 0], sizes = [2, 32], strides = [1, 1]} : vector<16x32xf32> to vector<2x32xf32>
    %158 = vector.extract_strided_slice %40 {offsets = [4, 0], sizes = [2, 32], strides = [1, 1]} : vector<16x32xf32> to vector<2x32xf32>
    %159 = vector.extract_strided_slice %41 {offsets = [4, 0], sizes = [2, 32], strides = [1, 1]} : vector<16x32xf32> to vector<2x32xf32>
    %cst_73 = arith.constant dense<0.000000e+00> : vector<2x32xf32>
    %160 = tpu.matmul %127, %1, %cst_73 {dimension_numbers = #tpu.dot_dimension_numbers<[1], [0], [0], [1], [0, 0, 1, 1], [], []>} : vector<2x32xf32>, vector<32x32xf32>, vector<2x32xf32> -> vector<2x32xf32>
    %cst_74 = arith.constant dense<0.000000e+00> : vector<2x32xf32>
    %161 = tpu.matmul %127, %3, %cst_74 {dimension_numbers = #tpu.dot_dimension_numbers<[1], [0], [0], [1], [0, 0, 1, 1], [], []>} : vector<2x32xf32>, vector<32x32xf32>, vector<2x32xf32> -> vector<2x32xf32>
    %cst_75 = arith.constant dense<0.000000e+00> : vector<2x32xf32>
    %162 = tpu.matmul %127, %5, %cst_75 {dimension_numbers = #tpu.dot_dimension_numbers<[1], [0], [0], [1], [0, 0, 1, 1], [], []>} : vector<2x32xf32>, vector<32x32xf32>, vector<2x32xf32> -> vector<2x32xf32>
    %163 = arith.addf %157, %160 : vector<2x32xf32>
    %164 = arith.negf %163 : vector<2x32xf32>
    %165 = math.exp %164 : vector<2x32xf32>
    %cst_76 = arith.constant 1.000000e+00 : f32
    %166 = vector.broadcast %cst_76 : f32 to vector<2x32xf32>
    %167 = arith.addf %166, %165 : vector<2x32xf32>
    %168 = arith.divf %166, %167 : vector<2x32xf32>
    %169 = arith.addf %158, %161 : vector<2x32xf32>
    %170 = arith.negf %169 : vector<2x32xf32>
    %171 = math.exp %170 : vector<2x32xf32>
    %cst_77 = arith.constant 1.000000e+00 : f32
    %172 = vector.broadcast %cst_77 : f32 to vector<2x32xf32>
    %173 = arith.addf %172, %171 : vector<2x32xf32>
    %174 = arith.divf %172, %173 : vector<2x32xf32>
    %175 = arith.addf %162, %25 : vector<2x32xf32>
    %176 = arith.mulf %168, %175 : vector<2x32xf32>
    %177 = arith.addf %159, %176 : vector<2x32xf32>
    %178 = math.tanh %177 : vector<2x32xf32>
    %cst_78 = arith.constant 1.000000e+00 : f32
    %179 = vector.broadcast %cst_78 : f32 to vector<2x32xf32>
    %180 = arith.subf %179, %174 : vector<2x32xf32>
    %181 = arith.mulf %180, %178 : vector<2x32xf32>
    %182 = arith.mulf %174, %127 : vector<2x32xf32>
    %183 = arith.addf %181, %182 : vector<2x32xf32>
    %184 = vector.extract_strided_slice %42 {offsets = [10, 0], sizes = [2, 32], strides = [1, 1]} : vector<16x32xf32> to vector<2x32xf32>
    %185 = vector.extract_strided_slice %43 {offsets = [10, 0], sizes = [2, 32], strides = [1, 1]} : vector<16x32xf32> to vector<2x32xf32>
    %186 = vector.extract_strided_slice %44 {offsets = [10, 0], sizes = [2, 32], strides = [1, 1]} : vector<16x32xf32> to vector<2x32xf32>
    %cst_79 = arith.constant dense<0.000000e+00> : vector<2x32xf32>
    %187 = tpu.matmul %154, %7, %cst_79 {dimension_numbers = #tpu.dot_dimension_numbers<[1], [0], [0], [1], [0, 0, 1, 1], [], []>} : vector<2x32xf32>, vector<32x32xf32>, vector<2x32xf32> -> vector<2x32xf32>
    %cst_80 = arith.constant dense<0.000000e+00> : vector<2x32xf32>
    %188 = tpu.matmul %154, %9, %cst_80 {dimension_numbers = #tpu.dot_dimension_numbers<[1], [0], [0], [1], [0, 0, 1, 1], [], []>} : vector<2x32xf32>, vector<32x32xf32>, vector<2x32xf32> -> vector<2x32xf32>
    %cst_81 = arith.constant dense<0.000000e+00> : vector<2x32xf32>
    %189 = tpu.matmul %154, %11, %cst_81 {dimension_numbers = #tpu.dot_dimension_numbers<[1], [0], [0], [1], [0, 0, 1, 1], [], []>} : vector<2x32xf32>, vector<32x32xf32>, vector<2x32xf32> -> vector<2x32xf32>
    %190 = arith.addf %184, %187 : vector<2x32xf32>
    %191 = arith.negf %190 : vector<2x32xf32>
    %192 = math.exp %191 : vector<2x32xf32>
    %cst_82 = arith.constant 1.000000e+00 : f32
    %193 = vector.broadcast %cst_82 : f32 to vector<2x32xf32>
    %194 = arith.addf %193, %192 : vector<2x32xf32>
    %195 = arith.divf %193, %194 : vector<2x32xf32>
    %196 = arith.addf %185, %188 : vector<2x32xf32>
    %197 = arith.negf %196 : vector<2x32xf32>
    %198 = math.exp %197 : vector<2x32xf32>
    %cst_83 = arith.constant 1.000000e+00 : f32
    %199 = vector.broadcast %cst_83 : f32 to vector<2x32xf32>
    %200 = arith.addf %199, %198 : vector<2x32xf32>
    %201 = arith.divf %199, %200 : vector<2x32xf32>
    %202 = arith.addf %189, %27 : vector<2x32xf32>
    %203 = arith.mulf %195, %202 : vector<2x32xf32>
    %204 = arith.addf %186, %203 : vector<2x32xf32>
    %205 = math.tanh %204 : vector<2x32xf32>
    %cst_84 = arith.constant 1.000000e+00 : f32
    %206 = vector.broadcast %cst_84 : f32 to vector<2x32xf32>
    %207 = arith.subf %206, %201 : vector<2x32xf32>
    %208 = arith.mulf %207, %205 : vector<2x32xf32>
    %209 = arith.mulf %201, %154 : vector<2x32xf32>
    %210 = arith.addf %208, %209 : vector<2x32xf32>
    %c4_85 = arith.constant 4 : index
    %c0_86 = arith.constant 0 : index
    %211 = vector.load %arg12[%c4_85, %c0_86] : memref<16x32xf32, #tpu.memory_space<vmem>>, vector<2x32xf32>
    tpu.vector_store %arg12[%c4_85, %c0_86], %183 {strides = array<i32>} : memref<16x32xf32, #tpu.memory_space<vmem>>, vector<2x32xf32>,
    %c10_87 = arith.constant 10 : index
    %c0_88 = arith.constant 0 : index
    %212 = vector.load %arg13[%c10_87, %c0_88] : memref<16x32xf32, #tpu.memory_space<vmem>>, vector<2x32xf32>
    tpu.vector_store %arg13[%c10_87, %c0_88], %210 {strides = array<i32>} : memref<16x32xf32, #tpu.memory_space<vmem>>, vector<2x32xf32>,
    %213 = vector.extract_strided_slice %39 {offsets = [6, 0], sizes = [2, 32], strides = [1, 1]} : vector<16x32xf32> to vector<2x32xf32>
    %214 = vector.extract_strided_slice %40 {offsets = [6, 0], sizes = [2, 32], strides = [1, 1]} : vector<16x32xf32> to vector<2x32xf32>
    %215 = vector.extract_strided_slice %41 {offsets = [6, 0], sizes = [2, 32], strides = [1, 1]} : vector<16x32xf32> to vector<2x32xf32>
    %cst_89 = arith.constant dense<0.000000e+00> : vector<2x32xf32>
    %216 = tpu.matmul %183, %1, %cst_89 {dimension_numbers = #tpu.dot_dimension_numbers<[1], [0], [0], [1], [0, 0, 1, 1], [], []>} : vector<2x32xf32>, vector<32x32xf32>, vector<2x32xf32> -> vector<2x32xf32>
    %cst_90 = arith.constant dense<0.000000e+00> : vector<2x32xf32>
    %217 = tpu.matmul %183, %3, %cst_90 {dimension_numbers = #tpu.dot_dimension_numbers<[1], [0], [0], [1], [0, 0, 1, 1], [], []>} : vector<2x32xf32>, vector<32x32xf32>, vector<2x32xf32> -> vector<2x32xf32>
    %cst_91 = arith.constant dense<0.000000e+00> : vector<2x32xf32>
    %218 = tpu.matmul %183, %5, %cst_91 {dimension_numbers = #tpu.dot_dimension_numbers<[1], [0], [0], [1], [0, 0, 1, 1], [], []>} : vector<2x32xf32>, vector<32x32xf32>, vector<2x32xf32> -> vector<2x32xf32>
    %219 = arith.addf %213, %216 : vector<2x32xf32>
    %220 = arith.negf %219 : vector<2x32xf32>
    %221 = math.exp %220 : vector<2x32xf32>
    %cst_92 = arith.constant 1.000000e+00 : f32
    %222 = vector.broadcast %cst_92 : f32 to vector<2x32xf32>
    %223 = arith.addf %222, %221 : vector<2x32xf32>
    %224 = arith.divf %222, %223 : vector<2x32xf32>
    %225 = arith.addf %214, %217 : vector<2x32xf32>
    %226 = arith.negf %225 : vector<2x32xf32>
    %227 = math.exp %226 : vector<2x32xf32>
    %cst_93 = arith.constant 1.000000e+00 : f32
    %228 = vector.broadcast %cst_93 : f32 to vector<2x32xf32>
    %229 = arith.addf %228, %227 : vector<2x32xf32>
    %230 = arith.divf %228, %229 : vector<2x32xf32>
    %231 = arith.addf %218, %25 : vector<2x32xf32>
    %232 = arith.mulf %224, %231 : vector<2x32xf32>
    %233 = arith.addf %215, %232 : vector<2x32xf32>
    %234 = math.tanh %233 : vector<2x32xf32>
    %cst_94 = arith.constant 1.000000e+00 : f32
    %235 = vector.broadcast %cst_94 : f32 to vector<2x32xf32>
    %236 = arith.subf %235, %230 : vector<2x32xf32>
    %237 = arith.mulf %236, %234 : vector<2x32xf32>
    %238 = arith.mulf %230, %183 : vector<2x32xf32>
    %239 = arith.addf %237, %238 : vector<2x32xf32>
    %240 = vector.extract_strided_slice %42 {offsets = [8, 0], sizes = [2, 32], strides = [1, 1]} : vector<16x32xf32> to vector<2x32xf32>
    %241 = vector.extract_strided_slice %43 {offsets = [8, 0], sizes = [2, 32], strides = [1, 1]} : vector<16x32xf32> to vector<2x32xf32>
    %242 = vector.extract_strided_slice %44 {offsets = [8, 0], sizes = [2, 32], strides = [1, 1]} : vector<16x32xf32> to vector<2x32xf32>
    %cst_95 = arith.constant dense<0.000000e+00> : vector<2x32xf32>
    %243 = tpu.matmul %210, %7, %cst_95 {dimension_numbers = #tpu.dot_dimension_numbers<[1], [0], [0], [1], [0, 0, 1, 1], [], []>} : vector<2x32xf32>, vector<32x32xf32>, vector<2x32xf32> -> vector<2x32xf32>
    %cst_96 = arith.constant dense<0.000000e+00> : vector<2x32xf32>
    %244 = tpu.matmul %210, %9, %cst_96 {dimension_numbers = #tpu.dot_dimension_numbers<[1], [0], [0], [1], [0, 0, 1, 1], [], []>} : vector<2x32xf32>, vector<32x32xf32>, vector<2x32xf32> -> vector<2x32xf32>
    %cst_97 = arith.constant dense<0.000000e+00> : vector<2x32xf32>
    %245 = tpu.matmul %210, %11, %cst_97 {dimension_numbers = #tpu.dot_dimension_numbers<[1], [0], [0], [1], [0, 0, 1, 1], [], []>} : vector<2x32xf32>, vector<32x32xf32>, vector<2x32xf32> -> vector<2x32xf32>
    %246 = arith.addf %240, %243 : vector<2x32xf32>
    %247 = arith.negf %246 : vector<2x32xf32>
    %248 = math.exp %247 : vector<2x32xf32>
    %cst_98 = arith.constant 1.000000e+00 : f32
    %249 = vector.broadcast %cst_98 : f32 to vector<2x32xf32>
    %250 = arith.addf %249, %248 : vector<2x32xf32>
    %251 = arith.divf %249, %250 : vector<2x32xf32>
    %252 = arith.addf %241, %244 : vector<2x32xf32>
    %253 = arith.negf %252 : vector<2x32xf32>
    %254 = math.exp %253 : vector<2x32xf32>
    %cst_99 = arith.constant 1.000000e+00 : f32
    %255 = vector.broadcast %cst_99 : f32 to vector<2x32xf32>
    %256 = arith.addf %255, %254 : vector<2x32xf32>
    %257 = arith.divf %255, %256 : vector<2x32xf32>
    %258 = arith.addf %245, %27 : vector<2x32xf32>
    %259 = arith.mulf %251, %258 : vector<2x32xf32>
    %260 = arith.addf %242, %259 : vector<2x32xf32>
    %261 = math.tanh %260 : vector<2x32xf32>
    %cst_100 = arith.constant 1.000000e+00 : f32
    %262 = vector.broadcast %cst_100 : f32 to vector<2x32xf32>
    %263 = arith.subf %262, %257 : vector<2x32xf32>
    %264 = arith.mulf %263, %261 : vector<2x32xf32>
    %265 = arith.mulf %257, %210 : vector<2x32xf32>
    %266 = arith.addf %264, %265 : vector<2x32xf32>
    %c6_101 = arith.constant 6 : index
    %c0_102 = arith.constant 0 : index
    %267 = vector.load %arg12[%c6_101, %c0_102] : memref<16x32xf32, #tpu.memory_space<vmem>>, vector<2x32xf32>
    tpu.vector_store %arg12[%c6_101, %c0_102], %239 {strides = array<i32>} : memref<16x32xf32, #tpu.memory_space<vmem>>, vector<2x32xf32>,
    %c8_103 = arith.constant 8 : index
    %c0_104 = arith.constant 0 : index
    %268 = vector.load %arg13[%c8_103, %c0_104] : memref<16x32xf32, #tpu.memory_space<vmem>>, vector<2x32xf32>
    tpu.vector_store %arg13[%c8_103, %c0_104], %266 {strides = array<i32>} : memref<16x32xf32, #tpu.memory_space<vmem>>, vector<2x32xf32>,
    %269 = vector.extract_strided_slice %39 {offsets = [8, 0], sizes = [2, 32], strides = [1, 1]} : vector<16x32xf32> to vector<2x32xf32>
    %270 = vector.extract_strided_slice %40 {offsets = [8, 0], sizes = [2, 32], strides = [1, 1]} : vector<16x32xf32> to vector<2x32xf32>
    %271 = vector.extract_strided_slice %41 {offsets = [8, 0], sizes = [2, 32], strides = [1, 1]} : vector<16x32xf32> to vector<2x32xf32>
    %cst_105 = arith.constant dense<0.000000e+00> : vector<2x32xf32>
    %272 = tpu.matmul %239, %1, %cst_105 {dimension_numbers = #tpu.dot_dimension_numbers<[1], [0], [0], [1], [0, 0, 1, 1], [], []>} : vector<2x32xf32>, vector<32x32xf32>, vector<2x32xf32> -> vector<2x32xf32>
    %cst_106 = arith.constant dense<0.000000e+00> : vector<2x32xf32>
    %273 = tpu.matmul %239, %3, %cst_106 {dimension_numbers = #tpu.dot_dimension_numbers<[1], [0], [0], [1], [0, 0, 1, 1], [], []>} : vector<2x32xf32>, vector<32x32xf32>, vector<2x32xf32> -> vector<2x32xf32>
    %cst_107 = arith.constant dense<0.000000e+00> : vector<2x32xf32>
    %274 = tpu.matmul %239, %5, %cst_107 {dimension_numbers = #tpu.dot_dimension_numbers<[1], [0], [0], [1], [0, 0, 1, 1], [], []>} : vector<2x32xf32>, vector<32x32xf32>, vector<2x32xf32> -> vector<2x32xf32>
    %275 = arith.addf %269, %272 : vector<2x32xf32>
    %276 = arith.negf %275 : vector<2x32xf32>
    %277 = math.exp %276 : vector<2x32xf32>
    %cst_108 = arith.constant 1.000000e+00 : f32
    %278 = vector.broadcast %cst_108 : f32 to vector<2x32xf32>
    %279 = arith.addf %278, %277 : vector<2x32xf32>
    %280 = arith.divf %278, %279 : vector<2x32xf32>
    %281 = arith.addf %270, %273 : vector<2x32xf32>
    %282 = arith.negf %281 : vector<2x32xf32>
    %283 = math.exp %282 : vector<2x32xf32>
    %cst_109 = arith.constant 1.000000e+00 : f32
    %284 = vector.broadcast %cst_109 : f32 to vector<2x32xf32>
    %285 = arith.addf %284, %283 : vector<2x32xf32>
    %286 = arith.divf %284, %285 : vector<2x32xf32>
    %287 = arith.addf %274, %25 : vector<2x32xf32>
    %288 = arith.mulf %280, %287 : vector<2x32xf32>
    %289 = arith.addf %271, %288 : vector<2x32xf32>
    %290 = math.tanh %289 : vector<2x32xf32>
    %cst_110 = arith.constant 1.000000e+00 : f32
    %291 = vector.broadcast %cst_110 : f32 to vector<2x32xf32>
    %292 = arith.subf %291, %286 : vector<2x32xf32>
    %293 = arith.mulf %292, %290 : vector<2x32xf32>
    %294 = arith.mulf %286, %239 : vector<2x32xf32>
    %295 = arith.addf %293, %294 : vector<2x32xf32>
    %296 = vector.extract_strided_slice %42 {offsets = [6, 0], sizes = [2, 32], strides = [1, 1]} : vector<16x32xf32> to vector<2x32xf32>
    %297 = vector.extract_strided_slice %43 {offsets = [6, 0], sizes = [2, 32], strides = [1, 1]} : vector<16x32xf32> to vector<2x32xf32>
    %298 = vector.extract_strided_slice %44 {offsets = [6, 0], sizes = [2, 32], strides = [1, 1]} : vector<16x32xf32> to vector<2x32xf32>
    %cst_111 = arith.constant dense<0.000000e+00> : vector<2x32xf32>
    %299 = tpu.matmul %266, %7, %cst_111 {dimension_numbers = #tpu.dot_dimension_numbers<[1], [0], [0], [1], [0, 0, 1, 1], [], []>} : vector<2x32xf32>, vector<32x32xf32>, vector<2x32xf32> -> vector<2x32xf32>
    %cst_112 = arith.constant dense<0.000000e+00> : vector<2x32xf32>
    %300 = tpu.matmul %266, %9, %cst_112 {dimension_numbers = #tpu.dot_dimension_numbers<[1], [0], [0], [1], [0, 0, 1, 1], [], []>} : vector<2x32xf32>, vector<32x32xf32>, vector<2x32xf32> -> vector<2x32xf32>
    %cst_113 = arith.constant dense<0.000000e+00> : vector<2x32xf32>
    %301 = tpu.matmul %266, %11, %cst_113 {dimension_numbers = #tpu.dot_dimension_numbers<[1], [0], [0], [1], [0, 0, 1, 1], [], []>} : vector<2x32xf32>, vector<32x32xf32>, vector<2x32xf32> -> vector<2x32xf32>
    %302 = arith.addf %296, %299 : vector<2x32xf32>
    %303 = arith.negf %302 : vector<2x32xf32>
    %304 = math.exp %303 : vector<2x32xf32>
    %cst_114 = arith.constant 1.000000e+00 : f32
    %305 = vector.broadcast %cst_114 : f32 to vector<2x32xf32>
    %306 = arith.addf %305, %304 : vector<2x32xf32>
    %307 = arith.divf %305, %306 : vector<2x32xf32>
    %308 = arith.addf %297, %300 : vector<2x32xf32>
    %309 = arith.negf %308 : vector<2x32xf32>
    %310 = math.exp %309 : vector<2x32xf32>
    %cst_115 = arith.constant 1.000000e+00 : f32
    %311 = vector.broadcast %cst_115 : f32 to vector<2x32xf32>
    %312 = arith.addf %311, %310 : vector<2x32xf32>
    %313 = arith.divf %311, %312 : vector<2x32xf32>
    %314 = arith.addf %301, %27 : vector<2x32xf32>
    %315 = arith.mulf %307, %314 : vector<2x32xf32>
    %316 = arith.addf %298, %315 : vector<2x32xf32>
    %317 = math.tanh %316 : vector<2x32xf32>
    %cst_116 = arith.constant 1.000000e+00 : f32
    %318 = vector.broadcast %cst_116 : f32 to vector<2x32xf32>
    %319 = arith.subf %318, %313 : vector<2x32xf32>
    %320 = arith.mulf %319, %317 : vector<2x32xf32>
    %321 = arith.mulf %313, %266 : vector<2x32xf32>
    %322 = arith.addf %320, %321 : vector<2x32xf32>
    %c8_117 = arith.constant 8 : index
    %c0_118 = arith.constant 0 : index
    %323 = vector.load %arg12[%c8_117, %c0_118] : memref<16x32xf32, #tpu.memory_space<vmem>>, vector<2x32xf32>
    tpu.vector_store %arg12[%c8_117, %c0_118], %295 {strides = array<i32>} : memref<16x32xf32, #tpu.memory_space<vmem>>, vector<2x32xf32>,
    %c6_119 = arith.constant 6 : index
    %c0_120 = arith.constant 0 : index
    %324 = vector.load %arg13[%c6_119, %c0_120] : memref<16x32xf32, #tpu.memory_space<vmem>>, vector<2x32xf32>
    tpu.vector_store %arg13[%c6_119, %c0_120], %322 {strides = array<i32>} : memref<16x32xf32, #tpu.memory_space<vmem>>, vector<2x32xf32>,
    %325 = vector.extract_strided_slice %39 {offsets = [10, 0], sizes = [2, 32], strides = [1, 1]} : vector<16x32xf32> to vector<2x32xf32>
    %326 = vector.extract_strided_slice %40 {offsets = [10, 0], sizes = [2, 32], strides = [1, 1]} : vector<16x32xf32> to vector<2x32xf32>
    %327 = vector.extract_strided_slice %41 {offsets = [10, 0], sizes = [2, 32], strides = [1, 1]} : vector<16x32xf32> to vector<2x32xf32>
    %cst_121 = arith.constant dense<0.000000e+00> : vector<2x32xf32>
    %328 = tpu.matmul %295, %1, %cst_121 {dimension_numbers = #tpu.dot_dimension_numbers<[1], [0], [0], [1], [0, 0, 1, 1], [], []>} : vector<2x32xf32>, vector<32x32xf32>, vector<2x32xf32> -> vector<2x32xf32>
    %cst_122 = arith.constant dense<0.000000e+00> : vector<2x32xf32>
    %329 = tpu.matmul %295, %3, %cst_122 {dimension_numbers = #tpu.dot_dimension_numbers<[1], [0], [0], [1], [0, 0, 1, 1], [], []>} : vector<2x32xf32>, vector<32x32xf32>, vector<2x32xf32> -> vector<2x32xf32>
    %cst_123 = arith.constant dense<0.000000e+00> : vector<2x32xf32>
    %330 = tpu.matmul %295, %5, %cst_123 {dimension_numbers = #tpu.dot_dimension_numbers<[1], [0], [0], [1], [0, 0, 1, 1], [], []>} : vector<2x32xf32>, vector<32x32xf32>, vector<2x32xf32> -> vector<2x32xf32>
    %331 = arith.addf %325, %328 : vector<2x32xf32>
    %332 = arith.negf %331 : vector<2x32xf32>
    %333 = math.exp %332 : vector<2x32xf32>
    %cst_124 = arith.constant 1.000000e+00 : f32
    %334 = vector.broadcast %cst_124 : f32 to vector<2x32xf32>
    %335 = arith.addf %334, %333 : vector<2x32xf32>
    %336 = arith.divf %334, %335 : vector<2x32xf32>
    %337 = arith.addf %326, %329 : vector<2x32xf32>
    %338 = arith.negf %337 : vector<2x32xf32>
    %339 = math.exp %338 : vector<2x32xf32>
    %cst_125 = arith.constant 1.000000e+00 : f32
    %340 = vector.broadcast %cst_125 : f32 to vector<2x32xf32>
    %341 = arith.addf %340, %339 : vector<2x32xf32>
    %342 = arith.divf %340, %341 : vector<2x32xf32>
    %343 = arith.addf %330, %25 : vector<2x32xf32>
    %344 = arith.mulf %336, %343 : vector<2x32xf32>
    %345 = arith.addf %327, %344 : vector<2x32xf32>
    %346 = math.tanh %345 : vector<2x32xf32>
    %cst_126 = arith.constant 1.000000e+00 : f32
    %347 = vector.broadcast %cst_126 : f32 to vector<2x32xf32>
    %348 = arith.subf %347, %342 : vector<2x32xf32>
    %349 = arith.mulf %348, %346 : vector<2x32xf32>
    %350 = arith.mulf %342, %295 : vector<2x32xf32>
    %351 = arith.addf %349, %350 : vector<2x32xf32>
    %352 = vector.extract_strided_slice %42 {offsets = [4, 0], sizes = [2, 32], strides = [1, 1]} : vector<16x32xf32> to vector<2x32xf32>
    %353 = vector.extract_strided_slice %43 {offsets = [4, 0], sizes = [2, 32], strides = [1, 1]} : vector<16x32xf32> to vector<2x32xf32>
    %354 = vector.extract_strided_slice %44 {offsets = [4, 0], sizes = [2, 32], strides = [1, 1]} : vector<16x32xf32> to vector<2x32xf32>
    %cst_127 = arith.constant dense<0.000000e+00> : vector<2x32xf32>
    %355 = tpu.matmul %322, %7, %cst_127 {dimension_numbers = #tpu.dot_dimension_numbers<[1], [0], [0], [1], [0, 0, 1, 1], [], []>} : vector<2x32xf32>, vector<32x32xf32>, vector<2x32xf32> -> vector<2x32xf32>
    %cst_128 = arith.constant dense<0.000000e+00> : vector<2x32xf32>
    %356 = tpu.matmul %322, %9, %cst_128 {dimension_numbers = #tpu.dot_dimension_numbers<[1], [0], [0], [1], [0, 0, 1, 1], [], []>} : vector<2x32xf32>, vector<32x32xf32>, vector<2x32xf32> -> vector<2x32xf32>
    %cst_129 = arith.constant dense<0.000000e+00> : vector<2x32xf32>
    %357 = tpu.matmul %322, %11, %cst_129 {dimension_numbers = #tpu.dot_dimension_numbers<[1], [0], [0], [1], [0, 0, 1, 1], [], []>} : vector<2x32xf32>, vector<32x32xf32>, vector<2x32xf32> -> vector<2x32xf32>
    %358 = arith.addf %352, %355 : vector<2x32xf32>
    %359 = arith.negf %358 : vector<2x32xf32>
    %360 = math.exp %359 : vector<2x32xf32>
    %cst_130 = arith.constant 1.000000e+00 : f32
    %361 = vector.broadcast %cst_130 : f32 to vector<2x32xf32>
    %362 = arith.addf %361, %360 : vector<2x32xf32>
    %363 = arith.divf %361, %362 : vector<2x32xf32>
    %364 = arith.addf %353, %356 : vector<2x32xf32>
    %365 = arith.negf %364 : vector<2x32xf32>
    %366 = math.exp %365 : vector<2x32xf32>
    %cst_131 = arith.constant 1.000000e+00 : f32
    %367 = vector.broadcast %cst_131 : f32 to vector<2x32xf32>
    %368 = arith.addf %367, %366 : vector<2x32xf32>
    %369 = arith.divf %367, %368 : vector<2x32xf32>
    %370 = arith.addf %357, %27 : vector<2x32xf32>
    %371 = arith.mulf %363, %370 : vector<2x32xf32>
    %372 = arith.addf %354, %371 : vector<2x32xf32>
    %373 = math.tanh %372 : vector<2x32xf32>
    %cst_132 = arith.constant 1.000000e+00 : f32
    %374 = vector.broadcast %cst_132 : f32 to vector<2x32xf32>
    %375 = arith.subf %374, %369 : vector<2x32xf32>
    %376 = arith.mulf %375, %373 : vector<2x32xf32>
    %377 = arith.mulf %369, %322 : vector<2x32xf32>
    %378 = arith.addf %376, %377 : vector<2x32xf32>
    %c10_133 = arith.constant 10 : index
    %c0_134 = arith.constant 0 : index
    %379 = vector.load %arg12[%c10_133, %c0_134] : memref<16x32xf32, #tpu.memory_space<vmem>>, vector<2x32xf32>
    tpu.vector_store %arg12[%c10_133, %c0_134], %351 {strides = array<i32>} : memref<16x32xf32, #tpu.memory_space<vmem>>, vector<2x32xf32>,
    %c4_135 = arith.constant 4 : index
    %c0_136 = arith.constant 0 : index
    %380 = vector.load %arg13[%c4_135, %c0_136] : memref<16x32xf32, #tpu.memory_space<vmem>>, vector<2x32xf32>
    tpu.vector_store %arg13[%c4_135, %c0_136], %378 {strides = array<i32>} : memref<16x32xf32, #tpu.memory_space<vmem>>, vector<2x32xf32>,
    %381 = vector.extract_strided_slice %39 {offsets = [12, 0], sizes = [2, 32], strides = [1, 1]} : vector<16x32xf32> to vector<2x32xf32>
    %382 = vector.extract_strided_slice %40 {offsets = [12, 0], sizes = [2, 32], strides = [1, 1]} : vector<16x32xf32> to vector<2x32xf32>
    %383 = vector.extract_strided_slice %41 {offsets = [12, 0], sizes = [2, 32], strides = [1, 1]} : vector<16x32xf32> to vector<2x32xf32>
    %cst_137 = arith.constant dense<0.000000e+00> : vector<2x32xf32>
    %384 = tpu.matmul %351, %1, %cst_137 {dimension_numbers = #tpu.dot_dimension_numbers<[1], [0], [0], [1], [0, 0, 1, 1], [], []>} : vector<2x32xf32>, vector<32x32xf32>, vector<2x32xf32> -> vector<2x32xf32>
    %cst_138 = arith.constant dense<0.000000e+00> : vector<2x32xf32>
    %385 = tpu.matmul %351, %3, %cst_138 {dimension_numbers = #tpu.dot_dimension_numbers<[1], [0], [0], [1], [0, 0, 1, 1], [], []>} : vector<2x32xf32>, vector<32x32xf32>, vector<2x32xf32> -> vector<2x32xf32>
    %cst_139 = arith.constant dense<0.000000e+00> : vector<2x32xf32>
    %386 = tpu.matmul %351, %5, %cst_139 {dimension_numbers = #tpu.dot_dimension_numbers<[1], [0], [0], [1], [0, 0, 1, 1], [], []>} : vector<2x32xf32>, vector<32x32xf32>, vector<2x32xf32> -> vector<2x32xf32>
    %387 = arith.addf %381, %384 : vector<2x32xf32>
    %388 = arith.negf %387 : vector<2x32xf32>
    %389 = math.exp %388 : vector<2x32xf32>
    %cst_140 = arith.constant 1.000000e+00 : f32
    %390 = vector.broadcast %cst_140 : f32 to vector<2x32xf32>
    %391 = arith.addf %390, %389 : vector<2x32xf32>
    %392 = arith.divf %390, %391 : vector<2x32xf32>
    %393 = arith.addf %382, %385 : vector<2x32xf32>
    %394 = arith.negf %393 : vector<2x32xf32>
    %395 = math.exp %394 : vector<2x32xf32>
    %cst_141 = arith.constant 1.000000e+00 : f32
    %396 = vector.broadcast %cst_141 : f32 to vector<2x32xf32>
    %397 = arith.addf %396, %395 : vector<2x32xf32>
    %398 = arith.divf %396, %397 : vector<2x32xf32>
    %399 = arith.addf %386, %25 : vector<2x32xf32>
    %400 = arith.mulf %392, %399 : vector<2x32xf32>
    %401 = arith.addf %383, %400 : vector<2x32xf32>
    %402 = math.tanh %401 : vector<2x32xf32>
    %cst_142 = arith.constant 1.000000e+00 : f32
    %403 = vector.broadcast %cst_142 : f32 to vector<2x32xf32>
    %404 = arith.subf %403, %398 : vector<2x32xf32>
    %405 = arith.mulf %404, %402 : vector<2x32xf32>
    %406 = arith.mulf %398, %351 : vector<2x32xf32>
    %407 = arith.addf %405, %406 : vector<2x32xf32>
    %408 = vector.extract_strided_slice %42 {offsets = [2, 0], sizes = [2, 32], strides = [1, 1]} : vector<16x32xf32> to vector<2x32xf32>
    %409 = vector.extract_strided_slice %43 {offsets = [2, 0], sizes = [2, 32], strides = [1, 1]} : vector<16x32xf32> to vector<2x32xf32>
    %410 = vector.extract_strided_slice %44 {offsets = [2, 0], sizes = [2, 32], strides = [1, 1]} : vector<16x32xf32> to vector<2x32xf32>
    %cst_143 = arith.constant dense<0.000000e+00> : vector<2x32xf32>
    %411 = tpu.matmul %378, %7, %cst_143 {dimension_numbers = #tpu.dot_dimension_numbers<[1], [0], [0], [1], [0, 0, 1, 1], [], []>} : vector<2x32xf32>, vector<32x32xf32>, vector<2x32xf32> -> vector<2x32xf32>
    %cst_144 = arith.constant dense<0.000000e+00> : vector<2x32xf32>
    %412 = tpu.matmul %378, %9, %cst_144 {dimension_numbers = #tpu.dot_dimension_numbers<[1], [0], [0], [1], [0, 0, 1, 1], [], []>} : vector<2x32xf32>, vector<32x32xf32>, vector<2x32xf32> -> vector<2x32xf32>
    %cst_145 = arith.constant dense<0.000000e+00> : vector<2x32xf32>
    %413 = tpu.matmul %378, %11, %cst_145 {dimension_numbers = #tpu.dot_dimension_numbers<[1], [0], [0], [1], [0, 0, 1, 1], [], []>} : vector<2x32xf32>, vector<32x32xf32>, vector<2x32xf32> -> vector<2x32xf32>
    %414 = arith.addf %408, %411 : vector<2x32xf32>
    %415 = arith.negf %414 : vector<2x32xf32>
    %416 = math.exp %415 : vector<2x32xf32>
    %cst_146 = arith.constant 1.000000e+00 : f32
    %417 = vector.broadcast %cst_146 : f32 to vector<2x32xf32>
    %418 = arith.addf %417, %416 : vector<2x32xf32>
    %419 = arith.divf %417, %418 : vector<2x32xf32>
    %420 = arith.addf %409, %412 : vector<2x32xf32>
    %421 = arith.negf %420 : vector<2x32xf32>
    %422 = math.exp %421 : vector<2x32xf32>
    %cst_147 = arith.constant 1.000000e+00 : f32
    %423 = vector.broadcast %cst_147 : f32 to vector<2x32xf32>
    %424 = arith.addf %423, %422 : vector<2x32xf32>
    %425 = arith.divf %423, %424 : vector<2x32xf32>
    %426 = arith.addf %413, %27 : vector<2x32xf32>
    %427 = arith.mulf %419, %426 : vector<2x32xf32>
    %428 = arith.addf %410, %427 : vector<2x32xf32>
    %429 = math.tanh %428 : vector<2x32xf32>
    %cst_148 = arith.constant 1.000000e+00 : f32
    %430 = vector.broadcast %cst_148 : f32 to vector<2x32xf32>
    %431 = arith.subf %430, %425 : vector<2x32xf32>
    %432 = arith.mulf %431, %429 : vector<2x32xf32>
    %433 = arith.mulf %425, %378 : vector<2x32xf32>
    %434 = arith.addf %432, %433 : vector<2x32xf32>
    %c12_149 = arith.constant 12 : index
    %c0_150 = arith.constant 0 : index
    %435 = vector.load %arg12[%c12_149, %c0_150] : memref<16x32xf32, #tpu.memory_space<vmem>>, vector<2x32xf32>
    tpu.vector_store %arg12[%c12_149, %c0_150], %407 {strides = array<i32>} : memref<16x32xf32, #tpu.memory_space<vmem>>, vector<2x32xf32>,
    %c2_151 = arith.constant 2 : index
    %c0_152 = arith.constant 0 : index
    %436 = vector.load %arg13[%c2_151, %c0_152] : memref<16x32xf32, #tpu.memory_space<vmem>>, vector<2x32xf32>
    tpu.vector_store %arg13[%c2_151, %c0_152], %434 {strides = array<i32>} : memref<16x32xf32, #tpu.memory_space<vmem>>, vector<2x32xf32>,
    %437 = vector.extract_strided_slice %39 {offsets = [14, 0], sizes = [2, 32], strides = [1, 1]} : vector<16x32xf32> to vector<2x32xf32>
    %438 = vector.extract_strided_slice %40 {offsets = [14, 0], sizes = [2, 32], strides = [1, 1]} : vector<16x32xf32> to vector<2x32xf32>
    %439 = vector.extract_strided_slice %41 {offsets = [14, 0], sizes = [2, 32], strides = [1, 1]} : vector<16x32xf32> to vector<2x32xf32>
    %cst_153 = arith.constant dense<0.000000e+00> : vector<2x32xf32>
    %440 = tpu.matmul %407, %1, %cst_153 {dimension_numbers = #tpu.dot_dimension_numbers<[1], [0], [0], [1], [0, 0, 1, 1], [], []>} : vector<2x32xf32>, vector<32x32xf32>, vector<2x32xf32> -> vector<2x32xf32>
    %cst_154 = arith.constant dense<0.000000e+00> : vector<2x32xf32>
    %441 = tpu.matmul %407, %3, %cst_154 {dimension_numbers = #tpu.dot_dimension_numbers<[1], [0], [0], [1], [0, 0, 1, 1], [], []>} : vector<2x32xf32>, vector<32x32xf32>, vector<2x32xf32> -> vector<2x32xf32>
    %cst_155 = arith.constant dense<0.000000e+00> : vector<2x32xf32>
    %442 = tpu.matmul %407, %5, %cst_155 {dimension_numbers = #tpu.dot_dimension_numbers<[1], [0], [0], [1], [0, 0, 1, 1], [], []>} : vector<2x32xf32>, vector<32x32xf32>, vector<2x32xf32> -> vector<2x32xf32>
    %443 = arith.addf %437, %440 : vector<2x32xf32>
    %444 = arith.negf %443 : vector<2x32xf32>
    %445 = math.exp %444 : vector<2x32xf32>
    %cst_156 = arith.constant 1.000000e+00 : f32
    %446 = vector.broadcast %cst_156 : f32 to vector<2x32xf32>
    %447 = arith.addf %446, %445 : vector<2x32xf32>
    %448 = arith.divf %446, %447 : vector<2x32xf32>
    %449 = arith.addf %438, %441 : vector<2x32xf32>
    %450 = arith.negf %449 : vector<2x32xf32>
    %451 = math.exp %450 : vector<2x32xf32>
    %cst_157 = arith.constant 1.000000e+00 : f32
    %452 = vector.broadcast %cst_157 : f32 to vector<2x32xf32>
    %453 = arith.addf %452, %451 : vector<2x32xf32>
    %454 = arith.divf %452, %453 : vector<2x32xf32>
    %455 = arith.addf %442, %25 : vector<2x32xf32>
    %456 = arith.mulf %448, %455 : vector<2x32xf32>
    %457 = arith.addf %439, %456 : vector<2x32xf32>
    %458 = math.tanh %457 : vector<2x32xf32>
    %cst_158 = arith.constant 1.000000e+00 : f32
    %459 = vector.broadcast %cst_158 : f32 to vector<2x32xf32>
    %460 = arith.subf %459, %454 : vector<2x32xf32>
    %461 = arith.mulf %460, %458 : vector<2x32xf32>
    %462 = arith.mulf %454, %407 : vector<2x32xf32>
    %463 = arith.addf %461, %462 : vector<2x32xf32>
    %464 = vector.extract_strided_slice %42 {offsets = [0, 0], sizes = [2, 32], strides = [1, 1]} : vector<16x32xf32> to vector<2x32xf32>
    %465 = vector.extract_strided_slice %43 {offsets = [0, 0], sizes = [2, 32], strides = [1, 1]} : vector<16x32xf32> to vector<2x32xf32>
    %466 = vector.extract_strided_slice %44 {offsets = [0, 0], sizes = [2, 32], strides = [1, 1]} : vector<16x32xf32> to vector<2x32xf32>
    %cst_159 = arith.constant dense<0.000000e+00> : vector<2x32xf32>
    %467 = tpu.matmul %434, %7, %cst_159 {dimension_numbers = #tpu.dot_dimension_numbers<[1], [0], [0], [1], [0, 0, 1, 1], [], []>} : vector<2x32xf32>, vector<32x32xf32>, vector<2x32xf32> -> vector<2x32xf32>
    %cst_160 = arith.constant dense<0.000000e+00> : vector<2x32xf32>
    %468 = tpu.matmul %434, %9, %cst_160 {dimension_numbers = #tpu.dot_dimension_numbers<[1], [0], [0], [1], [0, 0, 1, 1], [], []>} : vector<2x32xf32>, vector<32x32xf32>, vector<2x32xf32> -> vector<2x32xf32>
    %cst_161 = arith.constant dense<0.000000e+00> : vector<2x32xf32>
    %469 = tpu.matmul %434, %11, %cst_161 {dimension_numbers = #tpu.dot_dimension_numbers<[1], [0], [0], [1], [0, 0, 1, 1], [], []>} : vector<2x32xf32>, vector<32x32xf32>, vector<2x32xf32> -> vector<2x32xf32>
    %470 = arith.addf %464, %467 : vector<2x32xf32>
    %471 = arith.negf %470 : vector<2x32xf32>
    %472 = math.exp %471 : vector<2x32xf32>
    %cst_162 = arith.constant 1.000000e+00 : f32
    %473 = vector.broadcast %cst_162 : f32 to vector<2x32xf32>
    %474 = arith.addf %473, %472 : vector<2x32xf32>
    %475 = arith.divf %473, %474 : vector<2x32xf32>
    %476 = arith.addf %465, %468 : vector<2x32xf32>
    %477 = arith.negf %476 : vector<2x32xf32>
    %478 = math.exp %477 : vector<2x32xf32>
    %cst_163 = arith.constant 1.000000e+00 : f32
    %479 = vector.broadcast %cst_163 : f32 to vector<2x32xf32>
    %480 = arith.addf %479, %478 : vector<2x32xf32>
    %481 = arith.divf %479, %480 : vector<2x32xf32>
    %482 = arith.addf %469, %27 : vector<2x32xf32>
    %483 = arith.mulf %475, %482 : vector<2x32xf32>
    %484 = arith.addf %466, %483 : vector<2x32xf32>
    %485 = math.tanh %484 : vector<2x32xf32>
    %cst_164 = arith.constant 1.000000e+00 : f32
    %486 = vector.broadcast %cst_164 : f32 to vector<2x32xf32>
    %487 = arith.subf %486, %481 : vector<2x32xf32>
    %488 = arith.mulf %487, %485 : vector<2x32xf32>
    %489 = arith.mulf %481, %434 : vector<2x32xf32>
    %490 = arith.addf %488, %489 : vector<2x32xf32>
    %c14_165 = arith.constant 14 : index
    %c0_166 = arith.constant 0 : index
    %491 = vector.load %arg12[%c14_165, %c0_166] : memref<16x32xf32, #tpu.memory_space<vmem>>, vector<2x32xf32>
    tpu.vector_store %arg12[%c14_165, %c0_166], %463 {strides = array<i32>} : memref<16x32xf32, #tpu.memory_space<vmem>>, vector<2x32xf32>,
    %c0_167 = arith.constant 0 : index
    %c0_168 = arith.constant 0 : index
    %492 = vector.load %arg13[%c0_167, %c0_168] : memref<16x32xf32, #tpu.memory_space<vmem>>, vector<2x32xf32>
    tpu.vector_store %arg13[%c0_167, %c0_168], %490 {strides = array<i32>} : memref<16x32xf32, #tpu.memory_space<vmem>>, vector<2x32xf32>,
    %c0_169 = arith.constant 0 : index
    %c0_170 = arith.constant 0 : index
    %493 = vector.load %arg12[%c0_169, %c0_170] : memref<16x32xf32, #tpu.memory_space<vmem>>, vector<16x32xf32>
    %c0_171 = arith.constant 0 : index
    %c0_172 = arith.constant 0 : index
    %c0_173 = arith.constant 0 : index
    %494 = vector.load %arg3[%c0_171, %c0_172, %c0_173] : memref<2x32x192xf32, #tpu.memory_space<vmem>>, vector<1x32x192xf32>
    %495 = vector.shape_cast %494 : vector<1x32x192xf32> to vector<32x192xf32>
    %cst_174 = arith.constant dense<0.000000e+00> : vector<16x192xf32>
    %496 = tpu.matmul %493, %495, %cst_174 {dimension_numbers = #tpu.dot_dimension_numbers<[1], [0], [0], [1], [0, 0, 1, 1], [], []>} : vector<16x32xf32>, vector<32x192xf32>, vector<16x192xf32> -> vector<16x192xf32>
    %c0_175 = arith.constant 0 : index
    %c0_176 = arith.constant 0 : index
    %497 = vector.load %arg13[%c0_175, %c0_176] : memref<16x32xf32, #tpu.memory_space<vmem>>, vector<16x32xf32>
    %c1_177 = arith.constant 1 : index
    %c0_178 = arith.constant 0 : index
    %c0_179 = arith.constant 0 : index
    %498 = vector.load %arg3[%c1_177, %c0_178, %c0_179] : memref<2x32x192xf32, #tpu.memory_space<vmem>>, vector<1x32x192xf32>
    %499 = vector.shape_cast %498 : vector<1x32x192xf32> to vector<32x192xf32>
    %cst_180 = arith.constant dense<0.000000e+00> : vector<16x192xf32>
    %500 = tpu.matmul %497, %499, %cst_180 {dimension_numbers = #tpu.dot_dimension_numbers<[1], [0], [0], [1], [0, 0, 1, 1], [], []>} : vector<16x32xf32>, vector<32x192xf32>, vector<16x192xf32> -> vector<16x192xf32>
    %501 = arith.addf %496, %500 : vector<16x192xf32>
    %c0_181 = arith.constant 0 : index
    %c0_182 = arith.constant 0 : index
    %502 = vector.load %arg4[%c0_181, %c0_182] : memref<1x192xf32, #tpu.memory_space<vmem>>, vector<1x192xf32>
    %503 = vector.broadcast %502 : vector<1x192xf32> to vector<16x192xf32>
    %504 = arith.addf %501, %503 : vector<16x192xf32>
    %505 = vector.extract_strided_slice %504 {offsets = [0, 0], sizes = [16, 32], strides = [1, 1]} : vector<16x192xf32> to vector<16x32xf32>
    %506 = vector.extract_strided_slice %504 {offsets = [0, 32], sizes = [16, 32], strides = [1, 1]} : vector<16x192xf32> to vector<16x32xf32>
    %507 = vector.extract_strided_slice %504 {offsets = [0, 64], sizes = [16, 32], strides = [1, 1]} : vector<16x192xf32> to vector<16x32xf32>
    %508 = vector.extract_strided_slice %504 {offsets = [0, 96], sizes = [16, 32], strides = [1, 1]} : vector<16x192xf32> to vector<16x32xf32>
    %509 = vector.extract_strided_slice %504 {offsets = [0, 128], sizes = [16, 32], strides = [1, 1]} : vector<16x192xf32> to vector<16x32xf32>
    %510 = vector.extract_strided_slice %504 {offsets = [0, 160], sizes = [16, 32], strides = [1, 1]} : vector<16x192xf32> to vector<16x32xf32>
    %511 = vector.extract_strided_slice %508 {offsets = [14, 0], sizes = [2, 32], strides = [1, 1]} : vector<16x32xf32> to vector<2x32xf32>
    %512 = vector.extract_strided_slice %509 {offsets = [14, 0], sizes = [2, 32], strides = [1, 1]} : vector<16x32xf32> to vector<2x32xf32>
    %513 = vector.extract_strided_slice %510 {offsets = [14, 0], sizes = [2, 32], strides = [1, 1]} : vector<16x32xf32> to vector<2x32xf32>
    %cst_183 = arith.constant dense<0.000000e+00> : vector<2x32xf32>
    %514 = tpu.matmul %32, %19, %cst_183 {dimension_numbers = #tpu.dot_dimension_numbers<[1], [0], [0], [1], [0, 0, 1, 1], [], []>} : vector<2x32xf32>, vector<32x32xf32>, vector<2x32xf32> -> vector<2x32xf32>
    %cst_184 = arith.constant dense<0.000000e+00> : vector<2x32xf32>
    %515 = tpu.matmul %32, %21, %cst_184 {dimension_numbers = #tpu.dot_dimension_numbers<[1], [0], [0], [1], [0, 0, 1, 1], [], []>} : vector<2x32xf32>, vector<32x32xf32>, vector<2x32xf32> -> vector<2x32xf32>
    %cst_185 = arith.constant dense<0.000000e+00> : vector<2x32xf32>
    %516 = tpu.matmul %32, %23, %cst_185 {dimension_numbers = #tpu.dot_dimension_numbers<[1], [0], [0], [1], [0, 0, 1, 1], [], []>} : vector<2x32xf32>, vector<32x32xf32>, vector<2x32xf32> -> vector<2x32xf32>
    %517 = arith.addf %511, %514 : vector<2x32xf32>
    %518 = arith.negf %517 : vector<2x32xf32>
    %519 = math.exp %518 : vector<2x32xf32>
    %cst_186 = arith.constant 1.000000e+00 : f32
    %520 = vector.broadcast %cst_186 : f32 to vector<2x32xf32>
    %521 = arith.addf %520, %519 : vector<2x32xf32>
    %522 = arith.divf %520, %521 : vector<2x32xf32>
    %523 = arith.addf %512, %515 : vector<2x32xf32>
    %524 = arith.negf %523 : vector<2x32xf32>
    %525 = math.exp %524 : vector<2x32xf32>
    %cst_187 = arith.constant 1.000000e+00 : f32
    %526 = vector.broadcast %cst_187 : f32 to vector<2x32xf32>
    %527 = arith.addf %526, %525 : vector<2x32xf32>
    %528 = arith.divf %526, %527 : vector<2x32xf32>
    %529 = arith.addf %516, %31 : vector<2x32xf32>
    %530 = arith.mulf %522, %529 : vector<2x32xf32>
    %531 = arith.addf %513, %530 : vector<2x32xf32>
    %532 = math.tanh %531 : vector<2x32xf32>
    %cst_188 = arith.constant 1.000000e+00 : f32
    %533 = vector.broadcast %cst_188 : f32 to vector<2x32xf32>
    %534 = arith.subf %533, %528 : vector<2x32xf32>
    %535 = arith.mulf %534, %532 : vector<2x32xf32>
    %536 = arith.mulf %528, %32 : vector<2x32xf32>
    %537 = arith.addf %535, %536 : vector<2x32xf32>
    %538 = vector.extract_strided_slice %505 {offsets = [0, 0], sizes = [2, 32], strides = [1, 1]} : vector<16x32xf32> to vector<2x32xf32>
    %539 = vector.extract_strided_slice %506 {offsets = [0, 0], sizes = [2, 32], strides = [1, 1]} : vector<16x32xf32> to vector<2x32xf32>
    %540 = vector.extract_strided_slice %507 {offsets = [0, 0], sizes = [2, 32], strides = [1, 1]} : vector<16x32xf32> to vector<2x32xf32>
    %cst_189 = arith.constant dense<0.000000e+00> : vector<2x32xf32>
    %541 = tpu.matmul %32, %13, %cst_189 {dimension_numbers = #tpu.dot_dimension_numbers<[1], [0], [0], [1], [0, 0, 1, 1], [], []>} : vector<2x32xf32>, vector<32x32xf32>, vector<2x32xf32> -> vector<2x32xf32>
    %cst_190 = arith.constant dense<0.000000e+00> : vector<2x32xf32>
    %542 = tpu.matmul %32, %15, %cst_190 {dimension_numbers = #tpu.dot_dimension_numbers<[1], [0], [0], [1], [0, 0, 1, 1], [], []>} : vector<2x32xf32>, vector<32x32xf32>, vector<2x32xf32> -> vector<2x32xf32>
    %cst_191 = arith.constant dense<0.000000e+00> : vector<2x32xf32>
    %543 = tpu.matmul %32, %17, %cst_191 {dimension_numbers = #tpu.dot_dimension_numbers<[1], [0], [0], [1], [0, 0, 1, 1], [], []>} : vector<2x32xf32>, vector<32x32xf32>, vector<2x32xf32> -> vector<2x32xf32>
    %544 = arith.addf %538, %541 : vector<2x32xf32>
    %545 = arith.negf %544 : vector<2x32xf32>
    %546 = math.exp %545 : vector<2x32xf32>
    %cst_192 = arith.constant 1.000000e+00 : f32
    %547 = vector.broadcast %cst_192 : f32 to vector<2x32xf32>
    %548 = arith.addf %547, %546 : vector<2x32xf32>
    %549 = arith.divf %547, %548 : vector<2x32xf32>
    %550 = arith.addf %539, %542 : vector<2x32xf32>
    %551 = arith.negf %550 : vector<2x32xf32>
    %552 = math.exp %551 : vector<2x32xf32>
    %cst_193 = arith.constant 1.000000e+00 : f32
    %553 = vector.broadcast %cst_193 : f32 to vector<2x32xf32>
    %554 = arith.addf %553, %552 : vector<2x32xf32>
    %555 = arith.divf %553, %554 : vector<2x32xf32>
    %556 = arith.addf %543, %29 : vector<2x32xf32>
    %557 = arith.mulf %549, %556 : vector<2x32xf32>
    %558 = arith.addf %540, %557 : vector<2x32xf32>
    %559 = math.tanh %558 : vector<2x32xf32>
    %cst_194 = arith.constant 1.000000e+00 : f32
    %560 = vector.broadcast %cst_194 : f32 to vector<2x32xf32>
    %561 = arith.subf %560, %555 : vector<2x32xf32>
    %562 = arith.mulf %561, %559 : vector<2x32xf32>
    %563 = arith.mulf %555, %32 : vector<2x32xf32>
    %564 = arith.addf %562, %563 : vector<2x32xf32>
    %565 = vector.extract_strided_slice %505 {offsets = [2, 0], sizes = [2, 32], strides = [1, 1]} : vector<16x32xf32> to vector<2x32xf32>
    %566 = vector.extract_strided_slice %506 {offsets = [2, 0], sizes = [2, 32], strides = [1, 1]} : vector<16x32xf32> to vector<2x32xf32>
    %567 = vector.extract_strided_slice %507 {offsets = [2, 0], sizes = [2, 32], strides = [1, 1]} : vector<16x32xf32> to vector<2x32xf32>
    %cst_195 = arith.constant dense<0.000000e+00> : vector<2x32xf32>
    %568 = tpu.matmul %564, %13, %cst_195 {dimension_numbers = #tpu.dot_dimension_numbers<[1], [0], [0], [1], [0, 0, 1, 1], [], []>} : vector<2x32xf32>, vector<32x32xf32>, vector<2x32xf32> -> vector<2x32xf32>
    %cst_196 = arith.constant dense<0.000000e+00> : vector<2x32xf32>
    %569 = tpu.matmul %564, %15, %cst_196 {dimension_numbers = #tpu.dot_dimension_numbers<[1], [0], [0], [1], [0, 0, 1, 1], [], []>} : vector<2x32xf32>, vector<32x32xf32>, vector<2x32xf32> -> vector<2x32xf32>
    %cst_197 = arith.constant dense<0.000000e+00> : vector<2x32xf32>
    %570 = tpu.matmul %564, %17, %cst_197 {dimension_numbers = #tpu.dot_dimension_numbers<[1], [0], [0], [1], [0, 0, 1, 1], [], []>} : vector<2x32xf32>, vector<32x32xf32>, vector<2x32xf32> -> vector<2x32xf32>
    %571 = arith.addf %565, %568 : vector<2x32xf32>
    %572 = arith.negf %571 : vector<2x32xf32>
    %573 = math.exp %572 : vector<2x32xf32>
    %cst_198 = arith.constant 1.000000e+00 : f32
    %574 = vector.broadcast %cst_198 : f32 to vector<2x32xf32>
    %575 = arith.addf %574, %573 : vector<2x32xf32>
    %576 = arith.divf %574, %575 : vector<2x32xf32>
    %577 = arith.addf %566, %569 : vector<2x32xf32>
    %578 = arith.negf %577 : vector<2x32xf32>
    %579 = math.exp %578 : vector<2x32xf32>
    %cst_199 = arith.constant 1.000000e+00 : f32
    %580 = vector.broadcast %cst_199 : f32 to vector<2x32xf32>
    %581 = arith.addf %580, %579 : vector<2x32xf32>
    %582 = arith.divf %580, %581 : vector<2x32xf32>
    %583 = arith.addf %570, %29 : vector<2x32xf32>
    %584 = arith.mulf %576, %583 : vector<2x32xf32>
    %585 = arith.addf %567, %584 : vector<2x32xf32>
    %586 = math.tanh %585 : vector<2x32xf32>
    %cst_200 = arith.constant 1.000000e+00 : f32
    %587 = vector.broadcast %cst_200 : f32 to vector<2x32xf32>
    %588 = arith.subf %587, %582 : vector<2x32xf32>
    %589 = arith.mulf %588, %586 : vector<2x32xf32>
    %590 = arith.mulf %582, %564 : vector<2x32xf32>
    %591 = arith.addf %589, %590 : vector<2x32xf32>
    %592 = vector.extract_strided_slice %505 {offsets = [4, 0], sizes = [2, 32], strides = [1, 1]} : vector<16x32xf32> to vector<2x32xf32>
    %593 = vector.extract_strided_slice %506 {offsets = [4, 0], sizes = [2, 32], strides = [1, 1]} : vector<16x32xf32> to vector<2x32xf32>
    %594 = vector.extract_strided_slice %507 {offsets = [4, 0], sizes = [2, 32], strides = [1, 1]} : vector<16x32xf32> to vector<2x32xf32>
    %cst_201 = arith.constant dense<0.000000e+00> : vector<2x32xf32>
    %595 = tpu.matmul %591, %13, %cst_201 {dimension_numbers = #tpu.dot_dimension_numbers<[1], [0], [0], [1], [0, 0, 1, 1], [], []>} : vector<2x32xf32>, vector<32x32xf32>, vector<2x32xf32> -> vector<2x32xf32>
    %cst_202 = arith.constant dense<0.000000e+00> : vector<2x32xf32>
    %596 = tpu.matmul %591, %15, %cst_202 {dimension_numbers = #tpu.dot_dimension_numbers<[1], [0], [0], [1], [0, 0, 1, 1], [], []>} : vector<2x32xf32>, vector<32x32xf32>, vector<2x32xf32> -> vector<2x32xf32>
    %cst_203 = arith.constant dense<0.000000e+00> : vector<2x32xf32>
    %597 = tpu.matmul %591, %17, %cst_203 {dimension_numbers = #tpu.dot_dimension_numbers<[1], [0], [0], [1], [0, 0, 1, 1], [], []>} : vector<2x32xf32>, vector<32x32xf32>, vector<2x32xf32> -> vector<2x32xf32>
    %598 = arith.addf %592, %595 : vector<2x32xf32>
    %599 = arith.negf %598 : vector<2x32xf32>
    %600 = math.exp %599 : vector<2x32xf32>
    %cst_204 = arith.constant 1.000000e+00 : f32
    %601 = vector.broadcast %cst_204 : f32 to vector<2x32xf32>
    %602 = arith.addf %601, %600 : vector<2x32xf32>
    %603 = arith.divf %601, %602 : vector<2x32xf32>
    %604 = arith.addf %593, %596 : vector<2x32xf32>
    %605 = arith.negf %604 : vector<2x32xf32>
    %606 = math.exp %605 : vector<2x32xf32>
    %cst_205 = arith.constant 1.000000e+00 : f32
    %607 = vector.broadcast %cst_205 : f32 to vector<2x32xf32>
    %608 = arith.addf %607, %606 : vector<2x32xf32>
    %609 = arith.divf %607, %608 : vector<2x32xf32>
    %610 = arith.addf %597, %29 : vector<2x32xf32>
    %611 = arith.mulf %603, %610 : vector<2x32xf32>
    %612 = arith.addf %594, %611 : vector<2x32xf32>
    %613 = math.tanh %612 : vector<2x32xf32>
    %cst_206 = arith.constant 1.000000e+00 : f32
    %614 = vector.broadcast %cst_206 : f32 to vector<2x32xf32>
    %615 = arith.subf %614, %609 : vector<2x32xf32>
    %616 = arith.mulf %615, %613 : vector<2x32xf32>
    %617 = arith.mulf %609, %591 : vector<2x32xf32>
    %618 = arith.addf %616, %617 : vector<2x32xf32>
    %619 = vector.extract_strided_slice %505 {offsets = [6, 0], sizes = [2, 32], strides = [1, 1]} : vector<16x32xf32> to vector<2x32xf32>
    %620 = vector.extract_strided_slice %506 {offsets = [6, 0], sizes = [2, 32], strides = [1, 1]} : vector<16x32xf32> to vector<2x32xf32>
    %621 = vector.extract_strided_slice %507 {offsets = [6, 0], sizes = [2, 32], strides = [1, 1]} : vector<16x32xf32> to vector<2x32xf32>
    %cst_207 = arith.constant dense<0.000000e+00> : vector<2x32xf32>
    %622 = tpu.matmul %618, %13, %cst_207 {dimension_numbers = #tpu.dot_dimension_numbers<[1], [0], [0], [1], [0, 0, 1, 1], [], []>} : vector<2x32xf32>, vector<32x32xf32>, vector<2x32xf32> -> vector<2x32xf32>
    %cst_208 = arith.constant dense<0.000000e+00> : vector<2x32xf32>
    %623 = tpu.matmul %618, %15, %cst_208 {dimension_numbers = #tpu.dot_dimension_numbers<[1], [0], [0], [1], [0, 0, 1, 1], [], []>} : vector<2x32xf32>, vector<32x32xf32>, vector<2x32xf32> -> vector<2x32xf32>
    %cst_209 = arith.constant dense<0.000000e+00> : vector<2x32xf32>
    %624 = tpu.matmul %618, %17, %cst_209 {dimension_numbers = #tpu.dot_dimension_numbers<[1], [0], [0], [1], [0, 0, 1, 1], [], []>} : vector<2x32xf32>, vector<32x32xf32>, vector<2x32xf32> -> vector<2x32xf32>
    %625 = arith.addf %619, %622 : vector<2x32xf32>
    %626 = arith.negf %625 : vector<2x32xf32>
    %627 = math.exp %626 : vector<2x32xf32>
    %cst_210 = arith.constant 1.000000e+00 : f32
    %628 = vector.broadcast %cst_210 : f32 to vector<2x32xf32>
    %629 = arith.addf %628, %627 : vector<2x32xf32>
    %630 = arith.divf %628, %629 : vector<2x32xf32>
    %631 = arith.addf %620, %623 : vector<2x32xf32>
    %632 = arith.negf %631 : vector<2x32xf32>
    %633 = math.exp %632 : vector<2x32xf32>
    %cst_211 = arith.constant 1.000000e+00 : f32
    %634 = vector.broadcast %cst_211 : f32 to vector<2x32xf32>
    %635 = arith.addf %634, %633 : vector<2x32xf32>
    %636 = arith.divf %634, %635 : vector<2x32xf32>
    %637 = arith.addf %624, %29 : vector<2x32xf32>
    %638 = arith.mulf %630, %637 : vector<2x32xf32>
    %639 = arith.addf %621, %638 : vector<2x32xf32>
    %640 = math.tanh %639 : vector<2x32xf32>
    %cst_212 = arith.constant 1.000000e+00 : f32
    %641 = vector.broadcast %cst_212 : f32 to vector<2x32xf32>
    %642 = arith.subf %641, %636 : vector<2x32xf32>
    %643 = arith.mulf %642, %640 : vector<2x32xf32>
    %644 = arith.mulf %636, %618 : vector<2x32xf32>
    %645 = arith.addf %643, %644 : vector<2x32xf32>
    %646 = vector.extract_strided_slice %505 {offsets = [8, 0], sizes = [2, 32], strides = [1, 1]} : vector<16x32xf32> to vector<2x32xf32>
    %647 = vector.extract_strided_slice %506 {offsets = [8, 0], sizes = [2, 32], strides = [1, 1]} : vector<16x32xf32> to vector<2x32xf32>
    %648 = vector.extract_strided_slice %507 {offsets = [8, 0], sizes = [2, 32], strides = [1, 1]} : vector<16x32xf32> to vector<2x32xf32>
    %cst_213 = arith.constant dense<0.000000e+00> : vector<2x32xf32>
    %649 = tpu.matmul %645, %13, %cst_213 {dimension_numbers = #tpu.dot_dimension_numbers<[1], [0], [0], [1], [0, 0, 1, 1], [], []>} : vector<2x32xf32>, vector<32x32xf32>, vector<2x32xf32> -> vector<2x32xf32>
    %cst_214 = arith.constant dense<0.000000e+00> : vector<2x32xf32>
    %650 = tpu.matmul %645, %15, %cst_214 {dimension_numbers = #tpu.dot_dimension_numbers<[1], [0], [0], [1], [0, 0, 1, 1], [], []>} : vector<2x32xf32>, vector<32x32xf32>, vector<2x32xf32> -> vector<2x32xf32>
    %cst_215 = arith.constant dense<0.000000e+00> : vector<2x32xf32>
    %651 = tpu.matmul %645, %17, %cst_215 {dimension_numbers = #tpu.dot_dimension_numbers<[1], [0], [0], [1], [0, 0, 1, 1], [], []>} : vector<2x32xf32>, vector<32x32xf32>, vector<2x32xf32> -> vector<2x32xf32>
    %652 = arith.addf %646, %649 : vector<2x32xf32>
    %653 = arith.negf %652 : vector<2x32xf32>
    %654 = math.exp %653 : vector<2x32xf32>
    %cst_216 = arith.constant 1.000000e+00 : f32
    %655 = vector.broadcast %cst_216 : f32 to vector<2x32xf32>
    %656 = arith.addf %655, %654 : vector<2x32xf32>
    %657 = arith.divf %655, %656 : vector<2x32xf32>
    %658 = arith.addf %647, %650 : vector<2x32xf32>
    %659 = arith.negf %658 : vector<2x32xf32>
    %660 = math.exp %659 : vector<2x32xf32>
    %cst_217 = arith.constant 1.000000e+00 : f32
    %661 = vector.broadcast %cst_217 : f32 to vector<2x32xf32>
    %662 = arith.addf %661, %660 : vector<2x32xf32>
    %663 = arith.divf %661, %662 : vector<2x32xf32>
    %664 = arith.addf %651, %29 : vector<2x32xf32>
    %665 = arith.mulf %657, %664 : vector<2x32xf32>
    %666 = arith.addf %648, %665 : vector<2x32xf32>
    %667 = math.tanh %666 : vector<2x32xf32>
    %cst_218 = arith.constant 1.000000e+00 : f32
    %668 = vector.broadcast %cst_218 : f32 to vector<2x32xf32>
    %669 = arith.subf %668, %663 : vector<2x32xf32>
    %670 = arith.mulf %669, %667 : vector<2x32xf32>
    %671 = arith.mulf %663, %645 : vector<2x32xf32>
    %672 = arith.addf %670, %671 : vector<2x32xf32>
    %673 = vector.extract_strided_slice %505 {offsets = [10, 0], sizes = [2, 32], strides = [1, 1]} : vector<16x32xf32> to vector<2x32xf32>
    %674 = vector.extract_strided_slice %506 {offsets = [10, 0], sizes = [2, 32], strides = [1, 1]} : vector<16x32xf32> to vector<2x32xf32>
    %675 = vector.extract_strided_slice %507 {offsets = [10, 0], sizes = [2, 32], strides = [1, 1]} : vector<16x32xf32> to vector<2x32xf32>
    %cst_219 = arith.constant dense<0.000000e+00> : vector<2x32xf32>
    %676 = tpu.matmul %672, %13, %cst_219 {dimension_numbers = #tpu.dot_dimension_numbers<[1], [0], [0], [1], [0, 0, 1, 1], [], []>} : vector<2x32xf32>, vector<32x32xf32>, vector<2x32xf32> -> vector<2x32xf32>
    %cst_220 = arith.constant dense<0.000000e+00> : vector<2x32xf32>
    %677 = tpu.matmul %672, %15, %cst_220 {dimension_numbers = #tpu.dot_dimension_numbers<[1], [0], [0], [1], [0, 0, 1, 1], [], []>} : vector<2x32xf32>, vector<32x32xf32>, vector<2x32xf32> -> vector<2x32xf32>
    %cst_221 = arith.constant dense<0.000000e+00> : vector<2x32xf32>
    %678 = tpu.matmul %672, %17, %cst_221 {dimension_numbers = #tpu.dot_dimension_numbers<[1], [0], [0], [1], [0, 0, 1, 1], [], []>} : vector<2x32xf32>, vector<32x32xf32>, vector<2x32xf32> -> vector<2x32xf32>
    %679 = arith.addf %673, %676 : vector<2x32xf32>
    %680 = arith.negf %679 : vector<2x32xf32>
    %681 = math.exp %680 : vector<2x32xf32>
    %cst_222 = arith.constant 1.000000e+00 : f32
    %682 = vector.broadcast %cst_222 : f32 to vector<2x32xf32>
    %683 = arith.addf %682, %681 : vector<2x32xf32>
    %684 = arith.divf %682, %683 : vector<2x32xf32>
    %685 = arith.addf %674, %677 : vector<2x32xf32>
    %686 = arith.negf %685 : vector<2x32xf32>
    %687 = math.exp %686 : vector<2x32xf32>
    %cst_223 = arith.constant 1.000000e+00 : f32
    %688 = vector.broadcast %cst_223 : f32 to vector<2x32xf32>
    %689 = arith.addf %688, %687 : vector<2x32xf32>
    %690 = arith.divf %688, %689 : vector<2x32xf32>
    %691 = arith.addf %678, %29 : vector<2x32xf32>
    %692 = arith.mulf %684, %691 : vector<2x32xf32>
    %693 = arith.addf %675, %692 : vector<2x32xf32>
    %694 = math.tanh %693 : vector<2x32xf32>
    %cst_224 = arith.constant 1.000000e+00 : f32
    %695 = vector.broadcast %cst_224 : f32 to vector<2x32xf32>
    %696 = arith.subf %695, %690 : vector<2x32xf32>
    %697 = arith.mulf %696, %694 : vector<2x32xf32>
    %698 = arith.mulf %690, %672 : vector<2x32xf32>
    %699 = arith.addf %697, %698 : vector<2x32xf32>
    %700 = vector.extract_strided_slice %505 {offsets = [12, 0], sizes = [2, 32], strides = [1, 1]} : vector<16x32xf32> to vector<2x32xf32>
    %701 = vector.extract_strided_slice %506 {offsets = [12, 0], sizes = [2, 32], strides = [1, 1]} : vector<16x32xf32> to vector<2x32xf32>
    %702 = vector.extract_strided_slice %507 {offsets = [12, 0], sizes = [2, 32], strides = [1, 1]} : vector<16x32xf32> to vector<2x32xf32>
    %cst_225 = arith.constant dense<0.000000e+00> : vector<2x32xf32>
    %703 = tpu.matmul %699, %13, %cst_225 {dimension_numbers = #tpu.dot_dimension_numbers<[1], [0], [0], [1], [0, 0, 1, 1], [], []>} : vector<2x32xf32>, vector<32x32xf32>, vector<2x32xf32> -> vector<2x32xf32>
    %cst_226 = arith.constant dense<0.000000e+00> : vector<2x32xf32>
    %704 = tpu.matmul %699, %15, %cst_226 {dimension_numbers = #tpu.dot_dimension_numbers<[1], [0], [0], [1], [0, 0, 1, 1], [], []>} : vector<2x32xf32>, vector<32x32xf32>, vector<2x32xf32> -> vector<2x32xf32>
    %cst_227 = arith.constant dense<0.000000e+00> : vector<2x32xf32>
    %705 = tpu.matmul %699, %17, %cst_227 {dimension_numbers = #tpu.dot_dimension_numbers<[1], [0], [0], [1], [0, 0, 1, 1], [], []>} : vector<2x32xf32>, vector<32x32xf32>, vector<2x32xf32> -> vector<2x32xf32>
    %706 = arith.addf %700, %703 : vector<2x32xf32>
    %707 = arith.negf %706 : vector<2x32xf32>
    %708 = math.exp %707 : vector<2x32xf32>
    %cst_228 = arith.constant 1.000000e+00 : f32
    %709 = vector.broadcast %cst_228 : f32 to vector<2x32xf32>
    %710 = arith.addf %709, %708 : vector<2x32xf32>
    %711 = arith.divf %709, %710 : vector<2x32xf32>
    %712 = arith.addf %701, %704 : vector<2x32xf32>
    %713 = arith.negf %712 : vector<2x32xf32>
    %714 = math.exp %713 : vector<2x32xf32>
    %cst_229 = arith.constant 1.000000e+00 : f32
    %715 = vector.broadcast %cst_229 : f32 to vector<2x32xf32>
    %716 = arith.addf %715, %714 : vector<2x32xf32>
    %717 = arith.divf %715, %716 : vector<2x32xf32>
    %718 = arith.addf %705, %29 : vector<2x32xf32>
    %719 = arith.mulf %711, %718 : vector<2x32xf32>
    %720 = arith.addf %702, %719 : vector<2x32xf32>
    %721 = math.tanh %720 : vector<2x32xf32>
    %cst_230 = arith.constant 1.000000e+00 : f32
    %722 = vector.broadcast %cst_230 : f32 to vector<2x32xf32>
    %723 = arith.subf %722, %717 : vector<2x32xf32>
    %724 = arith.mulf %723, %721 : vector<2x32xf32>
    %725 = arith.mulf %717, %699 : vector<2x32xf32>
    %726 = arith.addf %724, %725 : vector<2x32xf32>
    %727 = vector.extract_strided_slice %505 {offsets = [14, 0], sizes = [2, 32], strides = [1, 1]} : vector<16x32xf32> to vector<2x32xf32>
    %728 = vector.extract_strided_slice %506 {offsets = [14, 0], sizes = [2, 32], strides = [1, 1]} : vector<16x32xf32> to vector<2x32xf32>
    %729 = vector.extract_strided_slice %507 {offsets = [14, 0], sizes = [2, 32], strides = [1, 1]} : vector<16x32xf32> to vector<2x32xf32>
    %cst_231 = arith.constant dense<0.000000e+00> : vector<2x32xf32>
    %730 = tpu.matmul %726, %13, %cst_231 {dimension_numbers = #tpu.dot_dimension_numbers<[1], [0], [0], [1], [0, 0, 1, 1], [], []>} : vector<2x32xf32>, vector<32x32xf32>, vector<2x32xf32> -> vector<2x32xf32>
    %cst_232 = arith.constant dense<0.000000e+00> : vector<2x32xf32>
    %731 = tpu.matmul %726, %15, %cst_232 {dimension_numbers = #tpu.dot_dimension_numbers<[1], [0], [0], [1], [0, 0, 1, 1], [], []>} : vector<2x32xf32>, vector<32x32xf32>, vector<2x32xf32> -> vector<2x32xf32>
    %cst_233 = arith.constant dense<0.000000e+00> : vector<2x32xf32>
    %732 = tpu.matmul %726, %17, %cst_233 {dimension_numbers = #tpu.dot_dimension_numbers<[1], [0], [0], [1], [0, 0, 1, 1], [], []>} : vector<2x32xf32>, vector<32x32xf32>, vector<2x32xf32> -> vector<2x32xf32>
    %733 = arith.addf %727, %730 : vector<2x32xf32>
    %734 = arith.negf %733 : vector<2x32xf32>
    %735 = math.exp %734 : vector<2x32xf32>
    %cst_234 = arith.constant 1.000000e+00 : f32
    %736 = vector.broadcast %cst_234 : f32 to vector<2x32xf32>
    %737 = arith.addf %736, %735 : vector<2x32xf32>
    %738 = arith.divf %736, %737 : vector<2x32xf32>
    %739 = arith.addf %728, %731 : vector<2x32xf32>
    %740 = arith.negf %739 : vector<2x32xf32>
    %741 = math.exp %740 : vector<2x32xf32>
    %cst_235 = arith.constant 1.000000e+00 : f32
    %742 = vector.broadcast %cst_235 : f32 to vector<2x32xf32>
    %743 = arith.addf %742, %741 : vector<2x32xf32>
    %744 = arith.divf %742, %743 : vector<2x32xf32>
    %745 = arith.addf %732, %29 : vector<2x32xf32>
    %746 = arith.mulf %738, %745 : vector<2x32xf32>
    %747 = arith.addf %729, %746 : vector<2x32xf32>
    %748 = math.tanh %747 : vector<2x32xf32>
    %cst_236 = arith.constant 1.000000e+00 : f32
    %749 = vector.broadcast %cst_236 : f32 to vector<2x32xf32>
    %750 = arith.subf %749, %744 : vector<2x32xf32>
    %751 = arith.mulf %750, %748 : vector<2x32xf32>
    %752 = arith.mulf %744, %726 : vector<2x32xf32>
    %753 = arith.addf %751, %752 : vector<2x32xf32>
    %c0_237 = arith.constant 0 : index
    %c0_238 = arith.constant 0 : index
    %c0_239 = arith.constant 0 : index
    %754 = vector.load %arg7[%c0_237, %c0_238, %c0_239] : memref<2x32x64xf32, #tpu.memory_space<vmem>>, vector<1x32x64xf32>
    %755 = vector.shape_cast %754 : vector<1x32x64xf32> to vector<32x64xf32>
    %cst_240 = arith.constant dense<0.000000e+00> : vector<2x64xf32>
    %756 = tpu.matmul %753, %755, %cst_240 {dimension_numbers = #tpu.dot_dimension_numbers<[1], [0], [0], [1], [0, 0, 1, 1], [], []>} : vector<2x32xf32>, vector<32x64xf32>, vector<2x64xf32> -> vector<2x64xf32>
    %c1_241 = arith.constant 1 : index
    %c0_242 = arith.constant 0 : index
    %c0_243 = arith.constant 0 : index
    %757 = vector.load %arg7[%c1_241, %c0_242, %c0_243] : memref<2x32x64xf32, #tpu.memory_space<vmem>>, vector<1x32x64xf32>
    %758 = vector.shape_cast %757 : vector<1x32x64xf32> to vector<32x64xf32>
    %cst_244 = arith.constant dense<0.000000e+00> : vector<2x64xf32>
    %759 = tpu.matmul %537, %758, %cst_244 {dimension_numbers = #tpu.dot_dimension_numbers<[1], [0], [0], [1], [0, 0, 1, 1], [], []>} : vector<2x32xf32>, vector<32x64xf32>, vector<2x64xf32> -> vector<2x64xf32>
    %760 = arith.addf %756, %759 : vector<2x64xf32>
    %c0_245 = arith.constant 0 : index
    %c0_246 = arith.constant 0 : index
    %761 = vector.load %arg8[%c0_245, %c0_246] : memref<1x64xf32, #tpu.memory_space<vmem>>, vector<1x64xf32>
    %762 = vector.broadcast %761 : vector<1x64xf32> to vector<2x64xf32>
    %763 = arith.addf %760, %762 : vector<2x64xf32>
    %cst_247 = arith.constant 0.000000e+00 : f32
    %764 = vector.broadcast %cst_247 : f32 to vector<2x64xf32>
    %765 = arith.maximumf %763, %764 : vector<2x64xf32>
    %c0_248 = arith.constant 0 : index
    %c0_249 = arith.constant 0 : index
    %766 = vector.load %arg9[%c0_248, %c0_249] : memref<64x128xf32, #tpu.memory_space<vmem>>, vector<64x128xf32>
    %cst_250 = arith.constant dense<0.000000e+00> : vector<2x128xf32>
    %767 = tpu.matmul %765, %766, %cst_250 {dimension_numbers = #tpu.dot_dimension_numbers<[1], [0], [0], [1], [0, 0, 1, 1], [], []>} : vector<2x64xf32>, vector<64x128xf32>, vector<2x128xf32> -> vector<2x128xf32>
    %c0_251 = arith.constant 0 : index
    %c0_252 = arith.constant 0 : index
    %768 = vector.load %arg10[%c0_251, %c0_252] : memref<1x128xf32, #tpu.memory_space<vmem>>, vector<1x128xf32>
    %769 = vector.broadcast %768 : vector<1x128xf32> to vector<2x128xf32>
    %770 = arith.addf %767, %769 : vector<2x128xf32>
    %c0_253 = arith.constant 0 : index
    %c0_254 = arith.constant 0 : index
    %771 = vector.load %arg11[%c0_253, %c0_254] : memref<2x128xf32, #tpu.memory_space<vmem>>, vector<2x128xf32>
    tpu.vector_store %arg11[%c0_253, %c0_254], %770 {strides = array<i32>} : memref<2x128xf32, #tpu.memory_space<vmem>>, vector<2x128xf32>,
    return
  }
}

</mosaic_0001>

<llo_original>
// kernel: leonard_bigru_forward.1
$region0: #{leonard_bigru_forward.1}
  #allocation0 [shape = 'u32[]', space=smem, size = 0x4, offset = 0x4, fixed_abs, tag = 'smem constant byte address 0x4 - core index']
  #allocation1 [shape = 'u32[144,128]{1,0:T(1,128)}', space=vmem, size = 0x12000, scoped, tag = 'internal scratch']
  #allocation2 [shape = 'f32[16,32]{1,0:T(8,128)}', space=vmem, size = 0x2000, scoped, tag = 'scratch operand']
  #allocation3 [shape = 'f32[16,32]{1,0:T(8,128)}', space=vmem, size = 0x2000, scoped, tag = 'scratch operand']
  %s0 = inlined_call_operand.vmem [shape: f32[16,32], index: 0, kind: input, shape index: {}]
  %s1 = inlined_call_operand.vmem [shape: f32[32,192], index: 1, kind: input, shape index: {}]
  %s2 = inlined_call_operand.vmem [shape: f32[1,192], index: 2, kind: input, shape index: {}]
  %s3 = inlined_call_operand.vmem [shape: f32[2,32,192], index: 3, kind: input, shape index: {}]
  %s4 = inlined_call_operand.vmem [shape: f32[1,192], index: 4, kind: input, shape index: {}]
  %s5 = inlined_call_operand.vmem [shape: f32[12,32,32], index: 5, kind: input, shape index: {}]
  %s6 = inlined_call_operand.vmem [shape: f32[4,2,32], index: 6, kind: input, shape index: {}]
  %s7 = inlined_call_operand.vmem [shape: f32[2,32,64], index: 7, kind: input, shape index: {}]
  %s8 = inlined_call_operand.vmem [shape: f32[1,64], index: 8, kind: input, shape index: {}]
  %s9 = inlined_call_operand.vmem [shape: f32[64,128], index: 9, kind: input, shape index: {}]
  %s10 = inlined_call_operand.vmem [shape: f32[1,128], index: 10, kind: input, shape index: {}]
  %s11 = inlined_call_operand.hbm [shape: f32[2,128], index: 11, kind: output, shape index: {}]
  %s12 = sld [smem:[#allocation0]]
  $region54: #{leonard_bigru_forward.1} parent=0
    _
  %s14 = ssub.s32 1, %s12
  %s15 = scalar_select 0, %s14, %s12
  $region1: #{leonard_bigru_forward.1} parent=0
    #allocation4 [shape = 'u8[1024]{0}', space=vmem, size = 0x400, scoped, tag = 'output window, operand 0, single buffered']
    #allocation5 [shape = 's32[1]{0}', space=sflag, size = 0x4, scoped, tag = 'scoped memory for leonard_bigru_forward.1']
    %16 = vsyncpa [#allocation5], 0
    // Predicated region
    $region2: #{leonard_bigru_forward.1} parent=1 // pred_check
      _
    $region3: #{leonard_bigru_forward.1} parent=1 // pred_check_branch
      %18 = sbr.rel (0) target = $region5
    $region4: #{leonard_bigru_forward.1} parent=1 // pred_region
      _
    $region5: #{leonard_bigru_forward.1} parent=1 // pred_fallthru
      _
    // Predicated region
    $region6: #{leonard_bigru_forward.1} parent=1 // pred_check
      _
    $region7: #{leonard_bigru_forward.1} parent=1 // pred_check_branch
      %20 = sbr.rel (0) target = $region9
    $region8: #{leonard_bigru_forward.1} parent=1 // pred_region
      _
    $region9: #{leonard_bigru_forward.1} parent=1 // pred_fallthru
      _
    // Predicated region
    $region10: #{leonard_bigru_forward.1} parent=1 // pred_check
      _
    $region11: #{leonard_bigru_forward.1} parent=1 // pred_check_branch
      %22 = sbr.rel (0) target = $region13
    $region12: #{leonard_bigru_forward.1} parent=1 // pred_region
      _
    $region13: #{leonard_bigru_forward.1} parent=1 // pred_fallthru
      _
    // Predicated region
    $region14: #{leonard_bigru_forward.1} parent=1 // pred_check
      _
    $region15: #{leonard_bigru_forward.1} parent=1 // pred_check_branch
      %24 = sbr.rel (0) target = $region17
    $region16: #{leonard_bigru_forward.1} parent=1 // pred_region
      _
    $region17: #{leonard_bigru_forward.1} parent=1 // pred_fallthru
      _
    // Predicated region
    $region18: #{leonard_bigru_forward.1} parent=1 // pred_check
      _
    $region19: #{leonard_bigru_forward.1} parent=1 // pred_check_branch
      %26 = sbr.rel (0) target = $region21
    $region20: #{leonard_bigru_forward.1} parent=1 // pred_region
      _
    $region21: #{leonard_bigru_forward.1} parent=1 // pred_fallthru
      _
    // Predicated region
    $region22: #{leonard_bigru_forward.1} parent=1 // pred_check
      _
    $region23: #{leonard_bigru_forward.1} parent=1 // pred_check_branch
      %28 = sbr.rel (0) target = $region25
    $region24: #{leonard_bigru_forward.1} parent=1 // pred_region
      _
    $region25: #{leonard_bigru_forward.1} parent=1 // pred_fallthru
      _
    // Predicated region
    $region26: #{leonard_bigru_forward.1} parent=1 // pred_check
      _
    $region27: #{leonard_bigru_forward.1} parent=1 // pred_check_branch
      %30 = sbr.rel (0) target = $region29
    $region28: #{leonard_bigru_forward.1} parent=1 // pred_region
      _
    $region29: #{leonard_bigru_forward.1} parent=1 // pred_fallthru
      _
    // Predicated region
    $region30: #{leonard_bigru_forward.1} parent=1 // pred_check
      _
    $region31: #{leonard_bigru_forward.1} parent=1 // pred_check_branch
      %32 = sbr.rel (0) target = $region33
    $region32: #{leonard_bigru_forward.1} parent=1 // pred_region
      _
    $region33: #{leonard_bigru_forward.1} parent=1 // pred_fallthru
      _
    // Predicated region
    $region34: #{leonard_bigru_forward.1} parent=1 // pred_check
      _
    $region35: #{leonard_bigru_forward.1} parent=1 // pred_check_branch
      %34 = sbr.rel (0) target = $region37
    $region36: #{leonard_bigru_forward.1} parent=1 // pred_region
      _
    $region37: #{leonard_bigru_forward.1} parent=1 // pred_fallthru
      _
    // Predicated region
    $region38: #{leonard_bigru_forward.1} parent=1 // pred_check
      _
    $region39: #{leonard_bigru_forward.1} parent=1 // pred_check_branch
      %36 = sbr.rel (0) target = $region41
    $region40: #{leonard_bigru_forward.1} parent=1 // pred_region
      _
    $region41: #{leonard_bigru_forward.1} parent=1 // pred_fallthru
      _
    // Predicated region
    $region42: #{leonard_bigru_forward.1} parent=1 // pred_check
      _
    $region43: #{leonard_bigru_forward.1} parent=1 // pred_check_branch
      %38 = sbr.rel (0) target = $region45
    $region44: #{leonard_bigru_forward.1} parent=1 // pred_region
      _
    $region45: #{leonard_bigru_forward.1} parent=1 // pred_fallthru
      _
    %v39 = vld [vmem:[%s5] sm:$0xff]
    %v40 = vld [vmem:[%s5 + $0x8] sm:$0xff]
    %v41 = vld [vmem:[%s5 + $0x10] sm:$0xff]
    %v42 = vld [vmem:[%s5 + $0x18] sm:$0xff]
    %s43 = scalar_lea.vmem %s5, 32
    %v44 = vld [vmem:[%s43] sm:$0xff]
    %v45 = vld [vmem:[%s43 + $0x8] sm:$0xff]
    %v46 = vld [vmem:[%s43 + $0x10] sm:$0xff]
    %v47 = vld [vmem:[%s43 + $0x18] sm:$0xff]
    %s48 = scalar_lea.vmem %s5, 64
    %v49 = vld [vmem:[%s48] sm:$0xff]
    %v50 = vld [vmem:[%s48 + $0x8] sm:$0xff]
    %v51 = vld [vmem:[%s48 + $0x10] sm:$0xff]
    %v52 = vld [vmem:[%s48 + $0x18] sm:$0xff]
    %s53 = scalar_lea.vmem %s5, 96
    %v54 = vld [vmem:[%s53] sm:$0xff]
    %v55 = vld [vmem:[%s53 + $0x8] sm:$0xff]
    %v56 = vld [vmem:[%s53 + $0x10] sm:$0xff]
    %v57 = vld [vmem:[%s53 + $0x18] sm:$0xff]
    %s58 = scalar_lea.vmem %s5, 128
    %v59 = vld [vmem:[%s58] sm:$0xff]
    %v60 = vld [vmem:[%s58 + $0x8] sm:$0xff]
    %v61 = vld [vmem:[%s58 + $0x10] sm:$0xff]
    %v62 = vld [vmem:[%s58 + $0x18] sm:$0xff]
    %s63 = scalar_lea.vmem %s5, 160
    %v64 = vld [vmem:[%s63] sm:$0xff]
    %v65 = vld [vmem:[%s63 + $0x8] sm:$0xff]
    %v66 = vld [vmem:[%s63 + $0x10] sm:$0xff]
    %v67 = vld [vmem:[%s63 + $0x18] sm:$0xff]
    %s68 = scalar_lea.vmem %s5, 192
    %v69 = vld [vmem:[%s68] sm:$0xff]
    %v70 = vld [vmem:[%s68 + $0x8] sm:$0xff]
    %v71 = vld [vmem:[%s68 + $0x10] sm:$0xff]
    %v72 = vld [vmem:[%s68 + $0x18] sm:$0xff]
    %s73 = scalar_lea.vmem %s5, 224
    %v74 = vld [vmem:[%s73] sm:$0xff]
    %v75 = vld [vmem:[%s73 + $0x8] sm:$0xff]
    %v76 = vld [vmem:[%s73 + $0x10] sm:$0xff]
    %v77 = vld [vmem:[%s73 + $0x18] sm:$0xff]
    %s78 = scalar_lea.vmem %s5, 256
    %v79 = vld [vmem:[%s78] sm:$0xff]
    %v80 = vld [vmem:[%s78 + $0x8] sm:$0xff]
    %v81 = vld [vmem:[%s78 + $0x10] sm:$0xff]
    %v82 = vld [vmem:[%s78 + $0x18] sm:$0xff]
    %s83 = scalar_lea.vmem %s5, 288
    %v84 = vld [vmem:[%s83] sm:$0xff]
    %v85 = vld [vmem:[%s83 + $0x8] sm:$0xff]
    %v86 = vld [vmem:[%s83 + $0x10] sm:$0xff]
    %v87 = vld [vmem:[%s83 + $0x18] sm:$0xff]
    %s88 = scalar_lea.vmem %s5, 320
    %v89 = vld [vmem:[%s88] sm:$0xff]
    %v90 = vld [vmem:[%s88 + $0x8] sm:$0xff]
    %v91 = vld [vmem:[%s88 + $0x10] sm:$0xff]
    %v92 = vld [vmem:[%s88 + $0x18] sm:$0xff]
    %s93 = scalar_lea.vmem %s5, 352
    %v94 = vld [vmem:[%s93] sm:$0xff]
    %v95 = vld [vmem:[%s93 + $0x8] sm:$0xff]
    %v96 = vld [vmem:[%s93 + $0x10] sm:$0xff]
    %v97 = vld [vmem:[%s93 + $0x18] sm:$0xff]
    %v98 = vld [vmem:[%s6] sm:$0x3]
    %s99 = scalar_lea.vmem %s6, 2
    %v100 = vld [vmem:[%s99] sm:$0x3]
    %s101 = scalar_lea.vmem %s6, 4
    %v102 = vld [vmem:[%s101] sm:$0x3]
    %s103 = scalar_lea.vmem %s6, 6
    %v104 = vld [vmem:[%s103] sm:$0x3]
    %v105 = vld [vmem:[%s0] sm:$0xff]
    %v106 = vld [vmem:[%s0 + $0x8] sm:$0xff]
    %v107 = vld [vmem:[%s1] sm:$0xff]
    %v108 = vld [vmem:[%s1 + $0x8] sm:$0xff]
    %v109 = vld [vmem:[%s1 + $0x10] sm:$0xff]
    %v110 = vld [vmem:[%s1 + $0x18] sm:$0xff]
    %v111 = vld [vmem:[%s1 + $0x20] sm:$0xff]
    %v112 = vld [vmem:[%s1 + $0x28] sm:$0xff]
    %v113 = vld [vmem:[%s1 + $0x30] sm:$0xff]
    %v114 = vld [vmem:[%s1 + $0x38] sm:$0xff]
    %v115 = vld [vmem:[%s2] sm:$0x3]
    %v117 = vlaneseq
    %v118 = vshrl.u32 %v117, 7
    %v119 = vsub.s32 0, %v118
    %v120 = vrot.slane %v115, %v119
    %v121 = vlaneseq
    %v122 = vshrl.u32 %v121, 7
    %v123 = vsub.s32 1, %v122
    %v124 = vrot.slane %v115, %v123
    %vm127 = vcmask 261120
    %v129 = vsel %vm127, %v105, 0
    %v132 = vsel %vm127, %v106, 0
    %134 = vmatprep.subr.mxu0 %v108
    %135 = vmatpush1.msra.mxu0 %v107
    %136 = vmatprep.subr.mxu0 %v110
    %137 = vmatpush1.msra.mxu0 %v109
    %138 = vmatprep.subr.mxu0 %v112
    %139 = vmatpush1.msra.mxu0 %v111
    %140 = vmatprep.subr.mxu0 %v114
    %141 = vmatpush1.msra.mxu0 %v113
    %142 = vmatprep.subr.mxu0 0.0
    %143 = vmatpush1.msra.mxu0 0.0
    %144 = vmatprep.subr.mxu0 0.0
    %145 = vmatpush1.msra.mxu0 0.0
    %146 = vmatprep.subr.mxu0 0.0
    %147 = vmatpush1.msra.mxu0 0.0
    %148 = vmatprep.subr.mxu0 0.0
    %149 = vmatpush1.msra.mxu0 0.0
    %150 = vmatprep.subr.mxu0 0.0
    %151 = vmatpush1.msra.mxu0 0.0
    %152 = vmatprep.subr.mxu0 0.0
    %153 = vmatpush1.msra.mxu0 0.0
    %154 = vmatprep.subr.mxu0 0.0
    %155 = vmatpush1.msra.mxu0 0.0
    %156 = vmatprep.subr.mxu0 0.0
    %157 = vmatpush1.msra.mxu0 0.0
    %158 = vmatprep.subr.mxu0 0.0
    %159 = vmatpush1.msra.mxu0 0.0
    %160 = vmatprep.subr.mxu0 0.0
    %161 = vmatpush1.msra.mxu0 0.0
    %162 = vmatprep.subr.mxu0 0.0
    %163 = vmatpush1.msra.mxu0 0.0
    %164 = vmatprep.subr.mxu0 0.0
    %165 = vmatpush1.msra.mxu0 0.0
    %166 = vmatprep.subr.mxu0 0.0
    %167 = vmatpush1.msra.mxu0 0.0
    %168 = vmatprep.subr.mxu0 0.0
    %169 = vmatpush1.msra.mxu0 0.0
    %170 = vmatprep.subr.mxu0 0.0
    %171 = vmatpush1.msra.mxu0 0.0
    %172 = vmatprep.subr.mxu0 0.0
    %173 = vmatpush1.msra.mxu0 0.0
    %174 = vmatprep.subr.mxu0 0.0
    %175 = vmatpush1.msra.mxu0 0.0
    %176 = vmatprep.subr.mxu0 0.0
    %177 = vmatpush1.msra.mxu0 0.0
    %178 = vmatprep.subr.mxu0 0.0
    %179 = vmatpush1.msra.mxu0 0.0
    %180 = vmatprep.subr.mxu0 0.0
    %181 = vmatpush1.msra.mxu0 0.0
    %182 = vmatprep.subr.mxu0 0.0
    %183 = vmatpush1.msra.mxu0 0.0
    %184 = vmatprep.subr.mxu0 0.0
    %185 = vmatpush1.msra.mxu0 0.0
    %186 = vmatprep.subr.mxu0 0.0
    %187 = vmatpush1.msra.mxu0 0.0
    %188 = vmatprep.subr.mxu0 0.0
    %189 = vmatpush1.msra.mxu0 0.0
    %190 = vmatprep.subr.mxu0 0.0
    %191 = vmatpush1.msra.mxu0 0.0
    %192 = vmatprep.subr.mxu0 0.0
    %193 = vmatpush1.msra.mxu0 0.0
    %194 = vmatprep.subr.mxu0 0.0
    %195 = vmatpush1.msra.mxu0 0.0
    %196 = vmatprep.subr.mxu0 0.0
    %197 = vmatpush1.msra.mxu0 0.0
    %198 = vmatprep.mubr.f32.mxu0 0.0
    %199 = vmatmul.mubr.f32.gmra.mrb[0].mxu0 %v129
    %v200 = vpop.f32.mrb[0].mxu0
    %v201 = vadd.f32 %v120, %v200
    %v202 = vpop.f32.mrb[0].mxu0
    %v203 = vadd.f32 %v124, %v202
    %204 = vmatprep.mubr.f32.mxu0 0.0
    %205 = vmatmul.mubr.f32.gmra.mrb[0].mxu0 %v132
    %v206 = vpop.f32.mrb[0].mxu0
    %v207 = vadd.f32 %v120, %v206
    %v208 = vpop.f32.mrb[0].mxu0
    %v209 = vadd.f32 %v124, %v208
    %210 = vdwg.mxu0
    %v212 = vsel %vm127, 0.0, 0
    %214 = vmatprep.subr.mxu0 0.0
    %215 = vmatpush1.msra.mxu0 %v39
    %216 = vmatprep.subr.mxu0 0.0
    %217 = vmatpush1.msra.mxu0 %v40
    %218 = vmatprep.subr.mxu0 0.0
    %219 = vmatpush1.msra.mxu0 %v41
    %220 = vmatprep.subr.mxu0 0.0
    %221 = vmatpush1.msra.mxu0 %v42
    %222 = vmatprep.subr.mxu0 0.0
    %223 = vmatpush1.msra.mxu0 0.0
    %224 = vmatprep.subr.mxu0 0.0
    %225 = vmatpush1.msra.mxu0 0.0
    %226 = vmatprep.subr.mxu0 0.0
    %227 = vmatpush1.msra.mxu0 0.0
    %228 = vmatprep.subr.mxu0 0.0
    %229 = vmatpush1.msra.mxu0 0.0
    %230 = vmatprep.subr.mxu0 0.0
    %231 = vmatpush1.msra.mxu0 0.0
    %232 = vmatprep.subr.mxu0 0.0
    %233 = vmatpush1.msra.mxu0 0.0
    %234 = vmatprep.subr.mxu0 0.0
    %235 = vmatpush1.msra.mxu0 0.0
    %236 = vmatprep.subr.mxu0 0.0
    %237 = vmatpush1.msra.mxu0 0.0
    %238 = vmatprep.subr.mxu0 0.0
    %239 = vmatpush1.msra.mxu0 0.0
    %240 = vmatprep.subr.mxu0 0.0
    %241 = vmatpush1.msra.mxu0 0.0
    %242 = vmatprep.subr.mxu0 0.0
    %243 = vmatpush1.msra.mxu0 0.0
    %244 = vmatprep.subr.mxu0 0.0
    %245 = vmatpush1.msra.mxu0 0.0
    %246 = vmatprep.subr.mxu0 0.0
    %247 = vmatpush1.msra.mxu0 0.0
    %248 = vmatprep.subr.mxu0 0.0
    %249 = vmatpush1.msra.mxu0 0.0
    %250 = vmatprep.subr.mxu0 0.0
    %251 = vmatpush1.msra.mxu0 0.0
    %252 = vmatprep.subr.mxu0 0.0
    %253 = vmatpush1.msra.mxu0 0.0
    %254 = vmatprep.subr.mxu0 0.0
    %255 = vmatpush1.msra.mxu0 0.0
    %256 = vmatprep.subr.mxu0 0.0
    %257 = vmatpush1.msra.mxu0 0.0
    %258 = vmatprep.subr.mxu0 0.0
    %259 = vmatpush1.msra.mxu0 0.0
    %260 = vmatprep.subr.mxu0 0.0
    %261 = vmatpush1.msra.mxu0 0.0
    %262 = vmatprep.subr.mxu0 0.0
    %263 = vmatpush1.msra.mxu0 0.0
    %264 = vmatprep.subr.mxu0 0.0
    %265 = vmatpush1.msra.mxu0 0.0
    %266 = vmatprep.subr.mxu0 0.0
    %267 = vmatpush1.msra.mxu0 0.0
    %268 = vmatprep.subr.mxu0 0.0
    %269 = vmatpush1.msra.mxu0 0.0
    %270 = vmatprep.subr.mxu0 0.0
    %271 = vmatpush1.msra.mxu0 0.0
    %272 = vmatprep.subr.mxu0 0.0
    %273 = vmatpush1.msra.mxu0 0.0
    %274 = vmatprep.subr.mxu0 0.0
    %275 = vmatpush1.msra.mxu0 0.0
    %276 = vmatprep.subr.mxu0 0.0
    %277 = vmatpush1.msra.mxu0 0.0
    %278 = vmatprep.mubr.f32.mxu0 0.0
    %279 = vmatmul.mubr.f32.gmra.mrb[0].mxu0 %v212
    %v280 = vpop.f32.mrb[0].mxu0
    %v281 = vadd.f32 0.0, %v280
    %v282 = vpop.f32.mrb[0].mxu0
    %283 = vdwg.mxu0
    %284 = vmatprep.subr.mxu0 0.0
    %285 = vmatpush1.msra.mxu0 %v44
    %286 = vmatprep.subr.mxu0 0.0
    %287 = vmatpush1.msra.mxu0 %v45
    %288 = vmatprep.subr.mxu0 0.0
    %289 = vmatpush1.msra.mxu0 %v46
    %290 = vmatprep.subr.mxu0 0.0
    %291 = vmatpush1.msra.mxu0 %v47
    %292 = vmatprep.subr.mxu0 0.0
    %293 = vmatpush1.msra.mxu0 0.0
    %294 = vmatprep.subr.mxu0 0.0
    %295 = vmatpush1.msra.mxu0 0.0
    %296 = vmatprep.subr.mxu0 0.0
    %297 = vmatpush1.msra.mxu0 0.0
    %298 = vmatprep.subr.mxu0 0.0
    %299 = vmatpush1.msra.mxu0 0.0
    %300 = vmatprep.subr.mxu0 0.0
    %301 = vmatpush1.msra.mxu0 0.0
    %302 = vmatprep.subr.mxu0 0.0
    %303 = vmatpush1.msra.mxu0 0.0
    %304 = vmatprep.subr.mxu0 0.0
    %305 = vmatpush1.msra.mxu0 0.0
    %306 = vmatprep.subr.mxu0 0.0
    %307 = vmatpush1.msra.mxu0 0.0
    %308 = vmatprep.subr.mxu0 0.0
    %309 = vmatpush1.msra.mxu0 0.0
    %310 = vmatprep.subr.mxu0 0.0
    %311 = vmatpush1.msra.mxu0 0.0
    %312 = vmatprep.subr.mxu0 0.0
    %313 = vmatpush1.msra.mxu0 0.0
    %314 = vmatprep.subr.mxu0 0.0
    %315 = vmatpush1.msra.mxu0 0.0
    %316 = vmatprep.subr.mxu0 0.0
    %317 = vmatpush1.msra.mxu0 0.0
    %318 = vmatprep.subr.mxu0 0.0
    %319 = vmatpush1.msra.mxu0 0.0
    %320 = vmatprep.subr.mxu0 0.0
    %321 = vmatpush1.msra.mxu0 0.0
    %322 = vmatprep.subr.mxu0 0.0
    %323 = vmatpush1.msra.mxu0 0.0
    %324 = vmatprep.subr.mxu0 0.0
    %325 = vmatpush1.msra.mxu0 0.0
    %326 = vmatprep.subr.mxu0 0.0
    %327 = vmatpush1.msra.mxu0 0.0
    %328 = vmatprep.subr.mxu0 0.0
    %329 = vmatpush1.msra.mxu0 0.0
    %330 = vmatprep.subr.mxu0 0.0
    %331 = vmatpush1.msra.mxu0 0.0
    %332 = vmatprep.subr.mxu0 0.0
    %333 = vmatpush1.msra.mxu0 0.0
    %334 = vmatprep.subr.mxu0 0.0
    %335 = vmatpush1.msra.mxu0 0.0
    %336 = vmatprep.subr.mxu0 0.0
    %337 = vmatpush1.msra.mxu0 0.0
    %338 = vmatprep.subr.mxu0 0.0
    %339 = vmatpush1.msra.mxu0 0.0
    %340 = vmatprep.subr.mxu0 0.0
    %341 = vmatpush1.msra.mxu0 0.0
    %342 = vmatprep.subr.mxu0 0.0
    %343 = vmatpush1.msra.mxu0 0.0
    %344 = vmatprep.subr.mxu0 0.0
    %345 = vmatpush1.msra.mxu0 0.0
    %346 = vmatprep.subr.mxu0 0.0
    %347 = vmatpush1.msra.mxu0 0.0
    %348 = vmatprep.mubr.f32.mxu0 0.0
    %349 = vmatmul.mubr.f32.gmra.mrb[0].mxu0 %v212
    %v350 = vpop.f32.mrb[0].mxu0
    %v351 = vadd.f32 0.0, %v350
    %v352 = vpop.f32.mrb[0].mxu0
    %353 = vdwg.mxu0
    %v354 = vadd.f32 %v201, %v281
    %v355 = vxor.u32 %v354, 2147483648
    %v356 = vmul.f32 %v355, 1.442695
    %v357 = vpow.pop %v356
    %v358 = vadd.f32 %v357, 1.0
    %v359 = vrcp.pop %v358
    %v360 = vmul.f32 1.0, %v359
    %362 = vrot.lane.b32.xlu0 %v351, 32
    %v363 = vpop.permute.xlu0 %362
    %v365 = vadd.f32 %v201, %v363
    %v366 = vxor.u32 %v365, 2147483648
    %v367 = vmul.f32 %v366, 1.442695
    %v368 = vpow.pop %v367
    %v369 = vadd.f32 %v368, 1.0
    %v370 = vrcp.pop %v369
    %v371 = vmul.f32 1.0, %v370
    %372 = vmatprep.subr.mxu0 0.0
    %373 = vmatpush1.msra.mxu0 %v49
    %374 = vmatprep.subr.mxu0 0.0
    %375 = vmatpush1.msra.mxu0 %v50
    %376 = vmatprep.subr.mxu0 0.0
    %377 = vmatpush1.msra.mxu0 %v51
    %378 = vmatprep.subr.mxu0 0.0
    %379 = vmatpush1.msra.mxu0 %v52
    %380 = vmatprep.subr.mxu0 0.0
    %381 = vmatpush1.msra.mxu0 0.0
    %382 = vmatprep.subr.mxu0 0.0
    %383 = vmatpush1.msra.mxu0 0.0
    %384 = vmatprep.subr.mxu0 0.0
    %385 = vmatpush1.msra.mxu0 0.0
    %386 = vmatprep.subr.mxu0 0.0
    %387 = vmatpush1.msra.mxu0 0.0
    %388 = vmatprep.subr.mxu0 0.0
    %389 = vmatpush1.msra.mxu0 0.0
    %390 = vmatprep.subr.mxu0 0.0
    %391 = vmatpush1.msra.mxu0 0.0
    %392 = vmatprep.subr.mxu0 0.0
    %393 = vmatpush1.msra.mxu0 0.0
    %394 = vmatprep.subr.mxu0 0.0
    %395 = vmatpush1.msra.mxu0 0.0
    %396 = vmatprep.subr.mxu0 0.0
    %397 = vmatpush1.msra.mxu0 0.0
    %398 = vmatprep.subr.mxu0 0.0
    %399 = vmatpush1.msra.mxu0 0.0
    %400 = vmatprep.subr.mxu0 0.0
    %401 = vmatpush1.msra.mxu0 0.0
    %402 = vmatprep.subr.mxu0 0.0
    %403 = vmatpush1.msra.mxu0 0.0
    %404 = vmatprep.subr.mxu0 0.0
    %405 = vmatpush1.msra.mxu0 0.0
    %406 = vmatprep.subr.mxu0 0.0
    %407 = vmatpush1.msra.mxu0 0.0
    %408 = vmatprep.subr.mxu0 0.0
    %409 = vmatpush1.msra.mxu0 0.0
    %410 = vmatprep.subr.mxu0 0.0
    %411 = vmatpush1.msra.mxu0 0.0
    %412 = vmatprep.subr.mxu0 0.0
    %413 = vmatpush1.msra.mxu0 0.0
    %414 = vmatprep.subr.mxu0 0.0
    %415 = vmatpush1.msra.mxu0 0.0
    %416 = vmatprep.subr.mxu0 0.0
    %417 = vmatpush1.msra.mxu0 0.0
    %418 = vmatprep.subr.mxu0 0.0
    %419 = vmatpush1.msra.mxu0 0.0
    %420 = vmatprep.subr.mxu0 0.0
    %421 = vmatpush1.msra.mxu0 0.0
    %422 = vmatprep.subr.mxu0 0.0
    %423 = vmatpush1.msra.mxu0 0.0
    %424 = vmatprep.subr.mxu0 0.0
    %425 = vmatpush1.msra.mxu0 0.0
    %426 = vmatprep.subr.mxu0 0.0
    %427 = vmatpush1.msra.mxu0 0.0
    %428 = vmatprep.subr.mxu0 0.0
    %429 = vmatpush1.msra.mxu0 0.0
    %430 = vmatprep.subr.mxu0 0.0
    %431 = vmatpush1.msra.mxu0 0.0
    %432 = vmatprep.subr.mxu0 0.0
    %433 = vmatpush1.msra.mxu0 0.0
    %434 = vmatprep.subr.mxu0 0.0
    %435 = vmatpush1.msra.mxu0 0.0
    %436 = vmatprep.mubr.f32.mxu0 0.0
    %437 = vmatmul.mubr.f32.gmra.mrb[0].mxu0 %v212
    %v438 = vpop.f32.mrb[0].mxu0
    %v439 = vadd.f32 %v98, %v438
    %v440 = vpop.f32.mrb[0].mxu0
    %441 = vdwg.mxu0
    %v442 = vmul.f32 %v360, %v439
    %444 = vrot.lane.b32.xlu0 %v442, 64
    %v445 = vpop.permute.xlu0 %444
    %v447 = vadd.f32 %v201, %v445
    %v448 = vtanh.pop %v447
    %v449 = vsub.f32 1.0, %v371
    %451 = vrot.lane.b32.xlu0 %v448, 96
    %v452 = vpop.permute.xlu0 %451
    %v454 = vmul.f32 %v449, %v452
    %v455 = vmul.f32 %v371, 0.0
    %v456 = vadd.f32 %v454, %v455
    %457 = vmatprep.subr.mxu0 0.0
    %458 = vmatpush1.msra.mxu0 %v54
    %459 = vmatprep.subr.mxu0 0.0
    %460 = vmatpush1.msra.mxu0 %v55
    %461 = vmatprep.subr.mxu0 0.0
    %462 = vmatpush1.msra.mxu0 %v56
    %463 = vmatprep.subr.mxu0 0.0
    %464 = vmatpush1.msra.mxu0 %v57
    %465 = vmatprep.subr.mxu0 0.0
    %466 = vmatpush1.msra.mxu0 0.0
    %467 = vmatprep.subr.mxu0 0.0
    %468 = vmatpush1.msra.mxu0 0.0
    %469 = vmatprep.subr.mxu0 0.0
    %470 = vmatpush1.msra.mxu0 0.0
    %471 = vmatprep.subr.mxu0 0.0
    %472 = vmatpush1.msra.mxu0 0.0
    %473 = vmatprep.subr.mxu0 0.0
    %474 = vmatpush1.msra.mxu0 0.0
    %475 = vmatprep.subr.mxu0 0.0
    %476 = vmatpush1.msra.mxu0 0.0
    %477 = vmatprep.subr.mxu0 0.0
    %478 = vmatpush1.msra.mxu0 0.0
    %479 = vmatprep.subr.mxu0 0.0
    %480 = vmatpush1.msra.mxu0 0.0
    %481 = vmatprep.subr.mxu0 0.0
    %482 = vmatpush1.msra.mxu0 0.0
    %483 = vmatprep.subr.mxu0 0.0
    %484 = vmatpush1.msra.mxu0 0.0
    %485 = vmatprep.subr.mxu0 0.0
    %486 = vmatpush1.msra.mxu0 0.0
    %487 = vmatprep.subr.mxu0 0.0
    %488 = vmatpush1.msra.mxu0 0.0
    %489 = vmatprep.subr.mxu0 0.0
    %490 = vmatpush1.msra.mxu0 0.0
    %491 = vmatprep.subr.mxu0 0.0
    %492 = vmatpush1.msra.mxu0 0.0
    %493 = vmatprep.subr.mxu0 0.0
    %494 = vmatpush1.msra.mxu0 0.0
    %495 = vmatprep.subr.mxu0 0.0
    %496 = vmatpush1.msra.mxu0 0.0
    %497 = vmatprep.subr.mxu0 0.0
    %498 = vmatpush1.msra.mxu0 0.0
    %499 = vmatprep.subr.mxu0 0.0
    %500 = vmatpush1.msra.mxu0 0.0
    %501 = vmatprep.subr.mxu0 0.0
    %502 = vmatpush1.msra.mxu0 0.0
    %503 = vmatprep.subr.mxu0 0.0
    %504 = vmatpush1.msra.mxu0 0.0
    %505 = vmatprep.subr.mxu0 0.0
    %506 = vmatpush1.msra.mxu0 0.0
    %507 = vmatprep.subr.mxu0 0.0
    %508 = vmatpush1.msra.mxu0 0.0
    %509 = vmatprep.subr.mxu0 0.0
    %510 = vmatpush1.msra.mxu0 0.0
    %511 = vmatprep.subr.mxu0 0.0
    %512 = vmatpush1.msra.mxu0 0.0
    %513 = vmatprep.subr.mxu0 0.0
    %514 = vmatpush1.msra.mxu0 0.0
    %515 = vmatprep.subr.mxu0 0.0
    %516 = vmatpush1.msra.mxu0 0.0
    %517 = vmatprep.subr.mxu0 0.0
    %518 = vmatpush1.msra.mxu0 0.0
    %519 = vmatprep.subr.mxu0 0.0
    %520 = vmatpush1.msra.mxu0 0.0
    %521 = vmatprep.mubr.f32.mxu0 0.0
    %522 = vmatmul.mubr.f32.gmra.mrb[0].mxu0 %v212
    %v523 = vpop.f32.mrb[0].mxu0
    %v524 = vadd.f32 0.0, %v523
    %v525 = vpop.f32.mrb[0].mxu0
    %526 = vdwg.mxu0
    %527 = vmatprep.subr.mxu0 0.0
    %528 = vmatpush1.msra.mxu0 %v59
    %529 = vmatprep.subr.mxu0 0.0
    %530 = vmatpush1.msra.mxu0 %v60
    %531 = vmatprep.subr.mxu0 0.0
    %532 = vmatpush1.msra.mxu0 %v61
    %533 = vmatprep.subr.mxu0 0.0
    %534 = vmatpush1.msra.mxu0 %v62
    %535 = vmatprep.subr.mxu0 0.0
    %536 = vmatpush1.msra.mxu0 0.0
    %537 = vmatprep.subr.mxu0 0.0
    %538 = vmatpush1.msra.mxu0 0.0
    %539 = vmatprep.subr.mxu0 0.0
    %540 = vmatpush1.msra.mxu0 0.0
    %541 = vmatprep.subr.mxu0 0.0
    %542 = vmatpush1.msra.mxu0 0.0
    %543 = vmatprep.subr.mxu0 0.0
    %544 = vmatpush1.msra.mxu0 0.0
    %545 = vmatprep.subr.mxu0 0.0
    %546 = vmatpush1.msra.mxu0 0.0
    %547 = vmatprep.subr.mxu0 0.0
    %548 = vmatpush1.msra.mxu0 0.0
    %549 = vmatprep.subr.mxu0 0.0
    %550 = vmatpush1.msra.mxu0 0.0
    %551 = vmatprep.subr.mxu0 0.0
    %552 = vmatpush1.msra.mxu0 0.0
    %553 = vmatprep.subr.mxu0 0.0
    %554 = vmatpush1.msra.mxu0 0.0
    %555 = vmatprep.subr.mxu0 0.0
    %556 = vmatpush1.msra.mxu0 0.0
    %557 = vmatprep.subr.mxu0 0.0
    %558 = vmatpush1.msra.mxu0 0.0
    %559 = vmatprep.subr.mxu0 0.0
    %560 = vmatpush1.msra.mxu0 0.0
    %561 = vmatprep.subr.mxu0 0.0
    %562 = vmatpush1.msra.mxu0 0.0
    %563 = vmatprep.subr.mxu0 0.0
    %564 = vmatpush1.msra.mxu0 0.0
    %565 = vmatprep.subr.mxu0 0.0
    %566 = vmatpush1.msra.mxu0 0.0
    %567 = vmatprep.subr.mxu0 0.0
    %568 = vmatpush1.msra.mxu0 0.0
    %569 = vmatprep.subr.mxu0 0.0
    %570 = vmatpush1.msra.mxu0 0.0
    %571 = vmatprep.subr.mxu0 0.0
    %572 = vmatpush1.msra.mxu0 0.0
    %573 = vmatprep.subr.mxu0 0.0
    %574 = vmatpush1.msra.mxu0 0.0
    %575 = vmatprep.subr.mxu0 0.0
    %576 = vmatpush1.msra.mxu0 0.0
    %577 = vmatprep.subr.mxu0 0.0
    %578 = vmatpush1.msra.mxu0 0.0
    %579 = vmatprep.subr.mxu0 0.0
    %580 = vmatpush1.msra.mxu0 0.0
    %581 = vmatprep.subr.mxu0 0.0
    %582 = vmatpush1.msra.mxu0 0.0
    %583 = vmatprep.subr.mxu0 0.0
    %584 = vmatpush1.msra.mxu0 0.0
    %585 = vmatprep.subr.mxu0 0.0
    %586 = vmatpush1.msra.mxu0 0.0
    %587 = vmatprep.subr.mxu0 0.0
    %588 = vmatpush1.msra.mxu0 0.0
    %589 = vmatprep.subr.mxu0 0.0
    %590 = vmatpush1.msra.mxu0 0.0
    %591 = vmatprep.mubr.f32.mxu0 0.0
    %592 = vmatmul.mubr.f32.gmra.mrb[0].mxu0 %v212
    %v593 = vpop.f32.mrb[0].mxu0
    %v594 = vadd.f32 0.0, %v593
    %v595 = vpop.f32.mrb[0].mxu0
    %596 = vdwg.mxu0
    %v598 = vrot.slane %v524, 2
    %599 = vrot.lane.b32.xlu0 %v598, 96
    %v600 = vpop.permute.xlu0 %599
    %v602 = vadd.f32 %v207, %v600
    %v603 = vxor.u32 %v602, 2147483648
    %v604 = vmul.f32 %v603, 1.442695
    %v605 = vpow.pop %v604
    %v606 = vadd.f32 %v605, 1.0
    %v607 = vrcp.pop %v606
    %v608 = vmul.f32 1.0, %v607
    %v610 = vrot.slane %v594, 2
    %v612 = vadd.f32 %v209, %v610
    %v613 = vxor.u32 %v612, 2147483648
    %v614 = vmul.f32 %v613, 1.442695
    %v615 = vpow.pop %v614
    %v616 = vadd.f32 %v615, 1.0
    %v617 = vrcp.pop %v616
    %v618 = vmul.f32 1.0, %v617
    %619 = vmatprep.subr.mxu0 0.0
    %620 = vmatpush1.msra.mxu0 %v64
    %621 = vmatprep.subr.mxu0 0.0
    %622 = vmatpush1.msra.mxu0 %v65
    %623 = vmatprep.subr.mxu0 0.0
    %624 = vmatpush1.msra.mxu0 %v66
    %625 = vmatprep.subr.mxu0 0.0
    %626 = vmatpush1.msra.mxu0 %v67
    %627 = vmatprep.subr.mxu0 0.0
    %628 = vmatpush1.msra.mxu0 0.0
    %629 = vmatprep.subr.mxu0 0.0
    %630 = vmatpush1.msra.mxu0 0.0
    %631 = vmatprep.subr.mxu0 0.0
    %632 = vmatpush1.msra.mxu0 0.0
    %633 = vmatprep.subr.mxu0 0.0
    %634 = vmatpush1.msra.mxu0 0.0
    %635 = vmatprep.subr.mxu0 0.0
    %636 = vmatpush1.msra.mxu0 0.0
    %637 = vmatprep.subr.mxu0 0.0
    %638 = vmatpush1.msra.mxu0 0.0
    %639 = vmatprep.subr.mxu0 0.0
    %640 = vmatpush1.msra.mxu0 0.0
    %641 = vmatprep.subr.mxu0 0.0
    %642 = vmatpush1.msra.mxu0 0.0
    %643 = vmatprep.subr.mxu0 0.0
    %644 = vmatpush1.msra.mxu0 0.0
    %645 = vmatprep.subr.mxu0 0.0
    %646 = vmatpush1.msra.mxu0 0.0
    %647 = vmatprep.subr.mxu0 0.0
    %648 = vmatpush1.msra.mxu0 0.0
    %649 = vmatprep.subr.mxu0 0.0
    %650 = vmatpush1.msra.mxu0 0.0
    %651 = vmatprep.subr.mxu0 0.0
    %652 = vmatpush1.msra.mxu0 0.0
    %653 = vmatprep.subr.mxu0 0.0
    %654 = vmatpush1.msra.mxu0 0.0
    %655 = vmatprep.subr.mxu0 0.0
    %656 = vmatpush1.msra.mxu0 0.0
    %657 = vmatprep.subr.mxu0 0.0
    %658 = vmatpush1.msra.mxu0 0.0
    %659 = vmatprep.subr.mxu0 0.0
    %660 = vmatpush1.msra.mxu0 0.0
    %661 = vmatprep.subr.mxu0 0.0
    %662 = vmatpush1.msra.mxu0 0.0
    %663 = vmatprep.subr.mxu0 0.0
    %664 = vmatpush1.msra.mxu0 0.0
    %665 = vmatprep.subr.mxu0 0.0
    %666 = vmatpush1.msra.mxu0 0.0
    %667 = vmatprep.subr.mxu0 0.0
    %668 = vmatpush1.msra.mxu0 0.0
    %669 = vmatprep.subr.mxu0 0.0
    %670 = vmatpush1.msra.mxu0 0.0
    %671 = vmatprep.subr.mxu0 0.0
    %672 = vmatpush1.msra.mxu0 0.0
    %673 = vmatprep.subr.mxu0 0.0
    %674 = vmatpush1.msra.mxu0 0.0
    %675 = vmatprep.subr.mxu0 0.0
    %676 = vmatpush1.msra.mxu0 0.0
    %677 = vmatprep.subr.mxu0 0.0
    %678 = vmatpush1.msra.mxu0 0.0
    %679 = vmatprep.subr.mxu0 0.0
    %680 = vmatpush1.msra.mxu0 0.0
    %681 = vmatprep.subr.mxu0 0.0
    %682 = vmatpush1.msra.mxu0 0.0
    %683 = vmatprep.mubr.f32.mxu0 0.0
    %684 = vmatmul.mubr.f32.gmra.mrb[0].mxu0 %v212
    %v685 = vpop.f32.mrb[0].mxu0
    %v686 = vadd.f32 %v100, %v685
    %v687 = vpop.f32.mrb[0].mxu0
    %688 = vdwg.mxu0
    %v690 = vrot.slane %v686, 2
    %691 = vrot.lane.b32.xlu0 %v690, 96
    %v692 = vpop.permute.xlu0 %691
    %v694 = vmul.f32 %v608, %v692
    %696 = vrot.lane.b32.xlu0 %v694, 64
    %v697 = vpop.permute.xlu0 %696
    %v699 = vadd.f32 %v209, %v697
    %v700 = vtanh.pop %v699
    %v701 = vsub.f32 1.0, %v618
    %703 = vrot.lane.b32.xlu0 %v700, 96
    %v704 = vpop.permute.xlu0 %703
    %v706 = vmul.f32 %v701, %v704
    %v707 = vmul.f32 %v618, 0.0
    %v708 = vadd.f32 %v706, %v707
    %710 = vrot.lane.b32.xlu0 %v456, 96
    %v711 = vpop.permute.xlu0 %710
    %vm713 = vcmask 254976
    %714 = vst.msk [vmem:[#allocation2] sm:$0x3] %vm713, %v711
    %vm715 = vcmask 261126
    %716 = vst.msk [vmem:[#allocation3 + $0x8] sm:$0xc0] %vm715, %v708
    %v717 = vsel %vm127, %v711, 0
    %719 = vmatprep.subr.mxu0 0.0
    %720 = vmatpush1.msra.mxu0 %v39
    %721 = vmatprep.subr.mxu0 0.0
    %722 = vmatpush1.msra.mxu0 %v40
    %723 = vmatprep.subr.mxu0 0.0
    %724 = vmatpush1.msra.mxu0 %v41
    %725 = vmatprep.subr.mxu0 0.0
    %726 = vmatpush1.msra.mxu0 %v42
    %727 = vmatprep.subr.mxu0 0.0
    %728 = vmatpush1.msra.mxu0 0.0
    %729 = vmatprep.subr.mxu0 0.0
    %730 = vmatpush1.msra.mxu0 0.0
    %731 = vmatprep.subr.mxu0 0.0
    %732 = vmatpush1.msra.mxu0 0.0
    %733 = vmatprep.subr.mxu0 0.0
    %734 = vmatpush1.msra.mxu0 0.0
    %735 = vmatprep.subr.mxu0 0.0
    %736 = vmatpush1.msra.mxu0 0.0
    %737 = vmatprep.subr.mxu0 0.0
    %738 = vmatpush1.msra.mxu0 0.0
    %739 = vmatprep.subr.mxu0 0.0
    %740 = vmatpush1.msra.mxu0 0.0
    %741 = vmatprep.subr.mxu0 0.0
    %742 = vmatpush1.msra.mxu0 0.0
    %743 = vmatprep.subr.mxu0 0.0
    %744 = vmatpush1.msra.mxu0 0.0
    %745 = vmatprep.subr.mxu0 0.0
    %746 = vmatpush1.msra.mxu0 0.0
    %747 = vmatprep.subr.mxu0 0.0
    %748 = vmatpush1.msra.mxu0 0.0
    %749 = vmatprep.subr.mxu0 0.0
    %750 = vmatpush1.msra.mxu0 0.0
    %751 = vmatprep.subr.mxu0 0.0
    %752 = vmatpush1.msra.mxu0 0.0
    %753 = vmatprep.subr.mxu0 0.0
    %754 = vmatpush1.msra.mxu0 0.0
    %755 = vmatprep.subr.mxu0 0.0
    %756 = vmatpush1.msra.mxu0 0.0
    %757 = vmatprep.subr.mxu0 0.0
    %758 = vmatpush1.msra.mxu0 0.0
    %759 = vmatprep.subr.mxu0 0.0
    %760 = vmatpush1.msra.mxu0 0.0
    %761 = vmatprep.subr.mxu0 0.0
    %762 = vmatpush1.msra.mxu0 0.0
    %763 = vmatprep.subr.mxu0 0.0
    %764 = vmatpush1.msra.mxu0 0.0
    %765 = vmatprep.subr.mxu0 0.0
    %766 = vmatpush1.msra.mxu0 0.0
    %767 = vmatprep.subr.mxu0 0.0
    %768 = vmatpush1.msra.mxu0 0.0
    %769 = vmatprep.subr.mxu0 0.0
    %770 = vmatpush1.msra.mxu0 0.0
    %771 = vmatprep.subr.mxu0 0.0
    %772 = vmatpush1.msra.mxu0 0.0
    %773 = vmatprep.subr.mxu0 0.0
    %774 = vmatpush1.msra.mxu0 0.0
    %775 = vmatprep.subr.mxu0 0.0
    %776 = vmatpush1.msra.mxu0 0.0
    %777 = vmatprep.subr.mxu0 0.0
    %778 = vmatpush1.msra.mxu0 0.0
    %779 = vmatprep.subr.mxu0 0.0
    %780 = vmatpush1.msra.mxu0 0.0
    %781 = vmatprep.subr.mxu0 0.0
    %782 = vmatpush1.msra.mxu0 0.0
    %783 = vmatprep.mubr.f32.mxu0 0.0
    %784 = vmatmul.mubr.f32.gmra.mrb[0].mxu0 %v717
    %v785 = vpop.f32.mrb[0].mxu0
    %v786 = vadd.f32 0.0, %v785
    %v787 = vpop.f32.mrb[0].mxu0
    %788 = vdwg.mxu0
    %789 = vmatprep.subr.mxu0 0.0
    %790 = vmatpush1.msra.mxu0 %v44
    %791 = vmatprep.subr.mxu0 0.0
    %792 = vmatpush1.msra.mxu0 %v45
    %793 = vmatprep.subr.mxu0 0.0
    %794 = vmatpush1.msra.mxu0 %v46
    %795 = vmatprep.subr.mxu0 0.0
    %796 = vmatpush1.msra.mxu0 %v47
    %797 = vmatprep.subr.mxu0 0.0
    %798 = vmatpush1.msra.mxu0 0.0
    %799 = vmatprep.subr.mxu0 0.0
    %800 = vmatpush1.msra.mxu0 0.0
    %801 = vmatprep.subr.mxu0 0.0
    %802 = vmatpush1.msra.mxu0 0.0
    %803 = vmatprep.subr.mxu0 0.0
    %804 = vmatpush1.msra.mxu0 0.0
    %805 = vmatprep.subr.mxu0 0.0
    %806 = vmatpush1.msra.mxu0 0.0
    %807 = vmatprep.subr.mxu0 0.0
    %808 = vmatpush1.msra.mxu0 0.0
    %809 = vmatprep.subr.mxu0 0.0
    %810 = vmatpush1.msra.mxu0 0.0
    %811 = vmatprep.subr.mxu0 0.0
    %812 = vmatpush1.msra.mxu0 0.0
    %813 = vmatprep.subr.mxu0 0.0
    %814 = vmatpush1.msra.mxu0 0.0
    %815 = vmatprep.subr.mxu0 0.0
    %816 = vmatpush1.msra.mxu0 0.0
    %817 = vmatprep.subr.mxu0 0.0
    %818 = vmatpush1.msra.mxu0 0.0
    %819 = vmatprep.subr.mxu0 0.0
    %820 = vmatpush1.msra.mxu0 0.0
    %821 = vmatprep.subr.mxu0 0.0
    %822 = vmatpush1.msra.mxu0 0.0
    %823 = vmatprep.subr.mxu0 0.0
    %824 = vmatpush1.msra.mxu0 0.0
    %825 = vmatprep.subr.mxu0 0.0
    %826 = vmatpush1.msra.mxu0 0.0
    %827 = vmatprep.subr.mxu0 0.0
    %828 = vmatpush1.msra.mxu0 0.0
    %829 = vmatprep.subr.mxu0 0.0
    %830 = vmatpush1.msra.mxu0 0.0
    %831 = vmatprep.subr.mxu0 0.0
    %832 = vmatpush1.msra.mxu0 0.0
    %833 = vmatprep.subr.mxu0 0.0
    %834 = vmatpush1.msra.mxu0 0.0
    %835 = vmatprep.subr.mxu0 0.0
    %836 = vmatpush1.msra.mxu0 0.0
    %837 = vmatprep.subr.mxu0 0.0
    %838 = vmatpush1.msra.mxu0 0.0
    %839 = vmatprep.subr.mxu0 0.0
    %840 = vmatpush1.msra.mxu0 0.0
    %841 = vmatprep.subr.mxu0 0.0
    %842 = vmatpush1.msra.mxu0 0.0
    %843 = vmatprep.subr.mxu0 0.0
    %844 = vmatpush1.msra.mxu0 0.0
    %845 = vmatprep.subr.mxu0 0.0
    %846 = vmatpush1.msra.mxu0 0.0
    %847 = vmatprep.subr.mxu0 0.0
    %848 = vmatpush1.msra.mxu0 0.0
    %849 = vmatprep.subr.mxu0 0.0
    %850 = vmatpush1.msra.mxu0 0.0
    %851 = vmatprep.subr.mxu0 0.0
    %852 = vmatpush1.msra.mxu0 0.0
    %853 = vmatprep.mubr.f32.mxu0 0.0
    %854 = vmatmul.mubr.f32.gmra.mrb[0].mxu0 %v717
    %v855 = vpop.f32.mrb[0].mxu0
    %v856 = vadd.f32 0.0, %v855
    %v857 = vpop.f32.mrb[0].mxu0
    %858 = vdwg.mxu0
    %v860 = vrot.slane %v786, 6
    %v862 = vadd.f32 %v201, %v860
    %v863 = vxor.u32 %v862, 2147483648
    %v864 = vmul.f32 %v863, 1.442695
    %v865 = vpow.pop %v864
    %v866 = vadd.f32 %v865, 1.0
    %v867 = vrcp.pop %v866
    %v868 = vmul.f32 1.0, %v867
    %v870 = vrot.slane %v856, 6
    %871 = vrot.lane.b32.xlu0 %v870, 32
    %v872 = vpop.permute.xlu0 %871
    %v874 = vadd.f32 %v201, %v872
    %v875 = vxor.u32 %v874, 2147483648
    %v876 = vmul.f32 %v875, 1.442695
    %v877 = vpow.pop %v876
    %v878 = vadd.f32 %v877, 1.0
    %v879 = vrcp.pop %v878
    %v880 = vmul.f32 1.0, %v879
    %881 = vmatprep.subr.mxu0 0.0
    %882 = vmatpush1.msra.mxu0 %v49
    %883 = vmatprep.subr.mxu0 0.0
    %884 = vmatpush1.msra.mxu0 %v50
    %885 = vmatprep.subr.mxu0 0.0
    %886 = vmatpush1.msra.mxu0 %v51
    %887 = vmatprep.subr.mxu0 0.0
    %888 = vmatpush1.msra.mxu0 %v52
    %889 = vmatprep.subr.mxu0 0.0
    %890 = vmatpush1.msra.mxu0 0.0
    %891 = vmatprep.subr.mxu0 0.0
    %892 = vmatpush1.msra.mxu0 0.0
    %893 = vmatprep.subr.mxu0 0.0
    %894 = vmatpush1.msra.mxu0 0.0
    %895 = vmatprep.subr.mxu0 0.0
    %896 = vmatpush1.msra.mxu0 0.0
    %897 = vmatprep.subr.mxu0 0.0
    %898 = vmatpush1.msra.mxu0 0.0
    %899 = vmatprep.subr.mxu0 0.0
    %900 = vmatpush1.msra.mxu0 0.0
    %901 = vmatprep.subr.mxu0 0.0
    %902 = vmatpush1.msra.mxu0 0.0
    %903 = vmatprep.subr.mxu0 0.0
    %904 = vmatpush1.msra.mxu0 0.0
    %905 = vmatprep.subr.mxu0 0.0
    %906 = vmatpush1.msra.mxu0 0.0
    %907 = vmatprep.subr.mxu0 0.0
    %908 = vmatpush1.msra.mxu0 0.0
    %909 = vmatprep.subr.mxu0 0.0
    %910 = vmatpush1.msra.mxu0 0.0
    %911 = vmatprep.subr.mxu0 0.0
    %912 = vmatpush1.msra.mxu0 0.0
    %913 = vmatprep.subr.mxu0 0.0
    %914 = vmatpush1.msra.mxu0 0.0
    %915 = vmatprep.subr.mxu0 0.0
    %916 = vmatpush1.msra.mxu0 0.0
    %917 = vmatprep.subr.mxu0 0.0
    %918 = vmatpush1.msra.mxu0 0.0
    %919 = vmatprep.subr.mxu0 0.0
    %920 = vmatpush1.msra.mxu0 0.0
    %921 = vmatprep.subr.mxu0 0.0
    %922 = vmatpush1.msra.mxu0 0.0
    %923 = vmatprep.subr.mxu0 0.0
    %924 = vmatpush1.msra.mxu0 0.0
    %925 = vmatprep.subr.mxu0 0.0
    %926 = vmatpush1.msra.mxu0 0.0
    %927 = vmatprep.subr.mxu0 0.0
    %928 = vmatpush1.msra.mxu0 0.0
    %929 = vmatprep.subr.mxu0 0.0
    %930 = vmatpush1.msra.mxu0 0.0
    %931 = vmatprep.subr.mxu0 0.0
    %932 = vmatpush1.msra.mxu0 0.0
    %933 = vmatprep.subr.mxu0 0.0
    %934 = vmatpush1.msra.mxu0 0.0
    %935 = vmatprep.subr.mxu0 0.0
    %936 = vmatpush1.msra.mxu0 0.0
    %937 = vmatprep.subr.mxu0 0.0
    %938 = vmatpush1.msra.mxu0 0.0
    %939 = vmatprep.subr.mxu0 0.0
    %940 = vmatpush1.msra.mxu0 0.0
    %941 = vmatprep.subr.mxu0 0.0
    %942 = vmatpush1.msra.mxu0 0.0
    %943 = vmatprep.subr.mxu0 0.0
    %944 = vmatpush1.msra.mxu0 0.0
    %945 = vmatprep.mubr.f32.mxu0 0.0
    %946 = vmatmul.mubr.f32.gmra.mrb[0].mxu0 %v717
    %v947 = vpop.f32.mrb[0].mxu0
    %v948 = vadd.f32 %v98, %v947
    %v949 = vpop.f32.mrb[0].mxu0
    %950 = vdwg.mxu0
    %v952 = vrot.slane %v948, 6
    %v954 = vmul.f32 %v868, %v952
    %956 = vrot.lane.b32.xlu0 %v954, 64
    %v957 = vpop.permute.xlu0 %956
    %v959 = vadd.f32 %v201, %v957
    %v960 = vtanh.pop %v959
    %v961 = vsub.f32 1.0, %v880
    %963 = vrot.lane.b32.xlu0 %v960, 96
    %v964 = vpop.permute.xlu0 %963
    %v966 = vmul.f32 %v961, %v964
    %v967 = vrot.slane %v456, 6
    %v969 = vmul.f32 %v880, %v967
    %v970 = vadd.f32 %v966, %v969
    %v972 = vrot.slane %v708, 6
    %v973 = vsel %vm127, %v972, 0
    %975 = vmatprep.subr.mxu0 0.0
    %976 = vmatpush1.msra.mxu0 %v54
    %977 = vmatprep.subr.mxu0 0.0
    %978 = vmatpush1.msra.mxu0 %v55
    %979 = vmatprep.subr.mxu0 0.0
    %980 = vmatpush1.msra.mxu0 %v56
    %981 = vmatprep.subr.mxu0 0.0
    %982 = vmatpush1.msra.mxu0 %v57
    %983 = vmatprep.subr.mxu0 0.0
    %984 = vmatpush1.msra.mxu0 0.0
    %985 = vmatprep.subr.mxu0 0.0
    %986 = vmatpush1.msra.mxu0 0.0
    %987 = vmatprep.subr.mxu0 0.0
    %988 = vmatpush1.msra.mxu0 0.0
    %989 = vmatprep.subr.mxu0 0.0
    %990 = vmatpush1.msra.mxu0 0.0
    %991 = vmatprep.subr.mxu0 0.0
    %992 = vmatpush1.msra.mxu0 0.0
    %993 = vmatprep.subr.mxu0 0.0
    %994 = vmatpush1.msra.mxu0 0.0
    %995 = vmatprep.subr.mxu0 0.0
    %996 = vmatpush1.msra.mxu0 0.0
    %997 = vmatprep.subr.mxu0 0.0
    %998 = vmatpush1.msra.mxu0 0.0
    %999 = vmatprep.subr.mxu0 0.0
    %1000 = vmatpush1.msra.mxu0 0.0
    %1001 = vmatprep.subr.mxu0 0.0
    %1002 = vmatpush1.msra.mxu0 0.0
    %1003 = vmatprep.subr.mxu0 0.0
    %1004 = vmatpush1.msra.mxu0 0.0
    %1005 = vmatprep.subr.mxu0 0.0
    %1006 = vmatpush1.msra.mxu0 0.0
    %1007 = vmatprep.subr.mxu0 0.0
    %1008 = vmatpush1.msra.mxu0 0.0
    %1009 = vmatprep.subr.mxu0 0.0
    %1010 = vmatpush1.msra.mxu0 0.0
    %1011 = vmatprep.subr.mxu0 0.0
    %1012 = vmatpush1.msra.mxu0 0.0
    %1013 = vmatprep.subr.mxu0 0.0
    %1014 = vmatpush1.msra.mxu0 0.0
    %1015 = vmatprep.subr.mxu0 0.0
    %1016 = vmatpush1.msra.mxu0 0.0
    %1017 = vmatprep.subr.mxu0 0.0
    %1018 = vmatpush1.msra.mxu0 0.0
    %1019 = vmatprep.subr.mxu0 0.0
    %1020 = vmatpush1.msra.mxu0 0.0
    %1021 = vmatprep.subr.mxu0 0.0
    %1022 = vmatpush1.msra.mxu0 0.0
    %1023 = vmatprep.subr.mxu0 0.0
    %1024 = vmatpush1.msra.mxu0 0.0
    %1025 = vmatprep.subr.mxu0 0.0
    %1026 = vmatpush1.msra.mxu0 0.0
    %1027 = vmatprep.subr.mxu0 0.0
    %1028 = vmatpush1.msra.mxu0 0.0
    %1029 = vmatprep.subr.mxu0 0.0
    %1030 = vmatpush1.msra.mxu0 0.0
    %1031 = vmatprep.subr.mxu0 0.0
    %1032 = vmatpush1.msra.mxu0 0.0
    %1033 = vmatprep.subr.mxu0 0.0
    %1034 = vmatpush1.msra.mxu0 0.0
    %1035 = vmatprep.subr.mxu0 0.0
    %1036 = vmatpush1.msra.mxu0 0.0
    %1037 = vmatprep.subr.mxu0 0.0
    %1038 = vmatpush1.msra.mxu0 0.0
    %1039 = vmatprep.mubr.f32.mxu0 0.0
    %1040 = vmatmul.mubr.f32.gmra.mrb[0].mxu0 %v973
    %v1041 = vpop.f32.mrb[0].mxu0
    %v1042 = vadd.f32 0.0, %v1041
    %v1043 = vpop.f32.mrb[0].mxu0
    %1044 = vdwg.mxu0
    %1045 = vmatprep.subr.mxu0 0.0
    %1046 = vmatpush1.msra.mxu0 %v59
    %1047 = vmatprep.subr.mxu0 0.0
    %1048 = vmatpush1.msra.mxu0 %v60
    %1049 = vmatprep.subr.mxu0 0.0
    %1050 = vmatpush1.msra.mxu0 %v61
    %1051 = vmatprep.subr.mxu0 0.0
    %1052 = vmatpush1.msra.mxu0 %v62
    %1053 = vmatprep.subr.mxu0 0.0
    %1054 = vmatpush1.msra.mxu0 0.0
    %1055 = vmatprep.subr.mxu0 0.0
    %1056 = vmatpush1.msra.mxu0 0.0
    %1057 = vmatprep.subr.mxu0 0.0
    %1058 = vmatpush1.msra.mxu0 0.0
    %1059 = vmatprep.subr.mxu0 0.0
    %1060 = vmatpush1.msra.mxu0 0.0
    %1061 = vmatprep.subr.mxu0 0.0
    %1062 = vmatpush1.msra.mxu0 0.0
    %1063 = vmatprep.subr.mxu0 0.0
    %1064 = vmatpush1.msra.mxu0 0.0
    %1065 = vmatprep.subr.mxu0 0.0
    %1066 = vmatpush1.msra.mxu0 0.0
    %1067 = vmatprep.subr.mxu0 0.0
    %1068 = vmatpush1.msra.mxu0 0.0
    %1069 = vmatprep.subr.mxu0 0.0
    %1070 = vmatpush1.msra.mxu0 0.0
    %1071 = vmatprep.subr.mxu0 0.0
    %1072 = vmatpush1.msra.mxu0 0.0
    %1073 = vmatprep.subr.mxu0 0.0
    %1074 = vmatpush1.msra.mxu0 0.0
    %1075 = vmatprep.subr.mxu0 0.0
    %1076 = vmatpush1.msra.mxu0 0.0
    %1077 = vmatprep.subr.mxu0 0.0
    %1078 = vmatpush1.msra.mxu0 0.0
    %1079 = vmatprep.subr.mxu0 0.0
    %1080 = vmatpush1.msra.mxu0 0.0
    %1081 = vmatprep.subr.mxu0 0.0
    %1082 = vmatpush1.msra.mxu0 0.0
    %1083 = vmatprep.subr.mxu0 0.0
    %1084 = vmatpush1.msra.mxu0 0.0
    %1085 = vmatprep.subr.mxu0 0.0
    %1086 = vmatpush1.msra.mxu0 0.0
    %1087 = vmatprep.subr.mxu0 0.0
    %1088 = vmatpush1.msra.mxu0 0.0
    %1089 = vmatprep.subr.mxu0 0.0
    %1090 = vmatpush1.msra.mxu0 0.0
    %1091 = vmatprep.subr.mxu0 0.0
    %1092 = vmatpush1.msra.mxu0 0.0
    %1093 = vmatprep.subr.mxu0 0.0
    %1094 = vmatpush1.msra.mxu0 0.0
    %1095 = vmatprep.subr.mxu0 0.0
    %1096 = vmatpush1.msra.mxu0 0.0
    %1097 = vmatprep.subr.mxu0 0.0
    %1098 = vmatpush1.msra.mxu0 0.0
    %1099 = vmatprep.subr.mxu0 0.0
    %1100 = vmatpush1.msra.mxu0 0.0
    %1101 = vmatprep.subr.mxu0 0.0
    %1102 = vmatpush1.msra.mxu0 0.0
    %1103 = vmatprep.subr.mxu0 0.0
    %1104 = vmatpush1.msra.mxu0 0.0
    %1105 = vmatprep.subr.mxu0 0.0
    %1106 = vmatpush1.msra.mxu0 0.0
    %1107 = vmatprep.subr.mxu0 0.0
    %1108 = vmatpush1.msra.mxu0 0.0
    %1109 = vmatprep.mubr.f32.mxu0 0.0
    %1110 = vmatmul.mubr.f32.gmra.mrb[0].mxu0 %v973
    %v1111 = vpop.f32.mrb[0].mxu0
    %v1112 = vadd.f32 0.0, %v1111
    %v1113 = vpop.f32.mrb[0].mxu0
    %1114 = vdwg.mxu0
    %v1116 = vrot.slane %v1042, 4
    %1117 = vrot.lane.b32.xlu0 %v1116, 96
    %v1118 = vpop.permute.xlu0 %1117
    %v1120 = vadd.f32 %v207, %v1118
    %v1121 = vxor.u32 %v1120, 2147483648
    %v1122 = vmul.f32 %v1121, 1.442695
    %v1123 = vpow.pop %v1122
    %v1124 = vadd.f32 %v1123, 1.0
    %v1125 = vrcp.pop %v1124
    %v1126 = vmul.f32 1.0, %v1125
    %v1128 = vrot.slane %v1112, 4
    %v1130 = vadd.f32 %v209, %v1128
    %v1131 = vxor.u32 %v1130, 2147483648
    %v1132 = vmul.f32 %v1131, 1.442695
    %v1133 = vpow.pop %v1132
    %v1134 = vadd.f32 %v1133, 1.0
    %v1135 = vrcp.pop %v1134
    %v1136 = vmul.f32 1.0, %v1135
    %1137 = vmatprep.subr.mxu0 0.0
    %1138 = vmatpush1.msra.mxu0 %v64
    %1139 = vmatprep.subr.mxu0 0.0
    %1140 = vmatpush1.msra.mxu0 %v65
    %1141 = vmatprep.subr.mxu0 0.0
    %1142 = vmatpush1.msra.mxu0 %v66
    %1143 = vmatprep.subr.mxu0 0.0
    %1144 = vmatpush1.msra.mxu0 %v67
    %1145 = vmatprep.subr.mxu0 0.0
    %1146 = vmatpush1.msra.mxu0 0.0
    %1147 = vmatprep.subr.mxu0 0.0
    %1148 = vmatpush1.msra.mxu0 0.0
    %1149 = vmatprep.subr.mxu0 0.0
    %1150 = vmatpush1.msra.mxu0 0.0
    %1151 = vmatprep.subr.mxu0 0.0
    %1152 = vmatpush1.msra.mxu0 0.0
    %1153 = vmatprep.subr.mxu0 0.0
    %1154 = vmatpush1.msra.mxu0 0.0
    %1155 = vmatprep.subr.mxu0 0.0
    %1156 = vmatpush1.msra.mxu0 0.0
    %1157 = vmatprep.subr.mxu0 0.0
    %1158 = vmatpush1.msra.mxu0 0.0
    %1159 = vmatprep.subr.mxu0 0.0
    %1160 = vmatpush1.msra.mxu0 0.0
    %1161 = vmatprep.subr.mxu0 0.0
    %1162 = vmatpush1.msra.mxu0 0.0
    %1163 = vmatprep.subr.mxu0 0.0
    %1164 = vmatpush1.msra.mxu0 0.0
    %1165 = vmatprep.subr.mxu0 0.0
    %1166 = vmatpush1.msra.mxu0 0.0
    %1167 = vmatprep.subr.mxu0 0.0
    %1168 = vmatpush1.msra.mxu0 0.0
    %1169 = vmatprep.subr.mxu0 0.0
    %1170 = vmatpush1.msra.mxu0 0.0
    %1171 = vmatprep.subr.mxu0 0.0
    %1172 = vmatpush1.msra.mxu0 0.0
    %1173 = vmatprep.subr.mxu0 0.0
    %1174 = vmatpush1.msra.mxu0 0.0
    %1175 = vmatprep.subr.mxu0 0.0
    %1176 = vmatpush1.msra.mxu0 0.0
    %1177 = vmatprep.subr.mxu0 0.0
    %1178 = vmatpush1.msra.mxu0 0.0
    %1179 = vmatprep.subr.mxu0 0.0
    %1180 = vmatpush1.msra.mxu0 0.0
    %1181 = vmatprep.subr.mxu0 0.0
    %1182 = vmatpush1.msra.mxu0 0.0
    %1183 = vmatprep.subr.mxu0 0.0
    %1184 = vmatpush1.msra.mxu0 0.0
    %1185 = vmatprep.subr.mxu0 0.0
    %1186 = vmatpush1.msra.mxu0 0.0
    %1187 = vmatprep.subr.mxu0 0.0
    %1188 = vmatpush1.msra.mxu0 0.0
    %1189 = vmatprep.subr.mxu0 0.0
    %1190 = vmatpush1.msra.mxu0 0.0
    %1191 = vmatprep.subr.mxu0 0.0
    %1192 = vmatpush1.msra.mxu0 0.0
    %1193 = vmatprep.subr.mxu0 0.0
    %1194 = vmatpush1.msra.mxu0 0.0
    %1195 = vmatprep.subr.mxu0 0.0
    %1196 = vmatpush1.msra.mxu0 0.0
    %1197 = vmatprep.subr.mxu0 0.0
    %1198 = vmatpush1.msra.mxu0 0.0
    %1199 = vmatprep.subr.mxu0 0.0
    %1200 = vmatpush1.msra.mxu0 0.0
    %1201 = vmatprep.mubr.f32.mxu0 0.0
    %1202 = vmatmul.mubr.f32.gmra.mrb[0].mxu0 %v973
    %v1203 = vpop.f32.mrb[0].mxu0
    %v1204 = vadd.f32 %v100, %v1203
    %v1205 = vpop.f32.mrb[0].mxu0
    %1206 = vdwg.mxu0
    %v1208 = vrot.slane %v1204, 4
    %1209 = vrot.lane.b32.xlu0 %v1208, 96
    %v1210 = vpop.permute.xlu0 %1209
    %v1212 = vmul.f32 %v1126, %v1210
    %1214 = vrot.lane.b32.xlu0 %v1212, 64
    %v1215 = vpop.permute.xlu0 %1214
    %v1217 = vadd.f32 %v209, %v1215
    %v1218 = vtanh.pop %v1217
    %v1219 = vsub.f32 1.0, %v1136
    %1221 = vrot.lane.b32.xlu0 %v1218, 96
    %v1222 = vpop.permute.xlu0 %1221
    %v1224 = vmul.f32 %v1219, %v1222
    %v1225 = vrot.slane %v708, 2
    %v1227 = vmul.f32 %v1136, %v1225
    %v1228 = vadd.f32 %v1224, %v1227
    %1230 = vrot.lane.b32.xlu0 %v970, 96
    %v1231 = vpop.permute.xlu0 %1230
    %vm1233 = vcmask 257026
    %1234 = vst.msk [vmem:[#allocation2] sm:$0xc] %vm1233, %v1231
    %vm1235 = vcmask 259076
    %1236 = vst.msk [vmem:[#allocation3 + $0x8] sm:$0x30] %vm1235, %v1228
    %v1237 = vrot.slane %v970, 2
    %1238 = vrot.lane.b32.xlu0 %v1237, 96
    %v1239 = vpop.permute.xlu0 %1238
    %v1240 = vsel %vm127, %v1239, 0
    %1242 = vmatprep.subr.mxu0 0.0
    %1243 = vmatpush1.msra.mxu0 %v39
    %1244 = vmatprep.subr.mxu0 0.0
    %1245 = vmatpush1.msra.mxu0 %v40
    %1246 = vmatprep.subr.mxu0 0.0
    %1247 = vmatpush1.msra.mxu0 %v41
    %1248 = vmatprep.subr.mxu0 0.0
    %1249 = vmatpush1.msra.mxu0 %v42
    %1250 = vmatprep.subr.mxu0 0.0
    %1251 = vmatpush1.msra.mxu0 0.0
    %1252 = vmatprep.subr.mxu0 0.0
    %1253 = vmatpush1.msra.mxu0 0.0
    %1254 = vmatprep.subr.mxu0 0.0
    %1255 = vmatpush1.msra.mxu0 0.0
    %1256 = vmatprep.subr.mxu0 0.0
    %1257 = vmatpush1.msra.mxu0 0.0
    %1258 = vmatprep.subr.mxu0 0.0
    %1259 = vmatpush1.msra.mxu0 0.0
    %1260 = vmatprep.subr.mxu0 0.0
    %1261 = vmatpush1.msra.mxu0 0.0
    %1262 = vmatprep.subr.mxu0 0.0
    %1263 = vmatpush1.msra.mxu0 0.0
    %1264 = vmatprep.subr.mxu0 0.0
    %1265 = vmatpush1.msra.mxu0 0.0
    %1266 = vmatprep.subr.mxu0 0.0
    %1267 = vmatpush1.msra.mxu0 0.0
    %1268 = vmatprep.subr.mxu0 0.0
    %1269 = vmatpush1.msra.mxu0 0.0
    %1270 = vmatprep.subr.mxu0 0.0
    %1271 = vmatpush1.msra.mxu0 0.0
    %1272 = vmatprep.subr.mxu0 0.0
    %1273 = vmatpush1.msra.mxu0 0.0
    %1274 = vmatprep.subr.mxu0 0.0
    %1275 = vmatpush1.msra.mxu0 0.0
    %1276 = vmatprep.subr.mxu0 0.0
    %1277 = vmatpush1.msra.mxu0 0.0
    %1278 = vmatprep.subr.mxu0 0.0
    %1279 = vmatpush1.msra.mxu0 0.0
    %1280 = vmatprep.subr.mxu0 0.0
    %1281 = vmatpush1.msra.mxu0 0.0
    %1282 = vmatprep.subr.mxu0 0.0
    %1283 = vmatpush1.msra.mxu0 0.0
    %1284 = vmatprep.subr.mxu0 0.0
    %1285 = vmatpush1.msra.mxu0 0.0
    %1286 = vmatprep.subr.mxu0 0.0
    %1287 = vmatpush1.msra.mxu0 0.0
    %1288 = vmatprep.subr.mxu0 0.0
    %1289 = vmatpush1.msra.mxu0 0.0
    %1290 = vmatprep.subr.mxu0 0.0
    %1291 = vmatpush1.msra.mxu0 0.0
    %1292 = vmatprep.subr.mxu0 0.0
    %1293 = vmatpush1.msra.mxu0 0.0
    %1294 = vmatprep.subr.mxu0 0.0
    %1295 = vmatpush1.msra.mxu0 0.0
    %1296 = vmatprep.subr.mxu0 0.0
    %1297 = vmatpush1.msra.mxu0 0.0
    %1298 = vmatprep.subr.mxu0 0.0
    %1299 = vmatpush1.msra.mxu0 0.0
    %1300 = vmatprep.subr.mxu0 0.0
    %1301 = vmatpush1.msra.mxu0 0.0
    %1302 = vmatprep.subr.mxu0 0.0
    %1303 = vmatpush1.msra.mxu0 0.0
    %1304 = vmatprep.subr.mxu0 0.0
    %1305 = vmatpush1.msra.mxu0 0.0
    %1306 = vmatprep.mubr.f32.mxu0 0.0
    %1307 = vmatmul.mubr.f32.gmra.mrb[0].mxu0 %v1240
    %v1308 = vpop.f32.mrb[0].mxu0
    %v1309 = vadd.f32 0.0, %v1308
    %v1310 = vpop.f32.mrb[0].mxu0
    %1311 = vdwg.mxu0
    %1312 = vmatprep.subr.mxu0 0.0
    %1313 = vmatpush1.msra.mxu0 %v44
    %1314 = vmatprep.subr.mxu0 0.0
    %1315 = vmatpush1.msra.mxu0 %v45
    %1316 = vmatprep.subr.mxu0 0.0
    %1317 = vmatpush1.msra.mxu0 %v46
    %1318 = vmatprep.subr.mxu0 0.0
    %1319 = vmatpush1.msra.mxu0 %v47
    %1320 = vmatprep.subr.mxu0 0.0
    %1321 = vmatpush1.msra.mxu0 0.0
    %1322 = vmatprep.subr.mxu0 0.0
    %1323 = vmatpush1.msra.mxu0 0.0
    %1324 = vmatprep.subr.mxu0 0.0
    %1325 = vmatpush1.msra.mxu0 0.0
    %1326 = vmatprep.subr.mxu0 0.0
    %1327 = vmatpush1.msra.mxu0 0.0
    %1328 = vmatprep.subr.mxu0 0.0
    %1329 = vmatpush1.msra.mxu0 0.0
    %1330 = vmatprep.subr.mxu0 0.0
    %1331 = vmatpush1.msra.mxu0 0.0
    %1332 = vmatprep.subr.mxu0 0.0
    %1333 = vmatpush1.msra.mxu0 0.0
    %1334 = vmatprep.subr.mxu0 0.0
    %1335 = vmatpush1.msra.mxu0 0.0
    %1336 = vmatprep.subr.mxu0 0.0
    %1337 = vmatpush1.msra.mxu0 0.0
    %1338 = vmatprep.subr.mxu0 0.0
    %1339 = vmatpush1.msra.mxu0 0.0
    %1340 = vmatprep.subr.mxu0 0.0
    %1341 = vmatpush1.msra.mxu0 0.0
    %1342 = vmatprep.subr.mxu0 0.0
    %1343 = vmatpush1.msra.mxu0 0.0
    %1344 = vmatprep.subr.mxu0 0.0
    %1345 = vmatpush1.msra.mxu0 0.0
    %1346 = vmatprep.subr.mxu0 0.0
    %1347 = vmatpush1.msra.mxu0 0.0
    %1348 = vmatprep.subr.mxu0 0.0
    %1349 = vmatpush1.msra.mxu0 0.0
    %1350 = vmatprep.subr.mxu0 0.0
    %1351 = vmatpush1.msra.mxu0 0.0
    %1352 = vmatprep.subr.mxu0 0.0
    %1353 = vmatpush1.msra.mxu0 0.0
    %1354 = vmatprep.subr.mxu0 0.0
    %1355 = vmatpush1.msra.mxu0 0.0
    %1356 = vmatprep.subr.mxu0 0.0
    %1357 = vmatpush1.msra.mxu0 0.0
    %1358 = vmatprep.subr.mxu0 0.0
    %1359 = vmatpush1.msra.mxu0 0.0
    %1360 = vmatprep.subr.mxu0 0.0
    %1361 = vmatpush1.msra.mxu0 0.0
    %1362 = vmatprep.subr.mxu0 0.0
    %1363 = vmatpush1.msra.mxu0 0.0
    %1364 = vmatprep.subr.mxu0 0.0
    %1365 = vmatpush1.msra.mxu0 0.0
    %1366 = vmatprep.subr.mxu0 0.0
    %1367 = vmatpush1.msra.mxu0 0.0
    %1368 = vmatprep.subr.mxu0 0.0
    %1369 = vmatpush1.msra.mxu0 0.0
    %1370 = vmatprep.subr.mxu0 0.0
    %1371 = vmatpush1.msra.mxu0 0.0
    %1372 = vmatprep.subr.mxu0 0.0
    %1373 = vmatpush1.msra.mxu0 0.0
    %1374 = vmatprep.subr.mxu0 0.0
    %1375 = vmatpush1.msra.mxu0 0.0
    %1376 = vmatprep.mubr.f32.mxu0 0.0
    %1377 = vmatmul.mubr.f32.gmra.mrb[0].mxu0 %v1240
    %v1378 = vpop.f32.mrb[0].mxu0
    %v1379 = vadd.f32 0.0, %v1378
    %v1380 = vpop.f32.mrb[0].mxu0
    %1381 = vdwg.mxu0
    %v1383 = vrot.slane %v1309, 4
    %v1385 = vadd.f32 %v201, %v1383
    %v1386 = vxor.u32 %v1385, 2147483648
    %v1387 = vmul.f32 %v1386, 1.442695
    %v1388 = vpow.pop %v1387
    %v1389 = vadd.f32 %v1388, 1.0
    %v1390 = vrcp.pop %v1389
    %v1391 = vmul.f32 1.0, %v1390
    %v1393 = vrot.slane %v1379, 4
    %1394 = vrot.lane.b32.xlu0 %v1393, 32
    %v1395 = vpop.permute.xlu0 %1394
    %v1397 = vadd.f32 %v201, %v1395
    %v1398 = vxor.u32 %v1397, 2147483648
    %v1399 = vmul.f32 %v1398, 1.442695
    %v1400 = vpow.pop %v1399
    %v1401 = vadd.f32 %v1400, 1.0
    %v1402 = vrcp.pop %v1401
    %v1403 = vmul.f32 1.0, %v1402
    %1404 = vmatprep.subr.mxu0 0.0
    %1405 = vmatpush1.msra.mxu0 %v49
    %1406 = vmatprep.subr.mxu0 0.0
    %1407 = vmatpush1.msra.mxu0 %v50
    %1408 = vmatprep.subr.mxu0 0.0
    %1409 = vmatpush1.msra.mxu0 %v51
    %1410 = vmatprep.subr.mxu0 0.0
    %1411 = vmatpush1.msra.mxu0 %v52
    %1412 = vmatprep.subr.mxu0 0.0
    %1413 = vmatpush1.msra.mxu0 0.0
    %1414 = vmatprep.subr.mxu0 0.0
    %1415 = vmatpush1.msra.mxu0 0.0
    %1416 = vmatprep.subr.mxu0 0.0
    %1417 = vmatpush1.msra.mxu0 0.0
    %1418 = vmatprep.subr.mxu0 0.0
    %1419 = vmatpush1.msra.mxu0 0.0
    %1420 = vmatprep.subr.mxu0 0.0
    %1421 = vmatpush1.msra.mxu0 0.0
    %1422 = vmatprep.subr.mxu0 0.0
    %1423 = vmatpush1.msra.mxu0 0.0
    %1424 = vmatprep.subr.mxu0 0.0
    %1425 = vmatpush1.msra.mxu0 0.0
    %1426 = vmatprep.subr.mxu0 0.0
    %1427 = vmatpush1.msra.mxu0 0.0
    %1428 = vmatprep.subr.mxu0 0.0
    %1429 = vmatpush1.msra.mxu0 0.0
    %1430 = vmatprep.subr.mxu0 0.0
    %1431 = vmatpush1.msra.mxu0 0.0
    %1432 = vmatprep.subr.mxu0 0.0
    %1433 = vmatpush1.msra.mxu0 0.0
    %1434 = vmatprep.subr.mxu0 0.0
    %1435 = vmatpush1.msra.mxu0 0.0
    %1436 = vmatprep.subr.mxu0 0.0
    %1437 = vmatpush1.msra.mxu0 0.0
    %1438 = vmatprep.subr.mxu0 0.0
    %1439 = vmatpush1.msra.mxu0 0.0
    %1440 = vmatprep.subr.mxu0 0.0
    %1441 = vmatpush1.msra.mxu0 0.0
    %1442 = vmatprep.subr.mxu0 0.0
    %1443 = vmatpush1.msra.mxu0 0.0
    %1444 = vmatprep.subr.mxu0 0.0
    %1445 = vmatpush1.msra.mxu0 0.0
    %1446 = vmatprep.subr.mxu0 0.0
    %1447 = vmatpush1.msra.mxu0 0.0
    %1448 = vmatprep.subr.mxu0 0.0
    %1449 = vmatpush1.msra.mxu0 0.0
    %1450 = vmatprep.subr.mxu0 0.0
    %1451 = vmatpush1.msra.mxu0 0.0
    %1452 = vmatprep.subr.mxu0 0.0
    %1453 = vmatpush1.msra.mxu0 0.0
    %1454 = vmatprep.subr.mxu0 0.0
    %1455 = vmatpush1.msra.mxu0 0.0
    %1456 = vmatprep.subr.mxu0 0.0
    %1457 = vmatpush1.msra.mxu0 0.0
    %1458 = vmatprep.subr.mxu0 0.0
    %1459 = vmatpush1.msra.mxu0 0.0
    %1460 = vmatprep.subr.mxu0 0.0
    %1461 = vmatpush1.msra.mxu0 0.0
    %1462 = vmatprep.subr.mxu0 0.0
    %1463 = vmatpush1.msra.mxu0 0.0
    %1464 = vmatprep.subr.mxu0 0.0
    %1465 = vmatpush1.msra.mxu0 0.0
    %1466 = vmatprep.subr.mxu0 0.0
    %1467 = vmatpush1.msra.mxu0 0.0
    %1468 = vmatprep.mubr.f32.mxu0 0.0
    %1469 = vmatmul.mubr.f32.gmra.mrb[0].mxu0 %v1240
    %v1470 = vpop.f32.mrb[0].mxu0
    %v1471 = vadd.f32 %v98, %v1470
    %v1472 = vpop.f32.mrb[0].mxu0
    %1473 = vdwg.mxu0
    %v1475 = vrot.slane %v1471, 4
    %v1477 = vmul.f32 %v1391, %v1475
    %1479 = vrot.lane.b32.xlu0 %v1477, 64
    %v1480 = vpop.permute.xlu0 %1479
    %v1482 = vadd.f32 %v201, %v1480
    %v1483 = vtanh.pop %v1482
    %v1484 = vsub.f32 1.0, %v1403
    %1486 = vrot.lane.b32.xlu0 %v1483, 96
    %v1487 = vpop.permute.xlu0 %1486
    %v1489 = vmul.f32 %v1484, %v1487
    %v1490 = vrot.slane %v970, 6
    %v1492 = vmul.f32 %v1403, %v1490
    %v1493 = vadd.f32 %v1489, %v1492
    %v1495 = vrot.slane %v1228, 4
    %v1496 = vsel %vm127, %v1495, 0
    %1498 = vmatprep.subr.mxu0 0.0
    %1499 = vmatpush1.msra.mxu0 %v54
    %1500 = vmatprep.subr.mxu0 0.0
    %1501 = vmatpush1.msra.mxu0 %v55
    %1502 = vmatprep.subr.mxu0 0.0
    %1503 = vmatpush1.msra.mxu0 %v56
    %1504 = vmatprep.subr.mxu0 0.0
    %1505 = vmatpush1.msra.mxu0 %v57
    %1506 = vmatprep.subr.mxu0 0.0
    %1507 = vmatpush1.msra.mxu0 0.0
    %1508 = vmatprep.subr.mxu0 0.0
    %1509 = vmatpush1.msra.mxu0 0.0
    %1510 = vmatprep.subr.mxu0 0.0
    %1511 = vmatpush1.msra.mxu0 0.0
    %1512 = vmatprep.subr.mxu0 0.0
    %1513 = vmatpush1.msra.mxu0 0.0
    %1514 = vmatprep.subr.mxu0 0.0
    %1515 = vmatpush1.msra.mxu0 0.0
    %1516 = vmatprep.subr.mxu0 0.0
    %1517 = vmatpush1.msra.mxu0 0.0
    %1518 = vmatprep.subr.mxu0 0.0
    %1519 = vmatpush1.msra.mxu0 0.0
    %1520 = vmatprep.subr.mxu0 0.0
    %1521 = vmatpush1.msra.mxu0 0.0
    %1522 = vmatprep.subr.mxu0 0.0
    %1523 = vmatpush1.msra.mxu0 0.0
    %1524 = vmatprep.subr.mxu0 0.0
    %1525 = vmatpush1.msra.mxu0 0.0
    %1526 = vmatprep.subr.mxu0 0.0
    %1527 = vmatpush1.msra.mxu0 0.0
    %1528 = vmatprep.subr.mxu0 0.0
    %1529 = vmatpush1.msra.mxu0 0.0
    %1530 = vmatprep.subr.mxu0 0.0
    %1531 = vmatpush1.msra.mxu0 0.0
    %1532 = vmatprep.subr.mxu0 0.0
    %1533 = vmatpush1.msra.mxu0 0.0
    %1534 = vmatprep.subr.mxu0 0.0
    %1535 = vmatpush1.msra.mxu0 0.0
    %1536 = vmatprep.subr.mxu0 0.0
    %1537 = vmatpush1.msra.mxu0 0.0
    %1538 = vmatprep.subr.mxu0 0.0
    %1539 = vmatpush1.msra.mxu0 0.0
    %1540 = vmatprep.subr.mxu0 0.0
    %1541 = vmatpush1.msra.mxu0 0.0
    %1542 = vmatprep.subr.mxu0 0.0
    %1543 = vmatpush1.msra.mxu0 0.0
    %1544 = vmatprep.subr.mxu0 0.0
    %1545 = vmatpush1.msra.mxu0 0.0
    %1546 = vmatprep.subr.mxu0 0.0
    %1547 = vmatpush1.msra.mxu0 0.0
    %1548 = vmatprep.subr.mxu0 0.0
    %1549 = vmatpush1.msra.mxu0 0.0
    %1550 = vmatprep.subr.mxu0 0.0
    %1551 = vmatpush1.msra.mxu0 0.0
    %1552 = vmatprep.subr.mxu0 0.0
    %1553 = vmatpush1.msra.mxu0 0.0
    %1554 = vmatprep.subr.mxu0 0.0
    %1555 = vmatpush1.msra.mxu0 0.0
    %1556 = vmatprep.subr.mxu0 0.0
    %1557 = vmatpush1.msra.mxu0 0.0
    %1558 = vmatprep.subr.mxu0 0.0
    %1559 = vmatpush1.msra.mxu0 0.0
    %1560 = vmatprep.subr.mxu0 0.0
    %1561 = vmatpush1.msra.mxu0 0.0
    %1562 = vmatprep.mubr.f32.mxu0 0.0
    %1563 = vmatmul.mubr.f32.gmra.mrb[0].mxu0 %v1496
    %v1564 = vpop.f32.mrb[0].mxu0
    %v1565 = vadd.f32 0.0, %v1564
    %v1566 = vpop.f32.mrb[0].mxu0
    %1567 = vdwg.mxu0
    %1568 = vmatprep.subr.mxu0 0.0
    %1569 = vmatpush1.msra.mxu0 %v59
    %1570 = vmatprep.subr.mxu0 0.0
    %1571 = vmatpush1.msra.mxu0 %v60
    %1572 = vmatprep.subr.mxu0 0.0
    %1573 = vmatpush1.msra.mxu0 %v61
    %1574 = vmatprep.subr.mxu0 0.0
    %1575 = vmatpush1.msra.mxu0 %v62
    %1576 = vmatprep.subr.mxu0 0.0
    %1577 = vmatpush1.msra.mxu0 0.0
    %1578 = vmatprep.subr.mxu0 0.0
    %1579 = vmatpush1.msra.mxu0 0.0
    %1580 = vmatprep.subr.mxu0 0.0
    %1581 = vmatpush1.msra.mxu0 0.0
    %1582 = vmatprep.subr.mxu0 0.0
    %1583 = vmatpush1.msra.mxu0 0.0
    %1584 = vmatprep.subr.mxu0 0.0
    %1585 = vmatpush1.msra.mxu0 0.0
    %1586 = vmatprep.subr.mxu0 0.0
    %1587 = vmatpush1.msra.mxu0 0.0
    %1588 = vmatprep.subr.mxu0 0.0
    %1589 = vmatpush1.msra.mxu0 0.0
    %1590 = vmatprep.subr.mxu0 0.0
    %1591 = vmatpush1.msra.mxu0 0.0
    %1592 = vmatprep.subr.mxu0 0.0
    %1593 = vmatpush1.msra.mxu0 0.0
    %1594 = vmatprep.subr.mxu0 0.0
    %1595 = vmatpush1.msra.mxu0 0.0
    %1596 = vmatprep.subr.mxu0 0.0
    %1597 = vmatpush1.msra.mxu0 0.0
    %1598 = vmatprep.subr.mxu0 0.0
    %1599 = vmatpush1.msra.mxu0 0.0
    %1600 = vmatprep.subr.mxu0 0.0
    %1601 = vmatpush1.msra.mxu0 0.0
    %1602 = vmatprep.subr.mxu0 0.0
    %1603 = vmatpush1.msra.mxu0 0.0
    %1604 = vmatprep.subr.mxu0 0.0
    %1605 = vmatpush1.msra.mxu0 0.0
    %1606 = vmatprep.subr.mxu0 0.0
    %1607 = vmatpush1.msra.mxu0 0.0
    %1608 = vmatprep.subr.mxu0 0.0
    %1609 = vmatpush1.msra.mxu0 0.0
    %1610 = vmatprep.subr.mxu0 0.0
    %1611 = vmatpush1.msra.mxu0 0.0
    %1612 = vmatprep.subr.mxu0 0.0
    %1613 = vmatpush1.msra.mxu0 0.0
    %1614 = vmatprep.subr.mxu0 0.0
    %1615 = vmatpush1.msra.mxu0 0.0
    %1616 = vmatprep.subr.mxu0 0.0
    %1617 = vmatpush1.msra.mxu0 0.0
    %1618 = vmatprep.subr.mxu0 0.0
    %1619 = vmatpush1.msra.mxu0 0.0
    %1620 = vmatprep.subr.mxu0 0.0
    %1621 = vmatpush1.msra.mxu0 0.0
    %1622 = vmatprep.subr.mxu0 0.0
    %1623 = vmatpush1.msra.mxu0 0.0
    %1624 = vmatprep.subr.mxu0 0.0
    %1625 = vmatpush1.msra.mxu0 0.0
    %1626 = vmatprep.subr.mxu0 0.0
    %1627 = vmatpush1.msra.mxu0 0.0
    %1628 = vmatprep.subr.mxu0 0.0
    %1629 = vmatpush1.msra.mxu0 0.0
    %1630 = vmatprep.subr.mxu0 0.0
    %1631 = vmatpush1.msra.mxu0 0.0
    %1632 = vmatprep.mubr.f32.mxu0 0.0
    %1633 = vmatmul.mubr.f32.gmra.mrb[0].mxu0 %v1496
    %v1634 = vpop.f32.mrb[0].mxu0
    %v1635 = vadd.f32 0.0, %v1634
    %v1636 = vpop.f32.mrb[0].mxu0
    %1637 = vdwg.mxu0
    %v1639 = vrot.slane %v1565, 6
    %1640 = vrot.lane.b32.xlu0 %v1639, 96
    %v1641 = vpop.permute.xlu0 %1640
    %v1643 = vadd.f32 %v207, %v1641
    %v1644 = vxor.u32 %v1643, 2147483648
    %v1645 = vmul.f32 %v1644, 1.442695
    %v1646 = vpow.pop %v1645
    %v1647 = vadd.f32 %v1646, 1.0
    %v1648 = vrcp.pop %v1647
    %v1649 = vmul.f32 1.0, %v1648
    %v1651 = vrot.slane %v1635, 6
    %v1653 = vadd.f32 %v209, %v1651
    %v1654 = vxor.u32 %v1653, 2147483648
    %v1655 = vmul.f32 %v1654, 1.442695
    %v1656 = vpow.pop %v1655
    %v1657 = vadd.f32 %v1656, 1.0
    %v1658 = vrcp.pop %v1657
    %v1659 = vmul.f32 1.0, %v1658
    %1660 = vmatprep.subr.mxu0 0.0
    %1661 = vmatpush1.msra.mxu0 %v64
    %1662 = vmatprep.subr.mxu0 0.0
    %1663 = vmatpush1.msra.mxu0 %v65
    %1664 = vmatprep.subr.mxu0 0.0
    %1665 = vmatpush1.msra.mxu0 %v66
    %1666 = vmatprep.subr.mxu0 0.0
    %1667 = vmatpush1.msra.mxu0 %v67
    %1668 = vmatprep.subr.mxu0 0.0
    %1669 = vmatpush1.msra.mxu0 0.0
    %1670 = vmatprep.subr.mxu0 0.0
    %1671 = vmatpush1.msra.mxu0 0.0
    %1672 = vmatprep.subr.mxu0 0.0
    %1673 = vmatpush1.msra.mxu0 0.0
    %1674 = vmatprep.subr.mxu0 0.0
    %1675 = vmatpush1.msra.mxu0 0.0
    %1676 = vmatprep.subr.mxu0 0.0
    %1677 = vmatpush1.msra.mxu0 0.0
    %1678 = vmatprep.subr.mxu0 0.0
    %1679 = vmatpush1.msra.mxu0 0.0
    %1680 = vmatprep.subr.mxu0 0.0
    %1681 = vmatpush1.msra.mxu0 0.0
    %1682 = vmatprep.subr.mxu0 0.0
    %1683 = vmatpush1.msra.mxu0 0.0
    %1684 = vmatprep.subr.mxu0 0.0
    %1685 = vmatpush1.msra.mxu0 0.0
    %1686 = vmatprep.subr.mxu0 0.0
    %1687 = vmatpush1.msra.mxu0 0.0
    %1688 = vmatprep.subr.mxu0 0.0
    %1689 = vmatpush1.msra.mxu0 0.0
    %1690 = vmatprep.subr.mxu0 0.0
    %1691 = vmatpush1.msra.mxu0 0.0
    %1692 = vmatprep.subr.mxu0 0.0
    %1693 = vmatpush1.msra.mxu0 0.0
    %1694 = vmatprep.subr.mxu0 0.0
    %1695 = vmatpush1.msra.mxu0 0.0
    %1696 = vmatprep.subr.mxu0 0.0
    %1697 = vmatpush1.msra.mxu0 0.0
    %1698 = vmatprep.subr.mxu0 0.0
    %1699 = vmatpush1.msra.mxu0 0.0
    %1700 = vmatprep.subr.mxu0 0.0
    %1701 = vmatpush1.msra.mxu0 0.0
    %1702 = vmatprep.subr.mxu0 0.0
    %1703 = vmatpush1.msra.mxu0 0.0
    %1704 = vmatprep.subr.mxu0 0.0
    %1705 = vmatpush1.msra.mxu0 0.0
    %1706 = vmatprep.subr.mxu0 0.0
    %1707 = vmatpush1.msra.mxu0 0.0
    %1708 = vmatprep.subr.mxu0 0.0
    %1709 = vmatpush1.msra.mxu0 0.0
    %1710 = vmatprep.subr.mxu0 0.0
    %1711 = vmatpush1.msra.mxu0 0.0
    %1712 = vmatprep.subr.mxu0 0.0
    %1713 = vmatpush1.msra.mxu0 0.0
    %1714 = vmatprep.subr.mxu0 0.0
    %1715 = vmatpush1.msra.mxu0 0.0
    %1716 = vmatprep.subr.mxu0 0.0
    %1717 = vmatpush1.msra.mxu0 0.0
    %1718 = vmatprep.subr.mxu0 0.0
    %1719 = vmatpush1.msra.mxu0 0.0
    %1720 = vmatprep.subr.mxu0 0.0
    %1721 = vmatpush1.msra.mxu0 0.0
    %1722 = vmatprep.subr.mxu0 0.0
    %1723 = vmatpush1.msra.mxu0 0.0
    %1724 = vmatprep.mubr.f32.mxu0 0.0
    %1725 = vmatmul.mubr.f32.gmra.mrb[0].mxu0 %v1496
    %v1726 = vpop.f32.mrb[0].mxu0
    %v1727 = vadd.f32 %v100, %v1726
    %v1728 = vpop.f32.mrb[0].mxu0
    %1729 = vdwg.mxu0
    %v1731 = vrot.slane %v1727, 6
    %1732 = vrot.lane.b32.xlu0 %v1731, 96
    %v1733 = vpop.permute.xlu0 %1732
    %v1735 = vmul.f32 %v1649, %v1733
    %1737 = vrot.lane.b32.xlu0 %v1735, 64
    %v1738 = vpop.permute.xlu0 %1737
    %v1740 = vadd.f32 %v209, %v1738
    %v1741 = vtanh.pop %v1740
    %v1742 = vsub.f32 1.0, %v1659
    %1744 = vrot.lane.b32.xlu0 %v1741, 96
    %v1745 = vpop.permute.xlu0 %1744
    %v1747 = vmul.f32 %v1742, %v1745
    %v1748 = vrot.slane %v1228, 2
    %v1750 = vmul.f32 %v1659, %v1748
    %v1751 = vadd.f32 %v1747, %v1750
    %1753 = vrot.lane.b32.xlu0 %v1493, 96
    %v1754 = vpop.permute.xlu0 %1753
    %1756 = vst.msk [vmem:[#allocation2] sm:$0x30] %vm1235, %v1754
    %1757 = vst.msk [vmem:[#allocation3 + $0x8] sm:$0xc] %vm1233, %v1751
    %v1758 = vrot.slane %v1493, 4
    %1759 = vrot.lane.b32.xlu0 %v1758, 96
    %v1760 = vpop.permute.xlu0 %1759
    %v1761 = vsel %vm127, %v1760, 0
    %1763 = vmatprep.subr.mxu0 0.0
    %1764 = vmatpush1.msra.mxu0 %v39
    %1765 = vmatprep.subr.mxu0 0.0
    %1766 = vmatpush1.msra.mxu0 %v40
    %1767 = vmatprep.subr.mxu0 0.0
    %1768 = vmatpush1.msra.mxu0 %v41
    %1769 = vmatprep.subr.mxu0 0.0
    %1770 = vmatpush1.msra.mxu0 %v42
    %1771 = vmatprep.subr.mxu0 0.0
    %1772 = vmatpush1.msra.mxu0 0.0
    %1773 = vmatprep.subr.mxu0 0.0
    %1774 = vmatpush1.msra.mxu0 0.0
    %1775 = vmatprep.subr.mxu0 0.0
    %1776 = vmatpush1.msra.mxu0 0.0
    %1777 = vmatprep.subr.mxu0 0.0
    %1778 = vmatpush1.msra.mxu0 0.0
    %1779 = vmatprep.subr.mxu0 0.0
    %1780 = vmatpush1.msra.mxu0 0.0
    %1781 = vmatprep.subr.mxu0 0.0
    %1782 = vmatpush1.msra.mxu0 0.0
    %1783 = vmatprep.subr.mxu0 0.0
    %1784 = vmatpush1.msra.mxu0 0.0
    %1785 = vmatprep.subr.mxu0 0.0
    %1786 = vmatpush1.msra.mxu0 0.0
    %1787 = vmatprep.subr.mxu0 0.0
    %1788 = vmatpush1.msra.mxu0 0.0
    %1789 = vmatprep.subr.mxu0 0.0
    %1790 = vmatpush1.msra.mxu0 0.0
    %1791 = vmatprep.subr.mxu0 0.0
    %1792 = vmatpush1.msra.mxu0 0.0
    %1793 = vmatprep.subr.mxu0 0.0
    %1794 = vmatpush1.msra.mxu0 0.0
    %1795 = vmatprep.subr.mxu0 0.0
    %1796 = vmatpush1.msra.mxu0 0.0
    %1797 = vmatprep.subr.mxu0 0.0
    %1798 = vmatpush1.msra.mxu0 0.0
    %1799 = vmatprep.subr.mxu0 0.0
    %1800 = vmatpush1.msra.mxu0 0.0
    %1801 = vmatprep.subr.mxu0 0.0
    %1802 = vmatpush1.msra.mxu0 0.0
    %1803 = vmatprep.subr.mxu0 0.0
    %1804 = vmatpush1.msra.mxu0 0.0
    %1805 = vmatprep.subr.mxu0 0.0
    %1806 = vmatpush1.msra.mxu0 0.0
    %1807 = vmatprep.subr.mxu0 0.0
    %1808 = vmatpush1.msra.mxu0 0.0
    %1809 = vmatprep.subr.mxu0 0.0
    %1810 = vmatpush1.msra.mxu0 0.0
    %1811 = vmatprep.subr.mxu0 0.0
    %1812 = vmatpush1.msra.mxu0 0.0
    %1813 = vmatprep.subr.mxu0 0.0
    %1814 = vmatpush1.msra.mxu0 0.0
    %1815 = vmatprep.subr.mxu0 0.0
    %1816 = vmatpush1.msra.mxu0 0.0
    %1817 = vmatprep.subr.mxu0 0.0
    %1818 = vmatpush1.msra.mxu0 0.0
    %1819 = vmatprep.subr.mxu0 0.0
    %1820 = vmatpush1.msra.mxu0 0.0
    %1821 = vmatprep.subr.mxu0 0.0
    %1822 = vmatpush1.msra.mxu0 0.0
    %1823 = vmatprep.subr.mxu0 0.0
    %1824 = vmatpush1.msra.mxu0 0.0
    %1825 = vmatprep.subr.mxu0 0.0
    %1826 = vmatpush1.msra.mxu0 0.0
    %1827 = vmatprep.mubr.f32.mxu0 0.0
    %1828 = vmatmul.mubr.f32.gmra.mrb[0].mxu0 %v1761
    %v1829 = vpop.f32.mrb[0].mxu0
    %v1830 = vadd.f32 0.0, %v1829
    %v1831 = vpop.f32.mrb[0].mxu0
    %1832 = vdwg.mxu0
    %1833 = vmatprep.subr.mxu0 0.0
    %1834 = vmatpush1.msra.mxu0 %v44
    %1835 = vmatprep.subr.mxu0 0.0
    %1836 = vmatpush1.msra.mxu0 %v45
    %1837 = vmatprep.subr.mxu0 0.0
    %1838 = vmatpush1.msra.mxu0 %v46
    %1839 = vmatprep.subr.mxu0 0.0
    %1840 = vmatpush1.msra.mxu0 %v47
    %1841 = vmatprep.subr.mxu0 0.0
    %1842 = vmatpush1.msra.mxu0 0.0
    %1843 = vmatprep.subr.mxu0 0.0
    %1844 = vmatpush1.msra.mxu0 0.0
    %1845 = vmatprep.subr.mxu0 0.0
    %1846 = vmatpush1.msra.mxu0 0.0
    %1847 = vmatprep.subr.mxu0 0.0
    %1848 = vmatpush1.msra.mxu0 0.0
    %1849 = vmatprep.subr.mxu0 0.0
    %1850 = vmatpush1.msra.mxu0 0.0
    %1851 = vmatprep.subr.mxu0 0.0
    %1852 = vmatpush1.msra.mxu0 0.0
    %1853 = vmatprep.subr.mxu0 0.0
    %1854 = vmatpush1.msra.mxu0 0.0
    %1855 = vmatprep.subr.mxu0 0.0
    %1856 = vmatpush1.msra.mxu0 0.0
    %1857 = vmatprep.subr.mxu0 0.0
    %1858 = vmatpush1.msra.mxu0 0.0
    %1859 = vmatprep.subr.mxu0 0.0
    %1860 = vmatpush1.msra.mxu0 0.0
    %1861 = vmatprep.subr.mxu0 0.0
    %1862 = vmatpush1.msra.mxu0 0.0
    %1863 = vmatprep.subr.mxu0 0.0
    %1864 = vmatpush1.msra.mxu0 0.0
    %1865 = vmatprep.subr.mxu0 0.0
    %1866 = vmatpush1.msra.mxu0 0.0
    %1867 = vmatprep.subr.mxu0 0.0
    %1868 = vmatpush1.msra.mxu0 0.0
    %1869 = vmatprep.subr.mxu0 0.0
    %1870 = vmatpush1.msra.mxu0 0.0
    %1871 = vmatprep.subr.mxu0 0.0
    %1872 = vmatpush1.msra.mxu0 0.0
    %1873 = vmatprep.subr.mxu0 0.0
    %1874 = vmatpush1.msra.mxu0 0.0
    %1875 = vmatprep.subr.mxu0 0.0
    %1876 = vmatpush1.msra.mxu0 0.0
    %1877 = vmatprep.subr.mxu0 0.0
    %1878 = vmatpush1.msra.mxu0 0.0
    %1879 = vmatprep.subr.mxu0 0.0
    %1880 = vmatpush1.msra.mxu0 0.0
    %1881 = vmatprep.subr.mxu0 0.0
    %1882 = vmatpush1.msra.mxu0 0.0
    %1883 = vmatprep.subr.mxu0 0.0
    %1884 = vmatpush1.msra.mxu0 0.0
    %1885 = vmatprep.subr.mxu0 0.0
    %1886 = vmatpush1.msra.mxu0 0.0
    %1887 = vmatprep.subr.mxu0 0.0
    %1888 = vmatpush1.msra.mxu0 0.0
    %1889 = vmatprep.subr.mxu0 0.0
    %1890 = vmatpush1.msra.mxu0 0.0
    %1891 = vmatprep.subr.mxu0 0.0
    %1892 = vmatpush1.msra.mxu0 0.0
    %1893 = vmatprep.subr.mxu0 0.0
    %1894 = vmatpush1.msra.mxu0 0.0
    %1895 = vmatprep.subr.mxu0 0.0
    %1896 = vmatpush1.msra.mxu0 0.0
    %1897 = vmatprep.mubr.f32.mxu0 0.0
    %1898 = vmatmul.mubr.f32.gmra.mrb[0].mxu0 %v1761
    %v1899 = vpop.f32.mrb[0].mxu0
    %v1900 = vadd.f32 0.0, %v1899
    %v1901 = vpop.f32.mrb[0].mxu0
    %1902 = vdwg.mxu0
    %v1904 = vrot.slane %v1830, 2
    %v1906 = vadd.f32 %v201, %v1904
    %v1907 = vxor.u32 %v1906, 2147483648
    %v1908 = vmul.f32 %v1907, 1.442695
    %v1909 = vpow.pop %v1908
    %v1910 = vadd.f32 %v1909, 1.0
    %v1911 = vrcp.pop %v1910
    %v1912 = vmul.f32 1.0, %v1911
    %v1914 = vrot.slane %v1900, 2
    %1915 = vrot.lane.b32.xlu0 %v1914, 32
    %v1916 = vpop.permute.xlu0 %1915
    %v1918 = vadd.f32 %v201, %v1916
    %v1919 = vxor.u32 %v1918, 2147483648
    %v1920 = vmul.f32 %v1919, 1.442695
    %v1921 = vpow.pop %v1920
    %v1922 = vadd.f32 %v1921, 1.0
    %v1923 = vrcp.pop %v1922
    %v1924 = vmul.f32 1.0, %v1923
    %1925 = vmatprep.subr.mxu0 0.0
    %1926 = vmatpush1.msra.mxu0 %v49
    %1927 = vmatprep.subr.mxu0 0.0
    %1928 = vmatpush1.msra.mxu0 %v50
    %1929 = vmatprep.subr.mxu0 0.0
    %1930 = vmatpush1.msra.mxu0 %v51
    %1931 = vmatprep.subr.mxu0 0.0
    %1932 = vmatpush1.msra.mxu0 %v52
    %1933 = vmatprep.subr.mxu0 0.0
    %1934 = vmatpush1.msra.mxu0 0.0
    %1935 = vmatprep.subr.mxu0 0.0
    %1936 = vmatpush1.msra.mxu0 0.0
    %1937 = vmatprep.subr.mxu0 0.0
    %1938 = vmatpush1.msra.mxu0 0.0
    %1939 = vmatprep.subr.mxu0 0.0
    %1940 = vmatpush1.msra.mxu0 0.0
    %1941 = vmatprep.subr.mxu0 0.0
    %1942 = vmatpush1.msra.mxu0 0.0
    %1943 = vmatprep.subr.mxu0 0.0
    %1944 = vmatpush1.msra.mxu0 0.0
    %1945 = vmatprep.subr.mxu0 0.0
    %1946 = vmatpush1.msra.mxu0 0.0
    %1947 = vmatprep.subr.mxu0 0.0
    %1948 = vmatpush1.msra.mxu0 0.0
    %1949 = vmatprep.subr.mxu0 0.0
    %1950 = vmatpush1.msra.mxu0 0.0
    %1951 = vmatprep.subr.mxu0 0.0
    %1952 = vmatpush1.msra.mxu0 0.0
    %1953 = vmatprep.subr.mxu0 0.0
    %1954 = vmatpush1.msra.mxu0 0.0
    %1955 = vmatprep.subr.mxu0 0.0
    %1956 = vmatpush1.msra.mxu0 0.0
    %1957 = vmatprep.subr.mxu0 0.0
    %1958 = vmatpush1.msra.mxu0 0.0
    %1959 = vmatprep.subr.mxu0 0.0
    %1960 = vmatpush1.msra.mxu0 0.0
    %1961 = vmatprep.subr.mxu0 0.0
    %1962 = vmatpush1.msra.mxu0 0.0
    %1963 = vmatprep.subr.mxu0 0.0
    %1964 = vmatpush1.msra.mxu0 0.0
    %1965 = vmatprep.subr.mxu0 0.0
    %1966 = vmatpush1.msra.mxu0 0.0
    %1967 = vmatprep.subr.mxu0 0.0
    %1968 = vmatpush1.msra.mxu0 0.0
    %1969 = vmatprep.subr.mxu0 0.0
    %1970 = vmatpush1.msra.mxu0 0.0
    %1971 = vmatprep.subr.mxu0 0.0
    %1972 = vmatpush1.msra.mxu0 0.0
    %1973 = vmatprep.subr.mxu0 0.0
    %1974 = vmatpush1.msra.mxu0 0.0
    %1975 = vmatprep.subr.mxu0 0.0
    %1976 = vmatpush1.msra.mxu0 0.0
    %1977 = vmatprep.subr.mxu0 0.0
    %1978 = vmatpush1.msra.mxu0 0.0
    %1979 = vmatprep.subr.mxu0 0.0
    %1980 = vmatpush1.msra.mxu0 0.0
    %1981 = vmatprep.subr.mxu0 0.0
    %1982 = vmatpush1.msra.mxu0 0.0
    %1983 = vmatprep.subr.mxu0 0.0
    %1984 = vmatpush1.msra.mxu0 0.0
    %1985 = vmatprep.subr.mxu0 0.0
    %1986 = vmatpush1.msra.mxu0 0.0
    %1987 = vmatprep.subr.mxu0 0.0
    %1988 = vmatpush1.msra.mxu0 0.0
    %1989 = vmatprep.mubr.f32.mxu0 0.0
    %1990 = vmatmul.mubr.f32.gmra.mrb[0].mxu0 %v1761
    %v1991 = vpop.f32.mrb[0].mxu0
    %v1992 = vadd.f32 %v98, %v1991
    %v1993 = vpop.f32.mrb[0].mxu0
    %1994 = vdwg.mxu0
    %v1996 = vrot.slane %v1992, 2
    %v1998 = vmul.f32 %v1912, %v1996
    %2000 = vrot.lane.b32.xlu0 %v1998, 64
    %v2001 = vpop.permute.xlu0 %2000
    %v2003 = vadd.f32 %v201, %v2001
    %v2004 = vtanh.pop %v2003
    %v2005 = vsub.f32 1.0, %v1924
    %2007 = vrot.lane.b32.xlu0 %v2004, 96
    %v2008 = vpop.permute.xlu0 %2007
    %v2010 = vmul.f32 %v2005, %v2008
    %v2011 = vrot.slane %v1493, 6
    %v2013 = vmul.f32 %v1924, %v2011
    %v2014 = vadd.f32 %v2010, %v2013
    %v2016 = vrot.slane %v1751, 2
    %v2017 = vsel %vm127, %v2016, 0
    %2019 = vmatprep.subr.mxu0 0.0
    %2020 = vmatpush1.msra.mxu0 %v54
    %2021 = vmatprep.subr.mxu0 0.0
    %2022 = vmatpush1.msra.mxu0 %v55
    %2023 = vmatprep.subr.mxu0 0.0
    %2024 = vmatpush1.msra.mxu0 %v56
    %2025 = vmatprep.subr.mxu0 0.0
    %2026 = vmatpush1.msra.mxu0 %v57
    %2027 = vmatprep.subr.mxu0 0.0
    %2028 = vmatpush1.msra.mxu0 0.0
    %2029 = vmatprep.subr.mxu0 0.0
    %2030 = vmatpush1.msra.mxu0 0.0
    %2031 = vmatprep.subr.mxu0 0.0
    %2032 = vmatpush1.msra.mxu0 0.0
    %2033 = vmatprep.subr.mxu0 0.0
    %2034 = vmatpush1.msra.mxu0 0.0
    %2035 = vmatprep.subr.mxu0 0.0
    %2036 = vmatpush1.msra.mxu0 0.0
    %2037 = vmatprep.subr.mxu0 0.0
    %2038 = vmatpush1.msra.mxu0 0.0
    %2039 = vmatprep.subr.mxu0 0.0
    %2040 = vmatpush1.msra.mxu0 0.0
    %2041 = vmatprep.subr.mxu0 0.0
    %2042 = vmatpush1.msra.mxu0 0.0
    %2043 = vmatprep.subr.mxu0 0.0
    %2044 = vmatpush1.msra.mxu0 0.0
    %2045 = vmatprep.subr.mxu0 0.0
    %2046 = vmatpush1.msra.mxu0 0.0
    %2047 = vmatprep.subr.mxu0 0.0
    %2048 = vmatpush1.msra.mxu0 0.0
    %2049 = vmatprep.subr.mxu0 0.0
    %2050 = vmatpush1.msra.mxu0 0.0
    %2051 = vmatprep.subr.mxu0 0.0
    %2052 = vmatpush1.msra.mxu0 0.0
    %2053 = vmatprep.subr.mxu0 0.0
    %2054 = vmatpush1.msra.mxu0 0.0
    %2055 = vmatprep.subr.mxu0 0.0
    %2056 = vmatpush1.msra.mxu0 0.0
    %2057 = vmatprep.subr.mxu0 0.0
    %2058 = vmatpush1.msra.mxu0 0.0
    %2059 = vmatprep.subr.mxu0 0.0
    %2060 = vmatpush1.msra.mxu0 0.0
    %2061 = vmatprep.subr.mxu0 0.0
    %2062 = vmatpush1.msra.mxu0 0.0
    %2063 = vmatprep.subr.mxu0 0.0
    %2064 = vmatpush1.msra.mxu0 0.0
    %2065 = vmatprep.subr.mxu0 0.0
    %2066 = vmatpush1.msra.mxu0 0.0
    %2067 = vmatprep.subr.mxu0 0.0
    %2068 = vmatpush1.msra.mxu0 0.0
    %2069 = vmatprep.subr.mxu0 0.0
    %2070 = vmatpush1.msra.mxu0 0.0
    %2071 = vmatprep.subr.mxu0 0.0
    %2072 = vmatpush1.msra.mxu0 0.0
    %2073 = vmatprep.subr.mxu0 0.0
    %2074 = vmatpush1.msra.mxu0 0.0
    %2075 = vmatprep.subr.mxu0 0.0
    %2076 = vmatpush1.msra.mxu0 0.0
    %2077 = vmatprep.subr.mxu0 0.0
    %2078 = vmatpush1.msra.mxu0 0.0
    %2079 = vmatprep.subr.mxu0 0.0
    %2080 = vmatpush1.msra.mxu0 0.0
    %2081 = vmatprep.subr.mxu0 0.0
    %2082 = vmatpush1.msra.mxu0 0.0
    %2083 = vmatprep.mubr.f32.mxu0 0.0
    %2084 = vmatmul.mubr.f32.gmra.mrb[0].mxu0 %v2017
    %v2085 = vpop.f32.mrb[0].mxu0
    %v2086 = vadd.f32 0.0, %v2085
    %v2087 = vpop.f32.mrb[0].mxu0
    %2088 = vdwg.mxu0
    %2089 = vmatprep.subr.mxu0 0.0
    %2090 = vmatpush1.msra.mxu0 %v59
    %2091 = vmatprep.subr.mxu0 0.0
    %2092 = vmatpush1.msra.mxu0 %v60
    %2093 = vmatprep.subr.mxu0 0.0
    %2094 = vmatpush1.msra.mxu0 %v61
    %2095 = vmatprep.subr.mxu0 0.0
    %2096 = vmatpush1.msra.mxu0 %v62
    %2097 = vmatprep.subr.mxu0 0.0
    %2098 = vmatpush1.msra.mxu0 0.0
    %2099 = vmatprep.subr.mxu0 0.0
    %2100 = vmatpush1.msra.mxu0 0.0
    %2101 = vmatprep.subr.mxu0 0.0
    %2102 = vmatpush1.msra.mxu0 0.0
    %2103 = vmatprep.subr.mxu0 0.0
    %2104 = vmatpush1.msra.mxu0 0.0
    %2105 = vmatprep.subr.mxu0 0.0
    %2106 = vmatpush1.msra.mxu0 0.0
    %2107 = vmatprep.subr.mxu0 0.0
    %2108 = vmatpush1.msra.mxu0 0.0
    %2109 = vmatprep.subr.mxu0 0.0
    %2110 = vmatpush1.msra.mxu0 0.0
    %2111 = vmatprep.subr.mxu0 0.0
    %2112 = vmatpush1.msra.mxu0 0.0
    %2113 = vmatprep.subr.mxu0 0.0
    %2114 = vmatpush1.msra.mxu0 0.0
    %2115 = vmatprep.subr.mxu0 0.0
    %2116 = vmatpush1.msra.mxu0 0.0
    %2117 = vmatprep.subr.mxu0 0.0
    %2118 = vmatpush1.msra.mxu0 0.0
    %2119 = vmatprep.subr.mxu0 0.0
    %2120 = vmatpush1.msra.mxu0 0.0
    %2121 = vmatprep.subr.mxu0 0.0
    %2122 = vmatpush1.msra.mxu0 0.0
    %2123 = vmatprep.subr.mxu0 0.0
    %2124 = vmatpush1.msra.mxu0 0.0
    %2125 = vmatprep.subr.mxu0 0.0
    %2126 = vmatpush1.msra.mxu0 0.0
    %2127 = vmatprep.subr.mxu0 0.0
    %2128 = vmatpush1.msra.mxu0 0.0
    %2129 = vmatprep.subr.mxu0 0.0
    %2130 = vmatpush1.msra.mxu0 0.0
    %2131 = vmatprep.subr.mxu0 0.0
    %2132 = vmatpush1.msra.mxu0 0.0
    %2133 = vmatprep.subr.mxu0 0.0
    %2134 = vmatpush1.msra.mxu0 0.0
    %2135 = vmatprep.subr.mxu0 0.0
    %2136 = vmatpush1.msra.mxu0 0.0
    %2137 = vmatprep.subr.mxu0 0.0
    %2138 = vmatpush1.msra.mxu0 0.0
    %2139 = vmatprep.subr.mxu0 0.0
    %2140 = vmatpush1.msra.mxu0 0.0
    %2141 = vmatprep.subr.mxu0 0.0
    %2142 = vmatpush1.msra.mxu0 0.0
    %2143 = vmatprep.subr.mxu0 0.0
    %2144 = vmatpush1.msra.mxu0 0.0
    %2145 = vmatprep.subr.mxu0 0.0
    %2146 = vmatpush1.msra.mxu0 0.0
    %2147 = vmatprep.subr.mxu0 0.0
    %2148 = vmatpush1.msra.mxu0 0.0
    %2149 = vmatprep.subr.mxu0 0.0
    %2150 = vmatpush1.msra.mxu0 0.0
    %2151 = vmatprep.subr.mxu0 0.0
    %2152 = vmatpush1.msra.mxu0 0.0
    %2153 = vmatprep.mubr.f32.mxu0 0.0
    %2154 = vmatmul.mubr.f32.gmra.mrb[0].mxu0 %v2017
    %v2155 = vpop.f32.mrb[0].mxu0
    %v2156 = vadd.f32 0.0, %v2155
    %v2157 = vpop.f32.mrb[0].mxu0
    %2158 = vdwg.mxu0
    %2160 = vrot.lane.b32.xlu0 %v2086, 96
    %v2161 = vpop.permute.xlu0 %2160
    %v2163 = vadd.f32 %v207, %v2161
    %v2164 = vxor.u32 %v2163, 2147483648
    %v2165 = vmul.f32 %v2164, 1.442695
    %v2166 = vpow.pop %v2165
    %v2167 = vadd.f32 %v2166, 1.0
    %v2168 = vrcp.pop %v2167
    %v2169 = vmul.f32 1.0, %v2168
    %v2170 = vadd.f32 %v209, %v2156
    %v2171 = vxor.u32 %v2170, 2147483648
    %v2172 = vmul.f32 %v2171, 1.442695
    %v2173 = vpow.pop %v2172
    %v2174 = vadd.f32 %v2173, 1.0
    %v2175 = vrcp.pop %v2174
    %v2176 = vmul.f32 1.0, %v2175
    %2177 = vmatprep.subr.mxu0 0.0
    %2178 = vmatpush1.msra.mxu0 %v64
    %2179 = vmatprep.subr.mxu0 0.0
    %2180 = vmatpush1.msra.mxu0 %v65
    %2181 = vmatprep.subr.mxu0 0.0
    %2182 = vmatpush1.msra.mxu0 %v66
    %2183 = vmatprep.subr.mxu0 0.0
    %2184 = vmatpush1.msra.mxu0 %v67
    %2185 = vmatprep.subr.mxu0 0.0
    %2186 = vmatpush1.msra.mxu0 0.0
    %2187 = vmatprep.subr.mxu0 0.0
    %2188 = vmatpush1.msra.mxu0 0.0
    %2189 = vmatprep.subr.mxu0 0.0
    %2190 = vmatpush1.msra.mxu0 0.0
    %2191 = vmatprep.subr.mxu0 0.0
    %2192 = vmatpush1.msra.mxu0 0.0
    %2193 = vmatprep.subr.mxu0 0.0
    %2194 = vmatpush1.msra.mxu0 0.0
    %2195 = vmatprep.subr.mxu0 0.0
    %2196 = vmatpush1.msra.mxu0 0.0
    %2197 = vmatprep.subr.mxu0 0.0
    %2198 = vmatpush1.msra.mxu0 0.0
    %2199 = vmatprep.subr.mxu0 0.0
    %2200 = vmatpush1.msra.mxu0 0.0
    %2201 = vmatprep.subr.mxu0 0.0
    %2202 = vmatpush1.msra.mxu0 0.0
    %2203 = vmatprep.subr.mxu0 0.0
    %2204 = vmatpush1.msra.mxu0 0.0
    %2205 = vmatprep.subr.mxu0 0.0
    %2206 = vmatpush1.msra.mxu0 0.0
    %2207 = vmatprep.subr.mxu0 0.0
    %2208 = vmatpush1.msra.mxu0 0.0
    %2209 = vmatprep.subr.mxu0 0.0
    %2210 = vmatpush1.msra.mxu0 0.0
    %2211 = vmatprep.subr.mxu0 0.0
    %2212 = vmatpush1.msra.mxu0 0.0
    %2213 = vmatprep.subr.mxu0 0.0
    %2214 = vmatpush1.msra.mxu0 0.0
    %2215 = vmatprep.subr.mxu0 0.0
    %2216 = vmatpush1.msra.mxu0 0.0
    %2217 = vmatprep.subr.mxu0 0.0
    %2218 = vmatpush1.msra.mxu0 0.0
    %2219 = vmatprep.subr.mxu0 0.0
    %2220 = vmatpush1.msra.mxu0 0.0
    %2221 = vmatprep.subr.mxu0 0.0
    %2222 = vmatpush1.msra.mxu0 0.0
    %2223 = vmatprep.subr.mxu0 0.0
    %2224 = vmatpush1.msra.mxu0 0.0
    %2225 = vmatprep.subr.mxu0 0.0
    %2226 = vmatpush1.msra.mxu0 0.0
    %2227 = vmatprep.subr.mxu0 0.0
    %2228 = vmatpush1.msra.mxu0 0.0
    %2229 = vmatprep.subr.mxu0 0.0
    %2230 = vmatpush1.msra.mxu0 0.0
    %2231 = vmatprep.subr.mxu0 0.0
    %2232 = vmatpush1.msra.mxu0 0.0
    %2233 = vmatprep.subr.mxu0 0.0
    %2234 = vmatpush1.msra.mxu0 0.0
    %2235 = vmatprep.subr.mxu0 0.0
    %2236 = vmatpush1.msra.mxu0 0.0
    %2237 = vmatprep.subr.mxu0 0.0
    %2238 = vmatpush1.msra.mxu0 0.0
    %2239 = vmatprep.subr.mxu0 0.0
    %2240 = vmatpush1.msra.mxu0 0.0
    %2241 = vmatprep.mubr.f32.mxu0 0.0
    %2242 = vmatmul.mubr.f32.gmra.mrb[0].mxu0 %v2017
    %v2243 = vpop.f32.mrb[0].mxu0
    %v2244 = vadd.f32 %v100, %v2243
    %v2245 = vpop.f32.mrb[0].mxu0
    %2246 = vdwg.mxu0
    %2248 = vrot.lane.b32.xlu0 %v2244, 96
    %v2249 = vpop.permute.xlu0 %2248
    %v2251 = vmul.f32 %v2169, %v2249
    %2253 = vrot.lane.b32.xlu0 %v2251, 64
    %v2254 = vpop.permute.xlu0 %2253
    %v2256 = vadd.f32 %v209, %v2254
    %v2257 = vtanh.pop %v2256
    %v2258 = vsub.f32 1.0, %v2176
    %2260 = vrot.lane.b32.xlu0 %v2257, 96
    %v2261 = vpop.permute.xlu0 %2260
    %v2263 = vmul.f32 %v2258, %v2261
    %v2265 = vmul.f32 %v2176, %v2016
    %v2266 = vadd.f32 %v2263, %v2265
    %2268 = vrot.lane.b32.xlu0 %v2014, 96
    %v2269 = vpop.permute.xlu0 %2268
    %2271 = vst.msk [vmem:[#allocation2] sm:$0xc0] %vm715, %v2269
    %2272 = vst.msk [vmem:[#allocation3 + $0x8] sm:$0x3] %vm713, %v2266
    %v2273 = vrot.slane %v2014, 6
    %2274 = vrot.lane.b32.xlu0 %v2273, 96
    %v2275 = vpop.permute.xlu0 %2274
    %v2276 = vsel %vm127, %v2275, 0
    %2278 = vmatprep.subr.mxu0 0.0
    %2279 = vmatpush1.msra.mxu0 %v39
    %2280 = vmatprep.subr.mxu0 0.0
    %2281 = vmatpush1.msra.mxu0 %v40
    %2282 = vmatprep.subr.mxu0 0.0
    %2283 = vmatpush1.msra.mxu0 %v41
    %2284 = vmatprep.subr.mxu0 0.0
    %2285 = vmatpush1.msra.mxu0 %v42
    %2286 = vmatprep.subr.mxu0 0.0
    %2287 = vmatpush1.msra.mxu0 0.0
    %2288 = vmatprep.subr.mxu0 0.0
    %2289 = vmatpush1.msra.mxu0 0.0
    %2290 = vmatprep.subr.mxu0 0.0
    %2291 = vmatpush1.msra.mxu0 0.0
    %2292 = vmatprep.subr.mxu0 0.0
    %2293 = vmatpush1.msra.mxu0 0.0
    %2294 = vmatprep.subr.mxu0 0.0
    %2295 = vmatpush1.msra.mxu0 0.0
    %2296 = vmatprep.subr.mxu0 0.0
    %2297 = vmatpush1.msra.mxu0 0.0
    %2298 = vmatprep.subr.mxu0 0.0
    %2299 = vmatpush1.msra.mxu0 0.0
    %2300 = vmatprep.subr.mxu0 0.0
    %2301 = vmatpush1.msra.mxu0 0.0
    %2302 = vmatprep.subr.mxu0 0.0
    %2303 = vmatpush1.msra.mxu0 0.0
    %2304 = vmatprep.subr.mxu0 0.0
    %2305 = vmatpush1.msra.mxu0 0.0
    %2306 = vmatprep.subr.mxu0 0.0
    %2307 = vmatpush1.msra.mxu0 0.0
    %2308 = vmatprep.subr.mxu0 0.0
    %2309 = vmatpush1.msra.mxu0 0.0
    %2310 = vmatprep.subr.mxu0 0.0
    %2311 = vmatpush1.msra.mxu0 0.0
    %2312 = vmatprep.subr.mxu0 0.0
    %2313 = vmatpush1.msra.mxu0 0.0
    %2314 = vmatprep.subr.mxu0 0.0
    %2315 = vmatpush1.msra.mxu0 0.0
    %2316 = vmatprep.subr.mxu0 0.0
    %2317 = vmatpush1.msra.mxu0 0.0
    %2318 = vmatprep.subr.mxu0 0.0
    %2319 = vmatpush1.msra.mxu0 0.0
    %2320 = vmatprep.subr.mxu0 0.0
    %2321 = vmatpush1.msra.mxu0 0.0
    %2322 = vmatprep.subr.mxu0 0.0
    %2323 = vmatpush1.msra.mxu0 0.0
    %2324 = vmatprep.subr.mxu0 0.0
    %2325 = vmatpush1.msra.mxu0 0.0
    %2326 = vmatprep.subr.mxu0 0.0
    %2327 = vmatpush1.msra.mxu0 0.0
    %2328 = vmatprep.subr.mxu0 0.0
    %2329 = vmatpush1.msra.mxu0 0.0
    %2330 = vmatprep.subr.mxu0 0.0
    %2331 = vmatpush1.msra.mxu0 0.0
    %2332 = vmatprep.subr.mxu0 0.0
    %2333 = vmatpush1.msra.mxu0 0.0
    %2334 = vmatprep.subr.mxu0 0.0
    %2335 = vmatpush1.msra.mxu0 0.0
    %2336 = vmatprep.subr.mxu0 0.0
    %2337 = vmatpush1.msra.mxu0 0.0
    %2338 = vmatprep.subr.mxu0 0.0
    %2339 = vmatpush1.msra.mxu0 0.0
    %2340 = vmatprep.subr.mxu0 0.0
    %2341 = vmatpush1.msra.mxu0 0.0
    %2342 = vmatprep.mubr.f32.mxu0 0.0
    %2343 = vmatmul.mubr.f32.gmra.mrb[0].mxu0 %v2276
    %v2344 = vpop.f32.mrb[0].mxu0
    %v2345 = vadd.f32 0.0, %v2344
    %v2346 = vpop.f32.mrb[0].mxu0
    %2347 = vdwg.mxu0
    %2348 = vmatprep.subr.mxu0 0.0
    %2349 = vmatpush1.msra.mxu0 %v44
    %2350 = vmatprep.subr.mxu0 0.0
    %2351 = vmatpush1.msra.mxu0 %v45
    %2352 = vmatprep.subr.mxu0 0.0
    %2353 = vmatpush1.msra.mxu0 %v46
    %2354 = vmatprep.subr.mxu0 0.0
    %2355 = vmatpush1.msra.mxu0 %v47
    %2356 = vmatprep.subr.mxu0 0.0
    %2357 = vmatpush1.msra.mxu0 0.0
    %2358 = vmatprep.subr.mxu0 0.0
    %2359 = vmatpush1.msra.mxu0 0.0
    %2360 = vmatprep.subr.mxu0 0.0
    %2361 = vmatpush1.msra.mxu0 0.0
    %2362 = vmatprep.subr.mxu0 0.0
    %2363 = vmatpush1.msra.mxu0 0.0
    %2364 = vmatprep.subr.mxu0 0.0
    %2365 = vmatpush1.msra.mxu0 0.0
    %2366 = vmatprep.subr.mxu0 0.0
    %2367 = vmatpush1.msra.mxu0 0.0
    %2368 = vmatprep.subr.mxu0 0.0
    %2369 = vmatpush1.msra.mxu0 0.0
    %2370 = vmatprep.subr.mxu0 0.0
    %2371 = vmatpush1.msra.mxu0 0.0
    %2372 = vmatprep.subr.mxu0 0.0
    %2373 = vmatpush1.msra.mxu0 0.0
    %2374 = vmatprep.subr.mxu0 0.0
    %2375 = vmatpush1.msra.mxu0 0.0
    %2376 = vmatprep.subr.mxu0 0.0
    %2377 = vmatpush1.msra.mxu0 0.0
    %2378 = vmatprep.subr.mxu0 0.0
    %2379 = vmatpush1.msra.mxu0 0.0
    %2380 = vmatprep.subr.mxu0 0.0
    %2381 = vmatpush1.msra.mxu0 0.0
    %2382 = vmatprep.subr.mxu0 0.0
    %2383 = vmatpush1.msra.mxu0 0.0
    %2384 = vmatprep.subr.mxu0 0.0
    %2385 = vmatpush1.msra.mxu0 0.0
    %2386 = vmatprep.subr.mxu0 0.0
    %2387 = vmatpush1.msra.mxu0 0.0
    %2388 = vmatprep.subr.mxu0 0.0
    %2389 = vmatpush1.msra.mxu0 0.0
    %2390 = vmatprep.subr.mxu0 0.0
    %2391 = vmatpush1.msra.mxu0 0.0
    %2392 = vmatprep.subr.mxu0 0.0
    %2393 = vmatpush1.msra.mxu0 0.0
    %2394 = vmatprep.subr.mxu0 0.0
    %2395 = vmatpush1.msra.mxu0 0.0
    %2396 = vmatprep.subr.mxu0 0.0
    %2397 = vmatpush1.msra.mxu0 0.0
    %2398 = vmatprep.subr.mxu0 0.0
    %2399 = vmatpush1.msra.mxu0 0.0
    %2400 = vmatprep.subr.mxu0 0.0
    %2401 = vmatpush1.msra.mxu0 0.0
    %2402 = vmatprep.subr.mxu0 0.0
    %2403 = vmatpush1.msra.mxu0 0.0
    %2404 = vmatprep.subr.mxu0 0.0
    %2405 = vmatpush1.msra.mxu0 0.0
    %2406 = vmatprep.subr.mxu0 0.0
    %2407 = vmatpush1.msra.mxu0 0.0
    %2408 = vmatprep.subr.mxu0 0.0
    %2409 = vmatpush1.msra.mxu0 0.0
    %2410 = vmatprep.subr.mxu0 0.0
    %2411 = vmatpush1.msra.mxu0 0.0
    %2412 = vmatprep.mubr.f32.mxu0 0.0
    %2413 = vmatmul.mubr.f32.gmra.mrb[0].mxu0 %v2276
    %v2414 = vpop.f32.mrb[0].mxu0
    %v2415 = vadd.f32 0.0, %v2414
    %v2416 = vpop.f32.mrb[0].mxu0
    %2417 = vdwg.mxu0
    %v2418 = vadd.f32 %v207, %v2345
    %v2419 = vxor.u32 %v2418, 2147483648
    %v2420 = vmul.f32 %v2419, 1.442695
    %v2421 = vpow.pop %v2420
    %v2422 = vadd.f32 %v2421, 1.0
    %v2423 = vrcp.pop %v2422
    %v2424 = vmul.f32 1.0, %v2423
    %2426 = vrot.lane.b32.xlu0 %v2415, 32
    %v2427 = vpop.permute.xlu0 %2426
    %v2429 = vadd.f32 %v207, %v2427
    %v2430 = vxor.u32 %v2429, 2147483648
    %v2431 = vmul.f32 %v2430, 1.442695
    %v2432 = vpow.pop %v2431
    %v2433 = vadd.f32 %v2432, 1.0
    %v2434 = vrcp.pop %v2433
    %v2435 = vmul.f32 1.0, %v2434
    %2436 = vmatprep.subr.mxu0 0.0
    %2437 = vmatpush1.msra.mxu0 %v49
    %2438 = vmatprep.subr.mxu0 0.0
    %2439 = vmatpush1.msra.mxu0 %v50
    %2440 = vmatprep.subr.mxu0 0.0
    %2441 = vmatpush1.msra.mxu0 %v51
    %2442 = vmatprep.subr.mxu0 0.0
    %2443 = vmatpush1.msra.mxu0 %v52
    %2444 = vmatprep.subr.mxu0 0.0
    %2445 = vmatpush1.msra.mxu0 0.0
    %2446 = vmatprep.subr.mxu0 0.0
    %2447 = vmatpush1.msra.mxu0 0.0
    %2448 = vmatprep.subr.mxu0 0.0
    %2449 = vmatpush1.msra.mxu0 0.0
    %2450 = vmatprep.subr.mxu0 0.0
    %2451 = vmatpush1.msra.mxu0 0.0
    %2452 = vmatprep.subr.mxu0 0.0
    %2453 = vmatpush1.msra.mxu0 0.0
    %2454 = vmatprep.subr.mxu0 0.0
    %2455 = vmatpush1.msra.mxu0 0.0
    %2456 = vmatprep.subr.mxu0 0.0
    %2457 = vmatpush1.msra.mxu0 0.0
    %2458 = vmatprep.subr.mxu0 0.0
    %2459 = vmatpush1.msra.mxu0 0.0
    %2460 = vmatprep.subr.mxu0 0.0
    %2461 = vmatpush1.msra.mxu0 0.0
    %2462 = vmatprep.subr.mxu0 0.0
    %2463 = vmatpush1.msra.mxu0 0.0
    %2464 = vmatprep.subr.mxu0 0.0
    %2465 = vmatpush1.msra.mxu0 0.0
    %2466 = vmatprep.subr.mxu0 0.0
    %2467 = vmatpush1.msra.mxu0 0.0
    %2468 = vmatprep.subr.mxu0 0.0
    %2469 = vmatpush1.msra.mxu0 0.0
    %2470 = vmatprep.subr.mxu0 0.0
    %2471 = vmatpush1.msra.mxu0 0.0
    %2472 = vmatprep.subr.mxu0 0.0
    %2473 = vmatpush1.msra.mxu0 0.0
    %2474 = vmatprep.subr.mxu0 0.0
    %2475 = vmatpush1.msra.mxu0 0.0
    %2476 = vmatprep.subr.mxu0 0.0
    %2477 = vmatpush1.msra.mxu0 0.0
    %2478 = vmatprep.subr.mxu0 0.0
    %2479 = vmatpush1.msra.mxu0 0.0
    %2480 = vmatprep.subr.mxu0 0.0
    %2481 = vmatpush1.msra.mxu0 0.0
    %2482 = vmatprep.subr.mxu0 0.0
    %2483 = vmatpush1.msra.mxu0 0.0
    %2484 = vmatprep.subr.mxu0 0.0
    %2485 = vmatpush1.msra.mxu0 0.0
    %2486 = vmatprep.subr.mxu0 0.0
    %2487 = vmatpush1.msra.mxu0 0.0
    %2488 = vmatprep.subr.mxu0 0.0
    %2489 = vmatpush1.msra.mxu0 0.0
    %2490 = vmatprep.subr.mxu0 0.0
    %2491 = vmatpush1.msra.mxu0 0.0
    %2492 = vmatprep.subr.mxu0 0.0
    %2493 = vmatpush1.msra.mxu0 0.0
    %2494 = vmatprep.subr.mxu0 0.0
    %2495 = vmatpush1.msra.mxu0 0.0
    %2496 = vmatprep.subr.mxu0 0.0
    %2497 = vmatpush1.msra.mxu0 0.0
    %2498 = vmatprep.subr.mxu0 0.0
    %2499 = vmatpush1.msra.mxu0 0.0
    %2500 = vmatprep.mubr.f32.mxu0 0.0
    %2501 = vmatmul.mubr.f32.gmra.mrb[0].mxu0 %v2276
    %v2502 = vpop.f32.mrb[0].mxu0
    %v2503 = vadd.f32 %v98, %v2502
    %v2504 = vpop.f32.mrb[0].mxu0
    %2505 = vdwg.mxu0
    %v2506 = vmul.f32 %v2424, %v2503
    %2508 = vrot.lane.b32.xlu0 %v2506, 64
    %v2509 = vpop.permute.xlu0 %2508
    %v2511 = vadd.f32 %v207, %v2509
    %v2512 = vtanh.pop %v2511
    %v2513 = vsub.f32 1.0, %v2435
    %2515 = vrot.lane.b32.xlu0 %v2512, 96
    %v2516 = vpop.permute.xlu0 %2515
    %v2518 = vmul.f32 %v2513, %v2516
    %v2520 = vmul.f32 %v2435, %v2273
    %v2521 = vadd.f32 %v2518, %v2520
    %v2523 = vsel %vm127, %v2266, 0
    %2525 = vmatprep.subr.mxu0 0.0
    %2526 = vmatpush1.msra.mxu0 %v54
    %2527 = vmatprep.subr.mxu0 0.0
    %2528 = vmatpush1.msra.mxu0 %v55
    %2529 = vmatprep.subr.mxu0 0.0
    %2530 = vmatpush1.msra.mxu0 %v56
    %2531 = vmatprep.subr.mxu0 0.0
    %2532 = vmatpush1.msra.mxu0 %v57
    %2533 = vmatprep.subr.mxu0 0.0
    %2534 = vmatpush1.msra.mxu0 0.0
    %2535 = vmatprep.subr.mxu0 0.0
    %2536 = vmatpush1.msra.mxu0 0.0
    %2537 = vmatprep.subr.mxu0 0.0
    %2538 = vmatpush1.msra.mxu0 0.0
    %2539 = vmatprep.subr.mxu0 0.0
    %2540 = vmatpush1.msra.mxu0 0.0
    %2541 = vmatprep.subr.mxu0 0.0
    %2542 = vmatpush1.msra.mxu0 0.0
    %2543 = vmatprep.subr.mxu0 0.0
    %2544 = vmatpush1.msra.mxu0 0.0
    %2545 = vmatprep.subr.mxu0 0.0
    %2546 = vmatpush1.msra.mxu0 0.0
    %2547 = vmatprep.subr.mxu0 0.0
    %2548 = vmatpush1.msra.mxu0 0.0
    %2549 = vmatprep.subr.mxu0 0.0
    %2550 = vmatpush1.msra.mxu0 0.0
    %2551 = vmatprep.subr.mxu0 0.0
    %2552 = vmatpush1.msra.mxu0 0.0
    %2553 = vmatprep.subr.mxu0 0.0
    %2554 = vmatpush1.msra.mxu0 0.0
    %2555 = vmatprep.subr.mxu0 0.0
    %2556 = vmatpush1.msra.mxu0 0.0
    %2557 = vmatprep.subr.mxu0 0.0
    %2558 = vmatpush1.msra.mxu0 0.0
    %2559 = vmatprep.subr.mxu0 0.0
    %2560 = vmatpush1.msra.mxu0 0.0
    %2561 = vmatprep.subr.mxu0 0.0
    %2562 = vmatpush1.msra.mxu0 0.0
    %2563 = vmatprep.subr.mxu0 0.0
    %2564 = vmatpush1.msra.mxu0 0.0
    %2565 = vmatprep.subr.mxu0 0.0
    %2566 = vmatpush1.msra.mxu0 0.0
    %2567 = vmatprep.subr.mxu0 0.0
    %2568 = vmatpush1.msra.mxu0 0.0
    %2569 = vmatprep.subr.mxu0 0.0
    %2570 = vmatpush1.msra.mxu0 0.0
    %2571 = vmatprep.subr.mxu0 0.0
    %2572 = vmatpush1.msra.mxu0 0.0
    %2573 = vmatprep.subr.mxu0 0.0
    %2574 = vmatpush1.msra.mxu0 0.0
    %2575 = vmatprep.subr.mxu0 0.0
    %2576 = vmatpush1.msra.mxu0 0.0
    %2577 = vmatprep.subr.mxu0 0.0
    %2578 = vmatpush1.msra.mxu0 0.0
    %2579 = vmatprep.subr.mxu0 0.0
    %2580 = vmatpush1.msra.mxu0 0.0
    %2581 = vmatprep.subr.mxu0 0.0
    %2582 = vmatpush1.msra.mxu0 0.0
    %2583 = vmatprep.subr.mxu0 0.0
    %2584 = vmatpush1.msra.mxu0 0.0
    %2585 = vmatprep.subr.mxu0 0.0
    %2586 = vmatpush1.msra.mxu0 0.0
    %2587 = vmatprep.subr.mxu0 0.0
    %2588 = vmatpush1.msra.mxu0 0.0
    %2589 = vmatprep.mubr.f32.mxu0 0.0
    %2590 = vmatmul.mubr.f32.gmra.mrb[0].mxu0 %v2523
    %v2591 = vpop.f32.mrb[0].mxu0
    %v2592 = vadd.f32 0.0, %v2591
    %v2593 = vpop.f32.mrb[0].mxu0
    %2594 = vdwg.mxu0
    %2595 = vmatprep.subr.mxu0 0.0
    %2596 = vmatpush1.msra.mxu0 %v59
    %2597 = vmatprep.subr.mxu0 0.0
    %2598 = vmatpush1.msra.mxu0 %v60
    %2599 = vmatprep.subr.mxu0 0.0
    %2600 = vmatpush1.msra.mxu0 %v61
    %2601 = vmatprep.subr.mxu0 0.0
    %2602 = vmatpush1.msra.mxu0 %v62
    %2603 = vmatprep.subr.mxu0 0.0
    %2604 = vmatpush1.msra.mxu0 0.0
    %2605 = vmatprep.subr.mxu0 0.0
    %2606 = vmatpush1.msra.mxu0 0.0
    %2607 = vmatprep.subr.mxu0 0.0
    %2608 = vmatpush1.msra.mxu0 0.0
    %2609 = vmatprep.subr.mxu0 0.0
    %2610 = vmatpush1.msra.mxu0 0.0
    %2611 = vmatprep.subr.mxu0 0.0
    %2612 = vmatpush1.msra.mxu0 0.0
    %2613 = vmatprep.subr.mxu0 0.0
    %2614 = vmatpush1.msra.mxu0 0.0
    %2615 = vmatprep.subr.mxu0 0.0
    %2616 = vmatpush1.msra.mxu0 0.0
    %2617 = vmatprep.subr.mxu0 0.0
    %2618 = vmatpush1.msra.mxu0 0.0
    %2619 = vmatprep.subr.mxu0 0.0
    %2620 = vmatpush1.msra.mxu0 0.0
    %2621 = vmatprep.subr.mxu0 0.0
    %2622 = vmatpush1.msra.mxu0 0.0
    %2623 = vmatprep.subr.mxu0 0.0
    %2624 = vmatpush1.msra.mxu0 0.0
    %2625 = vmatprep.subr.mxu0 0.0
    %2626 = vmatpush1.msra.mxu0 0.0
    %2627 = vmatprep.subr.mxu0 0.0
    %2628 = vmatpush1.msra.mxu0 0.0
    %2629 = vmatprep.subr.mxu0 0.0
    %2630 = vmatpush1.msra.mxu0 0.0
    %2631 = vmatprep.subr.mxu0 0.0
    %2632 = vmatpush1.msra.mxu0 0.0
    %2633 = vmatprep.subr.mxu0 0.0
    %2634 = vmatpush1.msra.mxu0 0.0
    %2635 = vmatprep.subr.mxu0 0.0
    %2636 = vmatpush1.msra.mxu0 0.0
    %2637 = vmatprep.subr.mxu0 0.0
    %2638 = vmatpush1.msra.mxu0 0.0
    %2639 = vmatprep.subr.mxu0 0.0
    %2640 = vmatpush1.msra.mxu0 0.0
    %2641 = vmatprep.subr.mxu0 0.0
    %2642 = vmatpush1.msra.mxu0 0.0
    %2643 = vmatprep.subr.mxu0 0.0
    %2644 = vmatpush1.msra.mxu0 0.0
    %2645 = vmatprep.subr.mxu0 0.0
    %2646 = vmatpush1.msra.mxu0 0.0
    %2647 = vmatprep.subr.mxu0 0.0
    %2648 = vmatpush1.msra.mxu0 0.0
    %2649 = vmatprep.subr.mxu0 0.0
    %2650 = vmatpush1.msra.mxu0 0.0
    %2651 = vmatprep.subr.mxu0 0.0
    %2652 = vmatpush1.msra.mxu0 0.0
    %2653 = vmatprep.subr.mxu0 0.0
    %2654 = vmatpush1.msra.mxu0 0.0
    %2655 = vmatprep.subr.mxu0 0.0
    %2656 = vmatpush1.msra.mxu0 0.0
    %2657 = vmatprep.subr.mxu0 0.0
    %2658 = vmatpush1.msra.mxu0 0.0
    %2659 = vmatprep.mubr.f32.mxu0 0.0
    %2660 = vmatmul.mubr.f32.gmra.mrb[0].mxu0 %v2523
    %v2661 = vpop.f32.mrb[0].mxu0
    %v2662 = vadd.f32 0.0, %v2661
    %v2663 = vpop.f32.mrb[0].mxu0
    %2664 = vdwg.mxu0
    %v2666 = vrot.slane %v2592, 2
    %2667 = vrot.lane.b32.xlu0 %v2666, 96
    %v2668 = vpop.permute.xlu0 %2667
    %v2670 = vadd.f32 %v201, %v2668
    %v2671 = vxor.u32 %v2670, 2147483648
    %v2672 = vmul.f32 %v2671, 1.442695
    %v2673 = vpow.pop %v2672
    %v2674 = vadd.f32 %v2673, 1.0
    %v2675 = vrcp.pop %v2674
    %v2676 = vmul.f32 1.0, %v2675
    %v2678 = vrot.slane %v2662, 2
    %v2680 = vadd.f32 %v203, %v2678
    %v2681 = vxor.u32 %v2680, 2147483648
    %v2682 = vmul.f32 %v2681, 1.442695
    %v2683 = vpow.pop %v2682
    %v2684 = vadd.f32 %v2683, 1.0
    %v2685 = vrcp.pop %v2684
    %v2686 = vmul.f32 1.0, %v2685
    %2687 = vmatprep.subr.mxu0 0.0
    %2688 = vmatpush1.msra.mxu0 %v64
    %2689 = vmatprep.subr.mxu0 0.0
    %2690 = vmatpush1.msra.mxu0 %v65
    %2691 = vmatprep.subr.mxu0 0.0
    %2692 = vmatpush1.msra.mxu0 %v66
    %2693 = vmatprep.subr.mxu0 0.0
    %2694 = vmatpush1.msra.mxu0 %v67
    %2695 = vmatprep.subr.mxu0 0.0
    %2696 = vmatpush1.msra.mxu0 0.0
    %2697 = vmatprep.subr.mxu0 0.0
    %2698 = vmatpush1.msra.mxu0 0.0
    %2699 = vmatprep.subr.mxu0 0.0
    %2700 = vmatpush1.msra.mxu0 0.0
    %2701 = vmatprep.subr.mxu0 0.0
    %2702 = vmatpush1.msra.mxu0 0.0
    %2703 = vmatprep.subr.mxu0 0.0
    %2704 = vmatpush1.msra.mxu0 0.0
    %2705 = vmatprep.subr.mxu0 0.0
    %2706 = vmatpush1.msra.mxu0 0.0
    %2707 = vmatprep.subr.mxu0 0.0
    %2708 = vmatpush1.msra.mxu0 0.0
    %2709 = vmatprep.subr.mxu0 0.0
    %2710 = vmatpush1.msra.mxu0 0.0
    %2711 = vmatprep.subr.mxu0 0.0
    %2712 = vmatpush1.msra.mxu0 0.0
    %2713 = vmatprep.subr.mxu0 0.0
    %2714 = vmatpush1.msra.mxu0 0.0
    %2715 = vmatprep.subr.mxu0 0.0
    %2716 = vmatpush1.msra.mxu0 0.0
    %2717 = vmatprep.subr.mxu0 0.0
    %2718 = vmatpush1.msra.mxu0 0.0
    %2719 = vmatprep.subr.mxu0 0.0
    %2720 = vmatpush1.msra.mxu0 0.0
    %2721 = vmatprep.subr.mxu0 0.0
    %2722 = vmatpush1.msra.mxu0 0.0
    %2723 = vmatprep.subr.mxu0 0.0
    %2724 = vmatpush1.msra.mxu0 0.0
    %2725 = vmatprep.subr.mxu0 0.0
    %2726 = vmatpush1.msra.mxu0 0.0
    %2727 = vmatprep.subr.mxu0 0.0
    %2728 = vmatpush1.msra.mxu0 0.0
    %2729 = vmatprep.subr.mxu0 0.0
    %2730 = vmatpush1.msra.mxu0 0.0
    %2731 = vmatprep.subr.mxu0 0.0
    %2732 = vmatpush1.msra.mxu0 0.0
    %2733 = vmatprep.subr.mxu0 0.0
    %2734 = vmatpush1.msra.mxu0 0.0
    %2735 = vmatprep.subr.mxu0 0.0
    %2736 = vmatpush1.msra.mxu0 0.0
    %2737 = vmatprep.subr.mxu0 0.0
    %2738 = vmatpush1.msra.mxu0 0.0
    %2739 = vmatprep.subr.mxu0 0.0
    %2740 = vmatpush1.msra.mxu0 0.0
    %2741 = vmatprep.subr.mxu0 0.0
    %2742 = vmatpush1.msra.mxu0 0.0
    %2743 = vmatprep.subr.mxu0 0.0
    %2744 = vmatpush1.msra.mxu0 0.0
    %2745 = vmatprep.subr.mxu0 0.0
    %2746 = vmatpush1.msra.mxu0 0.0
    %2747 = vmatprep.subr.mxu0 0.0
    %2748 = vmatpush1.msra.mxu0 0.0
    %2749 = vmatprep.subr.mxu0 0.0
    %2750 = vmatpush1.msra.mxu0 0.0
    %2751 = vmatprep.mubr.f32.mxu0 0.0
    %2752 = vmatmul.mubr.f32.gmra.mrb[0].mxu0 %v2523
    %v2753 = vpop.f32.mrb[0].mxu0
    %v2754 = vadd.f32 %v100, %v2753
    %v2755 = vpop.f32.mrb[0].mxu0
    %2756 = vdwg.mxu0
    %v2758 = vrot.slane %v2754, 2
    %2759 = vrot.lane.b32.xlu0 %v2758, 96
    %v2760 = vpop.permute.xlu0 %2759
    %v2762 = vmul.f32 %v2676, %v2760
    %2764 = vrot.lane.b32.xlu0 %v2762, 64
    %v2765 = vpop.permute.xlu0 %2764
    %v2767 = vadd.f32 %v203, %v2765
    %v2768 = vtanh.pop %v2767
    %v2769 = vsub.f32 1.0, %v2686
    %2771 = vrot.lane.b32.xlu0 %v2768, 96
    %v2772 = vpop.permute.xlu0 %2771
    %v2774 = vmul.f32 %v2769, %v2772
    %v2775 = vrot.slane %v2266, 2
    %v2777 = vmul.f32 %v2686, %v2775
    %v2778 = vadd.f32 %v2774, %v2777
    %2780 = vrot.lane.b32.xlu0 %v2521, 96
    %v2781 = vpop.permute.xlu0 %2780
    %2783 = vst.msk [vmem:[#allocation2 + $0x8] sm:$0x3] %vm713, %v2781
    %2784 = vst.msk [vmem:[#allocation3] sm:$0xc0] %vm715, %v2778
    %v2785 = vsel %vm127, %v2781, 0
    %2787 = vmatprep.subr.mxu0 0.0
    %2788 = vmatpush1.msra.mxu0 %v39
    %2789 = vmatprep.subr.mxu0 0.0
    %2790 = vmatpush1.msra.mxu0 %v40
    %2791 = vmatprep.subr.mxu0 0.0
    %2792 = vmatpush1.msra.mxu0 %v41
    %2793 = vmatprep.subr.mxu0 0.0
    %2794 = vmatpush1.msra.mxu0 %v42
    %2795 = vmatprep.subr.mxu0 0.0
    %2796 = vmatpush1.msra.mxu0 0.0
    %2797 = vmatprep.subr.mxu0 0.0
    %2798 = vmatpush1.msra.mxu0 0.0
    %2799 = vmatprep.subr.mxu0 0.0
    %2800 = vmatpush1.msra.mxu0 0.0
    %2801 = vmatprep.subr.mxu0 0.0
    %2802 = vmatpush1.msra.mxu0 0.0
    %2803 = vmatprep.subr.mxu0 0.0
    %2804 = vmatpush1.msra.mxu0 0.0
    %2805 = vmatprep.subr.mxu0 0.0
    %2806 = vmatpush1.msra.mxu0 0.0
    %2807 = vmatprep.subr.mxu0 0.0
    %2808 = vmatpush1.msra.mxu0 0.0
    %2809 = vmatprep.subr.mxu0 0.0
    %2810 = vmatpush1.msra.mxu0 0.0
    %2811 = vmatprep.subr.mxu0 0.0
    %2812 = vmatpush1.msra.mxu0 0.0
    %2813 = vmatprep.subr.mxu0 0.0
    %2814 = vmatpush1.msra.mxu0 0.0
    %2815 = vmatprep.subr.mxu0 0.0
    %2816 = vmatpush1.msra.mxu0 0.0
    %2817 = vmatprep.subr.mxu0 0.0
    %2818 = vmatpush1.msra.mxu0 0.0
    %2819 = vmatprep.subr.mxu0 0.0
    %2820 = vmatpush1.msra.mxu0 0.0
    %2821 = vmatprep.subr.mxu0 0.0
    %2822 = vmatpush1.msra.mxu0 0.0
    %2823 = vmatprep.subr.mxu0 0.0
    %2824 = vmatpush1.msra.mxu0 0.0
    %2825 = vmatprep.subr.mxu0 0.0
    %2826 = vmatpush1.msra.mxu0 0.0
    %2827 = vmatprep.subr.mxu0 0.0
    %2828 = vmatpush1.msra.mxu0 0.0
    %2829 = vmatprep.subr.mxu0 0.0
    %2830 = vmatpush1.msra.mxu0 0.0
    %2831 = vmatprep.subr.mxu0 0.0
    %2832 = vmatpush1.msra.mxu0 0.0
    %2833 = vmatprep.subr.mxu0 0.0
    %2834 = vmatpush1.msra.mxu0 0.0
    %2835 = vmatprep.subr.mxu0 0.0
    %2836 = vmatpush1.msra.mxu0 0.0
    %2837 = vmatprep.subr.mxu0 0.0
    %2838 = vmatpush1.msra.mxu0 0.0
    %2839 = vmatprep.subr.mxu0 0.0
    %2840 = vmatpush1.msra.mxu0 0.0
    %2841 = vmatprep.subr.mxu0 0.0
    %2842 = vmatpush1.msra.mxu0 0.0
    %2843 = vmatprep.subr.mxu0 0.0
    %2844 = vmatpush1.msra.mxu0 0.0
    %2845 = vmatprep.subr.mxu0 0.0
    %2846 = vmatpush1.msra.mxu0 0.0
    %2847 = vmatprep.subr.mxu0 0.0
    %2848 = vmatpush1.msra.mxu0 0.0
    %2849 = vmatprep.subr.mxu0 0.0
    %2850 = vmatpush1.msra.mxu0 0.0
    %2851 = vmatprep.mubr.f32.mxu0 0.0
    %2852 = vmatmul.mubr.f32.gmra.mrb[0].mxu0 %v2785
    %v2853 = vpop.f32.mrb[0].mxu0
    %v2854 = vadd.f32 0.0, %v2853
    %v2855 = vpop.f32.mrb[0].mxu0
    %2856 = vdwg.mxu0
    %2857 = vmatprep.subr.mxu0 0.0
    %2858 = vmatpush1.msra.mxu0 %v44
    %2859 = vmatprep.subr.mxu0 0.0
    %2860 = vmatpush1.msra.mxu0 %v45
    %2861 = vmatprep.subr.mxu0 0.0
    %2862 = vmatpush1.msra.mxu0 %v46
    %2863 = vmatprep.subr.mxu0 0.0
    %2864 = vmatpush1.msra.mxu0 %v47
    %2865 = vmatprep.subr.mxu0 0.0
    %2866 = vmatpush1.msra.mxu0 0.0
    %2867 = vmatprep.subr.mxu0 0.0
    %2868 = vmatpush1.msra.mxu0 0.0
    %2869 = vmatprep.subr.mxu0 0.0
    %2870 = vmatpush1.msra.mxu0 0.0
    %2871 = vmatprep.subr.mxu0 0.0
    %2872 = vmatpush1.msra.mxu0 0.0
    %2873 = vmatprep.subr.mxu0 0.0
    %2874 = vmatpush1.msra.mxu0 0.0
    %2875 = vmatprep.subr.mxu0 0.0
    %2876 = vmatpush1.msra.mxu0 0.0
    %2877 = vmatprep.subr.mxu0 0.0
    %2878 = vmatpush1.msra.mxu0 0.0
    %2879 = vmatprep.subr.mxu0 0.0
    %2880 = vmatpush1.msra.mxu0 0.0
    %2881 = vmatprep.subr.mxu0 0.0
    %2882 = vmatpush1.msra.mxu0 0.0
    %2883 = vmatprep.subr.mxu0 0.0
    %2884 = vmatpush1.msra.mxu0 0.0
    %2885 = vmatprep.subr.mxu0 0.0
    %2886 = vmatpush1.msra.mxu0 0.0
    %2887 = vmatprep.subr.mxu0 0.0
    %2888 = vmatpush1.msra.mxu0 0.0
    %2889 = vmatprep.subr.mxu0 0.0
    %2890 = vmatpush1.msra.mxu0 0.0
    %2891 = vmatprep.subr.mxu0 0.0
    %2892 = vmatpush1.msra.mxu0 0.0
    %2893 = vmatprep.subr.mxu0 0.0
    %2894 = vmatpush1.msra.mxu0 0.0
    %2895 = vmatprep.subr.mxu0 0.0
    %2896 = vmatpush1.msra.mxu0 0.0
    %2897 = vmatprep.subr.mxu0 0.0
    %2898 = vmatpush1.msra.mxu0 0.0
    %2899 = vmatprep.subr.mxu0 0.0
    %2900 = vmatpush1.msra.mxu0 0.0
    %2901 = vmatprep.subr.mxu0 0.0
    %2902 = vmatpush1.msra.mxu0 0.0
    %2903 = vmatprep.subr.mxu0 0.0
    %2904 = vmatpush1.msra.mxu0 0.0
    %2905 = vmatprep.subr.mxu0 0.0
    %2906 = vmatpush1.msra.mxu0 0.0
    %2907 = vmatprep.subr.mxu0 0.0
    %2908 = vmatpush1.msra.mxu0 0.0
    %2909 = vmatprep.subr.mxu0 0.0
    %2910 = vmatpush1.msra.mxu0 0.0
    %2911 = vmatprep.subr.mxu0 0.0
    %2912 = vmatpush1.msra.mxu0 0.0
    %2913 = vmatprep.subr.mxu0 0.0
    %2914 = vmatpush1.msra.mxu0 0.0
    %2915 = vmatprep.subr.mxu0 0.0
    %2916 = vmatpush1.msra.mxu0 0.0
    %2917 = vmatprep.subr.mxu0 0.0
    %2918 = vmatpush1.msra.mxu0 0.0
    %2919 = vmatprep.subr.mxu0 0.0
    %2920 = vmatpush1.msra.mxu0 0.0
    %2921 = vmatprep.mubr.f32.mxu0 0.0
    %2922 = vmatmul.mubr.f32.gmra.mrb[0].mxu0 %v2785
    %v2923 = vpop.f32.mrb[0].mxu0
    %v2924 = vadd.f32 0.0, %v2923
    %v2925 = vpop.f32.mrb[0].mxu0
    %2926 = vdwg.mxu0
    %v2928 = vrot.slane %v2854, 6
    %v2930 = vadd.f32 %v207, %v2928
    %v2931 = vxor.u32 %v2930, 2147483648
    %v2932 = vmul.f32 %v2931, 1.442695
    %v2933 = vpow.pop %v2932
    %v2934 = vadd.f32 %v2933, 1.0
    %v2935 = vrcp.pop %v2934
    %v2936 = vmul.f32 1.0, %v2935
    %v2938 = vrot.slane %v2924, 6
    %2939 = vrot.lane.b32.xlu0 %v2938, 32
    %v2940 = vpop.permute.xlu0 %2939
    %v2942 = vadd.f32 %v207, %v2940
    %v2943 = vxor.u32 %v2942, 2147483648
    %v2944 = vmul.f32 %v2943, 1.442695
    %v2945 = vpow.pop %v2944
    %v2946 = vadd.f32 %v2945, 1.0
    %v2947 = vrcp.pop %v2946
    %v2948 = vmul.f32 1.0, %v2947
    %2949 = vmatprep.subr.mxu0 0.0
    %2950 = vmatpush1.msra.mxu0 %v49
    %2951 = vmatprep.subr.mxu0 0.0
    %2952 = vmatpush1.msra.mxu0 %v50
    %2953 = vmatprep.subr.mxu0 0.0
    %2954 = vmatpush1.msra.mxu0 %v51
    %2955 = vmatprep.subr.mxu0 0.0
    %2956 = vmatpush1.msra.mxu0 %v52
    %2957 = vmatprep.subr.mxu0 0.0
    %2958 = vmatpush1.msra.mxu0 0.0
    %2959 = vmatprep.subr.mxu0 0.0
    %2960 = vmatpush1.msra.mxu0 0.0
    %2961 = vmatprep.subr.mxu0 0.0
    %2962 = vmatpush1.msra.mxu0 0.0
    %2963 = vmatprep.subr.mxu0 0.0
    %2964 = vmatpush1.msra.mxu0 0.0
    %2965 = vmatprep.subr.mxu0 0.0
    %2966 = vmatpush1.msra.mxu0 0.0
    %2967 = vmatprep.subr.mxu0 0.0
    %2968 = vmatpush1.msra.mxu0 0.0
    %2969 = vmatprep.subr.mxu0 0.0
    %2970 = vmatpush1.msra.mxu0 0.0
    %2971 = vmatprep.subr.mxu0 0.0
    %2972 = vmatpush1.msra.mxu0 0.0
    %2973 = vmatprep.subr.mxu0 0.0
    %2974 = vmatpush1.msra.mxu0 0.0
    %2975 = vmatprep.subr.mxu0 0.0
    %2976 = vmatpush1.msra.mxu0 0.0
    %2977 = vmatprep.subr.mxu0 0.0
    %2978 = vmatpush1.msra.mxu0 0.0
    %2979 = vmatprep.subr.mxu0 0.0
    %2980 = vmatpush1.msra.mxu0 0.0
    %2981 = vmatprep.subr.mxu0 0.0
    %2982 = vmatpush1.msra.mxu0 0.0
    %2983 = vmatprep.subr.mxu0 0.0
    %2984 = vmatpush1.msra.mxu0 0.0
    %2985 = vmatprep.subr.mxu0 0.0
    %2986 = vmatpush1.msra.mxu0 0.0
    %2987 = vmatprep.subr.mxu0 0.0
    %2988 = vmatpush1.msra.mxu0 0.0
    %2989 = vmatprep.subr.mxu0 0.0
    %2990 = vmatpush1.msra.mxu0 0.0
    %2991 = vmatprep.subr.mxu0 0.0
    %2992 = vmatpush1.msra.mxu0 0.0
    %2993 = vmatprep.subr.mxu0 0.0
    %2994 = vmatpush1.msra.mxu0 0.0
    %2995 = vmatprep.subr.mxu0 0.0
    %2996 = vmatpush1.msra.mxu0 0.0
    %2997 = vmatprep.subr.mxu0 0.0
    %2998 = vmatpush1.msra.mxu0 0.0
    %2999 = vmatprep.subr.mxu0 0.0
    %3000 = vmatpush1.msra.mxu0 0.0
    %3001 = vmatprep.subr.mxu0 0.0
    %3002 = vmatpush1.msra.mxu0 0.0
    %3003 = vmatprep.subr.mxu0 0.0
    %3004 = vmatpush1.msra.mxu0 0.0
    %3005 = vmatprep.subr.mxu0 0.0
    %3006 = vmatpush1.msra.mxu0 0.0
    %3007 = vmatprep.subr.mxu0 0.0
    %3008 = vmatpush1.msra.mxu0 0.0
    %3009 = vmatprep.subr.mxu0 0.0
    %3010 = vmatpush1.msra.mxu0 0.0
    %3011 = vmatprep.subr.mxu0 0.0
    %3012 = vmatpush1.msra.mxu0 0.0
    %3013 = vmatprep.mubr.f32.mxu0 0.0
    %3014 = vmatmul.mubr.f32.gmra.mrb[0].mxu0 %v2785
    %v3015 = vpop.f32.mrb[0].mxu0
    %v3016 = vadd.f32 %v98, %v3015
    %v3017 = vpop.f32.mrb[0].mxu0
    %3018 = vdwg.mxu0
    %v3020 = vrot.slane %v3016, 6
    %v3022 = vmul.f32 %v2936, %v3020
    %3024 = vrot.lane.b32.xlu0 %v3022, 64
    %v3025 = vpop.permute.xlu0 %3024
    %v3027 = vadd.f32 %v207, %v3025
    %v3028 = vtanh.pop %v3027
    %v3029 = vsub.f32 1.0, %v2948
    %3031 = vrot.lane.b32.xlu0 %v3028, 96
    %v3032 = vpop.permute.xlu0 %3031
    %v3034 = vmul.f32 %v3029, %v3032
    %v3035 = vrot.slane %v2521, 6
    %v3037 = vmul.f32 %v2948, %v3035
    %v3038 = vadd.f32 %v3034, %v3037
    %v3040 = vrot.slane %v2778, 6
    %v3041 = vsel %vm127, %v3040, 0
    %3043 = vmatprep.subr.mxu0 0.0
    %3044 = vmatpush1.msra.mxu0 %v54
    %3045 = vmatprep.subr.mxu0 0.0
    %3046 = vmatpush1.msra.mxu0 %v55
    %3047 = vmatprep.subr.mxu0 0.0
    %3048 = vmatpush1.msra.mxu0 %v56
    %3049 = vmatprep.subr.mxu0 0.0
    %3050 = vmatpush1.msra.mxu0 %v57
    %3051 = vmatprep.subr.mxu0 0.0
    %3052 = vmatpush1.msra.mxu0 0.0
    %3053 = vmatprep.subr.mxu0 0.0
    %3054 = vmatpush1.msra.mxu0 0.0
    %3055 = vmatprep.subr.mxu0 0.0
    %3056 = vmatpush1.msra.mxu0 0.0
    %3057 = vmatprep.subr.mxu0 0.0
    %3058 = vmatpush1.msra.mxu0 0.0
    %3059 = vmatprep.subr.mxu0 0.0
    %3060 = vmatpush1.msra.mxu0 0.0
    %3061 = vmatprep.subr.mxu0 0.0
    %3062 = vmatpush1.msra.mxu0 0.0
    %3063 = vmatprep.subr.mxu0 0.0
    %3064 = vmatpush1.msra.mxu0 0.0
    %3065 = vmatprep.subr.mxu0 0.0
    %3066 = vmatpush1.msra.mxu0 0.0
    %3067 = vmatprep.subr.mxu0 0.0
    %3068 = vmatpush1.msra.mxu0 0.0
    %3069 = vmatprep.subr.mxu0 0.0
    %3070 = vmatpush1.msra.mxu0 0.0
    %3071 = vmatprep.subr.mxu0 0.0
    %3072 = vmatpush1.msra.mxu0 0.0
    %3073 = vmatprep.subr.mxu0 0.0
    %3074 = vmatpush1.msra.mxu0 0.0
    %3075 = vmatprep.subr.mxu0 0.0
    %3076 = vmatpush1.msra.mxu0 0.0
    %3077 = vmatprep.subr.mxu0 0.0
    %3078 = vmatpush1.msra.mxu0 0.0
    %3079 = vmatprep.subr.mxu0 0.0
    %3080 = vmatpush1.msra.mxu0 0.0
    %3081 = vmatprep.subr.mxu0 0.0
    %3082 = vmatpush1.msra.mxu0 0.0
    %3083 = vmatprep.subr.mxu0 0.0
    %3084 = vmatpush1.msra.mxu0 0.0
    %3085 = vmatprep.subr.mxu0 0.0
    %3086 = vmatpush1.msra.mxu0 0.0
    %3087 = vmatprep.subr.mxu0 0.0
    %3088 = vmatpush1.msra.mxu0 0.0
    %3089 = vmatprep.subr.mxu0 0.0
    %3090 = vmatpush1.msra.mxu0 0.0
    %3091 = vmatprep.subr.mxu0 0.0
    %3092 = vmatpush1.msra.mxu0 0.0
    %3093 = vmatprep.subr.mxu0 0.0
    %3094 = vmatpush1.msra.mxu0 0.0
    %3095 = vmatprep.subr.mxu0 0.0
    %3096 = vmatpush1.msra.mxu0 0.0
    %3097 = vmatprep.subr.mxu0 0.0
    %3098 = vmatpush1.msra.mxu0 0.0
    %3099 = vmatprep.subr.mxu0 0.0
    %3100 = vmatpush1.msra.mxu0 0.0
    %3101 = vmatprep.subr.mxu0 0.0
    %3102 = vmatpush1.msra.mxu0 0.0
    %3103 = vmatprep.subr.mxu0 0.0
    %3104 = vmatpush1.msra.mxu0 0.0
    %3105 = vmatprep.subr.mxu0 0.0
    %3106 = vmatpush1.msra.mxu0 0.0
    %3107 = vmatprep.mubr.f32.mxu0 0.0
    %3108 = vmatmul.mubr.f32.gmra.mrb[0].mxu0 %v3041
    %v3109 = vpop.f32.mrb[0].mxu0
    %v3110 = vadd.f32 0.0, %v3109
    %v3111 = vpop.f32.mrb[0].mxu0
    %3112 = vdwg.mxu0
    %3113 = vmatprep.subr.mxu0 0.0
    %3114 = vmatpush1.msra.mxu0 %v59
    %3115 = vmatprep.subr.mxu0 0.0
    %3116 = vmatpush1.msra.mxu0 %v60
    %3117 = vmatprep.subr.mxu0 0.0
    %3118 = vmatpush1.msra.mxu0 %v61
    %3119 = vmatprep.subr.mxu0 0.0
    %3120 = vmatpush1.msra.mxu0 %v62
    %3121 = vmatprep.subr.mxu0 0.0
    %3122 = vmatpush1.msra.mxu0 0.0
    %3123 = vmatprep.subr.mxu0 0.0
    %3124 = vmatpush1.msra.mxu0 0.0
    %3125 = vmatprep.subr.mxu0 0.0
    %3126 = vmatpush1.msra.mxu0 0.0
    %3127 = vmatprep.subr.mxu0 0.0
    %3128 = vmatpush1.msra.mxu0 0.0
    %3129 = vmatprep.subr.mxu0 0.0
    %3130 = vmatpush1.msra.mxu0 0.0
    %3131 = vmatprep.subr.mxu0 0.0
    %3132 = vmatpush1.msra.mxu0 0.0
    %3133 = vmatprep.subr.mxu0 0.0
    %3134 = vmatpush1.msra.mxu0 0.0
    %3135 = vmatprep.subr.mxu0 0.0
    %3136 = vmatpush1.msra.mxu0 0.0
    %3137 = vmatprep.subr.mxu0 0.0
    %3138 = vmatpush1.msra.mxu0 0.0
    %3139 = vmatprep.subr.mxu0 0.0
    %3140 = vmatpush1.msra.mxu0 0.0
    %3141 = vmatprep.subr.mxu0 0.0
    %3142 = vmatpush1.msra.mxu0 0.0
    %3143 = vmatprep.subr.mxu0 0.0
    %3144 = vmatpush1.msra.mxu0 0.0
    %3145 = vmatprep.subr.mxu0 0.0
    %3146 = vmatpush1.msra.mxu0 0.0
    %3147 = vmatprep.subr.mxu0 0.0
    %3148 = vmatpush1.msra.mxu0 0.0
    %3149 = vmatprep.subr.mxu0 0.0
    %3150 = vmatpush1.msra.mxu0 0.0
    %3151 = vmatprep.subr.mxu0 0.0
    %3152 = vmatpush1.msra.mxu0 0.0
    %3153 = vmatprep.subr.mxu0 0.0
    %3154 = vmatpush1.msra.mxu0 0.0
    %3155 = vmatprep.subr.mxu0 0.0
    %3156 = vmatpush1.msra.mxu0 0.0
    %3157 = vmatprep.subr.mxu0 0.0
    %3158 = vmatpush1.msra.mxu0 0.0
    %3159 = vmatprep.subr.mxu0 0.0
    %3160 = vmatpush1.msra.mxu0 0.0
    %3161 = vmatprep.subr.mxu0 0.0
    %3162 = vmatpush1.msra.mxu0 0.0
    %3163 = vmatprep.subr.mxu0 0.0
    %3164 = vmatpush1.msra.mxu0 0.0
    %3165 = vmatprep.subr.mxu0 0.0
    %3166 = vmatpush1.msra.mxu0 0.0
    %3167 = vmatprep.subr.mxu0 0.0
    %3168 = vmatpush1.msra.mxu0 0.0
    %3169 = vmatprep.subr.mxu0 0.0
    %3170 = vmatpush1.msra.mxu0 0.0
    %3171 = vmatprep.subr.mxu0 0.0
    %3172 = vmatpush1.msra.mxu0 0.0
    %3173 = vmatprep.subr.mxu0 0.0
    %3174 = vmatpush1.msra.mxu0 0.0
    %3175 = vmatprep.subr.mxu0 0.0
    %3176 = vmatpush1.msra.mxu0 0.0
    %3177 = vmatprep.mubr.f32.mxu0 0.0
    %3178 = vmatmul.mubr.f32.gmra.mrb[0].mxu0 %v3041
    %v3179 = vpop.f32.mrb[0].mxu0
    %v3180 = vadd.f32 0.0, %v3179
    %v3181 = vpop.f32.mrb[0].mxu0
    %3182 = vdwg.mxu0
    %v3184 = vrot.slane %v3110, 4
    %3185 = vrot.lane.b32.xlu0 %v3184, 96
    %v3186 = vpop.permute.xlu0 %3185
    %v3188 = vadd.f32 %v201, %v3186
    %v3189 = vxor.u32 %v3188, 2147483648
    %v3190 = vmul.f32 %v3189, 1.442695
    %v3191 = vpow.pop %v3190
    %v3192 = vadd.f32 %v3191, 1.0
    %v3193 = vrcp.pop %v3192
    %v3194 = vmul.f32 1.0, %v3193
    %v3196 = vrot.slane %v3180, 4
    %v3198 = vadd.f32 %v203, %v3196
    %v3199 = vxor.u32 %v3198, 2147483648
    %v3200 = vmul.f32 %v3199, 1.442695
    %v3201 = vpow.pop %v3200
    %v3202 = vadd.f32 %v3201, 1.0
    %v3203 = vrcp.pop %v3202
    %v3204 = vmul.f32 1.0, %v3203
    %3205 = vmatprep.subr.mxu0 0.0
    %3206 = vmatpush1.msra.mxu0 %v64
    %3207 = vmatprep.subr.mxu0 0.0
    %3208 = vmatpush1.msra.mxu0 %v65
    %3209 = vmatprep.subr.mxu0 0.0
    %3210 = vmatpush1.msra.mxu0 %v66
    %3211 = vmatprep.subr.mxu0 0.0
    %3212 = vmatpush1.msra.mxu0 %v67
    %3213 = vmatprep.subr.mxu0 0.0
    %3214 = vmatpush1.msra.mxu0 0.0
    %3215 = vmatprep.subr.mxu0 0.0
    %3216 = vmatpush1.msra.mxu0 0.0
    %3217 = vmatprep.subr.mxu0 0.0
    %3218 = vmatpush1.msra.mxu0 0.0
    %3219 = vmatprep.subr.mxu0 0.0
    %3220 = vmatpush1.msra.mxu0 0.0
    %3221 = vmatprep.subr.mxu0 0.0
    %3222 = vmatpush1.msra.mxu0 0.0
    %3223 = vmatprep.subr.mxu0 0.0
    %3224 = vmatpush1.msra.mxu0 0.0
    %3225 = vmatprep.subr.mxu0 0.0
    %3226 = vmatpush1.msra.mxu0 0.0
    %3227 = vmatprep.subr.mxu0 0.0
    %3228 = vmatpush1.msra.mxu0 0.0
    %3229 = vmatprep.subr.mxu0 0.0
    %3230 = vmatpush1.msra.mxu0 0.0
    %3231 = vmatprep.subr.mxu0 0.0
    %3232 = vmatpush1.msra.mxu0 0.0
    %3233 = vmatprep.subr.mxu0 0.0
    %3234 = vmatpush1.msra.mxu0 0.0
    %3235 = vmatprep.subr.mxu0 0.0
    %3236 = vmatpush1.msra.mxu0 0.0
    %3237 = vmatprep.subr.mxu0 0.0
    %3238 = vmatpush1.msra.mxu0 0.0
    %3239 = vmatprep.subr.mxu0 0.0
    %3240 = vmatpush1.msra.mxu0 0.0
    %3241 = vmatprep.subr.mxu0 0.0
    %3242 = vmatpush1.msra.mxu0 0.0
    %3243 = vmatprep.subr.mxu0 0.0
    %3244 = vmatpush1.msra.mxu0 0.0
    %3245 = vmatprep.subr.mxu0 0.0
    %3246 = vmatpush1.msra.mxu0 0.0
    %3247 = vmatprep.subr.mxu0 0.0
    %3248 = vmatpush1.msra.mxu0 0.0
    %3249 = vmatprep.subr.mxu0 0.0
    %3250 = vmatpush1.msra.mxu0 0.0
    %3251 = vmatprep.subr.mxu0 0.0
    %3252 = vmatpush1.msra.mxu0 0.0
    %3253 = vmatprep.subr.mxu0 0.0
    %3254 = vmatpush1.msra.mxu0 0.0
    %3255 = vmatprep.subr.mxu0 0.0
    %3256 = vmatpush1.msra.mxu0 0.0
    %3257 = vmatprep.subr.mxu0 0.0
    %3258 = vmatpush1.msra.mxu0 0.0
    %3259 = vmatprep.subr.mxu0 0.0
    %3260 = vmatpush1.msra.mxu0 0.0
    %3261 = vmatprep.subr.mxu0 0.0
    %3262 = vmatpush1.msra.mxu0 0.0
    %3263 = vmatprep.subr.mxu0 0.0
    %3264 = vmatpush1.msra.mxu0 0.0
    %3265 = vmatprep.subr.mxu0 0.0
    %3266 = vmatpush1.msra.mxu0 0.0
    %3267 = vmatprep.subr.mxu0 0.0
    %3268 = vmatpush1.msra.mxu0 0.0
    %3269 = vmatprep.mubr.f32.mxu0 0.0
    %3270 = vmatmul.mubr.f32.gmra.mrb[0].mxu0 %v3041
    %v3271 = vpop.f32.mrb[0].mxu0
    %v3272 = vadd.f32 %v100, %v3271
    %v3273 = vpop.f32.mrb[0].mxu0
    %3274 = vdwg.mxu0
    %v3276 = vrot.slane %v3272, 4
    %3277 = vrot.lane.b32.xlu0 %v3276, 96
    %v3278 = vpop.permute.xlu0 %3277
    %v3280 = vmul.f32 %v3194, %v3278
    %3282 = vrot.lane.b32.xlu0 %v3280, 64
    %v3283 = vpop.permute.xlu0 %3282
    %v3285 = vadd.f32 %v203, %v3283
    %v3286 = vtanh.pop %v3285
    %v3287 = vsub.f32 1.0, %v3204
    %3289 = vrot.lane.b32.xlu0 %v3286, 96
    %v3290 = vpop.permute.xlu0 %3289
    %v3292 = vmul.f32 %v3287, %v3290
    %v3293 = vrot.slane %v2778, 2
    %v3295 = vmul.f32 %v3204, %v3293
    %v3296 = vadd.f32 %v3292, %v3295
    %3298 = vrot.lane.b32.xlu0 %v3038, 96
    %v3299 = vpop.permute.xlu0 %3298
    %3301 = vst.msk [vmem:[#allocation2 + $0x8] sm:$0xc] %vm1233, %v3299
    %3302 = vst.msk [vmem:[#allocation3] sm:$0x30] %vm1235, %v3296
    %v3303 = vrot.slane %v3038, 2
    %3304 = vrot.lane.b32.xlu0 %v3303, 96
    %v3305 = vpop.permute.xlu0 %3304
    %v3306 = vsel %vm127, %v3305, 0
    %3308 = vmatprep.subr.mxu0 0.0
    %3309 = vmatpush1.msra.mxu0 %v39
    %3310 = vmatprep.subr.mxu0 0.0
    %3311 = vmatpush1.msra.mxu0 %v40
    %3312 = vmatprep.subr.mxu0 0.0
    %3313 = vmatpush1.msra.mxu0 %v41
    %3314 = vmatprep.subr.mxu0 0.0
    %3315 = vmatpush1.msra.mxu0 %v42
    %3316 = vmatprep.subr.mxu0 0.0
    %3317 = vmatpush1.msra.mxu0 0.0
    %3318 = vmatprep.subr.mxu0 0.0
    %3319 = vmatpush1.msra.mxu0 0.0
    %3320 = vmatprep.subr.mxu0 0.0
    %3321 = vmatpush1.msra.mxu0 0.0
    %3322 = vmatprep.subr.mxu0 0.0
    %3323 = vmatpush1.msra.mxu0 0.0
    %3324 = vmatprep.subr.mxu0 0.0
    %3325 = vmatpush1.msra.mxu0 0.0
    %3326 = vmatprep.subr.mxu0 0.0
    %3327 = vmatpush1.msra.mxu0 0.0
    %3328 = vmatprep.subr.mxu0 0.0
    %3329 = vmatpush1.msra.mxu0 0.0
    %3330 = vmatprep.subr.mxu0 0.0
    %3331 = vmatpush1.msra.mxu0 0.0
    %3332 = vmatprep.subr.mxu0 0.0
    %3333 = vmatpush1.msra.mxu0 0.0
    %3334 = vmatprep.subr.mxu0 0.0
    %3335 = vmatpush1.msra.mxu0 0.0
    %3336 = vmatprep.subr.mxu0 0.0
    %3337 = vmatpush1.msra.mxu0 0.0
    %3338 = vmatprep.subr.mxu0 0.0
    %3339 = vmatpush1.msra.mxu0 0.0
    %3340 = vmatprep.subr.mxu0 0.0
    %3341 = vmatpush1.msra.mxu0 0.0
    %3342 = vmatprep.subr.mxu0 0.0
    %3343 = vmatpush1.msra.mxu0 0.0
    %3344 = vmatprep.subr.mxu0 0.0
    %3345 = vmatpush1.msra.mxu0 0.0
    %3346 = vmatprep.subr.mxu0 0.0
    %3347 = vmatpush1.msra.mxu0 0.0
    %3348 = vmatprep.subr.mxu0 0.0
    %3349 = vmatpush1.msra.mxu0 0.0
    %3350 = vmatprep.subr.mxu0 0.0
    %3351 = vmatpush1.msra.mxu0 0.0
    %3352 = vmatprep.subr.mxu0 0.0
    %3353 = vmatpush1.msra.mxu0 0.0
    %3354 = vmatprep.subr.mxu0 0.0
    %3355 = vmatpush1.msra.mxu0 0.0
    %3356 = vmatprep.subr.mxu0 0.0
    %3357 = vmatpush1.msra.mxu0 0.0
    %3358 = vmatprep.subr.mxu0 0.0
    %3359 = vmatpush1.msra.mxu0 0.0
    %3360 = vmatprep.subr.mxu0 0.0
    %3361 = vmatpush1.msra.mxu0 0.0
    %3362 = vmatprep.subr.mxu0 0.0
    %3363 = vmatpush1.msra.mxu0 0.0
    %3364 = vmatprep.subr.mxu0 0.0
    %3365 = vmatpush1.msra.mxu0 0.0
    %3366 = vmatprep.subr.mxu0 0.0
    %3367 = vmatpush1.msra.mxu0 0.0
    %3368 = vmatprep.subr.mxu0 0.0
    %3369 = vmatpush1.msra.mxu0 0.0
    %3370 = vmatprep.subr.mxu0 0.0
    %3371 = vmatpush1.msra.mxu0 0.0
    %3372 = vmatprep.mubr.f32.mxu0 0.0
    %3373 = vmatmul.mubr.f32.gmra.mrb[0].mxu0 %v3306
    %v3374 = vpop.f32.mrb[0].mxu0
    %v3375 = vadd.f32 0.0, %v3374
    %v3376 = vpop.f32.mrb[0].mxu0
    %3377 = vdwg.mxu0
    %3378 = vmatprep.subr.mxu0 0.0
    %3379 = vmatpush1.msra.mxu0 %v44
    %3380 = vmatprep.subr.mxu0 0.0
    %3381 = vmatpush1.msra.mxu0 %v45
    %3382 = vmatprep.subr.mxu0 0.0
    %3383 = vmatpush1.msra.mxu0 %v46
    %3384 = vmatprep.subr.mxu0 0.0
    %3385 = vmatpush1.msra.mxu0 %v47
    %3386 = vmatprep.subr.mxu0 0.0
    %3387 = vmatpush1.msra.mxu0 0.0
    %3388 = vmatprep.subr.mxu0 0.0
    %3389 = vmatpush1.msra.mxu0 0.0
    %3390 = vmatprep.subr.mxu0 0.0
    %3391 = vmatpush1.msra.mxu0 0.0
    %3392 = vmatprep.subr.mxu0 0.0
    %3393 = vmatpush1.msra.mxu0 0.0
    %3394 = vmatprep.subr.mxu0 0.0
    %3395 = vmatpush1.msra.mxu0 0.0
    %3396 = vmatprep.subr.mxu0 0.0
    %3397 = vmatpush1.msra.mxu0 0.0
    %3398 = vmatprep.subr.mxu0 0.0
    %3399 = vmatpush1.msra.mxu0 0.0
    %3400 = vmatprep.subr.mxu0 0.0
    %3401 = vmatpush1.msra.mxu0 0.0
    %3402 = vmatprep.subr.mxu0 0.0
    %3403 = vmatpush1.msra.mxu0 0.0
    %3404 = vmatprep.subr.mxu0 0.0
    %3405 = vmatpush1.msra.mxu0 0.0
    %3406 = vmatprep.subr.mxu0 0.0
    %3407 = vmatpush1.msra.mxu0 0.0
    %3408 = vmatprep.subr.mxu0 0.0
    %3409 = vmatpush1.msra.mxu0 0.0
    %3410 = vmatprep.subr.mxu0 0.0
    %3411 = vmatpush1.msra.mxu0 0.0
    %3412 = vmatprep.subr.mxu0 0.0
    %3413 = vmatpush1.msra.mxu0 0.0
    %3414 = vmatprep.subr.mxu0 0.0
    %3415 = vmatpush1.msra.mxu0 0.0
    %3416 = vmatprep.subr.mxu0 0.0
    %3417 = vmatpush1.msra.mxu0 0.0
    %3418 = vmatprep.subr.mxu0 0.0
    %3419 = vmatpush1.msra.mxu0 0.0
    %3420 = vmatprep.subr.mxu0 0.0
    %3421 = vmatpush1.msra.mxu0 0.0
    %3422 = vmatprep.subr.mxu0 0.0
    %3423 = vmatpush1.msra.mxu0 0.0
    %3424 = vmatprep.subr.mxu0 0.0
    %3425 = vmatpush1.msra.mxu0 0.0
    %3426 = vmatprep.subr.mxu0 0.0
    %3427 = vmatpush1.msra.mxu0 0.0
    %3428 = vmatprep.subr.mxu0 0.0
    %3429 = vmatpush1.msra.mxu0 0.0
    %3430 = vmatprep.subr.mxu0 0.0
    %3431 = vmatpush1.msra.mxu0 0.0
    %3432 = vmatprep.subr.mxu0 0.0
    %3433 = vmatpush1.msra.mxu0 0.0
    %3434 = vmatprep.subr.mxu0 0.0
    %3435 = vmatpush1.msra.mxu0 0.0
    %3436 = vmatprep.subr.mxu0 0.0
    %3437 = vmatpush1.msra.mxu0 0.0
    %3438 = vmatprep.subr.mxu0 0.0
    %3439 = vmatpush1.msra.mxu0 0.0
    %3440 = vmatprep.subr.mxu0 0.0
    %3441 = vmatpush1.msra.mxu0 0.0
    %3442 = vmatprep.mubr.f32.mxu0 0.0
    %3443 = vmatmul.mubr.f32.gmra.mrb[0].mxu0 %v3306
    %v3444 = vpop.f32.mrb[0].mxu0
    %v3445 = vadd.f32 0.0, %v3444
    %v3446 = vpop.f32.mrb[0].mxu0
    %3447 = vdwg.mxu0
    %v3449 = vrot.slane %v3375, 4
    %v3451 = vadd.f32 %v207, %v3449
    %v3452 = vxor.u32 %v3451, 2147483648
    %v3453 = vmul.f32 %v3452, 1.442695
    %v3454 = vpow.pop %v3453
    %v3455 = vadd.f32 %v3454, 1.0
    %v3456 = vrcp.pop %v3455
    %v3457 = vmul.f32 1.0, %v3456
    %v3459 = vrot.slane %v3445, 4
    %3460 = vrot.lane.b32.xlu0 %v3459, 32
    %v3461 = vpop.permute.xlu0 %3460
    %v3463 = vadd.f32 %v207, %v3461
    %v3464 = vxor.u32 %v3463, 2147483648
    %v3465 = vmul.f32 %v3464, 1.442695
    %v3466 = vpow.pop %v3465
    %v3467 = vadd.f32 %v3466, 1.0
    %v3468 = vrcp.pop %v3467
    %v3469 = vmul.f32 1.0, %v3468
    %3470 = vmatprep.subr.mxu0 0.0
    %3471 = vmatpush1.msra.mxu0 %v49
    %3472 = vmatprep.subr.mxu0 0.0
    %3473 = vmatpush1.msra.mxu0 %v50
    %3474 = vmatprep.subr.mxu0 0.0
    %3475 = vmatpush1.msra.mxu0 %v51
    %3476 = vmatprep.subr.mxu0 0.0
    %3477 = vmatpush1.msra.mxu0 %v52
    %3478 = vmatprep.subr.mxu0 0.0
    %3479 = vmatpush1.msra.mxu0 0.0
    %3480 = vmatprep.subr.mxu0 0.0
    %3481 = vmatpush1.msra.mxu0 0.0
    %3482 = vmatprep.subr.mxu0 0.0
    %3483 = vmatpush1.msra.mxu0 0.0
    %3484 = vmatprep.subr.mxu0 0.0
    %3485 = vmatpush1.msra.mxu0 0.0
    %3486 = vmatprep.subr.mxu0 0.0
    %3487 = vmatpush1.msra.mxu0 0.0
    %3488 = vmatprep.subr.mxu0 0.0
    %3489 = vmatpush1.msra.mxu0 0.0
    %3490 = vmatprep.subr.mxu0 0.0
    %3491 = vmatpush1.msra.mxu0 0.0
    %3492 = vmatprep.subr.mxu0 0.0
    %3493 = vmatpush1.msra.mxu0 0.0
    %3494 = vmatprep.subr.mxu0 0.0
    %3495 = vmatpush1.msra.mxu0 0.0
    %3496 = vmatprep.subr.mxu0 0.0
    %3497 = vmatpush1.msra.mxu0 0.0
    %3498 = vmatprep.subr.mxu0 0.0
    %3499 = vmatpush1.msra.mxu0 0.0
    %3500 = vmatprep.subr.mxu0 0.0
    %3501 = vmatpush1.msra.mxu0 0.0
    %3502 = vmatprep.subr.mxu0 0.0
    %3503 = vmatpush1.msra.mxu0 0.0
    %3504 = vmatprep.subr.mxu0 0.0
    %3505 = vmatpush1.msra.mxu0 0.0
    %3506 = vmatprep.subr.mxu0 0.0
    %3507 = vmatpush1.msra.mxu0 0.0
    %3508 = vmatprep.subr.mxu0 0.0
    %3509 = vmatpush1.msra.mxu0 0.0
    %3510 = vmatprep.subr.mxu0 0.0
    %3511 = vmatpush1.msra.mxu0 0.0
    %3512 = vmatprep.subr.mxu0 0.0
    %3513 = vmatpush1.msra.mxu0 0.0
    %3514 = vmatprep.subr.mxu0 0.0
    %3515 = vmatpush1.msra.mxu0 0.0
    %3516 = vmatprep.subr.mxu0 0.0
    %3517 = vmatpush1.msra.mxu0 0.0
    %3518 = vmatprep.subr.mxu0 0.0
    %3519 = vmatpush1.msra.mxu0 0.0
    %3520 = vmatprep.subr.mxu0 0.0
    %3521 = vmatpush1.msra.mxu0 0.0
    %3522 = vmatprep.subr.mxu0 0.0
    %3523 = vmatpush1.msra.mxu0 0.0
    %3524 = vmatprep.subr.mxu0 0.0
    %3525 = vmatpush1.msra.mxu0 0.0
    %3526 = vmatprep.subr.mxu0 0.0
    %3527 = vmatpush1.msra.mxu0 0.0
    %3528 = vmatprep.subr.mxu0 0.0
    %3529 = vmatpush1.msra.mxu0 0.0
    %3530 = vmatprep.subr.mxu0 0.0
    %3531 = vmatpush1.msra.mxu0 0.0
    %3532 = vmatprep.subr.mxu0 0.0
    %3533 = vmatpush1.msra.mxu0 0.0
    %3534 = vmatprep.mubr.f32.mxu0 0.0
    %3535 = vmatmul.mubr.f32.gmra.mrb[0].mxu0 %v3306
    %v3536 = vpop.f32.mrb[0].mxu0
    %v3537 = vadd.f32 %v98, %v3536
    %v3538 = vpop.f32.mrb[0].mxu0
    %3539 = vdwg.mxu0
    %v3541 = vrot.slane %v3537, 4
    %v3543 = vmul.f32 %v3457, %v3541
    %3545 = vrot.lane.b32.xlu0 %v3543, 64
    %v3546 = vpop.permute.xlu0 %3545
    %v3548 = vadd.f32 %v207, %v3546
    %v3549 = vtanh.pop %v3548
    %v3550 = vsub.f32 1.0, %v3469
    %3552 = vrot.lane.b32.xlu0 %v3549, 96
    %v3553 = vpop.permute.xlu0 %3552
    %v3555 = vmul.f32 %v3550, %v3553
    %v3556 = vrot.slane %v3038, 6
    %v3558 = vmul.f32 %v3469, %v3556
    %v3559 = vadd.f32 %v3555, %v3558
    %v3561 = vrot.slane %v3296, 4
    %v3562 = vsel %vm127, %v3561, 0
    %3564 = vmatprep.subr.mxu0 0.0
    %3565 = vmatpush1.msra.mxu0 %v54
    %3566 = vmatprep.subr.mxu0 0.0
    %3567 = vmatpush1.msra.mxu0 %v55
    %3568 = vmatprep.subr.mxu0 0.0
    %3569 = vmatpush1.msra.mxu0 %v56
    %3570 = vmatprep.subr.mxu0 0.0
    %3571 = vmatpush1.msra.mxu0 %v57
    %3572 = vmatprep.subr.mxu0 0.0
    %3573 = vmatpush1.msra.mxu0 0.0
    %3574 = vmatprep.subr.mxu0 0.0
    %3575 = vmatpush1.msra.mxu0 0.0
    %3576 = vmatprep.subr.mxu0 0.0
    %3577 = vmatpush1.msra.mxu0 0.0
    %3578 = vmatprep.subr.mxu0 0.0
    %3579 = vmatpush1.msra.mxu0 0.0
    %3580 = vmatprep.subr.mxu0 0.0
    %3581 = vmatpush1.msra.mxu0 0.0
    %3582 = vmatprep.subr.mxu0 0.0
    %3583 = vmatpush1.msra.mxu0 0.0
    %3584 = vmatprep.subr.mxu0 0.0
    %3585 = vmatpush1.msra.mxu0 0.0
    %3586 = vmatprep.subr.mxu0 0.0
    %3587 = vmatpush1.msra.mxu0 0.0
    %3588 = vmatprep.subr.mxu0 0.0
    %3589 = vmatpush1.msra.mxu0 0.0
    %3590 = vmatprep.subr.mxu0 0.0
    %3591 = vmatpush1.msra.mxu0 0.0
    %3592 = vmatprep.subr.mxu0 0.0
    %3593 = vmatpush1.msra.mxu0 0.0
    %3594 = vmatprep.subr.mxu0 0.0
    %3595 = vmatpush1.msra.mxu0 0.0
    %3596 = vmatprep.subr.mxu0 0.0
    %3597 = vmatpush1.msra.mxu0 0.0
    %3598 = vmatprep.subr.mxu0 0.0
    %3599 = vmatpush1.msra.mxu0 0.0
    %3600 = vmatprep.subr.mxu0 0.0
    %3601 = vmatpush1.msra.mxu0 0.0
    %3602 = vmatprep.subr.mxu0 0.0
    %3603 = vmatpush1.msra.mxu0 0.0
    %3604 = vmatprep.subr.mxu0 0.0
    %3605 = vmatpush1.msra.mxu0 0.0
    %3606 = vmatprep.subr.mxu0 0.0
    %3607 = vmatpush1.msra.mxu0 0.0
    %3608 = vmatprep.subr.mxu0 0.0
    %3609 = vmatpush1.msra.mxu0 0.0
    %3610 = vmatprep.subr.mxu0 0.0
    %3611 = vmatpush1.msra.mxu0 0.0
    %3612 = vmatprep.subr.mxu0 0.0
    %3613 = vmatpush1.msra.mxu0 0.0
    %3614 = vmatprep.subr.mxu0 0.0
    %3615 = vmatpush1.msra.mxu0 0.0
    %3616 = vmatprep.subr.mxu0 0.0
    %3617 = vmatpush1.msra.mxu0 0.0
    %3618 = vmatprep.subr.mxu0 0.0
    %3619 = vmatpush1.msra.mxu0 0.0
    %3620 = vmatprep.subr.mxu0 0.0
    %3621 = vmatpush1.msra.mxu0 0.0
    %3622 = vmatprep.subr.mxu0 0.0
    %3623 = vmatpush1.msra.mxu0 0.0
    %3624 = vmatprep.subr.mxu0 0.0
    %3625 = vmatpush1.msra.mxu0 0.0
    %3626 = vmatprep.subr.mxu0 0.0
    %3627 = vmatpush1.msra.mxu0 0.0
    %3628 = vmatprep.mubr.f32.mxu0 0.0
    %3629 = vmatmul.mubr.f32.gmra.mrb[0].mxu0 %v3562
    %v3630 = vpop.f32.mrb[0].mxu0
    %v3631 = vadd.f32 0.0, %v3630
    %v3632 = vpop.f32.mrb[0].mxu0
    %3633 = vdwg.mxu0
    %3634 = vmatprep.subr.mxu0 0.0
    %3635 = vmatpush1.msra.mxu0 %v59
    %3636 = vmatprep.subr.mxu0 0.0
    %3637 = vmatpush1.msra.mxu0 %v60
    %3638 = vmatprep.subr.mxu0 0.0
    %3639 = vmatpush1.msra.mxu0 %v61
    %3640 = vmatprep.subr.mxu0 0.0
    %3641 = vmatpush1.msra.mxu0 %v62
    %3642 = vmatprep.subr.mxu0 0.0
    %3643 = vmatpush1.msra.mxu0 0.0
    %3644 = vmatprep.subr.mxu0 0.0
    %3645 = vmatpush1.msra.mxu0 0.0
    %3646 = vmatprep.subr.mxu0 0.0
    %3647 = vmatpush1.msra.mxu0 0.0
    %3648 = vmatprep.subr.mxu0 0.0
    %3649 = vmatpush1.msra.mxu0 0.0
    %3650 = vmatprep.subr.mxu0 0.0
    %3651 = vmatpush1.msra.mxu0 0.0
    %3652 = vmatprep.subr.mxu0 0.0
    %3653 = vmatpush1.msra.mxu0 0.0
    %3654 = vmatprep.subr.mxu0 0.0
    %3655 = vmatpush1.msra.mxu0 0.0
    %3656 = vmatprep.subr.mxu0 0.0
    %3657 = vmatpush1.msra.mxu0 0.0
    %3658 = vmatprep.subr.mxu0 0.0
    %3659 = vmatpush1.msra.mxu0 0.0
    %3660 = vmatprep.subr.mxu0 0.0
    %3661 = vmatpush1.msra.mxu0 0.0
    %3662 = vmatprep.subr.mxu0 0.0
    %3663 = vmatpush1.msra.mxu0 0.0
    %3664 = vmatprep.subr.mxu0 0.0
    %3665 = vmatpush1.msra.mxu0 0.0
    %3666 = vmatprep.subr.mxu0 0.0
    %3667 = vmatpush1.msra.mxu0 0.0
    %3668 = vmatprep.subr.mxu0 0.0
    %3669 = vmatpush1.msra.mxu0 0.0
    %3670 = vmatprep.subr.mxu0 0.0
    %3671 = vmatpush1.msra.mxu0 0.0
    %3672 = vmatprep.subr.mxu0 0.0
    %3673 = vmatpush1.msra.mxu0 0.0
    %3674 = vmatprep.subr.mxu0 0.0
    %3675 = vmatpush1.msra.mxu0 0.0
    %3676 = vmatprep.subr.mxu0 0.0
    %3677 = vmatpush1.msra.mxu0 0.0
    %3678 = vmatprep.subr.mxu0 0.0
    %3679 = vmatpush1.msra.mxu0 0.0
    %3680 = vmatprep.subr.mxu0 0.0
    %3681 = vmatpush1.msra.mxu0 0.0
    %3682 = vmatprep.subr.mxu0 0.0
    %3683 = vmatpush1.msra.mxu0 0.0
    %3684 = vmatprep.subr.mxu0 0.0
    %3685 = vmatpush1.msra.mxu0 0.0
    %3686 = vmatprep.subr.mxu0 0.0
    %3687 = vmatpush1.msra.mxu0 0.0
    %3688 = vmatprep.subr.mxu0 0.0
    %3689 = vmatpush1.msra.mxu0 0.0
    %3690 = vmatprep.subr.mxu0 0.0
    %3691 = vmatpush1.msra.mxu0 0.0
    %3692 = vmatprep.subr.mxu0 0.0
    %3693 = vmatpush1.msra.mxu0 0.0
    %3694 = vmatprep.subr.mxu0 0.0
    %3695 = vmatpush1.msra.mxu0 0.0
    %3696 = vmatprep.subr.mxu0 0.0
    %3697 = vmatpush1.msra.mxu0 0.0
    %3698 = vmatprep.mubr.f32.mxu0 0.0
    %3699 = vmatmul.mubr.f32.gmra.mrb[0].mxu0 %v3562
    %v3700 = vpop.f32.mrb[0].mxu0
    %v3701 = vadd.f32 0.0, %v3700
    %v3702 = vpop.f32.mrb[0].mxu0
    %3703 = vdwg.mxu0
    %v3705 = vrot.slane %v3631, 6
    %3706 = vrot.lane.b32.xlu0 %v3705, 96
    %v3707 = vpop.permute.xlu0 %3706
    %v3709 = vadd.f32 %v201, %v3707
    %v3710 = vxor.u32 %v3709, 2147483648
    %v3711 = vmul.f32 %v3710, 1.442695
    %v3712 = vpow.pop %v3711
    %v3713 = vadd.f32 %v3712, 1.0
    %v3714 = vrcp.pop %v3713
    %v3715 = vmul.f32 1.0, %v3714
    %v3717 = vrot.slane %v3701, 6
    %v3719 = vadd.f32 %v203, %v3717
    %v3720 = vxor.u32 %v3719, 2147483648
    %v3721 = vmul.f32 %v3720, 1.442695
    %v3722 = vpow.pop %v3721
    %v3723 = vadd.f32 %v3722, 1.0
    %v3724 = vrcp.pop %v3723
    %v3725 = vmul.f32 1.0, %v3724
    %3726 = vmatprep.subr.mxu0 0.0
    %3727 = vmatpush1.msra.mxu0 %v64
    %3728 = vmatprep.subr.mxu0 0.0
    %3729 = vmatpush1.msra.mxu0 %v65
    %3730 = vmatprep.subr.mxu0 0.0
    %3731 = vmatpush1.msra.mxu0 %v66
    %3732 = vmatprep.subr.mxu0 0.0
    %3733 = vmatpush1.msra.mxu0 %v67
    %3734 = vmatprep.subr.mxu0 0.0
    %3735 = vmatpush1.msra.mxu0 0.0
    %3736 = vmatprep.subr.mxu0 0.0
    %3737 = vmatpush1.msra.mxu0 0.0
    %3738 = vmatprep.subr.mxu0 0.0
    %3739 = vmatpush1.msra.mxu0 0.0
    %3740 = vmatprep.subr.mxu0 0.0
    %3741 = vmatpush1.msra.mxu0 0.0
    %3742 = vmatprep.subr.mxu0 0.0
    %3743 = vmatpush1.msra.mxu0 0.0
    %3744 = vmatprep.subr.mxu0 0.0
    %3745 = vmatpush1.msra.mxu0 0.0
    %3746 = vmatprep.subr.mxu0 0.0
    %3747 = vmatpush1.msra.mxu0 0.0
    %3748 = vmatprep.subr.mxu0 0.0
    %3749 = vmatpush1.msra.mxu0 0.0
    %3750 = vmatprep.subr.mxu0 0.0
    %3751 = vmatpush1.msra.mxu0 0.0
    %3752 = vmatprep.subr.mxu0 0.0
    %3753 = vmatpush1.msra.mxu0 0.0
    %3754 = vmatprep.subr.mxu0 0.0
    %3755 = vmatpush1.msra.mxu0 0.0
    %3756 = vmatprep.subr.mxu0 0.0
    %3757 = vmatpush1.msra.mxu0 0.0
    %3758 = vmatprep.subr.mxu0 0.0
    %3759 = vmatpush1.msra.mxu0 0.0
    %3760 = vmatprep.subr.mxu0 0.0
    %3761 = vmatpush1.msra.mxu0 0.0
    %3762 = vmatprep.subr.mxu0 0.0
    %3763 = vmatpush1.msra.mxu0 0.0
    %3764 = vmatprep.subr.mxu0 0.0
    %3765 = vmatpush1.msra.mxu0 0.0
    %3766 = vmatprep.subr.mxu0 0.0
    %3767 = vmatpush1.msra.mxu0 0.0
    %3768 = vmatprep.subr.mxu0 0.0
    %3769 = vmatpush1.msra.mxu0 0.0
    %3770 = vmatprep.subr.mxu0 0.0
    %3771 = vmatpush1.msra.mxu0 0.0
    %3772 = vmatprep.subr.mxu0 0.0
    %3773 = vmatpush1.msra.mxu0 0.0
    %3774 = vmatprep.subr.mxu0 0.0
    %3775 = vmatpush1.msra.mxu0 0.0
    %3776 = vmatprep.subr.mxu0 0.0
    %3777 = vmatpush1.msra.mxu0 0.0
    %3778 = vmatprep.subr.mxu0 0.0
    %3779 = vmatpush1.msra.mxu0 0.0
    %3780 = vmatprep.subr.mxu0 0.0
    %3781 = vmatpush1.msra.mxu0 0.0
    %3782 = vmatprep.subr.mxu0 0.0
    %3783 = vmatpush1.msra.mxu0 0.0
    %3784 = vmatprep.subr.mxu0 0.0
    %3785 = vmatpush1.msra.mxu0 0.0
    %3786 = vmatprep.subr.mxu0 0.0
    %3787 = vmatpush1.msra.mxu0 0.0
    %3788 = vmatprep.subr.mxu0 0.0
    %3789 = vmatpush1.msra.mxu0 0.0
    %3790 = vmatprep.mubr.f32.mxu0 0.0
    %3791 = vmatmul.mubr.f32.gmra.mrb[0].mxu0 %v3562
    %v3792 = vpop.f32.mrb[0].mxu0
    %v3793 = vadd.f32 %v100, %v3792
    %v3794 = vpop.f32.mrb[0].mxu0
    %3795 = vdwg.mxu0
    %v3797 = vrot.slane %v3793, 6
    %3798 = vrot.lane.b32.xlu0 %v3797, 96
    %v3799 = vpop.permute.xlu0 %3798
    %v3801 = vmul.f32 %v3715, %v3799
    %3803 = vrot.lane.b32.xlu0 %v3801, 64
    %v3804 = vpop.permute.xlu0 %3803
    %v3806 = vadd.f32 %v203, %v3804
    %v3807 = vtanh.pop %v3806
    %v3808 = vsub.f32 1.0, %v3725
    %3810 = vrot.lane.b32.xlu0 %v3807, 96
    %v3811 = vpop.permute.xlu0 %3810
    %v3813 = vmul.f32 %v3808, %v3811
    %v3814 = vrot.slane %v3296, 2
    %v3816 = vmul.f32 %v3725, %v3814
    %v3817 = vadd.f32 %v3813, %v3816
    %3819 = vrot.lane.b32.xlu0 %v3559, 96
    %v3820 = vpop.permute.xlu0 %3819
    %3822 = vst.msk [vmem:[#allocation2 + $0x8] sm:$0x30] %vm1235, %v3820
    %3823 = vst.msk [vmem:[#allocation3] sm:$0xc] %vm1233, %v3817
    %v3824 = vrot.slane %v3559, 4
    %3825 = vrot.lane.b32.xlu0 %v3824, 96
    %v3826 = vpop.permute.xlu0 %3825
    %v3827 = vsel %vm127, %v3826, 0
    %3829 = vmatprep.subr.mxu0 0.0
    %3830 = vmatpush1.msra.mxu0 %v39
    %3831 = vmatprep.subr.mxu0 0.0
    %3832 = vmatpush1.msra.mxu0 %v40
    %3833 = vmatprep.subr.mxu0 0.0
    %3834 = vmatpush1.msra.mxu0 %v41
    %3835 = vmatprep.subr.mxu0 0.0
    %3836 = vmatpush1.msra.mxu0 %v42
    %3837 = vmatprep.subr.mxu0 0.0
    %3838 = vmatpush1.msra.mxu0 0.0
    %3839 = vmatprep.subr.mxu0 0.0
    %3840 = vmatpush1.msra.mxu0 0.0
    %3841 = vmatprep.subr.mxu0 0.0
    %3842 = vmatpush1.msra.mxu0 0.0
    %3843 = vmatprep.subr.mxu0 0.0
    %3844 = vmatpush1.msra.mxu0 0.0
    %3845 = vmatprep.subr.mxu0 0.0
    %3846 = vmatpush1.msra.mxu0 0.0
    %3847 = vmatprep.subr.mxu0 0.0
    %3848 = vmatpush1.msra.mxu0 0.0
    %3849 = vmatprep.subr.mxu0 0.0
    %3850 = vmatpush1.msra.mxu0 0.0
    %3851 = vmatprep.subr.mxu0 0.0
    %3852 = vmatpush1.msra.mxu0 0.0
    %3853 = vmatprep.subr.mxu0 0.0
    %3854 = vmatpush1.msra.mxu0 0.0
    %3855 = vmatprep.subr.mxu0 0.0
    %3856 = vmatpush1.msra.mxu0 0.0
    %3857 = vmatprep.subr.mxu0 0.0
    %3858 = vmatpush1.msra.mxu0 0.0
    %3859 = vmatprep.subr.mxu0 0.0
    %3860 = vmatpush1.msra.mxu0 0.0
    %3861 = vmatprep.subr.mxu0 0.0
    %3862 = vmatpush1.msra.mxu0 0.0
    %3863 = vmatprep.subr.mxu0 0.0
    %3864 = vmatpush1.msra.mxu0 0.0
    %3865 = vmatprep.subr.mxu0 0.0
    %3866 = vmatpush1.msra.mxu0 0.0
    %3867 = vmatprep.subr.mxu0 0.0
    %3868 = vmatpush1.msra.mxu0 0.0
    %3869 = vmatprep.subr.mxu0 0.0
    %3870 = vmatpush1.msra.mxu0 0.0
    %3871 = vmatprep.subr.mxu0 0.0
    %3872 = vmatpush1.msra.mxu0 0.0
    %3873 = vmatprep.subr.mxu0 0.0
    %3874 = vmatpush1.msra.mxu0 0.0
    %3875 = vmatprep.subr.mxu0 0.0
    %3876 = vmatpush1.msra.mxu0 0.0
    %3877 = vmatprep.subr.mxu0 0.0
    %3878 = vmatpush1.msra.mxu0 0.0
    %3879 = vmatprep.subr.mxu0 0.0
    %3880 = vmatpush1.msra.mxu0 0.0
    %3881 = vmatprep.subr.mxu0 0.0
    %3882 = vmatpush1.msra.mxu0 0.0
    %3883 = vmatprep.subr.mxu0 0.0
    %3884 = vmatpush1.msra.mxu0 0.0
    %3885 = vmatprep.subr.mxu0 0.0
    %3886 = vmatpush1.msra.mxu0 0.0
    %3887 = vmatprep.subr.mxu0 0.0
    %3888 = vmatpush1.msra.mxu0 0.0
    %3889 = vmatprep.subr.mxu0 0.0
    %3890 = vmatpush1.msra.mxu0 0.0
    %3891 = vmatprep.subr.mxu0 0.0
    %3892 = vmatpush1.msra.mxu0 0.0
    %3893 = vmatprep.mubr.f32.mxu0 0.0
    %3894 = vmatmul.mubr.f32.gmra.mrb[0].mxu0 %v3827
    %v3895 = vpop.f32.mrb[0].mxu0
    %v3896 = vadd.f32 0.0, %v3895
    %v3897 = vpop.f32.mrb[0].mxu0
    %3898 = vdwg.mxu0
    %3899 = vmatprep.subr.mxu0 0.0
    %3900 = vmatpush1.msra.mxu0 %v44
    %3901 = vmatprep.subr.mxu0 0.0
    %3902 = vmatpush1.msra.mxu0 %v45
    %3903 = vmatprep.subr.mxu0 0.0
    %3904 = vmatpush1.msra.mxu0 %v46
    %3905 = vmatprep.subr.mxu0 0.0
    %3906 = vmatpush1.msra.mxu0 %v47
    %3907 = vmatprep.subr.mxu0 0.0
    %3908 = vmatpush1.msra.mxu0 0.0
    %3909 = vmatprep.subr.mxu0 0.0
    %3910 = vmatpush1.msra.mxu0 0.0
    %3911 = vmatprep.subr.mxu0 0.0
    %3912 = vmatpush1.msra.mxu0 0.0
    %3913 = vmatprep.subr.mxu0 0.0
    %3914 = vmatpush1.msra.mxu0 0.0
    %3915 = vmatprep.subr.mxu0 0.0
    %3916 = vmatpush1.msra.mxu0 0.0
    %3917 = vmatprep.subr.mxu0 0.0
    %3918 = vmatpush1.msra.mxu0 0.0
    %3919 = vmatprep.subr.mxu0 0.0
    %3920 = vmatpush1.msra.mxu0 0.0
    %3921 = vmatprep.subr.mxu0 0.0
    %3922 = vmatpush1.msra.mxu0 0.0
    %3923 = vmatprep.subr.mxu0 0.0
    %3924 = vmatpush1.msra.mxu0 0.0
    %3925 = vmatprep.subr.mxu0 0.0
    %3926 = vmatpush1.msra.mxu0 0.0
    %3927 = vmatprep.subr.mxu0 0.0
    %3928 = vmatpush1.msra.mxu0 0.0
    %3929 = vmatprep.subr.mxu0 0.0
    %3930 = vmatpush1.msra.mxu0 0.0
    %3931 = vmatprep.subr.mxu0 0.0
    %3932 = vmatpush1.msra.mxu0 0.0
    %3933 = vmatprep.subr.mxu0 0.0
    %3934 = vmatpush1.msra.mxu0 0.0
    %3935 = vmatprep.subr.mxu0 0.0
    %3936 = vmatpush1.msra.mxu0 0.0
    %3937 = vmatprep.subr.mxu0 0.0
    %3938 = vmatpush1.msra.mxu0 0.0
    %3939 = vmatprep.subr.mxu0 0.0
    %3940 = vmatpush1.msra.mxu0 0.0
    %3941 = vmatprep.subr.mxu0 0.0
    %3942 = vmatpush1.msra.mxu0 0.0
    %3943 = vmatprep.subr.mxu0 0.0
    %3944 = vmatpush1.msra.mxu0 0.0
    %3945 = vmatprep.subr.mxu0 0.0
    %3946 = vmatpush1.msra.mxu0 0.0
    %3947 = vmatprep.subr.mxu0 0.0
    %3948 = vmatpush1.msra.mxu0 0.0
    %3949 = vmatprep.subr.mxu0 0.0
    %3950 = vmatpush1.msra.mxu0 0.0
    %3951 = vmatprep.subr.mxu0 0.0
    %3952 = vmatpush1.msra.mxu0 0.0
    %3953 = vmatprep.subr.mxu0 0.0
    %3954 = vmatpush1.msra.mxu0 0.0
    %3955 = vmatprep.subr.mxu0 0.0
    %3956 = vmatpush1.msra.mxu0 0.0
    %3957 = vmatprep.subr.mxu0 0.0
    %3958 = vmatpush1.msra.mxu0 0.0
    %3959 = vmatprep.subr.mxu0 0.0
    %3960 = vmatpush1.msra.mxu0 0.0
    %3961 = vmatprep.subr.mxu0 0.0
    %3962 = vmatpush1.msra.mxu0 0.0
    %3963 = vmatprep.mubr.f32.mxu0 0.0
    %3964 = vmatmul.mubr.f32.gmra.mrb[0].mxu0 %v3827
    %v3965 = vpop.f32.mrb[0].mxu0
    %v3966 = vadd.f32 0.0, %v3965
    %v3967 = vpop.f32.mrb[0].mxu0
    %3968 = vdwg.mxu0
    %v3970 = vrot.slane %v3896, 2
    %v3972 = vadd.f32 %v207, %v3970
    %v3973 = vxor.u32 %v3972, 2147483648
    %v3974 = vmul.f32 %v3973, 1.442695
    %v3975 = vpow.pop %v3974
    %v3976 = vadd.f32 %v3975, 1.0
    %v3977 = vrcp.pop %v3976
    %v3978 = vmul.f32 1.0, %v3977
    %v3980 = vrot.slane %v3966, 2
    %3981 = vrot.lane.b32.xlu0 %v3980, 32
    %v3982 = vpop.permute.xlu0 %3981
    %v3984 = vadd.f32 %v207, %v3982
    %v3985 = vxor.u32 %v3984, 2147483648
    %v3986 = vmul.f32 %v3985, 1.442695
    %v3987 = vpow.pop %v3986
    %v3988 = vadd.f32 %v3987, 1.0
    %v3989 = vrcp.pop %v3988
    %v3990 = vmul.f32 1.0, %v3989
    %3991 = vmatprep.subr.mxu0 0.0
    %3992 = vmatpush1.msra.mxu0 %v49
    %3993 = vmatprep.subr.mxu0 0.0
    %3994 = vmatpush1.msra.mxu0 %v50
    %3995 = vmatprep.subr.mxu0 0.0
    %3996 = vmatpush1.msra.mxu0 %v51
    %3997 = vmatprep.subr.mxu0 0.0
    %3998 = vmatpush1.msra.mxu0 %v52
    %3999 = vmatprep.subr.mxu0 0.0
    %4000 = vmatpush1.msra.mxu0 0.0
    %4001 = vmatprep.subr.mxu0 0.0
    %4002 = vmatpush1.msra.mxu0 0.0
    %4003 = vmatprep.subr.mxu0 0.0
    %4004 = vmatpush1.msra.mxu0 0.0
    %4005 = vmatprep.subr.mxu0 0.0
    %4006 = vmatpush1.msra.mxu0 0.0
    %4007 = vmatprep.subr.mxu0 0.0
    %4008 = vmatpush1.msra.mxu0 0.0
    %4009 = vmatprep.subr.mxu0 0.0
    %4010 = vmatpush1.msra.mxu0 0.0
    %4011 = vmatprep.subr.mxu0 0.0
    %4012 = vmatpush1.msra.mxu0 0.0
    %4013 = vmatprep.subr.mxu0 0.0
    %4014 = vmatpush1.msra.mxu0 0.0
    %4015 = vmatprep.subr.mxu0 0.0
    %4016 = vmatpush1.msra.mxu0 0.0
    %4017 = vmatprep.subr.mxu0 0.0
    %4018 = vmatpush1.msra.mxu0 0.0
    %4019 = vmatprep.subr.mxu0 0.0
    %4020 = vmatpush1.msra.mxu0 0.0
    %4021 = vmatprep.subr.mxu0 0.0
    %4022 = vmatpush1.msra.mxu0 0.0
    %4023 = vmatprep.subr.mxu0 0.0
    %4024 = vmatpush1.msra.mxu0 0.0
    %4025 = vmatprep.subr.mxu0 0.0
    %4026 = vmatpush1.msra.mxu0 0.0
    %4027 = vmatprep.subr.mxu0 0.0
    %4028 = vmatpush1.msra.mxu0 0.0
    %4029 = vmatprep.subr.mxu0 0.0
    %4030 = vmatpush1.msra.mxu0 0.0
    %4031 = vmatprep.subr.mxu0 0.0
    %4032 = vmatpush1.msra.mxu0 0.0
    %4033 = vmatprep.subr.mxu0 0.0
    %4034 = vmatpush1.msra.mxu0 0.0
    %4035 = vmatprep.subr.mxu0 0.0
    %4036 = vmatpush1.msra.mxu0 0.0
    %4037 = vmatprep.subr.mxu0 0.0
    %4038 = vmatpush1.msra.mxu0 0.0
    %4039 = vmatprep.subr.mxu0 0.0
    %4040 = vmatpush1.msra.mxu0 0.0
    %4041 = vmatprep.subr.mxu0 0.0
    %4042 = vmatpush1.msra.mxu0 0.0
    %4043 = vmatprep.subr.mxu0 0.0
    %4044 = vmatpush1.msra.mxu0 0.0
    %4045 = vmatprep.subr.mxu0 0.0
    %4046 = vmatpush1.msra.mxu0 0.0
    %4047 = vmatprep.subr.mxu0 0.0
    %4048 = vmatpush1.msra.mxu0 0.0
    %4049 = vmatprep.subr.mxu0 0.0
    %4050 = vmatpush1.msra.mxu0 0.0
    %4051 = vmatprep.subr.mxu0 0.0
    %4052 = vmatpush1.msra.mxu0 0.0
    %4053 = vmatprep.subr.mxu0 0.0
    %4054 = vmatpush1.msra.mxu0 0.0
    %4055 = vmatprep.mubr.f32.mxu0 0.0
    %4056 = vmatmul.mubr.f32.gmra.mrb[0].mxu0 %v3827
    %v4057 = vpop.f32.mrb[0].mxu0
    %v4058 = vadd.f32 %v98, %v4057
    %v4059 = vpop.f32.mrb[0].mxu0
    %4060 = vdwg.mxu0
    %v4062 = vrot.slane %v4058, 2
    %v4064 = vmul.f32 %v3978, %v4062
    %4066 = vrot.lane.b32.xlu0 %v4064, 64
    %v4067 = vpop.permute.xlu0 %4066
    %v4069 = vadd.f32 %v207, %v4067
    %v4070 = vtanh.pop %v4069
    %v4071 = vsub.f32 1.0, %v3990
    %4073 = vrot.lane.b32.xlu0 %v4070, 96
    %v4074 = vpop.permute.xlu0 %4073
    %v4076 = vmul.f32 %v4071, %v4074
    %v4077 = vrot.slane %v3559, 6
    %v4079 = vmul.f32 %v3990, %v4077
    %v4080 = vadd.f32 %v4076, %v4079
    %v4082 = vrot.slane %v3817, 2
    %v4083 = vsel %vm127, %v4082, 0
    %4085 = vmatprep.subr.mxu0 0.0
    %4086 = vmatpush1.msra.mxu0 %v54
    %4087 = vmatprep.subr.mxu0 0.0
    %4088 = vmatpush1.msra.mxu0 %v55
    %4089 = vmatprep.subr.mxu0 0.0
    %4090 = vmatpush1.msra.mxu0 %v56
    %4091 = vmatprep.subr.mxu0 0.0
    %4092 = vmatpush1.msra.mxu0 %v57
    %4093 = vmatprep.subr.mxu0 0.0
    %4094 = vmatpush1.msra.mxu0 0.0
    %4095 = vmatprep.subr.mxu0 0.0
    %4096 = vmatpush1.msra.mxu0 0.0
    %4097 = vmatprep.subr.mxu0 0.0
    %4098 = vmatpush1.msra.mxu0 0.0
    %4099 = vmatprep.subr.mxu0 0.0
    %4100 = vmatpush1.msra.mxu0 0.0
    %4101 = vmatprep.subr.mxu0 0.0
    %4102 = vmatpush1.msra.mxu0 0.0
    %4103 = vmatprep.subr.mxu0 0.0
    %4104 = vmatpush1.msra.mxu0 0.0
    %4105 = vmatprep.subr.mxu0 0.0
    %4106 = vmatpush1.msra.mxu0 0.0
    %4107 = vmatprep.subr.mxu0 0.0
    %4108 = vmatpush1.msra.mxu0 0.0
    %4109 = vmatprep.subr.mxu0 0.0
    %4110 = vmatpush1.msra.mxu0 0.0
    %4111 = vmatprep.subr.mxu0 0.0
    %4112 = vmatpush1.msra.mxu0 0.0
    %4113 = vmatprep.subr.mxu0 0.0
    %4114 = vmatpush1.msra.mxu0 0.0
    %4115 = vmatprep.subr.mxu0 0.0
    %4116 = vmatpush1.msra.mxu0 0.0
    %4117 = vmatprep.subr.mxu0 0.0
    %4118 = vmatpush1.msra.mxu0 0.0
    %4119 = vmatprep.subr.mxu0 0.0
    %4120 = vmatpush1.msra.mxu0 0.0
    %4121 = vmatprep.subr.mxu0 0.0
    %4122 = vmatpush1.msra.mxu0 0.0
    %4123 = vmatprep.subr.mxu0 0.0
    %4124 = vmatpush1.msra.mxu0 0.0
    %4125 = vmatprep.subr.mxu0 0.0
    %4126 = vmatpush1.msra.mxu0 0.0
    %4127 = vmatprep.subr.mxu0 0.0
    %4128 = vmatpush1.msra.mxu0 0.0
    %4129 = vmatprep.subr.mxu0 0.0
    %4130 = vmatpush1.msra.mxu0 0.0
    %4131 = vmatprep.subr.mxu0 0.0
    %4132 = vmatpush1.msra.mxu0 0.0
    %4133 = vmatprep.subr.mxu0 0.0
    %4134 = vmatpush1.msra.mxu0 0.0
    %4135 = vmatprep.subr.mxu0 0.0
    %4136 = vmatpush1.msra.mxu0 0.0
    %4137 = vmatprep.subr.mxu0 0.0
    %4138 = vmatpush1.msra.mxu0 0.0
    %4139 = vmatprep.subr.mxu0 0.0
    %4140 = vmatpush1.msra.mxu0 0.0
    %4141 = vmatprep.subr.mxu0 0.0
    %4142 = vmatpush1.msra.mxu0 0.0
    %4143 = vmatprep.subr.mxu0 0.0
    %4144 = vmatpush1.msra.mxu0 0.0
    %4145 = vmatprep.subr.mxu0 0.0
    %4146 = vmatpush1.msra.mxu0 0.0
    %4147 = vmatprep.subr.mxu0 0.0
    %4148 = vmatpush1.msra.mxu0 0.0
    %4149 = vmatprep.mubr.f32.mxu0 0.0
    %4150 = vmatmul.mubr.f32.gmra.mrb[0].mxu0 %v4083
    %v4151 = vpop.f32.mrb[0].mxu0
    %v4152 = vadd.f32 0.0, %v4151
    %v4153 = vpop.f32.mrb[0].mxu0
    %4154 = vdwg.mxu0
    %4155 = vmatprep.subr.mxu0 0.0
    %4156 = vmatpush1.msra.mxu0 %v59
    %4157 = vmatprep.subr.mxu0 0.0
    %4158 = vmatpush1.msra.mxu0 %v60
    %4159 = vmatprep.subr.mxu0 0.0
    %4160 = vmatpush1.msra.mxu0 %v61
    %4161 = vmatprep.subr.mxu0 0.0
    %4162 = vmatpush1.msra.mxu0 %v62
    %4163 = vmatprep.subr.mxu0 0.0
    %4164 = vmatpush1.msra.mxu0 0.0
    %4165 = vmatprep.subr.mxu0 0.0
    %4166 = vmatpush1.msra.mxu0 0.0
    %4167 = vmatprep.subr.mxu0 0.0
    %4168 = vmatpush1.msra.mxu0 0.0
    %4169 = vmatprep.subr.mxu0 0.0
    %4170 = vmatpush1.msra.mxu0 0.0
    %4171 = vmatprep.subr.mxu0 0.0
    %4172 = vmatpush1.msra.mxu0 0.0
    %4173 = vmatprep.subr.mxu0 0.0
    %4174 = vmatpush1.msra.mxu0 0.0
    %4175 = vmatprep.subr.mxu0 0.0
    %4176 = vmatpush1.msra.mxu0 0.0
    %4177 = vmatprep.subr.mxu0 0.0
    %4178 = vmatpush1.msra.mxu0 0.0
    %4179 = vmatprep.subr.mxu0 0.0
    %4180 = vmatpush1.msra.mxu0 0.0
    %4181 = vmatprep.subr.mxu0 0.0
    %4182 = vmatpush1.msra.mxu0 0.0
    %4183 = vmatprep.subr.mxu0 0.0
    %4184 = vmatpush1.msra.mxu0 0.0
    %4185 = vmatprep.subr.mxu0 0.0
    %4186 = vmatpush1.msra.mxu0 0.0
    %4187 = vmatprep.subr.mxu0 0.0
    %4188 = vmatpush1.msra.mxu0 0.0
    %4189 = vmatprep.subr.mxu0 0.0
    %4190 = vmatpush1.msra.mxu0 0.0
    %4191 = vmatprep.subr.mxu0 0.0
    %4192 = vmatpush1.msra.mxu0 0.0
    %4193 = vmatprep.subr.mxu0 0.0
    %4194 = vmatpush1.msra.mxu0 0.0
    %4195 = vmatprep.subr.mxu0 0.0
    %4196 = vmatpush1.msra.mxu0 0.0
    %4197 = vmatprep.subr.mxu0 0.0
    %4198 = vmatpush1.msra.mxu0 0.0
    %4199 = vmatprep.subr.mxu0 0.0
    %4200 = vmatpush1.msra.mxu0 0.0
    %4201 = vmatprep.subr.mxu0 0.0
    %4202 = vmatpush1.msra.mxu0 0.0
    %4203 = vmatprep.subr.mxu0 0.0
    %4204 = vmatpush1.msra.mxu0 0.0
    %4205 = vmatprep.subr.mxu0 0.0
    %4206 = vmatpush1.msra.mxu0 0.0
    %4207 = vmatprep.subr.mxu0 0.0
    %4208 = vmatpush1.msra.mxu0 0.0
    %4209 = vmatprep.subr.mxu0 0.0
    %4210 = vmatpush1.msra.mxu0 0.0
    %4211 = vmatprep.subr.mxu0 0.0
    %4212 = vmatpush1.msra.mxu0 0.0
    %4213 = vmatprep.subr.mxu0 0.0
    %4214 = vmatpush1.msra.mxu0 0.0
    %4215 = vmatprep.subr.mxu0 0.0
    %4216 = vmatpush1.msra.mxu0 0.0
    %4217 = vmatprep.subr.mxu0 0.0
    %4218 = vmatpush1.msra.mxu0 0.0
    %4219 = vmatprep.mubr.f32.mxu0 0.0
    %4220 = vmatmul.mubr.f32.gmra.mrb[0].mxu0 %v4083
    %v4221 = vpop.f32.mrb[0].mxu0
    %v4222 = vadd.f32 0.0, %v4221
    %v4223 = vpop.f32.mrb[0].mxu0
    %4224 = vdwg.mxu0
    %4226 = vrot.lane.b32.xlu0 %v4152, 96
    %v4227 = vpop.permute.xlu0 %4226
    %v4229 = vadd.f32 %v201, %v4227
    %v4230 = vxor.u32 %v4229, 2147483648
    %v4231 = vmul.f32 %v4230, 1.442695
    %v4232 = vpow.pop %v4231
    %v4233 = vadd.f32 %v4232, 1.0
    %v4234 = vrcp.pop %v4233
    %v4235 = vmul.f32 1.0, %v4234
    %v4236 = vadd.f32 %v203, %v4222
    %v4237 = vxor.u32 %v4236, 2147483648
    %v4238 = vmul.f32 %v4237, 1.442695
    %v4239 = vpow.pop %v4238
    %v4240 = vadd.f32 %v4239, 1.0
    %v4241 = vrcp.pop %v4240
    %v4242 = vmul.f32 1.0, %v4241
    %4243 = vmatprep.subr.mxu0 0.0
    %4244 = vmatpush1.msra.mxu0 %v64
    %4245 = vmatprep.subr.mxu0 0.0
    %4246 = vmatpush1.msra.mxu0 %v65
    %4247 = vmatprep.subr.mxu0 0.0
    %4248 = vmatpush1.msra.mxu0 %v66
    %4249 = vmatprep.subr.mxu0 0.0
    %4250 = vmatpush1.msra.mxu0 %v67
    %4251 = vmatprep.subr.mxu0 0.0
    %4252 = vmatpush1.msra.mxu0 0.0
    %4253 = vmatprep.subr.mxu0 0.0
    %4254 = vmatpush1.msra.mxu0 0.0
    %4255 = vmatprep.subr.mxu0 0.0
    %4256 = vmatpush1.msra.mxu0 0.0
    %4257 = vmatprep.subr.mxu0 0.0
    %4258 = vmatpush1.msra.mxu0 0.0
    %4259 = vmatprep.subr.mxu0 0.0
    %4260 = vmatpush1.msra.mxu0 0.0
    %4261 = vmatprep.subr.mxu0 0.0
    %4262 = vmatpush1.msra.mxu0 0.0
    %4263 = vmatprep.subr.mxu0 0.0
    %4264 = vmatpush1.msra.mxu0 0.0
    %4265 = vmatprep.subr.mxu0 0.0
    %4266 = vmatpush1.msra.mxu0 0.0
    %4267 = vmatprep.subr.mxu0 0.0
    %4268 = vmatpush1.msra.mxu0 0.0
    %4269 = vmatprep.subr.mxu0 0.0
    %4270 = vmatpush1.msra.mxu0 0.0
    %4271 = vmatprep.subr.mxu0 0.0
    %4272 = vmatpush1.msra.mxu0 0.0
    %4273 = vmatprep.subr.mxu0 0.0
    %4274 = vmatpush1.msra.mxu0 0.0
    %4275 = vmatprep.subr.mxu0 0.0
    %4276 = vmatpush1.msra.mxu0 0.0
    %4277 = vmatprep.subr.mxu0 0.0
    %4278 = vmatpush1.msra.mxu0 0.0
    %4279 = vmatprep.subr.mxu0 0.0
    %4280 = vmatpush1.msra.mxu0 0.0
    %4281 = vmatprep.subr.mxu0 0.0
    %4282 = vmatpush1.msra.mxu0 0.0
    %4283 = vmatprep.subr.mxu0 0.0
    %4284 = vmatpush1.msra.mxu0 0.0
    %4285 = vmatprep.subr.mxu0 0.0
    %4286 = vmatpush1.msra.mxu0 0.0
    %4287 = vmatprep.subr.mxu0 0.0
    %4288 = vmatpush1.msra.mxu0 0.0
    %4289 = vmatprep.subr.mxu0 0.0
    %4290 = vmatpush1.msra.mxu0 0.0
    %4291 = vmatprep.subr.mxu0 0.0
    %4292 = vmatpush1.msra.mxu0 0.0
    %4293 = vmatprep.subr.mxu0 0.0
    %4294 = vmatpush1.msra.mxu0 0.0
    %4295 = vmatprep.subr.mxu0 0.0
    %4296 = vmatpush1.msra.mxu0 0.0
    %4297 = vmatprep.subr.mxu0 0.0
    %4298 = vmatpush1.msra.mxu0 0.0
    %4299 = vmatprep.subr.mxu0 0.0
    %4300 = vmatpush1.msra.mxu0 0.0
    %4301 = vmatprep.subr.mxu0 0.0
    %4302 = vmatpush1.msra.mxu0 0.0
    %4303 = vmatprep.subr.mxu0 0.0
    %4304 = vmatpush1.msra.mxu0 0.0
    %4305 = vmatprep.subr.mxu0 0.0
    %4306 = vmatpush1.msra.mxu0 0.0
    %4307 = vmatprep.mubr.f32.mxu0 0.0
    %4308 = vmatmul.mubr.f32.gmra.mrb[0].mxu0 %v4083
    %v4309 = vpop.f32.mrb[0].mxu0
    %v4310 = vadd.f32 %v100, %v4309
    %v4311 = vpop.f32.mrb[0].mxu0
    %4312 = vdwg.mxu0
    %4314 = vrot.lane.b32.xlu0 %v4310, 96
    %v4315 = vpop.permute.xlu0 %4314
    %v4317 = vmul.f32 %v4235, %v4315
    %4319 = vrot.lane.b32.xlu0 %v4317, 64
    %v4320 = vpop.permute.xlu0 %4319
    %v4322 = vadd.f32 %v203, %v4320
    %v4323 = vtanh.pop %v4322
    %v4324 = vsub.f32 1.0, %v4242
    %4326 = vrot.lane.b32.xlu0 %v4323, 96
    %v4327 = vpop.permute.xlu0 %4326
    %v4329 = vmul.f32 %v4324, %v4327
    %v4331 = vmul.f32 %v4242, %v4082
    %v4332 = vadd.f32 %v4329, %v4331
    %4334 = vrot.lane.b32.xlu0 %v4080, 96
    %v4335 = vpop.permute.xlu0 %4334
    %4337 = vst.msk [vmem:[#allocation2 + $0x8] sm:$0xc0] %vm715, %v4335
    %4338 = vst.msk [vmem:[#allocation3] sm:$0x3] %vm713, %v4332
    %v4339 = vld [vmem:[#allocation2] sm:$0xff]
    %v4340 = vld [vmem:[#allocation2 + $0x8] sm:$0xff]
    %v4341 = vld [vmem:[%s3] sm:$0xff]
    %v4342 = vld [vmem:[%s3 + $0x8] sm:$0xff]
    %v4343 = vld [vmem:[%s3 + $0x10] sm:$0xff]
    %v4344 = vld [vmem:[%s3 + $0x18] sm:$0xff]
    %v4345 = vld [vmem:[%s3 + $0x20] sm:$0xff]
    %v4346 = vld [vmem:[%s3 + $0x28] sm:$0xff]
    %v4347 = vld [vmem:[%s3 + $0x30] sm:$0xff]
    %v4348 = vld [vmem:[%s3 + $0x38] sm:$0xff]
    %v4349 = vld [vmem:[#allocation3] sm:$0xff]
    %v4350 = vld [vmem:[#allocation3 + $0x8] sm:$0xff]
    %s4351 = scalar_lea.vmem %s3, 64
    %v4352 = vld [vmem:[%s4351] sm:$0xff]
    %v4353 = vld [vmem:[%s4351 + $0x8] sm:$0xff]
    %v4354 = vld [vmem:[%s4351 + $0x10] sm:$0xff]
    %v4355 = vld [vmem:[%s4351 + $0x18] sm:$0xff]
    %v4356 = vld [vmem:[%s4351 + $0x20] sm:$0xff]
    %v4357 = vld [vmem:[%s4351 + $0x28] sm:$0xff]
    %v4358 = vld [vmem:[%s4351 + $0x30] sm:$0xff]
    %v4359 = vld [vmem:[%s4351 + $0x38] sm:$0xff]
    %v4361 = vsel %vm127, %v4349, 0
    %v4364 = vsel %vm127, %v4350, 0
    %4366 = vmatprep.subr.mxu0 %v4353
    %4367 = vmatpush1.msra.mxu0 %v4352
    %4368 = vmatprep.subr.mxu0 %v4355
    %4369 = vmatpush1.msra.mxu0 %v4354
    %4370 = vmatprep.subr.mxu0 %v4357
    %4371 = vmatpush1.msra.mxu0 %v4356
    %4372 = vmatprep.subr.mxu0 %v4359
    %4373 = vmatpush1.msra.mxu0 %v4358
    %4374 = vmatprep.subr.mxu0 0.0
    %4375 = vmatpush1.msra.mxu0 0.0
    %4376 = vmatprep.subr.mxu0 0.0
    %4377 = vmatpush1.msra.mxu0 0.0
    %4378 = vmatprep.subr.mxu0 0.0
    %4379 = vmatpush1.msra.mxu0 0.0
    %4380 = vmatprep.subr.mxu0 0.0
    %4381 = vmatpush1.msra.mxu0 0.0
    %4382 = vmatprep.subr.mxu0 0.0
    %4383 = vmatpush1.msra.mxu0 0.0
    %4384 = vmatprep.subr.mxu0 0.0
    %4385 = vmatpush1.msra.mxu0 0.0
    %4386 = vmatprep.subr.mxu0 0.0
    %4387 = vmatpush1.msra.mxu0 0.0
    %4388 = vmatprep.subr.mxu0 0.0
    %4389 = vmatpush1.msra.mxu0 0.0
    %4390 = vmatprep.subr.mxu0 0.0
    %4391 = vmatpush1.msra.mxu0 0.0
    %4392 = vmatprep.subr.mxu0 0.0
    %4393 = vmatpush1.msra.mxu0 0.0
    %4394 = vmatprep.subr.mxu0 0.0
    %4395 = vmatpush1.msra.mxu0 0.0
    %4396 = vmatprep.subr.mxu0 0.0
    %4397 = vmatpush1.msra.mxu0 0.0
    %4398 = vmatprep.subr.mxu0 0.0
    %4399 = vmatpush1.msra.mxu0 0.0
    %4400 = vmatprep.subr.mxu0 0.0
    %4401 = vmatpush1.msra.mxu0 0.0
    %4402 = vmatprep.subr.mxu0 0.0
    %4403 = vmatpush1.msra.mxu0 0.0
    %4404 = vmatprep.subr.mxu0 0.0
    %4405 = vmatpush1.msra.mxu0 0.0
    %4406 = vmatprep.subr.mxu0 0.0
    %4407 = vmatpush1.msra.mxu0 0.0
    %4408 = vmatprep.subr.mxu0 0.0
    %4409 = vmatpush1.msra.mxu0 0.0
    %4410 = vmatprep.subr.mxu0 0.0
    %4411 = vmatpush1.msra.mxu0 0.0
    %4412 = vmatprep.subr.mxu0 0.0
    %4413 = vmatpush1.msra.mxu0 0.0
    %4414 = vmatprep.subr.mxu0 0.0
    %4415 = vmatpush1.msra.mxu0 0.0
    %4416 = vmatprep.subr.mxu0 0.0
    %4417 = vmatpush1.msra.mxu0 0.0
    %4418 = vmatprep.subr.mxu0 0.0
    %4419 = vmatpush1.msra.mxu0 0.0
    %4420 = vmatprep.subr.mxu0 0.0
    %4421 = vmatpush1.msra.mxu0 0.0
    %4422 = vmatprep.subr.mxu0 0.0
    %4423 = vmatpush1.msra.mxu0 0.0
    %4424 = vmatprep.subr.mxu0 0.0
    %4425 = vmatpush1.msra.mxu0 0.0
    %4426 = vmatprep.subr.mxu0 0.0
    %4427 = vmatpush1.msra.mxu0 0.0
    %4428 = vmatprep.subr.mxu0 0.0
    %4429 = vmatpush1.msra.mxu0 0.0
    %4430 = vmatprep.mubr.f32.mxu0 0.0
    %4431 = vmatmul.mubr.f32.gmra.mrb[0].mxu0 %v4361
    %v4432 = vpop.f32.mrb[0].mxu0
    %v4433 = vadd.f32 0.0, %v4432
    %v4434 = vpop.f32.mrb[0].mxu0
    %4435 = vmatprep.mubr.f32.mxu0 0.0
    %4436 = vmatmul.mubr.f32.gmra.mrb[0].mxu0 %v4364
    %v4437 = vpop.f32.mrb[0].mxu0
    %v4438 = vadd.f32 0.0, %v4437
    %v4439 = vpop.f32.mrb[0].mxu0
    %v4440 = vadd.f32 0.0, %v4439
    %4441 = vdwg.mxu0
    %v4443 = vsel %vm127, %v4339, 0
    %v4446 = vsel %vm127, %v4340, 0
    %4448 = vmatprep.subr.mxu0 %v4342
    %4449 = vmatpush1.msra.mxu0 %v4341
    %4450 = vmatprep.subr.mxu0 %v4344
    %4451 = vmatpush1.msra.mxu0 %v4343
    %4452 = vmatprep.subr.mxu0 %v4346
    %4453 = vmatpush1.msra.mxu0 %v4345
    %4454 = vmatprep.subr.mxu0 %v4348
    %4455 = vmatpush1.msra.mxu0 %v4347
    %4456 = vmatprep.subr.mxu0 0.0
    %4457 = vmatpush1.msra.mxu0 0.0
    %4458 = vmatprep.subr.mxu0 0.0
    %4459 = vmatpush1.msra.mxu0 0.0
    %4460 = vmatprep.subr.mxu0 0.0
    %4461 = vmatpush1.msra.mxu0 0.0
    %4462 = vmatprep.subr.mxu0 0.0
    %4463 = vmatpush1.msra.mxu0 0.0
    %4464 = vmatprep.subr.mxu0 0.0
    %4465 = vmatpush1.msra.mxu0 0.0
    %4466 = vmatprep.subr.mxu0 0.0
    %4467 = vmatpush1.msra.mxu0 0.0
    %4468 = vmatprep.subr.mxu0 0.0
    %4469 = vmatpush1.msra.mxu0 0.0
    %4470 = vmatprep.subr.mxu0 0.0
    %4471 = vmatpush1.msra.mxu0 0.0
    %4472 = vmatprep.subr.mxu0 0.0
    %4473 = vmatpush1.msra.mxu0 0.0
    %4474 = vmatprep.subr.mxu0 0.0
    %4475 = vmatpush1.msra.mxu0 0.0
    %4476 = vmatprep.subr.mxu0 0.0
    %4477 = vmatpush1.msra.mxu0 0.0
    %4478 = vmatprep.subr.mxu0 0.0
    %4479 = vmatpush1.msra.mxu0 0.0
    %4480 = vmatprep.subr.mxu0 0.0
    %4481 = vmatpush1.msra.mxu0 0.0
    %4482 = vmatprep.subr.mxu0 0.0
    %4483 = vmatpush1.msra.mxu0 0.0
    %4484 = vmatprep.subr.mxu0 0.0
    %4485 = vmatpush1.msra.mxu0 0.0
    %4486 = vmatprep.subr.mxu0 0.0
    %4487 = vmatpush1.msra.mxu0 0.0
    %4488 = vmatprep.subr.mxu0 0.0
    %4489 = vmatpush1.msra.mxu0 0.0
    %4490 = vmatprep.subr.mxu0 0.0
    %4491 = vmatpush1.msra.mxu0 0.0
    %4492 = vmatprep.subr.mxu0 0.0
    %4493 = vmatpush1.msra.mxu0 0.0
    %4494 = vmatprep.subr.mxu0 0.0
    %4495 = vmatpush1.msra.mxu0 0.0
    %4496 = vmatprep.subr.mxu0 0.0
    %4497 = vmatpush1.msra.mxu0 0.0
    %4498 = vmatprep.subr.mxu0 0.0
    %4499 = vmatpush1.msra.mxu0 0.0
    %4500 = vmatprep.subr.mxu0 0.0
    %4501 = vmatpush1.msra.mxu0 0.0
    %4502 = vmatprep.subr.mxu0 0.0
    %4503 = vmatpush1.msra.mxu0 0.0
    %4504 = vmatprep.subr.mxu0 0.0
    %4505 = vmatpush1.msra.mxu0 0.0
    %4506 = vmatprep.subr.mxu0 0.0
    %4507 = vmatpush1.msra.mxu0 0.0
    %4508 = vmatprep.subr.mxu0 0.0
    %4509 = vmatpush1.msra.mxu0 0.0
    %4510 = vmatprep.subr.mxu0 0.0
    %4511 = vmatpush1.msra.mxu0 0.0
    %4512 = vmatprep.mubr.f32.mxu0 0.0
    %4513 = vmatmul.mubr.f32.gmra.mrb[0].mxu0 %v4443
    %v4514 = vpop.f32.mrb[0].mxu0
    %v4515 = vadd.f32 %v4433, %v4514
    %v4516 = vpop.f32.mrb[0].mxu0
    %4517 = vmatprep.mubr.f32.mxu0 0.0
    %4518 = vmatmul.mubr.f32.gmra.mrb[0].mxu0 %v4446
    %v4519 = vpop.f32.mrb[0].mxu0
    %v4520 = vadd.f32 %v4438, %v4519
    %v4521 = vpop.f32.mrb[0].mxu0
    %v4522 = vadd.f32 %v4440, %v4521
    %4523 = vdwg.mxu0
    %v4524 = vld [vmem:[%s4] sm:$0x3]
    %v4526 = vlaneseq
    %v4527 = vshrl.u32 %v4526, 7
    %v4528 = vsub.s32 0, %v4527
    %v4529 = vrot.slane %v4524, %v4528
    %v4530 = vlaneseq
    %v4531 = vshrl.u32 %v4530, 7
    %v4532 = vsub.s32 1, %v4531
    %v4533 = vrot.slane %v4524, %v4532
    %v4536 = vadd.f32 %v4515, %v4529
    %v4537 = vadd.f32 %v4520, %v4529
    %v4538 = vadd.f32 %v4522, %v4533
    %4539 = vmatprep.subr.mxu0 0.0
    %4540 = vmatpush1.msra.mxu0 %v84
    %4541 = vmatprep.subr.mxu0 0.0
    %4542 = vmatpush1.msra.mxu0 %v85
    %4543 = vmatprep.subr.mxu0 0.0
    %4544 = vmatpush1.msra.mxu0 %v86
    %4545 = vmatprep.subr.mxu0 0.0
    %4546 = vmatpush1.msra.mxu0 %v87
    %4547 = vmatprep.subr.mxu0 0.0
    %4548 = vmatpush1.msra.mxu0 0.0
    %4549 = vmatprep.subr.mxu0 0.0
    %4550 = vmatpush1.msra.mxu0 0.0
    %4551 = vmatprep.subr.mxu0 0.0
    %4552 = vmatpush1.msra.mxu0 0.0
    %4553 = vmatprep.subr.mxu0 0.0
    %4554 = vmatpush1.msra.mxu0 0.0
    %4555 = vmatprep.subr.mxu0 0.0
    %4556 = vmatpush1.msra.mxu0 0.0
    %4557 = vmatprep.subr.mxu0 0.0
    %4558 = vmatpush1.msra.mxu0 0.0
    %4559 = vmatprep.subr.mxu0 0.0
    %4560 = vmatpush1.msra.mxu0 0.0
    %4561 = vmatprep.subr.mxu0 0.0
    %4562 = vmatpush1.msra.mxu0 0.0
    %4563 = vmatprep.subr.mxu0 0.0
    %4564 = vmatpush1.msra.mxu0 0.0
    %4565 = vmatprep.subr.mxu0 0.0
    %4566 = vmatpush1.msra.mxu0 0.0
    %4567 = vmatprep.subr.mxu0 0.0
    %4568 = vmatpush1.msra.mxu0 0.0
    %4569 = vmatprep.subr.mxu0 0.0
    %4570 = vmatpush1.msra.mxu0 0.0
    %4571 = vmatprep.subr.mxu0 0.0
    %4572 = vmatpush1.msra.mxu0 0.0
    %4573 = vmatprep.subr.mxu0 0.0
    %4574 = vmatpush1.msra.mxu0 0.0
    %4575 = vmatprep.subr.mxu0 0.0
    %4576 = vmatpush1.msra.mxu0 0.0
    %4577 = vmatprep.subr.mxu0 0.0
    %4578 = vmatpush1.msra.mxu0 0.0
    %4579 = vmatprep.subr.mxu0 0.0
    %4580 = vmatpush1.msra.mxu0 0.0
    %4581 = vmatprep.subr.mxu0 0.0
    %4582 = vmatpush1.msra.mxu0 0.0
    %4583 = vmatprep.subr.mxu0 0.0
    %4584 = vmatpush1.msra.mxu0 0.0
    %4585 = vmatprep.subr.mxu0 0.0
    %4586 = vmatpush1.msra.mxu0 0.0
    %4587 = vmatprep.subr.mxu0 0.0
    %4588 = vmatpush1.msra.mxu0 0.0
    %4589 = vmatprep.subr.mxu0 0.0
    %4590 = vmatpush1.msra.mxu0 0.0
    %4591 = vmatprep.subr.mxu0 0.0
    %4592 = vmatpush1.msra.mxu0 0.0
    %4593 = vmatprep.subr.mxu0 0.0
    %4594 = vmatpush1.msra.mxu0 0.0
    %4595 = vmatprep.subr.mxu0 0.0
    %4596 = vmatpush1.msra.mxu0 0.0
    %4597 = vmatprep.subr.mxu0 0.0
    %4598 = vmatpush1.msra.mxu0 0.0
    %4599 = vmatprep.subr.mxu0 0.0
    %4600 = vmatpush1.msra.mxu0 0.0
    %4601 = vmatprep.subr.mxu0 0.0
    %4602 = vmatpush1.msra.mxu0 0.0
    %4603 = vmatprep.mubr.f32.mxu0 0.0
    %4604 = vmatmul.mubr.f32.gmra.mrb[0].mxu0 %v212
    %v4605 = vpop.f32.mrb[0].mxu0
    %v4606 = vadd.f32 0.0, %v4605
    %v4607 = vpop.f32.mrb[0].mxu0
    %4608 = vdwg.mxu0
    %4609 = vmatprep.subr.mxu0 0.0
    %4610 = vmatpush1.msra.mxu0 %v89
    %4611 = vmatprep.subr.mxu0 0.0
    %4612 = vmatpush1.msra.mxu0 %v90
    %4613 = vmatprep.subr.mxu0 0.0
    %4614 = vmatpush1.msra.mxu0 %v91
    %4615 = vmatprep.subr.mxu0 0.0
    %4616 = vmatpush1.msra.mxu0 %v92
    %4617 = vmatprep.subr.mxu0 0.0
    %4618 = vmatpush1.msra.mxu0 0.0
    %4619 = vmatprep.subr.mxu0 0.0
    %4620 = vmatpush1.msra.mxu0 0.0
    %4621 = vmatprep.subr.mxu0 0.0
    %4622 = vmatpush1.msra.mxu0 0.0
    %4623 = vmatprep.subr.mxu0 0.0
    %4624 = vmatpush1.msra.mxu0 0.0
    %4625 = vmatprep.subr.mxu0 0.0
    %4626 = vmatpush1.msra.mxu0 0.0
    %4627 = vmatprep.subr.mxu0 0.0
    %4628 = vmatpush1.msra.mxu0 0.0
    %4629 = vmatprep.subr.mxu0 0.0
    %4630 = vmatpush1.msra.mxu0 0.0
    %4631 = vmatprep.subr.mxu0 0.0
    %4632 = vmatpush1.msra.mxu0 0.0
    %4633 = vmatprep.subr.mxu0 0.0
    %4634 = vmatpush1.msra.mxu0 0.0
    %4635 = vmatprep.subr.mxu0 0.0
    %4636 = vmatpush1.msra.mxu0 0.0
    %4637 = vmatprep.subr.mxu0 0.0
    %4638 = vmatpush1.msra.mxu0 0.0
    %4639 = vmatprep.subr.mxu0 0.0
    %4640 = vmatpush1.msra.mxu0 0.0
    %4641 = vmatprep.subr.mxu0 0.0
    %4642 = vmatpush1.msra.mxu0 0.0
    %4643 = vmatprep.subr.mxu0 0.0
    %4644 = vmatpush1.msra.mxu0 0.0
    %4645 = vmatprep.subr.mxu0 0.0
    %4646 = vmatpush1.msra.mxu0 0.0
    %4647 = vmatprep.subr.mxu0 0.0
    %4648 = vmatpush1.msra.mxu0 0.0
    %4649 = vmatprep.subr.mxu0 0.0
    %4650 = vmatpush1.msra.mxu0 0.0
    %4651 = vmatprep.subr.mxu0 0.0
    %4652 = vmatpush1.msra.mxu0 0.0
    %4653 = vmatprep.subr.mxu0 0.0
    %4654 = vmatpush1.msra.mxu0 0.0
    %4655 = vmatprep.subr.mxu0 0.0
    %4656 = vmatpush1.msra.mxu0 0.0
    %4657 = vmatprep.subr.mxu0 0.0
    %4658 = vmatpush1.msra.mxu0 0.0
    %4659 = vmatprep.subr.mxu0 0.0
    %4660 = vmatpush1.msra.mxu0 0.0
    %4661 = vmatprep.subr.mxu0 0.0
    %4662 = vmatpush1.msra.mxu0 0.0
    %4663 = vmatprep.subr.mxu0 0.0
    %4664 = vmatpush1.msra.mxu0 0.0
    %4665 = vmatprep.subr.mxu0 0.0
    %4666 = vmatpush1.msra.mxu0 0.0
    %4667 = vmatprep.subr.mxu0 0.0
    %4668 = vmatpush1.msra.mxu0 0.0
    %4669 = vmatprep.subr.mxu0 0.0
    %4670 = vmatpush1.msra.mxu0 0.0
    %4671 = vmatprep.subr.mxu0 0.0
    %4672 = vmatpush1.msra.mxu0 0.0
    %4673 = vmatprep.mubr.f32.mxu0 0.0
    %4674 = vmatmul.mubr.f32.gmra.mrb[0].mxu0 %v212
    %v4675 = vpop.f32.mrb[0].mxu0
    %v4676 = vadd.f32 0.0, %v4675
    %v4677 = vpop.f32.mrb[0].mxu0
    %4678 = vdwg.mxu0
    %v4680 = vrot.slane %v4606, 2
    %4681 = vrot.lane.b32.xlu0 %v4680, 96
    %v4682 = vpop.permute.xlu0 %4681
    %v4684 = vadd.f32 %v4537, %v4682
    %v4685 = vxor.u32 %v4684, 2147483648
    %v4686 = vmul.f32 %v4685, 1.442695
    %v4687 = vpow.pop %v4686
    %v4688 = vadd.f32 %v4687, 1.0
    %v4689 = vrcp.pop %v4688
    %v4690 = vmul.f32 1.0, %v4689
    %v4692 = vrot.slane %v4676, 2
    %v4694 = vadd.f32 %v4538, %v4692
    %v4695 = vxor.u32 %v4694, 2147483648
    %v4696 = vmul.f32 %v4695, 1.442695
    %v4697 = vpow.pop %v4696
    %v4698 = vadd.f32 %v4697, 1.0
    %v4699 = vrcp.pop %v4698
    %v4700 = vmul.f32 1.0, %v4699
    %4701 = vmatprep.subr.mxu0 0.0
    %4702 = vmatpush1.msra.mxu0 %v94
    %4703 = vmatprep.subr.mxu0 0.0
    %4704 = vmatpush1.msra.mxu0 %v95
    %4705 = vmatprep.subr.mxu0 0.0
    %4706 = vmatpush1.msra.mxu0 %v96
    %4707 = vmatprep.subr.mxu0 0.0
    %4708 = vmatpush1.msra.mxu0 %v97
    %4709 = vmatprep.subr.mxu0 0.0
    %4710 = vmatpush1.msra.mxu0 0.0
    %4711 = vmatprep.subr.mxu0 0.0
    %4712 = vmatpush1.msra.mxu0 0.0
    %4713 = vmatprep.subr.mxu0 0.0
    %4714 = vmatpush1.msra.mxu0 0.0
    %4715 = vmatprep.subr.mxu0 0.0
    %4716 = vmatpush1.msra.mxu0 0.0
    %4717 = vmatprep.subr.mxu0 0.0
    %4718 = vmatpush1.msra.mxu0 0.0
    %4719 = vmatprep.subr.mxu0 0.0
    %4720 = vmatpush1.msra.mxu0 0.0
    %4721 = vmatprep.subr.mxu0 0.0
    %4722 = vmatpush1.msra.mxu0 0.0
    %4723 = vmatprep.subr.mxu0 0.0
    %4724 = vmatpush1.msra.mxu0 0.0
    %4725 = vmatprep.subr.mxu0 0.0
    %4726 = vmatpush1.msra.mxu0 0.0
    %4727 = vmatprep.subr.mxu0 0.0
    %4728 = vmatpush1.msra.mxu0 0.0
    %4729 = vmatprep.subr.mxu0 0.0
    %4730 = vmatpush1.msra.mxu0 0.0
    %4731 = vmatprep.subr.mxu0 0.0
    %4732 = vmatpush1.msra.mxu0 0.0
    %4733 = vmatprep.subr.mxu0 0.0
    %4734 = vmatpush1.msra.mxu0 0.0
    %4735 = vmatprep.subr.mxu0 0.0
    %4736 = vmatpush1.msra.mxu0 0.0
    %4737 = vmatprep.subr.mxu0 0.0
    %4738 = vmatpush1.msra.mxu0 0.0
    %4739 = vmatprep.subr.mxu0 0.0
    %4740 = vmatpush1.msra.mxu0 0.0
    %4741 = vmatprep.subr.mxu0 0.0
    %4742 = vmatpush1.msra.mxu0 0.0
    %4743 = vmatprep.subr.mxu0 0.0
    %4744 = vmatpush1.msra.mxu0 0.0
    %4745 = vmatprep.subr.mxu0 0.0
    %4746 = vmatpush1.msra.mxu0 0.0
    %4747 = vmatprep.subr.mxu0 0.0
    %4748 = vmatpush1.msra.mxu0 0.0
    %4749 = vmatprep.subr.mxu0 0.0
    %4750 = vmatpush1.msra.mxu0 0.0
    %4751 = vmatprep.subr.mxu0 0.0
    %4752 = vmatpush1.msra.mxu0 0.0
    %4753 = vmatprep.subr.mxu0 0.0
    %4754 = vmatpush1.msra.mxu0 0.0
    %4755 = vmatprep.subr.mxu0 0.0
    %4756 = vmatpush1.msra.mxu0 0.0
    %4757 = vmatprep.subr.mxu0 0.0
    %4758 = vmatpush1.msra.mxu0 0.0
    %4759 = vmatprep.subr.mxu0 0.0
    %4760 = vmatpush1.msra.mxu0 0.0
    %4761 = vmatprep.subr.mxu0 0.0
    %4762 = vmatpush1.msra.mxu0 0.0
    %4763 = vmatprep.subr.mxu0 0.0
    %4764 = vmatpush1.msra.mxu0 0.0
    %4765 = vmatprep.mubr.f32.mxu0 0.0
    %4766 = vmatmul.mubr.f32.gmra.mrb[0].mxu0 %v212
    %v4767 = vpop.f32.mrb[0].mxu0
    %v4768 = vadd.f32 %v104, %v4767
    %v4769 = vpop.f32.mrb[0].mxu0
    %4770 = vdwg.mxu0
    %v4772 = vrot.slane %v4768, 2
    %4773 = vrot.lane.b32.xlu0 %v4772, 96
    %v4774 = vpop.permute.xlu0 %4773
    %v4776 = vmul.f32 %v4690, %v4774
    %4778 = vrot.lane.b32.xlu0 %v4776, 64
    %v4779 = vpop.permute.xlu0 %4778
    %v4781 = vadd.f32 %v4538, %v4779
    %v4782 = vtanh.pop %v4781
    %v4783 = vsub.f32 1.0, %v4700
    %4785 = vrot.lane.b32.xlu0 %v4782, 96
    %v4786 = vpop.permute.xlu0 %4785
    %v4788 = vmul.f32 %v4783, %v4786
    %v4789 = vmul.f32 %v4700, 0.0
    %v4790 = vadd.f32 %v4788, %v4789
    %4791 = vmatprep.subr.mxu0 0.0
    %4792 = vmatpush1.msra.mxu0 %v69
    %4793 = vmatprep.subr.mxu0 0.0
    %4794 = vmatpush1.msra.mxu0 %v70
    %4795 = vmatprep.subr.mxu0 0.0
    %4796 = vmatpush1.msra.mxu0 %v71
    %4797 = vmatprep.subr.mxu0 0.0
    %4798 = vmatpush1.msra.mxu0 %v72
    %4799 = vmatprep.subr.mxu0 0.0
    %4800 = vmatpush1.msra.mxu0 0.0
    %4801 = vmatprep.subr.mxu0 0.0
    %4802 = vmatpush1.msra.mxu0 0.0
    %4803 = vmatprep.subr.mxu0 0.0
    %4804 = vmatpush1.msra.mxu0 0.0
    %4805 = vmatprep.subr.mxu0 0.0
    %4806 = vmatpush1.msra.mxu0 0.0
    %4807 = vmatprep.subr.mxu0 0.0
    %4808 = vmatpush1.msra.mxu0 0.0
    %4809 = vmatprep.subr.mxu0 0.0
    %4810 = vmatpush1.msra.mxu0 0.0
    %4811 = vmatprep.subr.mxu0 0.0
    %4812 = vmatpush1.msra.mxu0 0.0
    %4813 = vmatprep.subr.mxu0 0.0
    %4814 = vmatpush1.msra.mxu0 0.0
    %4815 = vmatprep.subr.mxu0 0.0
    %4816 = vmatpush1.msra.mxu0 0.0
    %4817 = vmatprep.subr.mxu0 0.0
    %4818 = vmatpush1.msra.mxu0 0.0
    %4819 = vmatprep.subr.mxu0 0.0
    %4820 = vmatpush1.msra.mxu0 0.0
    %4821 = vmatprep.subr.mxu0 0.0
    %4822 = vmatpush1.msra.mxu0 0.0
    %4823 = vmatprep.subr.mxu0 0.0
    %4824 = vmatpush1.msra.mxu0 0.0
    %4825 = vmatprep.subr.mxu0 0.0
    %4826 = vmatpush1.msra.mxu0 0.0
    %4827 = vmatprep.subr.mxu0 0.0
    %4828 = vmatpush1.msra.mxu0 0.0
    %4829 = vmatprep.subr.mxu0 0.0
    %4830 = vmatpush1.msra.mxu0 0.0
    %4831 = vmatprep.subr.mxu0 0.0
    %4832 = vmatpush1.msra.mxu0 0.0
    %4833 = vmatprep.subr.mxu0 0.0
    %4834 = vmatpush1.msra.mxu0 0.0
    %4835 = vmatprep.subr.mxu0 0.0
    %4836 = vmatpush1.msra.mxu0 0.0
    %4837 = vmatprep.subr.mxu0 0.0
    %4838 = vmatpush1.msra.mxu0 0.0
    %4839 = vmatprep.subr.mxu0 0.0
    %4840 = vmatpush1.msra.mxu0 0.0
    %4841 = vmatprep.subr.mxu0 0.0
    %4842 = vmatpush1.msra.mxu0 0.0
    %4843 = vmatprep.subr.mxu0 0.0
    %4844 = vmatpush1.msra.mxu0 0.0
    %4845 = vmatprep.subr.mxu0 0.0
    %4846 = vmatpush1.msra.mxu0 0.0
    %4847 = vmatprep.subr.mxu0 0.0
    %4848 = vmatpush1.msra.mxu0 0.0
    %4849 = vmatprep.subr.mxu0 0.0
    %4850 = vmatpush1.msra.mxu0 0.0
    %4851 = vmatprep.subr.mxu0 0.0
    %4852 = vmatpush1.msra.mxu0 0.0
    %4853 = vmatprep.subr.mxu0 0.0
    %4854 = vmatpush1.msra.mxu0 0.0
    %4855 = vmatprep.mubr.f32.mxu0 0.0
    %4856 = vmatmul.mubr.f32.gmra.mrb[0].mxu0 %v212
    %v4857 = vpop.f32.mrb[0].mxu0
    %v4858 = vadd.f32 0.0, %v4857
    %v4859 = vpop.f32.mrb[0].mxu0
    %4860 = vdwg.mxu0
    %4861 = vmatprep.subr.mxu0 0.0
    %4862 = vmatpush1.msra.mxu0 %v74
    %4863 = vmatprep.subr.mxu0 0.0
    %4864 = vmatpush1.msra.mxu0 %v75
    %4865 = vmatprep.subr.mxu0 0.0
    %4866 = vmatpush1.msra.mxu0 %v76
    %4867 = vmatprep.subr.mxu0 0.0
    %4868 = vmatpush1.msra.mxu0 %v77
    %4869 = vmatprep.subr.mxu0 0.0
    %4870 = vmatpush1.msra.mxu0 0.0
    %4871 = vmatprep.subr.mxu0 0.0
    %4872 = vmatpush1.msra.mxu0 0.0
    %4873 = vmatprep.subr.mxu0 0.0
    %4874 = vmatpush1.msra.mxu0 0.0
    %4875 = vmatprep.subr.mxu0 0.0
    %4876 = vmatpush1.msra.mxu0 0.0
    %4877 = vmatprep.subr.mxu0 0.0
    %4878 = vmatpush1.msra.mxu0 0.0
    %4879 = vmatprep.subr.mxu0 0.0
    %4880 = vmatpush1.msra.mxu0 0.0
    %4881 = vmatprep.subr.mxu0 0.0
    %4882 = vmatpush1.msra.mxu0 0.0
    %4883 = vmatprep.subr.mxu0 0.0
    %4884 = vmatpush1.msra.mxu0 0.0
    %4885 = vmatprep.subr.mxu0 0.0
    %4886 = vmatpush1.msra.mxu0 0.0
    %4887 = vmatprep.subr.mxu0 0.0
    %4888 = vmatpush1.msra.mxu0 0.0
    %4889 = vmatprep.subr.mxu0 0.0
    %4890 = vmatpush1.msra.mxu0 0.0
    %4891 = vmatprep.subr.mxu0 0.0
    %4892 = vmatpush1.msra.mxu0 0.0
    %4893 = vmatprep.subr.mxu0 0.0
    %4894 = vmatpush1.msra.mxu0 0.0
    %4895 = vmatprep.subr.mxu0 0.0
    %4896 = vmatpush1.msra.mxu0 0.0
    %4897 = vmatprep.subr.mxu0 0.0
    %4898 = vmatpush1.msra.mxu0 0.0
    %4899 = vmatprep.subr.mxu0 0.0
    %4900 = vmatpush1.msra.mxu0 0.0
    %4901 = vmatprep.subr.mxu0 0.0
    %4902 = vmatpush1.msra.mxu0 0.0
    %4903 = vmatprep.subr.mxu0 0.0
    %4904 = vmatpush1.msra.mxu0 0.0
    %4905 = vmatprep.subr.mxu0 0.0
    %4906 = vmatpush1.msra.mxu0 0.0
    %4907 = vmatprep.subr.mxu0 0.0
    %4908 = vmatpush1.msra.mxu0 0.0
    %4909 = vmatprep.subr.mxu0 0.0
    %4910 = vmatpush1.msra.mxu0 0.0
    %4911 = vmatprep.subr.mxu0 0.0
    %4912 = vmatpush1.msra.mxu0 0.0
    %4913 = vmatprep.subr.mxu0 0.0
    %4914 = vmatpush1.msra.mxu0 0.0
    %4915 = vmatprep.subr.mxu0 0.0
    %4916 = vmatpush1.msra.mxu0 0.0
    %4917 = vmatprep.subr.mxu0 0.0
    %4918 = vmatpush1.msra.mxu0 0.0
    %4919 = vmatprep.subr.mxu0 0.0
    %4920 = vmatpush1.msra.mxu0 0.0
    %4921 = vmatprep.subr.mxu0 0.0
    %4922 = vmatpush1.msra.mxu0 0.0
    %4923 = vmatprep.subr.mxu0 0.0
    %4924 = vmatpush1.msra.mxu0 0.0
    %4925 = vmatprep.mubr.f32.mxu0 0.0
    %4926 = vmatmul.mubr.f32.gmra.mrb[0].mxu0 %v212
    %v4927 = vpop.f32.mrb[0].mxu0
    %v4928 = vadd.f32 0.0, %v4927
    %v4929 = vpop.f32.mrb[0].mxu0
    %4930 = vdwg.mxu0
    %v4931 = vadd.f32 %v4536, %v4858
    %v4932 = vxor.u32 %v4931, 2147483648
    %v4933 = vmul.f32 %v4932, 1.442695
    %v4934 = vpow.pop %v4933
    %v4935 = vadd.f32 %v4934, 1.0
    %v4936 = vrcp.pop %v4935
    %v4937 = vmul.f32 1.0, %v4936
    %4939 = vrot.lane.b32.xlu0 %v4928, 32
    %v4940 = vpop.permute.xlu0 %4939
    %v4942 = vadd.f32 %v4536, %v4940
    %v4943 = vxor.u32 %v4942, 2147483648
    %v4944 = vmul.f32 %v4943, 1.442695
    %v4945 = vpow.pop %v4944
    %v4946 = vadd.f32 %v4945, 1.0
    %v4947 = vrcp.pop %v4946
    %v4948 = vmul.f32 1.0, %v4947
    %4949 = vmatprep.subr.mxu0 0.0
    %4950 = vmatpush1.msra.mxu0 %v79
    %4951 = vmatprep.subr.mxu0 0.0
    %4952 = vmatpush1.msra.mxu0 %v80
    %4953 = vmatprep.subr.mxu0 0.0
    %4954 = vmatpush1.msra.mxu0 %v81
    %4955 = vmatprep.subr.mxu0 0.0
    %4956 = vmatpush1.msra.mxu0 %v82
    %4957 = vmatprep.subr.mxu0 0.0
    %4958 = vmatpush1.msra.mxu0 0.0
    %4959 = vmatprep.subr.mxu0 0.0
    %4960 = vmatpush1.msra.mxu0 0.0
    %4961 = vmatprep.subr.mxu0 0.0
    %4962 = vmatpush1.msra.mxu0 0.0
    %4963 = vmatprep.subr.mxu0 0.0
    %4964 = vmatpush1.msra.mxu0 0.0
    %4965 = vmatprep.subr.mxu0 0.0
    %4966 = vmatpush1.msra.mxu0 0.0
    %4967 = vmatprep.subr.mxu0 0.0
    %4968 = vmatpush1.msra.mxu0 0.0
    %4969 = vmatprep.subr.mxu0 0.0
    %4970 = vmatpush1.msra.mxu0 0.0
    %4971 = vmatprep.subr.mxu0 0.0
    %4972 = vmatpush1.msra.mxu0 0.0
    %4973 = vmatprep.subr.mxu0 0.0
    %4974 = vmatpush1.msra.mxu0 0.0
    %4975 = vmatprep.subr.mxu0 0.0
    %4976 = vmatpush1.msra.mxu0 0.0
    %4977 = vmatprep.subr.mxu0 0.0
    %4978 = vmatpush1.msra.mxu0 0.0
    %4979 = vmatprep.subr.mxu0 0.0
    %4980 = vmatpush1.msra.mxu0 0.0
    %4981 = vmatprep.subr.mxu0 0.0
    %4982 = vmatpush1.msra.mxu0 0.0
    %4983 = vmatprep.subr.mxu0 0.0
    %4984 = vmatpush1.msra.mxu0 0.0
    %4985 = vmatprep.subr.mxu0 0.0
    %4986 = vmatpush1.msra.mxu0 0.0
    %4987 = vmatprep.subr.mxu0 0.0
    %4988 = vmatpush1.msra.mxu0 0.0
    %4989 = vmatprep.subr.mxu0 0.0
    %4990 = vmatpush1.msra.mxu0 0.0
    %4991 = vmatprep.subr.mxu0 0.0
    %4992 = vmatpush1.msra.mxu0 0.0
    %4993 = vmatprep.subr.mxu0 0.0
    %4994 = vmatpush1.msra.mxu0 0.0
    %4995 = vmatprep.subr.mxu0 0.0
    %4996 = vmatpush1.msra.mxu0 0.0
    %4997 = vmatprep.subr.mxu0 0.0
    %4998 = vmatpush1.msra.mxu0 0.0
    %4999 = vmatprep.subr.mxu0 0.0
    %5000 = vmatpush1.msra.mxu0 0.0
    %5001 = vmatprep.subr.mxu0 0.0
    %5002 = vmatpush1.msra.mxu0 0.0
    %5003 = vmatprep.subr.mxu0 0.0
    %5004 = vmatpush1.msra.mxu0 0.0
    %5005 = vmatprep.subr.mxu0 0.0
    %5006 = vmatpush1.msra.mxu0 0.0
    %5007 = vmatprep.subr.mxu0 0.0
    %5008 = vmatpush1.msra.mxu0 0.0
    %5009 = vmatprep.subr.mxu0 0.0
    %5010 = vmatpush1.msra.mxu0 0.0
    %5011 = vmatprep.subr.mxu0 0.0
    %5012 = vmatpush1.msra.mxu0 0.0
    %5013 = vmatprep.mubr.f32.mxu0 0.0
    %5014 = vmatmul.mubr.f32.gmra.mrb[0].mxu0 %v212
    %v5015 = vpop.f32.mrb[0].mxu0
    %v5016 = vadd.f32 %v102, %v5015
    %v5017 = vpop.f32.mrb[0].mxu0
    %5018 = vdwg.mxu0
    %v5019 = vmul.f32 %v4937, %v5016
    %5021 = vrot.lane.b32.xlu0 %v5019, 64
    %v5022 = vpop.permute.xlu0 %5021
    %v5024 = vadd.f32 %v4536, %v5022
    %v5025 = vtanh.pop %v5024
    %v5026 = vsub.f32 1.0, %v4948
    %5028 = vrot.lane.b32.xlu0 %v5025, 96
    %v5029 = vpop.permute.xlu0 %5028
    %v5031 = vmul.f32 %v5026, %v5029
    %v5032 = vmul.f32 %v4948, 0.0
    %v5033 = vadd.f32 %v5031, %v5032
    %5035 = vrot.lane.b32.xlu0 %v5033, 96
    %v5036 = vpop.permute.xlu0 %5035
    %v5037 = vsel %vm127, %v5036, 0
    %5039 = vmatprep.subr.mxu0 0.0
    %5040 = vmatpush1.msra.mxu0 %v69
    %5041 = vmatprep.subr.mxu0 0.0
    %5042 = vmatpush1.msra.mxu0 %v70
    %5043 = vmatprep.subr.mxu0 0.0
    %5044 = vmatpush1.msra.mxu0 %v71
    %5045 = vmatprep.subr.mxu0 0.0
    %5046 = vmatpush1.msra.mxu0 %v72
    %5047 = vmatprep.subr.mxu0 0.0
    %5048 = vmatpush1.msra.mxu0 0.0
    %5049 = vmatprep.subr.mxu0 0.0
    %5050 = vmatpush1.msra.mxu0 0.0
    %5051 = vmatprep.subr.mxu0 0.0
    %5052 = vmatpush1.msra.mxu0 0.0
    %5053 = vmatprep.subr.mxu0 0.0
    %5054 = vmatpush1.msra.mxu0 0.0
    %5055 = vmatprep.subr.mxu0 0.0
    %5056 = vmatpush1.msra.mxu0 0.0
    %5057 = vmatprep.subr.mxu0 0.0
    %5058 = vmatpush1.msra.mxu0 0.0
    %5059 = vmatprep.subr.mxu0 0.0
    %5060 = vmatpush1.msra.mxu0 0.0
    %5061 = vmatprep.subr.mxu0 0.0
    %5062 = vmatpush1.msra.mxu0 0.0
    %5063 = vmatprep.subr.mxu0 0.0
    %5064 = vmatpush1.msra.mxu0 0.0
    %5065 = vmatprep.subr.mxu0 0.0
    %5066 = vmatpush1.msra.mxu0 0.0
    %5067 = vmatprep.subr.mxu0 0.0
    %5068 = vmatpush1.msra.mxu0 0.0
    %5069 = vmatprep.subr.mxu0 0.0
    %5070 = vmatpush1.msra.mxu0 0.0
    %5071 = vmatprep.subr.mxu0 0.0
    %5072 = vmatpush1.msra.mxu0 0.0
    %5073 = vmatprep.subr.mxu0 0.0
    %5074 = vmatpush1.msra.mxu0 0.0
    %5075 = vmatprep.subr.mxu0 0.0
    %5076 = vmatpush1.msra.mxu0 0.0
    %5077 = vmatprep.subr.mxu0 0.0
    %5078 = vmatpush1.msra.mxu0 0.0
    %5079 = vmatprep.subr.mxu0 0.0
    %5080 = vmatpush1.msra.mxu0 0.0
    %5081 = vmatprep.subr.mxu0 0.0
    %5082 = vmatpush1.msra.mxu0 0.0
    %5083 = vmatprep.subr.mxu0 0.0
    %5084 = vmatpush1.msra.mxu0 0.0
    %5085 = vmatprep.subr.mxu0 0.0
    %5086 = vmatpush1.msra.mxu0 0.0
    %5087 = vmatprep.subr.mxu0 0.0
    %5088 = vmatpush1.msra.mxu0 0.0
    %5089 = vmatprep.subr.mxu0 0.0
    %5090 = vmatpush1.msra.mxu0 0.0
    %5091 = vmatprep.subr.mxu0 0.0
    %5092 = vmatpush1.msra.mxu0 0.0
    %5093 = vmatprep.subr.mxu0 0.0
    %5094 = vmatpush1.msra.mxu0 0.0
    %5095 = vmatprep.subr.mxu0 0.0
    %5096 = vmatpush1.msra.mxu0 0.0
    %5097 = vmatprep.subr.mxu0 0.0
    %5098 = vmatpush1.msra.mxu0 0.0
    %5099 = vmatprep.subr.mxu0 0.0
    %5100 = vmatpush1.msra.mxu0 0.0
    %5101 = vmatprep.subr.mxu0 0.0
    %5102 = vmatpush1.msra.mxu0 0.0
    %5103 = vmatprep.mubr.f32.mxu0 0.0
    %5104 = vmatmul.mubr.f32.gmra.mrb[0].mxu0 %v5037
    %v5105 = vpop.f32.mrb[0].mxu0
    %v5106 = vadd.f32 0.0, %v5105
    %v5107 = vpop.f32.mrb[0].mxu0
    %5108 = vdwg.mxu0
    %5109 = vmatprep.subr.mxu0 0.0
    %5110 = vmatpush1.msra.mxu0 %v74
    %5111 = vmatprep.subr.mxu0 0.0
    %5112 = vmatpush1.msra.mxu0 %v75
    %5113 = vmatprep.subr.mxu0 0.0
    %5114 = vmatpush1.msra.mxu0 %v76
    %5115 = vmatprep.subr.mxu0 0.0
    %5116 = vmatpush1.msra.mxu0 %v77
    %5117 = vmatprep.subr.mxu0 0.0
    %5118 = vmatpush1.msra.mxu0 0.0
    %5119 = vmatprep.subr.mxu0 0.0
    %5120 = vmatpush1.msra.mxu0 0.0
    %5121 = vmatprep.subr.mxu0 0.0
    %5122 = vmatpush1.msra.mxu0 0.0
    %5123 = vmatprep.subr.mxu0 0.0
    %5124 = vmatpush1.msra.mxu0 0.0
    %5125 = vmatprep.subr.mxu0 0.0
    %5126 = vmatpush1.msra.mxu0 0.0
    %5127 = vmatprep.subr.mxu0 0.0
    %5128 = vmatpush1.msra.mxu0 0.0
    %5129 = vmatprep.subr.mxu0 0.0
    %5130 = vmatpush1.msra.mxu0 0.0
    %5131 = vmatprep.subr.mxu0 0.0
    %5132 = vmatpush1.msra.mxu0 0.0
    %5133 = vmatprep.subr.mxu0 0.0
    %5134 = vmatpush1.msra.mxu0 0.0
    %5135 = vmatprep.subr.mxu0 0.0
    %5136 = vmatpush1.msra.mxu0 0.0
    %5137 = vmatprep.subr.mxu0 0.0
    %5138 = vmatpush1.msra.mxu0 0.0
    %5139 = vmatprep.subr.mxu0 0.0
    %5140 = vmatpush1.msra.mxu0 0.0
    %5141 = vmatprep.subr.mxu0 0.0
    %5142 = vmatpush1.msra.mxu0 0.0
    %5143 = vmatprep.subr.mxu0 0.0
    %5144 = vmatpush1.msra.mxu0 0.0
    %5145 = vmatprep.subr.mxu0 0.0
    %5146 = vmatpush1.msra.mxu0 0.0
    %5147 = vmatprep.subr.mxu0 0.0
    %5148 = vmatpush1.msra.mxu0 0.0
    %5149 = vmatprep.subr.mxu0 0.0
    %5150 = vmatpush1.msra.mxu0 0.0
    %5151 = vmatprep.subr.mxu0 0.0
    %5152 = vmatpush1.msra.mxu0 0.0
    %5153 = vmatprep.subr.mxu0 0.0
    %5154 = vmatpush1.msra.mxu0 0.0
    %5155 = vmatprep.subr.mxu0 0.0
    %5156 = vmatpush1.msra.mxu0 0.0
    %5157 = vmatprep.subr.mxu0 0.0
    %5158 = vmatpush1.msra.mxu0 0.0
    %5159 = vmatprep.subr.mxu0 0.0
    %5160 = vmatpush1.msra.mxu0 0.0
    %5161 = vmatprep.subr.mxu0 0.0
    %5162 = vmatpush1.msra.mxu0 0.0
    %5163 = vmatprep.subr.mxu0 0.0
    %5164 = vmatpush1.msra.mxu0 0.0
    %5165 = vmatprep.subr.mxu0 0.0
    %5166 = vmatpush1.msra.mxu0 0.0
    %5167 = vmatprep.subr.mxu0 0.0
    %5168 = vmatpush1.msra.mxu0 0.0
    %5169 = vmatprep.subr.mxu0 0.0
    %5170 = vmatpush1.msra.mxu0 0.0
    %5171 = vmatprep.subr.mxu0 0.0
    %5172 = vmatpush1.msra.mxu0 0.0
    %5173 = vmatprep.mubr.f32.mxu0 0.0
    %5174 = vmatmul.mubr.f32.gmra.mrb[0].mxu0 %v5037
    %v5175 = vpop.f32.mrb[0].mxu0
    %v5176 = vadd.f32 0.0, %v5175
    %v5177 = vpop.f32.mrb[0].mxu0
    %5178 = vdwg.mxu0
    %v5180 = vrot.slane %v5106, 6
    %v5182 = vadd.f32 %v4536, %v5180
    %v5183 = vxor.u32 %v5182, 2147483648
    %v5184 = vmul.f32 %v5183, 1.442695
    %v5185 = vpow.pop %v5184
    %v5186 = vadd.f32 %v5185, 1.0
    %v5187 = vrcp.pop %v5186
    %v5188 = vmul.f32 1.0, %v5187
    %v5190 = vrot.slane %v5176, 6
    %5191 = vrot.lane.b32.xlu0 %v5190, 32
    %v5192 = vpop.permute.xlu0 %5191
    %v5194 = vadd.f32 %v4536, %v5192
    %v5195 = vxor.u32 %v5194, 2147483648
    %v5196 = vmul.f32 %v5195, 1.442695
    %v5197 = vpow.pop %v5196
    %v5198 = vadd.f32 %v5197, 1.0
    %v5199 = vrcp.pop %v5198
    %v5200 = vmul.f32 1.0, %v5199
    %5201 = vmatprep.subr.mxu0 0.0
    %5202 = vmatpush1.msra.mxu0 %v79
    %5203 = vmatprep.subr.mxu0 0.0
    %5204 = vmatpush1.msra.mxu0 %v80
    %5205 = vmatprep.subr.mxu0 0.0
    %5206 = vmatpush1.msra.mxu0 %v81
    %5207 = vmatprep.subr.mxu0 0.0
    %5208 = vmatpush1.msra.mxu0 %v82
    %5209 = vmatprep.subr.mxu0 0.0
    %5210 = vmatpush1.msra.mxu0 0.0
    %5211 = vmatprep.subr.mxu0 0.0
    %5212 = vmatpush1.msra.mxu0 0.0
    %5213 = vmatprep.subr.mxu0 0.0
    %5214 = vmatpush1.msra.mxu0 0.0
    %5215 = vmatprep.subr.mxu0 0.0
    %5216 = vmatpush1.msra.mxu0 0.0
    %5217 = vmatprep.subr.mxu0 0.0
    %5218 = vmatpush1.msra.mxu0 0.0
    %5219 = vmatprep.subr.mxu0 0.0
    %5220 = vmatpush1.msra.mxu0 0.0
    %5221 = vmatprep.subr.mxu0 0.0
    %5222 = vmatpush1.msra.mxu0 0.0
    %5223 = vmatprep.subr.mxu0 0.0
    %5224 = vmatpush1.msra.mxu0 0.0
    %5225 = vmatprep.subr.mxu0 0.0
    %5226 = vmatpush1.msra.mxu0 0.0
    %5227 = vmatprep.subr.mxu0 0.0
    %5228 = vmatpush1.msra.mxu0 0.0
    %5229 = vmatprep.subr.mxu0 0.0
    %5230 = vmatpush1.msra.mxu0 0.0
    %5231 = vmatprep.subr.mxu0 0.0
    %5232 = vmatpush1.msra.mxu0 0.0
    %5233 = vmatprep.subr.mxu0 0.0
    %5234 = vmatpush1.msra.mxu0 0.0
    %5235 = vmatprep.subr.mxu0 0.0
    %5236 = vmatpush1.msra.mxu0 0.0
    %5237 = vmatprep.subr.mxu0 0.0
    %5238 = vmatpush1.msra.mxu0 0.0
    %5239 = vmatprep.subr.mxu0 0.0
    %5240 = vmatpush1.msra.mxu0 0.0
    %5241 = vmatprep.subr.mxu0 0.0
    %5242 = vmatpush1.msra.mxu0 0.0
    %5243 = vmatprep.subr.mxu0 0.0
    %5244 = vmatpush1.msra.mxu0 0.0
    %5245 = vmatprep.subr.mxu0 0.0
    %5246 = vmatpush1.msra.mxu0 0.0
    %5247 = vmatprep.subr.mxu0 0.0
    %5248 = vmatpush1.msra.mxu0 0.0
    %5249 = vmatprep.subr.mxu0 0.0
    %5250 = vmatpush1.msra.mxu0 0.0
    %5251 = vmatprep.subr.mxu0 0.0
    %5252 = vmatpush1.msra.mxu0 0.0
    %5253 = vmatprep.subr.mxu0 0.0
    %5254 = vmatpush1.msra.mxu0 0.0
    %5255 = vmatprep.subr.mxu0 0.0
    %5256 = vmatpush1.msra.mxu0 0.0
    %5257 = vmatprep.subr.mxu0 0.0
    %5258 = vmatpush1.msra.mxu0 0.0
    %5259 = vmatprep.subr.mxu0 0.0
    %5260 = vmatpush1.msra.mxu0 0.0
    %5261 = vmatprep.subr.mxu0 0.0
    %5262 = vmatpush1.msra.mxu0 0.0
    %5263 = vmatprep.subr.mxu0 0.0
    %5264 = vmatpush1.msra.mxu0 0.0
    %5265 = vmatprep.mubr.f32.mxu0 0.0
    %5266 = vmatmul.mubr.f32.gmra.mrb[0].mxu0 %v5037
    %v5267 = vpop.f32.mrb[0].mxu0
    %v5268 = vadd.f32 %v102, %v5267
    %v5269 = vpop.f32.mrb[0].mxu0
    %5270 = vdwg.mxu0
    %v5272 = vrot.slane %v5268, 6
    %v5274 = vmul.f32 %v5188, %v5272
    %5276 = vrot.lane.b32.xlu0 %v5274, 64
    %v5277 = vpop.permute.xlu0 %5276
    %v5279 = vadd.f32 %v4536, %v5277
    %v5280 = vtanh.pop %v5279
    %v5281 = vsub.f32 1.0, %v5200
    %5283 = vrot.lane.b32.xlu0 %v5280, 96
    %v5284 = vpop.permute.xlu0 %5283
    %v5286 = vmul.f32 %v5281, %v5284
    %v5287 = vrot.slane %v5033, 6
    %v5289 = vmul.f32 %v5200, %v5287
    %v5290 = vadd.f32 %v5286, %v5289
    %v5292 = vrot.slane %v5290, 2
    %5293 = vrot.lane.b32.xlu0 %v5292, 96
    %v5294 = vpop.permute.xlu0 %5293
    %v5295 = vsel %vm127, %v5294, 0
    %5297 = vmatprep.subr.mxu0 0.0
    %5298 = vmatpush1.msra.mxu0 %v69
    %5299 = vmatprep.subr.mxu0 0.0
    %5300 = vmatpush1.msra.mxu0 %v70
    %5301 = vmatprep.subr.mxu0 0.0
    %5302 = vmatpush1.msra.mxu0 %v71
    %5303 = vmatprep.subr.mxu0 0.0
    %5304 = vmatpush1.msra.mxu0 %v72
    %5305 = vmatprep.subr.mxu0 0.0
    %5306 = vmatpush1.msra.mxu0 0.0
    %5307 = vmatprep.subr.mxu0 0.0
    %5308 = vmatpush1.msra.mxu0 0.0
    %5309 = vmatprep.subr.mxu0 0.0
    %5310 = vmatpush1.msra.mxu0 0.0
    %5311 = vmatprep.subr.mxu0 0.0
    %5312 = vmatpush1.msra.mxu0 0.0
    %5313 = vmatprep.subr.mxu0 0.0
    %5314 = vmatpush1.msra.mxu0 0.0
    %5315 = vmatprep.subr.mxu0 0.0
    %5316 = vmatpush1.msra.mxu0 0.0
    %5317 = vmatprep.subr.mxu0 0.0
    %5318 = vmatpush1.msra.mxu0 0.0
    %5319 = vmatprep.subr.mxu0 0.0
    %5320 = vmatpush1.msra.mxu0 0.0
    %5321 = vmatprep.subr.mxu0 0.0
    %5322 = vmatpush1.msra.mxu0 0.0
    %5323 = vmatprep.subr.mxu0 0.0
    %5324 = vmatpush1.msra.mxu0 0.0
    %5325 = vmatprep.subr.mxu0 0.0
    %5326 = vmatpush1.msra.mxu0 0.0
    %5327 = vmatprep.subr.mxu0 0.0
    %5328 = vmatpush1.msra.mxu0 0.0
    %5329 = vmatprep.subr.mxu0 0.0
    %5330 = vmatpush1.msra.mxu0 0.0
    %5331 = vmatprep.subr.mxu0 0.0
    %5332 = vmatpush1.msra.mxu0 0.0
    %5333 = vmatprep.subr.mxu0 0.0
    %5334 = vmatpush1.msra.mxu0 0.0
    %5335 = vmatprep.subr.mxu0 0.0
    %5336 = vmatpush1.msra.mxu0 0.0
    %5337 = vmatprep.subr.mxu0 0.0
    %5338 = vmatpush1.msra.mxu0 0.0
    %5339 = vmatprep.subr.mxu0 0.0
    %5340 = vmatpush1.msra.mxu0 0.0
    %5341 = vmatprep.subr.mxu0 0.0
    %5342 = vmatpush1.msra.mxu0 0.0
    %5343 = vmatprep.subr.mxu0 0.0
    %5344 = vmatpush1.msra.mxu0 0.0
    %5345 = vmatprep.subr.mxu0 0.0
    %5346 = vmatpush1.msra.mxu0 0.0
    %5347 = vmatprep.subr.mxu0 0.0
    %5348 = vmatpush1.msra.mxu0 0.0
    %5349 = vmatprep.subr.mxu0 0.0
    %5350 = vmatpush1.msra.mxu0 0.0
    %5351 = vmatprep.subr.mxu0 0.0
    %5352 = vmatpush1.msra.mxu0 0.0
    %5353 = vmatprep.subr.mxu0 0.0
    %5354 = vmatpush1.msra.mxu0 0.0
    %5355 = vmatprep.subr.mxu0 0.0
    %5356 = vmatpush1.msra.mxu0 0.0
    %5357 = vmatprep.subr.mxu0 0.0
    %5358 = vmatpush1.msra.mxu0 0.0
    %5359 = vmatprep.subr.mxu0 0.0
    %5360 = vmatpush1.msra.mxu0 0.0
    %5361 = vmatprep.mubr.f32.mxu0 0.0
    %5362 = vmatmul.mubr.f32.gmra.mrb[0].mxu0 %v5295
    %v5363 = vpop.f32.mrb[0].mxu0
    %v5364 = vadd.f32 0.0, %v5363
    %v5365 = vpop.f32.mrb[0].mxu0
    %5366 = vdwg.mxu0
    %5367 = vmatprep.subr.mxu0 0.0
    %5368 = vmatpush1.msra.mxu0 %v74
    %5369 = vmatprep.subr.mxu0 0.0
    %5370 = vmatpush1.msra.mxu0 %v75
    %5371 = vmatprep.subr.mxu0 0.0
    %5372 = vmatpush1.msra.mxu0 %v76
    %5373 = vmatprep.subr.mxu0 0.0
    %5374 = vmatpush1.msra.mxu0 %v77
    %5375 = vmatprep.subr.mxu0 0.0
    %5376 = vmatpush1.msra.mxu0 0.0
    %5377 = vmatprep.subr.mxu0 0.0
    %5378 = vmatpush1.msra.mxu0 0.0
    %5379 = vmatprep.subr.mxu0 0.0
    %5380 = vmatpush1.msra.mxu0 0.0
    %5381 = vmatprep.subr.mxu0 0.0
    %5382 = vmatpush1.msra.mxu0 0.0
    %5383 = vmatprep.subr.mxu0 0.0
    %5384 = vmatpush1.msra.mxu0 0.0
    %5385 = vmatprep.subr.mxu0 0.0
    %5386 = vmatpush1.msra.mxu0 0.0
    %5387 = vmatprep.subr.mxu0 0.0
    %5388 = vmatpush1.msra.mxu0 0.0
    %5389 = vmatprep.subr.mxu0 0.0
    %5390 = vmatpush1.msra.mxu0 0.0
    %5391 = vmatprep.subr.mxu0 0.0
    %5392 = vmatpush1.msra.mxu0 0.0
    %5393 = vmatprep.subr.mxu0 0.0
    %5394 = vmatpush1.msra.mxu0 0.0
    %5395 = vmatprep.subr.mxu0 0.0
    %5396 = vmatpush1.msra.mxu0 0.0
    %5397 = vmatprep.subr.mxu0 0.0
    %5398 = vmatpush1.msra.mxu0 0.0
    %5399 = vmatprep.subr.mxu0 0.0
    %5400 = vmatpush1.msra.mxu0 0.0
    %5401 = vmatprep.subr.mxu0 0.0
    %5402 = vmatpush1.msra.mxu0 0.0
    %5403 = vmatprep.subr.mxu0 0.0
    %5404 = vmatpush1.msra.mxu0 0.0
    %5405 = vmatprep.subr.mxu0 0.0
    %5406 = vmatpush1.msra.mxu0 0.0
    %5407 = vmatprep.subr.mxu0 0.0
    %5408 = vmatpush1.msra.mxu0 0.0
    %5409 = vmatprep.subr.mxu0 0.0
    %5410 = vmatpush1.msra.mxu0 0.0
    %5411 = vmatprep.subr.mxu0 0.0
    %5412 = vmatpush1.msra.mxu0 0.0
    %5413 = vmatprep.subr.mxu0 0.0
    %5414 = vmatpush1.msra.mxu0 0.0
    %5415 = vmatprep.subr.mxu0 0.0
    %5416 = vmatpush1.msra.mxu0 0.0
    %5417 = vmatprep.subr.mxu0 0.0
    %5418 = vmatpush1.msra.mxu0 0.0
    %5419 = vmatprep.subr.mxu0 0.0
    %5420 = vmatpush1.msra.mxu0 0.0
    %5421 = vmatprep.subr.mxu0 0.0
    %5422 = vmatpush1.msra.mxu0 0.0
    %5423 = vmatprep.subr.mxu0 0.0
    %5424 = vmatpush1.msra.mxu0 0.0
    %5425 = vmatprep.subr.mxu0 0.0
    %5426 = vmatpush1.msra.mxu0 0.0
    %5427 = vmatprep.subr.mxu0 0.0
    %5428 = vmatpush1.msra.mxu0 0.0
    %5429 = vmatprep.subr.mxu0 0.0
    %5430 = vmatpush1.msra.mxu0 0.0
    %5431 = vmatprep.mubr.f32.mxu0 0.0
    %5432 = vmatmul.mubr.f32.gmra.mrb[0].mxu0 %v5295
    %v5433 = vpop.f32.mrb[0].mxu0
    %v5434 = vadd.f32 0.0, %v5433
    %v5435 = vpop.f32.mrb[0].mxu0
    %5436 = vdwg.mxu0
    %v5438 = vrot.slane %v5364, 4
    %v5440 = vadd.f32 %v4536, %v5438
    %v5441 = vxor.u32 %v5440, 2147483648
    %v5442 = vmul.f32 %v5441, 1.442695
    %v5443 = vpow.pop %v5442
    %v5444 = vadd.f32 %v5443, 1.0
    %v5445 = vrcp.pop %v5444
    %v5446 = vmul.f32 1.0, %v5445
    %v5448 = vrot.slane %v5434, 4
    %5449 = vrot.lane.b32.xlu0 %v5448, 32
    %v5450 = vpop.permute.xlu0 %5449
    %v5452 = vadd.f32 %v4536, %v5450
    %v5453 = vxor.u32 %v5452, 2147483648
    %v5454 = vmul.f32 %v5453, 1.442695
    %v5455 = vpow.pop %v5454
    %v5456 = vadd.f32 %v5455, 1.0
    %v5457 = vrcp.pop %v5456
    %v5458 = vmul.f32 1.0, %v5457
    %5459 = vmatprep.subr.mxu0 0.0
    %5460 = vmatpush1.msra.mxu0 %v79
    %5461 = vmatprep.subr.mxu0 0.0
    %5462 = vmatpush1.msra.mxu0 %v80
    %5463 = vmatprep.subr.mxu0 0.0
    %5464 = vmatpush1.msra.mxu0 %v81
    %5465 = vmatprep.subr.mxu0 0.0
    %5466 = vmatpush1.msra.mxu0 %v82
    %5467 = vmatprep.subr.mxu0 0.0
    %5468 = vmatpush1.msra.mxu0 0.0
    %5469 = vmatprep.subr.mxu0 0.0
    %5470 = vmatpush1.msra.mxu0 0.0
    %5471 = vmatprep.subr.mxu0 0.0
    %5472 = vmatpush1.msra.mxu0 0.0
    %5473 = vmatprep.subr.mxu0 0.0
    %5474 = vmatpush1.msra.mxu0 0.0
    %5475 = vmatprep.subr.mxu0 0.0
    %5476 = vmatpush1.msra.mxu0 0.0
    %5477 = vmatprep.subr.mxu0 0.0
    %5478 = vmatpush1.msra.mxu0 0.0
    %5479 = vmatprep.subr.mxu0 0.0
    %5480 = vmatpush1.msra.mxu0 0.0
    %5481 = vmatprep.subr.mxu0 0.0
    %5482 = vmatpush1.msra.mxu0 0.0
    %5483 = vmatprep.subr.mxu0 0.0
    %5484 = vmatpush1.msra.mxu0 0.0
    %5485 = vmatprep.subr.mxu0 0.0
    %5486 = vmatpush1.msra.mxu0 0.0
    %5487 = vmatprep.subr.mxu0 0.0
    %5488 = vmatpush1.msra.mxu0 0.0
    %5489 = vmatprep.subr.mxu0 0.0
    %5490 = vmatpush1.msra.mxu0 0.0
    %5491 = vmatprep.subr.mxu0 0.0
    %5492 = vmatpush1.msra.mxu0 0.0
    %5493 = vmatprep.subr.mxu0 0.0
    %5494 = vmatpush1.msra.mxu0 0.0
    %5495 = vmatprep.subr.mxu0 0.0
    %5496 = vmatpush1.msra.mxu0 0.0
    %5497 = vmatprep.subr.mxu0 0.0
    %5498 = vmatpush1.msra.mxu0 0.0
    %5499 = vmatprep.subr.mxu0 0.0
    %5500 = vmatpush1.msra.mxu0 0.0
    %5501 = vmatprep.subr.mxu0 0.0
    %5502 = vmatpush1.msra.mxu0 0.0
    %5503 = vmatprep.subr.mxu0 0.0
    %5504 = vmatpush1.msra.mxu0 0.0
    %5505 = vmatprep.subr.mxu0 0.0
    %5506 = vmatpush1.msra.mxu0 0.0
    %5507 = vmatprep.subr.mxu0 0.0
    %5508 = vmatpush1.msra.mxu0 0.0
    %5509 = vmatprep.subr.mxu0 0.0
    %5510 = vmatpush1.msra.mxu0 0.0
    %5511 = vmatprep.subr.mxu0 0.0
    %5512 = vmatpush1.msra.mxu0 0.0
    %5513 = vmatprep.subr.mxu0 0.0
    %5514 = vmatpush1.msra.mxu0 0.0
    %5515 = vmatprep.subr.mxu0 0.0
    %5516 = vmatpush1.msra.mxu0 0.0
    %5517 = vmatprep.subr.mxu0 0.0
    %5518 = vmatpush1.msra.mxu0 0.0
    %5519 = vmatprep.subr.mxu0 0.0
    %5520 = vmatpush1.msra.mxu0 0.0
    %5521 = vmatprep.subr.mxu0 0.0
    %5522 = vmatpush1.msra.mxu0 0.0
    %5523 = vmatprep.mubr.f32.mxu0 0.0
    %5524 = vmatmul.mubr.f32.gmra.mrb[0].mxu0 %v5295
    %v5525 = vpop.f32.mrb[0].mxu0
    %v5526 = vadd.f32 %v102, %v5525
    %v5527 = vpop.f32.mrb[0].mxu0
    %5528 = vdwg.mxu0
    %v5530 = vrot.slane %v5526, 4
    %v5532 = vmul.f32 %v5446, %v5530
    %5534 = vrot.lane.b32.xlu0 %v5532, 64
    %v5535 = vpop.permute.xlu0 %5534
    %v5537 = vadd.f32 %v4536, %v5535
    %v5538 = vtanh.pop %v5537
    %v5539 = vsub.f32 1.0, %v5458
    %5541 = vrot.lane.b32.xlu0 %v5538, 96
    %v5542 = vpop.permute.xlu0 %5541
    %v5544 = vmul.f32 %v5539, %v5542
    %v5545 = vrot.slane %v5290, 6
    %v5547 = vmul.f32 %v5458, %v5545
    %v5548 = vadd.f32 %v5544, %v5547
    %v5550 = vrot.slane %v5548, 4
    %5551 = vrot.lane.b32.xlu0 %v5550, 96
    %v5552 = vpop.permute.xlu0 %5551
    %v5553 = vsel %vm127, %v5552, 0
    %5555 = vmatprep.subr.mxu0 0.0
    %5556 = vmatpush1.msra.mxu0 %v69
    %5557 = vmatprep.subr.mxu0 0.0
    %5558 = vmatpush1.msra.mxu0 %v70
    %5559 = vmatprep.subr.mxu0 0.0
    %5560 = vmatpush1.msra.mxu0 %v71
    %5561 = vmatprep.subr.mxu0 0.0
    %5562 = vmatpush1.msra.mxu0 %v72
    %5563 = vmatprep.subr.mxu0 0.0
    %5564 = vmatpush1.msra.mxu0 0.0
    %5565 = vmatprep.subr.mxu0 0.0
    %5566 = vmatpush1.msra.mxu0 0.0
    %5567 = vmatprep.subr.mxu0 0.0
    %5568 = vmatpush1.msra.mxu0 0.0
    %5569 = vmatprep.subr.mxu0 0.0
    %5570 = vmatpush1.msra.mxu0 0.0
    %5571 = vmatprep.subr.mxu0 0.0
    %5572 = vmatpush1.msra.mxu0 0.0
    %5573 = vmatprep.subr.mxu0 0.0
    %5574 = vmatpush1.msra.mxu0 0.0
    %5575 = vmatprep.subr.mxu0 0.0
    %5576 = vmatpush1.msra.mxu0 0.0
    %5577 = vmatprep.subr.mxu0 0.0
    %5578 = vmatpush1.msra.mxu0 0.0
    %5579 = vmatprep.subr.mxu0 0.0
    %5580 = vmatpush1.msra.mxu0 0.0
    %5581 = vmatprep.subr.mxu0 0.0
    %5582 = vmatpush1.msra.mxu0 0.0
    %5583 = vmatprep.subr.mxu0 0.0
    %5584 = vmatpush1.msra.mxu0 0.0
    %5585 = vmatprep.subr.mxu0 0.0
    %5586 = vmatpush1.msra.mxu0 0.0
    %5587 = vmatprep.subr.mxu0 0.0
    %5588 = vmatpush1.msra.mxu0 0.0
    %5589 = vmatprep.subr.mxu0 0.0
    %5590 = vmatpush1.msra.mxu0 0.0
    %5591 = vmatprep.subr.mxu0 0.0
    %5592 = vmatpush1.msra.mxu0 0.0
    %5593 = vmatprep.subr.mxu0 0.0
    %5594 = vmatpush1.msra.mxu0 0.0
    %5595 = vmatprep.subr.mxu0 0.0
    %5596 = vmatpush1.msra.mxu0 0.0
    %5597 = vmatprep.subr.mxu0 0.0
    %5598 = vmatpush1.msra.mxu0 0.0
    %5599 = vmatprep.subr.mxu0 0.0
    %5600 = vmatpush1.msra.mxu0 0.0
    %5601 = vmatprep.subr.mxu0 0.0
    %5602 = vmatpush1.msra.mxu0 0.0
    %5603 = vmatprep.subr.mxu0 0.0
    %5604 = vmatpush1.msra.mxu0 0.0
    %5605 = vmatprep.subr.mxu0 0.0
    %5606 = vmatpush1.msra.mxu0 0.0
    %5607 = vmatprep.subr.mxu0 0.0
    %5608 = vmatpush1.msra.mxu0 0.0
    %5609 = vmatprep.subr.mxu0 0.0
    %5610 = vmatpush1.msra.mxu0 0.0
    %5611 = vmatprep.subr.mxu0 0.0
    %5612 = vmatpush1.msra.mxu0 0.0
    %5613 = vmatprep.subr.mxu0 0.0
    %5614 = vmatpush1.msra.mxu0 0.0
    %5615 = vmatprep.subr.mxu0 0.0
    %5616 = vmatpush1.msra.mxu0 0.0
    %5617 = vmatprep.subr.mxu0 0.0
    %5618 = vmatpush1.msra.mxu0 0.0
    %5619 = vmatprep.mubr.f32.mxu0 0.0
    %5620 = vmatmul.mubr.f32.gmra.mrb[0].mxu0 %v5553
    %v5621 = vpop.f32.mrb[0].mxu0
    %v5622 = vadd.f32 0.0, %v5621
    %v5623 = vpop.f32.mrb[0].mxu0
    %5624 = vdwg.mxu0
    %5625 = vmatprep.subr.mxu0 0.0
    %5626 = vmatpush1.msra.mxu0 %v74
    %5627 = vmatprep.subr.mxu0 0.0
    %5628 = vmatpush1.msra.mxu0 %v75
    %5629 = vmatprep.subr.mxu0 0.0
    %5630 = vmatpush1.msra.mxu0 %v76
    %5631 = vmatprep.subr.mxu0 0.0
    %5632 = vmatpush1.msra.mxu0 %v77
    %5633 = vmatprep.subr.mxu0 0.0
    %5634 = vmatpush1.msra.mxu0 0.0
    %5635 = vmatprep.subr.mxu0 0.0
    %5636 = vmatpush1.msra.mxu0 0.0
    %5637 = vmatprep.subr.mxu0 0.0
    %5638 = vmatpush1.msra.mxu0 0.0
    %5639 = vmatprep.subr.mxu0 0.0
    %5640 = vmatpush1.msra.mxu0 0.0
    %5641 = vmatprep.subr.mxu0 0.0
    %5642 = vmatpush1.msra.mxu0 0.0
    %5643 = vmatprep.subr.mxu0 0.0
    %5644 = vmatpush1.msra.mxu0 0.0
    %5645 = vmatprep.subr.mxu0 0.0
    %5646 = vmatpush1.msra.mxu0 0.0
    %5647 = vmatprep.subr.mxu0 0.0
    %5648 = vmatpush1.msra.mxu0 0.0
    %5649 = vmatprep.subr.mxu0 0.0
    %5650 = vmatpush1.msra.mxu0 0.0
    %5651 = vmatprep.subr.mxu0 0.0
    %5652 = vmatpush1.msra.mxu0 0.0
    %5653 = vmatprep.subr.mxu0 0.0
    %5654 = vmatpush1.msra.mxu0 0.0
    %5655 = vmatprep.subr.mxu0 0.0
    %5656 = vmatpush1.msra.mxu0 0.0
    %5657 = vmatprep.subr.mxu0 0.0
    %5658 = vmatpush1.msra.mxu0 0.0
    %5659 = vmatprep.subr.mxu0 0.0
    %5660 = vmatpush1.msra.mxu0 0.0
    %5661 = vmatprep.subr.mxu0 0.0
    %5662 = vmatpush1.msra.mxu0 0.0
    %5663 = vmatprep.subr.mxu0 0.0
    %5664 = vmatpush1.msra.mxu0 0.0
    %5665 = vmatprep.subr.mxu0 0.0
    %5666 = vmatpush1.msra.mxu0 0.0
    %5667 = vmatprep.subr.mxu0 0.0
    %5668 = vmatpush1.msra.mxu0 0.0
    %5669 = vmatprep.subr.mxu0 0.0
    %5670 = vmatpush1.msra.mxu0 0.0
    %5671 = vmatprep.subr.mxu0 0.0
    %5672 = vmatpush1.msra.mxu0 0.0
    %5673 = vmatprep.subr.mxu0 0.0
    %5674 = vmatpush1.msra.mxu0 0.0
    %5675 = vmatprep.subr.mxu0 0.0
    %5676 = vmatpush1.msra.mxu0 0.0
    %5677 = vmatprep.subr.mxu0 0.0
    %5678 = vmatpush1.msra.mxu0 0.0
    %5679 = vmatprep.subr.mxu0 0.0
    %5680 = vmatpush1.msra.mxu0 0.0
    %5681 = vmatprep.subr.mxu0 0.0
    %5682 = vmatpush1.msra.mxu0 0.0
    %5683 = vmatprep.subr.mxu0 0.0
    %5684 = vmatpush1.msra.mxu0 0.0
    %5685 = vmatprep.subr.mxu0 0.0
    %5686 = vmatpush1.msra.mxu0 0.0
    %5687 = vmatprep.subr.mxu0 0.0
    %5688 = vmatpush1.msra.mxu0 0.0
    %5689 = vmatprep.mubr.f32.mxu0 0.0
    %5690 = vmatmul.mubr.f32.gmra.mrb[0].mxu0 %v5553
    %v5691 = vpop.f32.mrb[0].mxu0
    %v5692 = vadd.f32 0.0, %v5691
    %v5693 = vpop.f32.mrb[0].mxu0
    %5694 = vdwg.mxu0
    %v5696 = vrot.slane %v5622, 2
    %v5698 = vadd.f32 %v4536, %v5696
    %v5699 = vxor.u32 %v5698, 2147483648
    %v5700 = vmul.f32 %v5699, 1.442695
    %v5701 = vpow.pop %v5700
    %v5702 = vadd.f32 %v5701, 1.0
    %v5703 = vrcp.pop %v5702
    %v5704 = vmul.f32 1.0, %v5703
    %v5706 = vrot.slane %v5692, 2
    %5707 = vrot.lane.b32.xlu0 %v5706, 32
    %v5708 = vpop.permute.xlu0 %5707
    %v5710 = vadd.f32 %v4536, %v5708
    %v5711 = vxor.u32 %v5710, 2147483648
    %v5712 = vmul.f32 %v5711, 1.442695
    %v5713 = vpow.pop %v5712
    %v5714 = vadd.f32 %v5713, 1.0
    %v5715 = vrcp.pop %v5714
    %v5716 = vmul.f32 1.0, %v5715
    %5717 = vmatprep.subr.mxu0 0.0
    %5718 = vmatpush1.msra.mxu0 %v79
    %5719 = vmatprep.subr.mxu0 0.0
    %5720 = vmatpush1.msra.mxu0 %v80
    %5721 = vmatprep.subr.mxu0 0.0
    %5722 = vmatpush1.msra.mxu0 %v81
    %5723 = vmatprep.subr.mxu0 0.0
    %5724 = vmatpush1.msra.mxu0 %v82
    %5725 = vmatprep.subr.mxu0 0.0
    %5726 = vmatpush1.msra.mxu0 0.0
    %5727 = vmatprep.subr.mxu0 0.0
    %5728 = vmatpush1.msra.mxu0 0.0
    %5729 = vmatprep.subr.mxu0 0.0
    %5730 = vmatpush1.msra.mxu0 0.0
    %5731 = vmatprep.subr.mxu0 0.0
    %5732 = vmatpush1.msra.mxu0 0.0
    %5733 = vmatprep.subr.mxu0 0.0
    %5734 = vmatpush1.msra.mxu0 0.0
    %5735 = vmatprep.subr.mxu0 0.0
    %5736 = vmatpush1.msra.mxu0 0.0
    %5737 = vmatprep.subr.mxu0 0.0
    %5738 = vmatpush1.msra.mxu0 0.0
    %5739 = vmatprep.subr.mxu0 0.0
    %5740 = vmatpush1.msra.mxu0 0.0
    %5741 = vmatprep.subr.mxu0 0.0
    %5742 = vmatpush1.msra.mxu0 0.0
    %5743 = vmatprep.subr.mxu0 0.0
    %5744 = vmatpush1.msra.mxu0 0.0
    %5745 = vmatprep.subr.mxu0 0.0
    %5746 = vmatpush1.msra.mxu0 0.0
    %5747 = vmatprep.subr.mxu0 0.0
    %5748 = vmatpush1.msra.mxu0 0.0
    %5749 = vmatprep.subr.mxu0 0.0
    %5750 = vmatpush1.msra.mxu0 0.0
    %5751 = vmatprep.subr.mxu0 0.0
    %5752 = vmatpush1.msra.mxu0 0.0
    %5753 = vmatprep.subr.mxu0 0.0
    %5754 = vmatpush1.msra.mxu0 0.0
    %5755 = vmatprep.subr.mxu0 0.0
    %5756 = vmatpush1.msra.mxu0 0.0
    %5757 = vmatprep.subr.mxu0 0.0
    %5758 = vmatpush1.msra.mxu0 0.0
    %5759 = vmatprep.subr.mxu0 0.0
    %5760 = vmatpush1.msra.mxu0 0.0
    %5761 = vmatprep.subr.mxu0 0.0
    %5762 = vmatpush1.msra.mxu0 0.0
    %5763 = vmatprep.subr.mxu0 0.0
    %5764 = vmatpush1.msra.mxu0 0.0
    %5765 = vmatprep.subr.mxu0 0.0
    %5766 = vmatpush1.msra.mxu0 0.0
    %5767 = vmatprep.subr.mxu0 0.0
    %5768 = vmatpush1.msra.mxu0 0.0
    %5769 = vmatprep.subr.mxu0 0.0
    %5770 = vmatpush1.msra.mxu0 0.0
    %5771 = vmatprep.subr.mxu0 0.0
    %5772 = vmatpush1.msra.mxu0 0.0
    %5773 = vmatprep.subr.mxu0 0.0
    %5774 = vmatpush1.msra.mxu0 0.0
    %5775 = vmatprep.subr.mxu0 0.0
    %5776 = vmatpush1.msra.mxu0 0.0
    %5777 = vmatprep.subr.mxu0 0.0
    %5778 = vmatpush1.msra.mxu0 0.0
    %5779 = vmatprep.subr.mxu0 0.0
    %5780 = vmatpush1.msra.mxu0 0.0
    %5781 = vmatprep.mubr.f32.mxu0 0.0
    %5782 = vmatmul.mubr.f32.gmra.mrb[0].mxu0 %v5553
    %v5783 = vpop.f32.mrb[0].mxu0
    %v5784 = vadd.f32 %v102, %v5783
    %v5785 = vpop.f32.mrb[0].mxu0
    %5786 = vdwg.mxu0
    %v5788 = vrot.slane %v5784, 2
    %v5790 = vmul.f32 %v5704, %v5788
    %5792 = vrot.lane.b32.xlu0 %v5790, 64
    %v5793 = vpop.permute.xlu0 %5792
    %v5795 = vadd.f32 %v4536, %v5793
    %v5796 = vtanh.pop %v5795
    %v5797 = vsub.f32 1.0, %v5716
    %5799 = vrot.lane.b32.xlu0 %v5796, 96
    %v5800 = vpop.permute.xlu0 %5799
    %v5802 = vmul.f32 %v5797, %v5800
    %v5803 = vrot.slane %v5548, 6
    %v5805 = vmul.f32 %v5716, %v5803
    %v5806 = vadd.f32 %v5802, %v5805
    %v5808 = vrot.slane %v5806, 6
    %5809 = vrot.lane.b32.xlu0 %v5808, 96
    %v5810 = vpop.permute.xlu0 %5809
    %v5811 = vsel %vm127, %v5810, 0
    %5813 = vmatprep.subr.mxu0 0.0
    %5814 = vmatpush1.msra.mxu0 %v69
    %5815 = vmatprep.subr.mxu0 0.0
    %5816 = vmatpush1.msra.mxu0 %v70
    %5817 = vmatprep.subr.mxu0 0.0
    %5818 = vmatpush1.msra.mxu0 %v71
    %5819 = vmatprep.subr.mxu0 0.0
    %5820 = vmatpush1.msra.mxu0 %v72
    %5821 = vmatprep.subr.mxu0 0.0
    %5822 = vmatpush1.msra.mxu0 0.0
    %5823 = vmatprep.subr.mxu0 0.0
    %5824 = vmatpush1.msra.mxu0 0.0
    %5825 = vmatprep.subr.mxu0 0.0
    %5826 = vmatpush1.msra.mxu0 0.0
    %5827 = vmatprep.subr.mxu0 0.0
    %5828 = vmatpush1.msra.mxu0 0.0
    %5829 = vmatprep.subr.mxu0 0.0
    %5830 = vmatpush1.msra.mxu0 0.0
    %5831 = vmatprep.subr.mxu0 0.0
    %5832 = vmatpush1.msra.mxu0 0.0
    %5833 = vmatprep.subr.mxu0 0.0
    %5834 = vmatpush1.msra.mxu0 0.0
    %5835 = vmatprep.subr.mxu0 0.0
    %5836 = vmatpush1.msra.mxu0 0.0
    %5837 = vmatprep.subr.mxu0 0.0
    %5838 = vmatpush1.msra.mxu0 0.0
    %5839 = vmatprep.subr.mxu0 0.0
    %5840 = vmatpush1.msra.mxu0 0.0
    %5841 = vmatprep.subr.mxu0 0.0
    %5842 = vmatpush1.msra.mxu0 0.0
    %5843 = vmatprep.subr.mxu0 0.0
    %5844 = vmatpush1.msra.mxu0 0.0
    %5845 = vmatprep.subr.mxu0 0.0
    %5846 = vmatpush1.msra.mxu0 0.0
    %5847 = vmatprep.subr.mxu0 0.0
    %5848 = vmatpush1.msra.mxu0 0.0
    %5849 = vmatprep.subr.mxu0 0.0
    %5850 = vmatpush1.msra.mxu0 0.0
    %5851 = vmatprep.subr.mxu0 0.0
    %5852 = vmatpush1.msra.mxu0 0.0
    %5853 = vmatprep.subr.mxu0 0.0
    %5854 = vmatpush1.msra.mxu0 0.0
    %5855 = vmatprep.subr.mxu0 0.0
    %5856 = vmatpush1.msra.mxu0 0.0
    %5857 = vmatprep.subr.mxu0 0.0
    %5858 = vmatpush1.msra.mxu0 0.0
    %5859 = vmatprep.subr.mxu0 0.0
    %5860 = vmatpush1.msra.mxu0 0.0
    %5861 = vmatprep.subr.mxu0 0.0
    %5862 = vmatpush1.msra.mxu0 0.0
    %5863 = vmatprep.subr.mxu0 0.0
    %5864 = vmatpush1.msra.mxu0 0.0
    %5865 = vmatprep.subr.mxu0 0.0
    %5866 = vmatpush1.msra.mxu0 0.0
    %5867 = vmatprep.subr.mxu0 0.0
    %5868 = vmatpush1.msra.mxu0 0.0
    %5869 = vmatprep.subr.mxu0 0.0
    %5870 = vmatpush1.msra.mxu0 0.0
    %5871 = vmatprep.subr.mxu0 0.0
    %5872 = vmatpush1.msra.mxu0 0.0
    %5873 = vmatprep.subr.mxu0 0.0
    %5874 = vmatpush1.msra.mxu0 0.0
    %5875 = vmatprep.subr.mxu0 0.0
    %5876 = vmatpush1.msra.mxu0 0.0
    %5877 = vmatprep.mubr.f32.mxu0 0.0
    %5878 = vmatmul.mubr.f32.gmra.mrb[0].mxu0 %v5811
    %v5879 = vpop.f32.mrb[0].mxu0
    %v5880 = vadd.f32 0.0, %v5879
    %v5881 = vpop.f32.mrb[0].mxu0
    %5882 = vdwg.mxu0
    %5883 = vmatprep.subr.mxu0 0.0
    %5884 = vmatpush1.msra.mxu0 %v74
    %5885 = vmatprep.subr.mxu0 0.0
    %5886 = vmatpush1.msra.mxu0 %v75
    %5887 = vmatprep.subr.mxu0 0.0
    %5888 = vmatpush1.msra.mxu0 %v76
    %5889 = vmatprep.subr.mxu0 0.0
    %5890 = vmatpush1.msra.mxu0 %v77
    %5891 = vmatprep.subr.mxu0 0.0
    %5892 = vmatpush1.msra.mxu0 0.0
    %5893 = vmatprep.subr.mxu0 0.0
    %5894 = vmatpush1.msra.mxu0 0.0
    %5895 = vmatprep.subr.mxu0 0.0
    %5896 = vmatpush1.msra.mxu0 0.0
    %5897 = vmatprep.subr.mxu0 0.0
    %5898 = vmatpush1.msra.mxu0 0.0
    %5899 = vmatprep.subr.mxu0 0.0
    %5900 = vmatpush1.msra.mxu0 0.0
    %5901 = vmatprep.subr.mxu0 0.0
    %5902 = vmatpush1.msra.mxu0 0.0
    %5903 = vmatprep.subr.mxu0 0.0
    %5904 = vmatpush1.msra.mxu0 0.0
    %5905 = vmatprep.subr.mxu0 0.0
    %5906 = vmatpush1.msra.mxu0 0.0
    %5907 = vmatprep.subr.mxu0 0.0
    %5908 = vmatpush1.msra.mxu0 0.0
    %5909 = vmatprep.subr.mxu0 0.0
    %5910 = vmatpush1.msra.mxu0 0.0
    %5911 = vmatprep.subr.mxu0 0.0
    %5912 = vmatpush1.msra.mxu0 0.0
    %5913 = vmatprep.subr.mxu0 0.0
    %5914 = vmatpush1.msra.mxu0 0.0
    %5915 = vmatprep.subr.mxu0 0.0
    %5916 = vmatpush1.msra.mxu0 0.0
    %5917 = vmatprep.subr.mxu0 0.0
    %5918 = vmatpush1.msra.mxu0 0.0
    %5919 = vmatprep.subr.mxu0 0.0
    %5920 = vmatpush1.msra.mxu0 0.0
    %5921 = vmatprep.subr.mxu0 0.0
    %5922 = vmatpush1.msra.mxu0 0.0
    %5923 = vmatprep.subr.mxu0 0.0
    %5924 = vmatpush1.msra.mxu0 0.0
    %5925 = vmatprep.subr.mxu0 0.0
    %5926 = vmatpush1.msra.mxu0 0.0
    %5927 = vmatprep.subr.mxu0 0.0
    %5928 = vmatpush1.msra.mxu0 0.0
    %5929 = vmatprep.subr.mxu0 0.0
    %5930 = vmatpush1.msra.mxu0 0.0
    %5931 = vmatprep.subr.mxu0 0.0
    %5932 = vmatpush1.msra.mxu0 0.0
    %5933 = vmatprep.subr.mxu0 0.0
    %5934 = vmatpush1.msra.mxu0 0.0
    %5935 = vmatprep.subr.mxu0 0.0
    %5936 = vmatpush1.msra.mxu0 0.0
    %5937 = vmatprep.subr.mxu0 0.0
    %5938 = vmatpush1.msra.mxu0 0.0
    %5939 = vmatprep.subr.mxu0 0.0
    %5940 = vmatpush1.msra.mxu0 0.0
    %5941 = vmatprep.subr.mxu0 0.0
    %5942 = vmatpush1.msra.mxu0 0.0
    %5943 = vmatprep.subr.mxu0 0.0
    %5944 = vmatpush1.msra.mxu0 0.0
    %5945 = vmatprep.subr.mxu0 0.0
    %5946 = vmatpush1.msra.mxu0 0.0
    %5947 = vmatprep.mubr.f32.mxu0 0.0
    %5948 = vmatmul.mubr.f32.gmra.mrb[0].mxu0 %v5811
    %v5949 = vpop.f32.mrb[0].mxu0
    %v5950 = vadd.f32 0.0, %v5949
    %v5951 = vpop.f32.mrb[0].mxu0
    %5952 = vdwg.mxu0
    %v5953 = vadd.f32 %v4537, %v5880
    %v5954 = vxor.u32 %v5953, 2147483648
    %v5955 = vmul.f32 %v5954, 1.442695
    %v5956 = vpow.pop %v5955
    %v5957 = vadd.f32 %v5956, 1.0
    %v5958 = vrcp.pop %v5957
    %v5959 = vmul.f32 1.0, %v5958
    %5961 = vrot.lane.b32.xlu0 %v5950, 32
    %v5962 = vpop.permute.xlu0 %5961
    %v5964 = vadd.f32 %v4537, %v5962
    %v5965 = vxor.u32 %v5964, 2147483648
    %v5966 = vmul.f32 %v5965, 1.442695
    %v5967 = vpow.pop %v5966
    %v5968 = vadd.f32 %v5967, 1.0
    %v5969 = vrcp.pop %v5968
    %v5970 = vmul.f32 1.0, %v5969
    %5971 = vmatprep.subr.mxu0 0.0
    %5972 = vmatpush1.msra.mxu0 %v79
    %5973 = vmatprep.subr.mxu0 0.0
    %5974 = vmatpush1.msra.mxu0 %v80
    %5975 = vmatprep.subr.mxu0 0.0
    %5976 = vmatpush1.msra.mxu0 %v81
    %5977 = vmatprep.subr.mxu0 0.0
    %5978 = vmatpush1.msra.mxu0 %v82
    %5979 = vmatprep.subr.mxu0 0.0
    %5980 = vmatpush1.msra.mxu0 0.0
    %5981 = vmatprep.subr.mxu0 0.0
    %5982 = vmatpush1.msra.mxu0 0.0
    %5983 = vmatprep.subr.mxu0 0.0
    %5984 = vmatpush1.msra.mxu0 0.0
    %5985 = vmatprep.subr.mxu0 0.0
    %5986 = vmatpush1.msra.mxu0 0.0
    %5987 = vmatprep.subr.mxu0 0.0
    %5988 = vmatpush1.msra.mxu0 0.0
    %5989 = vmatprep.subr.mxu0 0.0
    %5990 = vmatpush1.msra.mxu0 0.0
    %5991 = vmatprep.subr.mxu0 0.0
    %5992 = vmatpush1.msra.mxu0 0.0
    %5993 = vmatprep.subr.mxu0 0.0
    %5994 = vmatpush1.msra.mxu0 0.0
    %5995 = vmatprep.subr.mxu0 0.0
    %5996 = vmatpush1.msra.mxu0 0.0
    %5997 = vmatprep.subr.mxu0 0.0
    %5998 = vmatpush1.msra.mxu0 0.0
    %5999 = vmatprep.subr.mxu0 0.0
    %6000 = vmatpush1.msra.mxu0 0.0
    %6001 = vmatprep.subr.mxu0 0.0
    %6002 = vmatpush1.msra.mxu0 0.0
    %6003 = vmatprep.subr.mxu0 0.0
    %6004 = vmatpush1.msra.mxu0 0.0
    %6005 = vmatprep.subr.mxu0 0.0
    %6006 = vmatpush1.msra.mxu0 0.0
    %6007 = vmatprep.subr.mxu0 0.0
    %6008 = vmatpush1.msra.mxu0 0.0
    %6009 = vmatprep.subr.mxu0 0.0
    %6010 = vmatpush1.msra.mxu0 0.0
    %6011 = vmatprep.subr.mxu0 0.0
    %6012 = vmatpush1.msra.mxu0 0.0
    %6013 = vmatprep.subr.mxu0 0.0
    %6014 = vmatpush1.msra.mxu0 0.0
    %6015 = vmatprep.subr.mxu0 0.0
    %6016 = vmatpush1.msra.mxu0 0.0
    %6017 = vmatprep.subr.mxu0 0.0
    %6018 = vmatpush1.msra.mxu0 0.0
    %6019 = vmatprep.subr.mxu0 0.0
    %6020 = vmatpush1.msra.mxu0 0.0
    %6021 = vmatprep.subr.mxu0 0.0
    %6022 = vmatpush1.msra.mxu0 0.0
    %6023 = vmatprep.subr.mxu0 0.0
    %6024 = vmatpush1.msra.mxu0 0.0
    %6025 = vmatprep.subr.mxu0 0.0
    %6026 = vmatpush1.msra.mxu0 0.0
    %6027 = vmatprep.subr.mxu0 0.0
    %6028 = vmatpush1.msra.mxu0 0.0
    %6029 = vmatprep.subr.mxu0 0.0
    %6030 = vmatpush1.msra.mxu0 0.0
    %6031 = vmatprep.subr.mxu0 0.0
    %6032 = vmatpush1.msra.mxu0 0.0
    %6033 = vmatprep.subr.mxu0 0.0
    %6034 = vmatpush1.msra.mxu0 0.0
    %6035 = vmatprep.mubr.f32.mxu0 0.0
    %6036 = vmatmul.mubr.f32.gmra.mrb[0].mxu0 %v5811
    %v6037 = vpop.f32.mrb[0].mxu0
    %v6038 = vadd.f32 %v102, %v6037
    %v6039 = vpop.f32.mrb[0].mxu0
    %6040 = vdwg.mxu0
    %v6041 = vmul.f32 %v5959, %v6038
    %6043 = vrot.lane.b32.xlu0 %v6041, 64
    %v6044 = vpop.permute.xlu0 %6043
    %v6046 = vadd.f32 %v4537, %v6044
    %v6047 = vtanh.pop %v6046
    %v6048 = vsub.f32 1.0, %v5970
    %6050 = vrot.lane.b32.xlu0 %v6047, 96
    %v6051 = vpop.permute.xlu0 %6050
    %v6053 = vmul.f32 %v6048, %v6051
    %v6055 = vmul.f32 %v5970, %v5808
    %v6056 = vadd.f32 %v6053, %v6055
    %6058 = vrot.lane.b32.xlu0 %v6056, 96
    %v6059 = vpop.permute.xlu0 %6058
    %v6060 = vsel %vm127, %v6059, 0
    %6062 = vmatprep.subr.mxu0 0.0
    %6063 = vmatpush1.msra.mxu0 %v69
    %6064 = vmatprep.subr.mxu0 0.0
    %6065 = vmatpush1.msra.mxu0 %v70
    %6066 = vmatprep.subr.mxu0 0.0
    %6067 = vmatpush1.msra.mxu0 %v71
    %6068 = vmatprep.subr.mxu0 0.0
    %6069 = vmatpush1.msra.mxu0 %v72
    %6070 = vmatprep.subr.mxu0 0.0
    %6071 = vmatpush1.msra.mxu0 0.0
    %6072 = vmatprep.subr.mxu0 0.0
    %6073 = vmatpush1.msra.mxu0 0.0
    %6074 = vmatprep.subr.mxu0 0.0
    %6075 = vmatpush1.msra.mxu0 0.0
    %6076 = vmatprep.subr.mxu0 0.0
    %6077 = vmatpush1.msra.mxu0 0.0
    %6078 = vmatprep.subr.mxu0 0.0
    %6079 = vmatpush1.msra.mxu0 0.0
    %6080 = vmatprep.subr.mxu0 0.0
    %6081 = vmatpush1.msra.mxu0 0.0
    %6082 = vmatprep.subr.mxu0 0.0
    %6083 = vmatpush1.msra.mxu0 0.0
    %6084 = vmatprep.subr.mxu0 0.0
    %6085 = vmatpush1.msra.mxu0 0.0
    %6086 = vmatprep.subr.mxu0 0.0
    %6087 = vmatpush1.msra.mxu0 0.0
    %6088 = vmatprep.subr.mxu0 0.0
    %6089 = vmatpush1.msra.mxu0 0.0
    %6090 = vmatprep.subr.mxu0 0.0
    %6091 = vmatpush1.msra.mxu0 0.0
    %6092 = vmatprep.subr.mxu0 0.0
    %6093 = vmatpush1.msra.mxu0 0.0
    %6094 = vmatprep.subr.mxu0 0.0
    %6095 = vmatpush1.msra.mxu0 0.0
    %6096 = vmatprep.subr.mxu0 0.0
    %6097 = vmatpush1.msra.mxu0 0.0
    %6098 = vmatprep.subr.mxu0 0.0
    %6099 = vmatpush1.msra.mxu0 0.0
    %6100 = vmatprep.subr.mxu0 0.0
    %6101 = vmatpush1.msra.mxu0 0.0
    %6102 = vmatprep.subr.mxu0 0.0
    %6103 = vmatpush1.msra.mxu0 0.0
    %6104 = vmatprep.subr.mxu0 0.0
    %6105 = vmatpush1.msra.mxu0 0.0
    %6106 = vmatprep.subr.mxu0 0.0
    %6107 = vmatpush1.msra.mxu0 0.0
    %6108 = vmatprep.subr.mxu0 0.0
    %6109 = vmatpush1.msra.mxu0 0.0
    %6110 = vmatprep.subr.mxu0 0.0
    %6111 = vmatpush1.msra.mxu0 0.0
    %6112 = vmatprep.subr.mxu0 0.0
    %6113 = vmatpush1.msra.mxu0 0.0
    %6114 = vmatprep.subr.mxu0 0.0
    %6115 = vmatpush1.msra.mxu0 0.0
    %6116 = vmatprep.subr.mxu0 0.0
    %6117 = vmatpush1.msra.mxu0 0.0
    %6118 = vmatprep.subr.mxu0 0.0
    %6119 = vmatpush1.msra.mxu0 0.0
    %6120 = vmatprep.subr.mxu0 0.0
    %6121 = vmatpush1.msra.mxu0 0.0
    %6122 = vmatprep.subr.mxu0 0.0
    %6123 = vmatpush1.msra.mxu0 0.0
    %6124 = vmatprep.subr.mxu0 0.0
    %6125 = vmatpush1.msra.mxu0 0.0
    %6126 = vmatprep.mubr.f32.mxu0 0.0
    %6127 = vmatmul.mubr.f32.gmra.mrb[0].mxu0 %v6060
    %v6128 = vpop.f32.mrb[0].mxu0
    %v6129 = vadd.f32 0.0, %v6128
    %v6130 = vpop.f32.mrb[0].mxu0
    %6131 = vdwg.mxu0
    %6132 = vmatprep.subr.mxu0 0.0
    %6133 = vmatpush1.msra.mxu0 %v74
    %6134 = vmatprep.subr.mxu0 0.0
    %6135 = vmatpush1.msra.mxu0 %v75
    %6136 = vmatprep.subr.mxu0 0.0
    %6137 = vmatpush1.msra.mxu0 %v76
    %6138 = vmatprep.subr.mxu0 0.0
    %6139 = vmatpush1.msra.mxu0 %v77
    %6140 = vmatprep.subr.mxu0 0.0
    %6141 = vmatpush1.msra.mxu0 0.0
    %6142 = vmatprep.subr.mxu0 0.0
    %6143 = vmatpush1.msra.mxu0 0.0
    %6144 = vmatprep.subr.mxu0 0.0
    %6145 = vmatpush1.msra.mxu0 0.0
    %6146 = vmatprep.subr.mxu0 0.0
    %6147 = vmatpush1.msra.mxu0 0.0
    %6148 = vmatprep.subr.mxu0 0.0
    %6149 = vmatpush1.msra.mxu0 0.0
    %6150 = vmatprep.subr.mxu0 0.0
    %6151 = vmatpush1.msra.mxu0 0.0
    %6152 = vmatprep.subr.mxu0 0.0
    %6153 = vmatpush1.msra.mxu0 0.0
    %6154 = vmatprep.subr.mxu0 0.0
    %6155 = vmatpush1.msra.mxu0 0.0
    %6156 = vmatprep.subr.mxu0 0.0
    %6157 = vmatpush1.msra.mxu0 0.0
    %6158 = vmatprep.subr.mxu0 0.0
    %6159 = vmatpush1.msra.mxu0 0.0
    %6160 = vmatprep.subr.mxu0 0.0
    %6161 = vmatpush1.msra.mxu0 0.0
    %6162 = vmatprep.subr.mxu0 0.0
    %6163 = vmatpush1.msra.mxu0 0.0
    %6164 = vmatprep.subr.mxu0 0.0
    %6165 = vmatpush1.msra.mxu0 0.0
    %6166 = vmatprep.subr.mxu0 0.0
    %6167 = vmatpush1.msra.mxu0 0.0
    %6168 = vmatprep.subr.mxu0 0.0
    %6169 = vmatpush1.msra.mxu0 0.0
    %6170 = vmatprep.subr.mxu0 0.0
    %6171 = vmatpush1.msra.mxu0 0.0
    %6172 = vmatprep.subr.mxu0 0.0
    %6173 = vmatpush1.msra.mxu0 0.0
    %6174 = vmatprep.subr.mxu0 0.0
    %6175 = vmatpush1.msra.mxu0 0.0
    %6176 = vmatprep.subr.mxu0 0.0
    %6177 = vmatpush1.msra.mxu0 0.0
    %6178 = vmatprep.subr.mxu0 0.0
    %6179 = vmatpush1.msra.mxu0 0.0
    %6180 = vmatprep.subr.mxu0 0.0
    %6181 = vmatpush1.msra.mxu0 0.0
    %6182 = vmatprep.subr.mxu0 0.0
    %6183 = vmatpush1.msra.mxu0 0.0
    %6184 = vmatprep.subr.mxu0 0.0
    %6185 = vmatpush1.msra.mxu0 0.0
    %6186 = vmatprep.subr.mxu0 0.0
    %6187 = vmatpush1.msra.mxu0 0.0
    %6188 = vmatprep.subr.mxu0 0.0
    %6189 = vmatpush1.msra.mxu0 0.0
    %6190 = vmatprep.subr.mxu0 0.0
    %6191 = vmatpush1.msra.mxu0 0.0
    %6192 = vmatprep.subr.mxu0 0.0
    %6193 = vmatpush1.msra.mxu0 0.0
    %6194 = vmatprep.subr.mxu0 0.0
    %6195 = vmatpush1.msra.mxu0 0.0
    %6196 = vmatprep.mubr.f32.mxu0 0.0
    %6197 = vmatmul.mubr.f32.gmra.mrb[0].mxu0 %v6060
    %v6198 = vpop.f32.mrb[0].mxu0
    %v6199 = vadd.f32 0.0, %v6198
    %v6200 = vpop.f32.mrb[0].mxu0
    %6201 = vdwg.mxu0
    %v6203 = vrot.slane %v6129, 6
    %v6205 = vadd.f32 %v4537, %v6203
    %v6206 = vxor.u32 %v6205, 2147483648
    %v6207 = vmul.f32 %v6206, 1.442695
    %v6208 = vpow.pop %v6207
    %v6209 = vadd.f32 %v6208, 1.0
    %v6210 = vrcp.pop %v6209
    %v6211 = vmul.f32 1.0, %v6210
    %v6213 = vrot.slane %v6199, 6
    %6214 = vrot.lane.b32.xlu0 %v6213, 32
    %v6215 = vpop.permute.xlu0 %6214
    %v6217 = vadd.f32 %v4537, %v6215
    %v6218 = vxor.u32 %v6217, 2147483648
    %v6219 = vmul.f32 %v6218, 1.442695
    %v6220 = vpow.pop %v6219
    %v6221 = vadd.f32 %v6220, 1.0
    %v6222 = vrcp.pop %v6221
    %v6223 = vmul.f32 1.0, %v6222
    %6224 = vmatprep.subr.mxu0 0.0
    %6225 = vmatpush1.msra.mxu0 %v79
    %6226 = vmatprep.subr.mxu0 0.0
    %6227 = vmatpush1.msra.mxu0 %v80
    %6228 = vmatprep.subr.mxu0 0.0
    %6229 = vmatpush1.msra.mxu0 %v81
    %6230 = vmatprep.subr.mxu0 0.0
    %6231 = vmatpush1.msra.mxu0 %v82
    %6232 = vmatprep.subr.mxu0 0.0
    %6233 = vmatpush1.msra.mxu0 0.0
    %6234 = vmatprep.subr.mxu0 0.0
    %6235 = vmatpush1.msra.mxu0 0.0
    %6236 = vmatprep.subr.mxu0 0.0
    %6237 = vmatpush1.msra.mxu0 0.0
    %6238 = vmatprep.subr.mxu0 0.0
    %6239 = vmatpush1.msra.mxu0 0.0
    %6240 = vmatprep.subr.mxu0 0.0
    %6241 = vmatpush1.msra.mxu0 0.0
    %6242 = vmatprep.subr.mxu0 0.0
    %6243 = vmatpush1.msra.mxu0 0.0
    %6244 = vmatprep.subr.mxu0 0.0
    %6245 = vmatpush1.msra.mxu0 0.0
    %6246 = vmatprep.subr.mxu0 0.0
    %6247 = vmatpush1.msra.mxu0 0.0
    %6248 = vmatprep.subr.mxu0 0.0
    %6249 = vmatpush1.msra.mxu0 0.0
    %6250 = vmatprep.subr.mxu0 0.0
    %6251 = vmatpush1.msra.mxu0 0.0
    %6252 = vmatprep.subr.mxu0 0.0
    %6253 = vmatpush1.msra.mxu0 0.0
    %6254 = vmatprep.subr.mxu0 0.0
    %6255 = vmatpush1.msra.mxu0 0.0
    %6256 = vmatprep.subr.mxu0 0.0
    %6257 = vmatpush1.msra.mxu0 0.0
    %6258 = vmatprep.subr.mxu0 0.0
    %6259 = vmatpush1.msra.mxu0 0.0
    %6260 = vmatprep.subr.mxu0 0.0
    %6261 = vmatpush1.msra.mxu0 0.0
    %6262 = vmatprep.subr.mxu0 0.0
    %6263 = vmatpush1.msra.mxu0 0.0
    %6264 = vmatprep.subr.mxu0 0.0
    %6265 = vmatpush1.msra.mxu0 0.0
    %6266 = vmatprep.subr.mxu0 0.0
    %6267 = vmatpush1.msra.mxu0 0.0
    %6268 = vmatprep.subr.mxu0 0.0
    %6269 = vmatpush1.msra.mxu0 0.0
    %6270 = vmatprep.subr.mxu0 0.0
    %6271 = vmatpush1.msra.mxu0 0.0
    %6272 = vmatprep.subr.mxu0 0.0
    %6273 = vmatpush1.msra.mxu0 0.0
    %6274 = vmatprep.subr.mxu0 0.0
    %6275 = vmatpush1.msra.mxu0 0.0
    %6276 = vmatprep.subr.mxu0 0.0
    %6277 = vmatpush1.msra.mxu0 0.0
    %6278 = vmatprep.subr.mxu0 0.0
    %6279 = vmatpush1.msra.mxu0 0.0
    %6280 = vmatprep.subr.mxu0 0.0
    %6281 = vmatpush1.msra.mxu0 0.0
    %6282 = vmatprep.subr.mxu0 0.0
    %6283 = vmatpush1.msra.mxu0 0.0
    %6284 = vmatprep.subr.mxu0 0.0
    %6285 = vmatpush1.msra.mxu0 0.0
    %6286 = vmatprep.subr.mxu0 0.0
    %6287 = vmatpush1.msra.mxu0 0.0
    %6288 = vmatprep.mubr.f32.mxu0 0.0
    %6289 = vmatmul.mubr.f32.gmra.mrb[0].mxu0 %v6060
    %v6290 = vpop.f32.mrb[0].mxu0
    %v6291 = vadd.f32 %v102, %v6290
    %v6292 = vpop.f32.mrb[0].mxu0
    %6293 = vdwg.mxu0
    %v6295 = vrot.slane %v6291, 6
    %v6297 = vmul.f32 %v6211, %v6295
    %6299 = vrot.lane.b32.xlu0 %v6297, 64
    %v6300 = vpop.permute.xlu0 %6299
    %v6302 = vadd.f32 %v4537, %v6300
    %v6303 = vtanh.pop %v6302
    %v6304 = vsub.f32 1.0, %v6223
    %6306 = vrot.lane.b32.xlu0 %v6303, 96
    %v6307 = vpop.permute.xlu0 %6306
    %v6309 = vmul.f32 %v6304, %v6307
    %v6310 = vrot.slane %v6056, 6
    %v6312 = vmul.f32 %v6223, %v6310
    %v6313 = vadd.f32 %v6309, %v6312
    %v6315 = vrot.slane %v6313, 2
    %6316 = vrot.lane.b32.xlu0 %v6315, 96
    %v6317 = vpop.permute.xlu0 %6316
    %v6318 = vsel %vm127, %v6317, 0
    %6320 = vmatprep.subr.mxu0 0.0
    %6321 = vmatpush1.msra.mxu0 %v69
    %6322 = vmatprep.subr.mxu0 0.0
    %6323 = vmatpush1.msra.mxu0 %v70
    %6324 = vmatprep.subr.mxu0 0.0
    %6325 = vmatpush1.msra.mxu0 %v71
    %6326 = vmatprep.subr.mxu0 0.0
    %6327 = vmatpush1.msra.mxu0 %v72
    %6328 = vmatprep.subr.mxu0 0.0
    %6329 = vmatpush1.msra.mxu0 0.0
    %6330 = vmatprep.subr.mxu0 0.0
    %6331 = vmatpush1.msra.mxu0 0.0
    %6332 = vmatprep.subr.mxu0 0.0
    %6333 = vmatpush1.msra.mxu0 0.0
    %6334 = vmatprep.subr.mxu0 0.0
    %6335 = vmatpush1.msra.mxu0 0.0
    %6336 = vmatprep.subr.mxu0 0.0
    %6337 = vmatpush1.msra.mxu0 0.0
    %6338 = vmatprep.subr.mxu0 0.0
    %6339 = vmatpush1.msra.mxu0 0.0
    %6340 = vmatprep.subr.mxu0 0.0
    %6341 = vmatpush1.msra.mxu0 0.0
    %6342 = vmatprep.subr.mxu0 0.0
    %6343 = vmatpush1.msra.mxu0 0.0
    %6344 = vmatprep.subr.mxu0 0.0
    %6345 = vmatpush1.msra.mxu0 0.0
    %6346 = vmatprep.subr.mxu0 0.0
    %6347 = vmatpush1.msra.mxu0 0.0
    %6348 = vmatprep.subr.mxu0 0.0
    %6349 = vmatpush1.msra.mxu0 0.0
    %6350 = vmatprep.subr.mxu0 0.0
    %6351 = vmatpush1.msra.mxu0 0.0
    %6352 = vmatprep.subr.mxu0 0.0
    %6353 = vmatpush1.msra.mxu0 0.0
    %6354 = vmatprep.subr.mxu0 0.0
    %6355 = vmatpush1.msra.mxu0 0.0
    %6356 = vmatprep.subr.mxu0 0.0
    %6357 = vmatpush1.msra.mxu0 0.0
    %6358 = vmatprep.subr.mxu0 0.0
    %6359 = vmatpush1.msra.mxu0 0.0
    %6360 = vmatprep.subr.mxu0 0.0
    %6361 = vmatpush1.msra.mxu0 0.0
    %6362 = vmatprep.subr.mxu0 0.0
    %6363 = vmatpush1.msra.mxu0 0.0
    %6364 = vmatprep.subr.mxu0 0.0
    %6365 = vmatpush1.msra.mxu0 0.0
    %6366 = vmatprep.subr.mxu0 0.0
    %6367 = vmatpush1.msra.mxu0 0.0
    %6368 = vmatprep.subr.mxu0 0.0
    %6369 = vmatpush1.msra.mxu0 0.0
    %6370 = vmatprep.subr.mxu0 0.0
    %6371 = vmatpush1.msra.mxu0 0.0
    %6372 = vmatprep.subr.mxu0 0.0
    %6373 = vmatpush1.msra.mxu0 0.0
    %6374 = vmatprep.subr.mxu0 0.0
    %6375 = vmatpush1.msra.mxu0 0.0
    %6376 = vmatprep.subr.mxu0 0.0
    %6377 = vmatpush1.msra.mxu0 0.0
    %6378 = vmatprep.subr.mxu0 0.0
    %6379 = vmatpush1.msra.mxu0 0.0
    %6380 = vmatprep.subr.mxu0 0.0
    %6381 = vmatpush1.msra.mxu0 0.0
    %6382 = vmatprep.subr.mxu0 0.0
    %6383 = vmatpush1.msra.mxu0 0.0
    %6384 = vmatprep.mubr.f32.mxu0 0.0
    %6385 = vmatmul.mubr.f32.gmra.mrb[0].mxu0 %v6318
    %v6386 = vpop.f32.mrb[0].mxu0
    %v6387 = vadd.f32 0.0, %v6386
    %v6388 = vpop.f32.mrb[0].mxu0
    %6389 = vdwg.mxu0
    %6390 = vmatprep.subr.mxu0 0.0
    %6391 = vmatpush1.msra.mxu0 %v74
    %6392 = vmatprep.subr.mxu0 0.0
    %6393 = vmatpush1.msra.mxu0 %v75
    %6394 = vmatprep.subr.mxu0 0.0
    %6395 = vmatpush1.msra.mxu0 %v76
    %6396 = vmatprep.subr.mxu0 0.0
    %6397 = vmatpush1.msra.mxu0 %v77
    %6398 = vmatprep.subr.mxu0 0.0
    %6399 = vmatpush1.msra.mxu0 0.0
    %6400 = vmatprep.subr.mxu0 0.0
    %6401 = vmatpush1.msra.mxu0 0.0
    %6402 = vmatprep.subr.mxu0 0.0
    %6403 = vmatpush1.msra.mxu0 0.0
    %6404 = vmatprep.subr.mxu0 0.0
    %6405 = vmatpush1.msra.mxu0 0.0
    %6406 = vmatprep.subr.mxu0 0.0
    %6407 = vmatpush1.msra.mxu0 0.0
    %6408 = vmatprep.subr.mxu0 0.0
    %6409 = vmatpush1.msra.mxu0 0.0
    %6410 = vmatprep.subr.mxu0 0.0
    %6411 = vmatpush1.msra.mxu0 0.0
    %6412 = vmatprep.subr.mxu0 0.0
    %6413 = vmatpush1.msra.mxu0 0.0
    %6414 = vmatprep.subr.mxu0 0.0
    %6415 = vmatpush1.msra.mxu0 0.0
    %6416 = vmatprep.subr.mxu0 0.0
    %6417 = vmatpush1.msra.mxu0 0.0
    %6418 = vmatprep.subr.mxu0 0.0
    %6419 = vmatpush1.msra.mxu0 0.0
    %6420 = vmatprep.subr.mxu0 0.0
    %6421 = vmatpush1.msra.mxu0 0.0
    %6422 = vmatprep.subr.mxu0 0.0
    %6423 = vmatpush1.msra.mxu0 0.0
    %6424 = vmatprep.subr.mxu0 0.0
    %6425 = vmatpush1.msra.mxu0 0.0
    %6426 = vmatprep.subr.mxu0 0.0
    %6427 = vmatpush1.msra.mxu0 0.0
    %6428 = vmatprep.subr.mxu0 0.0
    %6429 = vmatpush1.msra.mxu0 0.0
    %6430 = vmatprep.subr.mxu0 0.0
    %6431 = vmatpush1.msra.mxu0 0.0
    %6432 = vmatprep.subr.mxu0 0.0
    %6433 = vmatpush1.msra.mxu0 0.0
    %6434 = vmatprep.subr.mxu0 0.0
    %6435 = vmatpush1.msra.mxu0 0.0
    %6436 = vmatprep.subr.mxu0 0.0
    %6437 = vmatpush1.msra.mxu0 0.0
    %6438 = vmatprep.subr.mxu0 0.0
    %6439 = vmatpush1.msra.mxu0 0.0
    %6440 = vmatprep.subr.mxu0 0.0
    %6441 = vmatpush1.msra.mxu0 0.0
    %6442 = vmatprep.subr.mxu0 0.0
    %6443 = vmatpush1.msra.mxu0 0.0
    %6444 = vmatprep.subr.mxu0 0.0
    %6445 = vmatpush1.msra.mxu0 0.0
    %6446 = vmatprep.subr.mxu0 0.0
    %6447 = vmatpush1.msra.mxu0 0.0
    %6448 = vmatprep.subr.mxu0 0.0
    %6449 = vmatpush1.msra.mxu0 0.0
    %6450 = vmatprep.subr.mxu0 0.0
    %6451 = vmatpush1.msra.mxu0 0.0
    %6452 = vmatprep.subr.mxu0 0.0
    %6453 = vmatpush1.msra.mxu0 0.0
    %6454 = vmatprep.mubr.f32.mxu0 0.0
    %6455 = vmatmul.mubr.f32.gmra.mrb[0].mxu0 %v6318
    %v6456 = vpop.f32.mrb[0].mxu0
    %v6457 = vadd.f32 0.0, %v6456
    %v6458 = vpop.f32.mrb[0].mxu0
    %6459 = vdwg.mxu0
    %v6461 = vrot.slane %v6387, 4
    %v6463 = vadd.f32 %v4537, %v6461
    %v6464 = vxor.u32 %v6463, 2147483648
    %v6465 = vmul.f32 %v6464, 1.442695
    %v6466 = vpow.pop %v6465
    %v6467 = vadd.f32 %v6466, 1.0
    %v6468 = vrcp.pop %v6467
    %v6469 = vmul.f32 1.0, %v6468
    %v6471 = vrot.slane %v6457, 4
    %6472 = vrot.lane.b32.xlu0 %v6471, 32
    %v6473 = vpop.permute.xlu0 %6472
    %v6475 = vadd.f32 %v4537, %v6473
    %v6476 = vxor.u32 %v6475, 2147483648
    %v6477 = vmul.f32 %v6476, 1.442695
    %v6478 = vpow.pop %v6477
    %v6479 = vadd.f32 %v6478, 1.0
    %v6480 = vrcp.pop %v6479
    %v6481 = vmul.f32 1.0, %v6480
    %6482 = vmatprep.subr.mxu0 0.0
    %6483 = vmatpush1.msra.mxu0 %v79
    %6484 = vmatprep.subr.mxu0 0.0
    %6485 = vmatpush1.msra.mxu0 %v80
    %6486 = vmatprep.subr.mxu0 0.0
    %6487 = vmatpush1.msra.mxu0 %v81
    %6488 = vmatprep.subr.mxu0 0.0
    %6489 = vmatpush1.msra.mxu0 %v82
    %6490 = vmatprep.subr.mxu0 0.0
    %6491 = vmatpush1.msra.mxu0 0.0
    %6492 = vmatprep.subr.mxu0 0.0
    %6493 = vmatpush1.msra.mxu0 0.0
    %6494 = vmatprep.subr.mxu0 0.0
    %6495 = vmatpush1.msra.mxu0 0.0
    %6496 = vmatprep.subr.mxu0 0.0
    %6497 = vmatpush1.msra.mxu0 0.0
    %6498 = vmatprep.subr.mxu0 0.0
    %6499 = vmatpush1.msra.mxu0 0.0
    %6500 = vmatprep.subr.mxu0 0.0
    %6501 = vmatpush1.msra.mxu0 0.0
    %6502 = vmatprep.subr.mxu0 0.0
    %6503 = vmatpush1.msra.mxu0 0.0
    %6504 = vmatprep.subr.mxu0 0.0
    %6505 = vmatpush1.msra.mxu0 0.0
    %6506 = vmatprep.subr.mxu0 0.0
    %6507 = vmatpush1.msra.mxu0 0.0
    %6508 = vmatprep.subr.mxu0 0.0
    %6509 = vmatpush1.msra.mxu0 0.0
    %6510 = vmatprep.subr.mxu0 0.0
    %6511 = vmatpush1.msra.mxu0 0.0
    %6512 = vmatprep.subr.mxu0 0.0
    %6513 = vmatpush1.msra.mxu0 0.0
    %6514 = vmatprep.subr.mxu0 0.0
    %6515 = vmatpush1.msra.mxu0 0.0
    %6516 = vmatprep.subr.mxu0 0.0
    %6517 = vmatpush1.msra.mxu0 0.0
    %6518 = vmatprep.subr.mxu0 0.0
    %6519 = vmatpush1.msra.mxu0 0.0
    %6520 = vmatprep.subr.mxu0 0.0
    %6521 = vmatpush1.msra.mxu0 0.0
    %6522 = vmatprep.subr.mxu0 0.0
    %6523 = vmatpush1.msra.mxu0 0.0
    %6524 = vmatprep.subr.mxu0 0.0
    %6525 = vmatpush1.msra.mxu0 0.0
    %6526 = vmatprep.subr.mxu0 0.0
    %6527 = vmatpush1.msra.mxu0 0.0
    %6528 = vmatprep.subr.mxu0 0.0
    %6529 = vmatpush1.msra.mxu0 0.0
    %6530 = vmatprep.subr.mxu0 0.0
    %6531 = vmatpush1.msra.mxu0 0.0
    %6532 = vmatprep.subr.mxu0 0.0
    %6533 = vmatpush1.msra.mxu0 0.0
    %6534 = vmatprep.subr.mxu0 0.0
    %6535 = vmatpush1.msra.mxu0 0.0
    %6536 = vmatprep.subr.mxu0 0.0
    %6537 = vmatpush1.msra.mxu0 0.0
    %6538 = vmatprep.subr.mxu0 0.0
    %6539 = vmatpush1.msra.mxu0 0.0
    %6540 = vmatprep.subr.mxu0 0.0
    %6541 = vmatpush1.msra.mxu0 0.0
    %6542 = vmatprep.subr.mxu0 0.0
    %6543 = vmatpush1.msra.mxu0 0.0
    %6544 = vmatprep.subr.mxu0 0.0
    %6545 = vmatpush1.msra.mxu0 0.0
    %6546 = vmatprep.mubr.f32.mxu0 0.0
    %6547 = vmatmul.mubr.f32.gmra.mrb[0].mxu0 %v6318
    %v6548 = vpop.f32.mrb[0].mxu0
    %v6549 = vadd.f32 %v102, %v6548
    %v6550 = vpop.f32.mrb[0].mxu0
    %6551 = vdwg.mxu0
    %v6553 = vrot.slane %v6549, 4
    %v6555 = vmul.f32 %v6469, %v6553
    %6557 = vrot.lane.b32.xlu0 %v6555, 64
    %v6558 = vpop.permute.xlu0 %6557
    %v6560 = vadd.f32 %v4537, %v6558
    %v6561 = vtanh.pop %v6560
    %v6562 = vsub.f32 1.0, %v6481
    %6564 = vrot.lane.b32.xlu0 %v6561, 96
    %v6565 = vpop.permute.xlu0 %6564
    %v6567 = vmul.f32 %v6562, %v6565
    %v6568 = vrot.slane %v6313, 6
    %v6570 = vmul.f32 %v6481, %v6568
    %v6571 = vadd.f32 %v6567, %v6570
    %v6573 = vrot.slane %v6571, 4
    %6574 = vrot.lane.b32.xlu0 %v6573, 96
    %v6575 = vpop.permute.xlu0 %6574
    %v6576 = vsel %vm127, %v6575, 0
    %6578 = vmatprep.subr.mxu0 0.0
    %6579 = vmatpush1.msra.mxu0 %v69
    %6580 = vmatprep.subr.mxu0 0.0
    %6581 = vmatpush1.msra.mxu0 %v70
    %6582 = vmatprep.subr.mxu0 0.0
    %6583 = vmatpush1.msra.mxu0 %v71
    %6584 = vmatprep.subr.mxu0 0.0
    %6585 = vmatpush1.msra.mxu0 %v72
    %6586 = vmatprep.subr.mxu0 0.0
    %6587 = vmatpush1.msra.mxu0 0.0
    %6588 = vmatprep.subr.mxu0 0.0
    %6589 = vmatpush1.msra.mxu0 0.0
    %6590 = vmatprep.subr.mxu0 0.0
    %6591 = vmatpush1.msra.mxu0 0.0
    %6592 = vmatprep.subr.mxu0 0.0
    %6593 = vmatpush1.msra.mxu0 0.0
    %6594 = vmatprep.subr.mxu0 0.0
    %6595 = vmatpush1.msra.mxu0 0.0
    %6596 = vmatprep.subr.mxu0 0.0
    %6597 = vmatpush1.msra.mxu0 0.0
    %6598 = vmatprep.subr.mxu0 0.0
    %6599 = vmatpush1.msra.mxu0 0.0
    %6600 = vmatprep.subr.mxu0 0.0
    %6601 = vmatpush1.msra.mxu0 0.0
    %6602 = vmatprep.subr.mxu0 0.0
    %6603 = vmatpush1.msra.mxu0 0.0
    %6604 = vmatprep.subr.mxu0 0.0
    %6605 = vmatpush1.msra.mxu0 0.0
    %6606 = vmatprep.subr.mxu0 0.0
    %6607 = vmatpush1.msra.mxu0 0.0
    %6608 = vmatprep.subr.mxu0 0.0
    %6609 = vmatpush1.msra.mxu0 0.0
    %6610 = vmatprep.subr.mxu0 0.0
    %6611 = vmatpush1.msra.mxu0 0.0
    %6612 = vmatprep.subr.mxu0 0.0
    %6613 = vmatpush1.msra.mxu0 0.0
    %6614 = vmatprep.subr.mxu0 0.0
    %6615 = vmatpush1.msra.mxu0 0.0
    %6616 = vmatprep.subr.mxu0 0.0
    %6617 = vmatpush1.msra.mxu0 0.0
    %6618 = vmatprep.subr.mxu0 0.0
    %6619 = vmatpush1.msra.mxu0 0.0
    %6620 = vmatprep.subr.mxu0 0.0
    %6621 = vmatpush1.msra.mxu0 0.0
    %6622 = vmatprep.subr.mxu0 0.0
    %6623 = vmatpush1.msra.mxu0 0.0
    %6624 = vmatprep.subr.mxu0 0.0
    %6625 = vmatpush1.msra.mxu0 0.0
    %6626 = vmatprep.subr.mxu0 0.0
    %6627 = vmatpush1.msra.mxu0 0.0
    %6628 = vmatprep.subr.mxu0 0.0
    %6629 = vmatpush1.msra.mxu0 0.0
    %6630 = vmatprep.subr.mxu0 0.0
    %6631 = vmatpush1.msra.mxu0 0.0
    %6632 = vmatprep.subr.mxu0 0.0
    %6633 = vmatpush1.msra.mxu0 0.0
    %6634 = vmatprep.subr.mxu0 0.0
    %6635 = vmatpush1.msra.mxu0 0.0
    %6636 = vmatprep.subr.mxu0 0.0
    %6637 = vmatpush1.msra.mxu0 0.0
    %6638 = vmatprep.subr.mxu0 0.0
    %6639 = vmatpush1.msra.mxu0 0.0
    %6640 = vmatprep.subr.mxu0 0.0
    %6641 = vmatpush1.msra.mxu0 0.0
    %6642 = vmatprep.mubr.f32.mxu0 0.0
    %6643 = vmatmul.mubr.f32.gmra.mrb[0].mxu0 %v6576
    %v6644 = vpop.f32.mrb[0].mxu0
    %v6645 = vadd.f32 0.0, %v6644
    %v6646 = vpop.f32.mrb[0].mxu0
    %6647 = vdwg.mxu0
    %6648 = vmatprep.subr.mxu0 0.0
    %6649 = vmatpush1.msra.mxu0 %v74
    %6650 = vmatprep.subr.mxu0 0.0
    %6651 = vmatpush1.msra.mxu0 %v75
    %6652 = vmatprep.subr.mxu0 0.0
    %6653 = vmatpush1.msra.mxu0 %v76
    %6654 = vmatprep.subr.mxu0 0.0
    %6655 = vmatpush1.msra.mxu0 %v77
    %6656 = vmatprep.subr.mxu0 0.0
    %6657 = vmatpush1.msra.mxu0 0.0
    %6658 = vmatprep.subr.mxu0 0.0
    %6659 = vmatpush1.msra.mxu0 0.0
    %6660 = vmatprep.subr.mxu0 0.0
    %6661 = vmatpush1.msra.mxu0 0.0
    %6662 = vmatprep.subr.mxu0 0.0
    %6663 = vmatpush1.msra.mxu0 0.0
    %6664 = vmatprep.subr.mxu0 0.0
    %6665 = vmatpush1.msra.mxu0 0.0
    %6666 = vmatprep.subr.mxu0 0.0
    %6667 = vmatpush1.msra.mxu0 0.0
    %6668 = vmatprep.subr.mxu0 0.0
    %6669 = vmatpush1.msra.mxu0 0.0
    %6670 = vmatprep.subr.mxu0 0.0
    %6671 = vmatpush1.msra.mxu0 0.0
    %6672 = vmatprep.subr.mxu0 0.0
    %6673 = vmatpush1.msra.mxu0 0.0
    %6674 = vmatprep.subr.mxu0 0.0
    %6675 = vmatpush1.msra.mxu0 0.0
    %6676 = vmatprep.subr.mxu0 0.0
    %6677 = vmatpush1.msra.mxu0 0.0
    %6678 = vmatprep.subr.mxu0 0.0
    %6679 = vmatpush1.msra.mxu0 0.0
    %6680 = vmatprep.subr.mxu0 0.0
    %6681 = vmatpush1.msra.mxu0 0.0
    %6682 = vmatprep.subr.mxu0 0.0
    %6683 = vmatpush1.msra.mxu0 0.0
    %6684 = vmatprep.subr.mxu0 0.0
    %6685 = vmatpush1.msra.mxu0 0.0
    %6686 = vmatprep.subr.mxu0 0.0
    %6687 = vmatpush1.msra.mxu0 0.0
    %6688 = vmatprep.subr.mxu0 0.0
    %6689 = vmatpush1.msra.mxu0 0.0
    %6690 = vmatprep.subr.mxu0 0.0
    %6691 = vmatpush1.msra.mxu0 0.0
    %6692 = vmatprep.subr.mxu0 0.0
    %6693 = vmatpush1.msra.mxu0 0.0
    %6694 = vmatprep.subr.mxu0 0.0
    %6695 = vmatpush1.msra.mxu0 0.0
    %6696 = vmatprep.subr.mxu0 0.0
    %6697 = vmatpush1.msra.mxu0 0.0
    %6698 = vmatprep.subr.mxu0 0.0
    %6699 = vmatpush1.msra.mxu0 0.0
    %6700 = vmatprep.subr.mxu0 0.0
    %6701 = vmatpush1.msra.mxu0 0.0
    %6702 = vmatprep.subr.mxu0 0.0
    %6703 = vmatpush1.msra.mxu0 0.0
    %6704 = vmatprep.subr.mxu0 0.0
    %6705 = vmatpush1.msra.mxu0 0.0
    %6706 = vmatprep.subr.mxu0 0.0
    %6707 = vmatpush1.msra.mxu0 0.0
    %6708 = vmatprep.subr.mxu0 0.0
    %6709 = vmatpush1.msra.mxu0 0.0
    %6710 = vmatprep.subr.mxu0 0.0
    %6711 = vmatpush1.msra.mxu0 0.0
    %6712 = vmatprep.mubr.f32.mxu0 0.0
    %6713 = vmatmul.mubr.f32.gmra.mrb[0].mxu0 %v6576
    %v6714 = vpop.f32.mrb[0].mxu0
    %v6715 = vadd.f32 0.0, %v6714
    %v6716 = vpop.f32.mrb[0].mxu0
    %6717 = vdwg.mxu0
    %v6719 = vrot.slane %v6645, 2
    %v6721 = vadd.f32 %v4537, %v6719
    %v6722 = vxor.u32 %v6721, 2147483648
    %v6723 = vmul.f32 %v6722, 1.442695
    %v6724 = vpow.pop %v6723
    %v6725 = vadd.f32 %v6724, 1.0
    %v6726 = vrcp.pop %v6725
    %v6727 = vmul.f32 1.0, %v6726
    %v6729 = vrot.slane %v6715, 2
    %6730 = vrot.lane.b32.xlu0 %v6729, 32
    %v6731 = vpop.permute.xlu0 %6730
    %v6733 = vadd.f32 %v4537, %v6731
    %v6734 = vxor.u32 %v6733, 2147483648
    %v6735 = vmul.f32 %v6734, 1.442695
    %v6736 = vpow.pop %v6735
    %v6737 = vadd.f32 %v6736, 1.0
    %v6738 = vrcp.pop %v6737
    %v6739 = vmul.f32 1.0, %v6738
    %6740 = vmatprep.subr.mxu0 0.0
    %6741 = vmatpush1.msra.mxu0 %v79
    %6742 = vmatprep.subr.mxu0 0.0
    %6743 = vmatpush1.msra.mxu0 %v80
    %6744 = vmatprep.subr.mxu0 0.0
    %6745 = vmatpush1.msra.mxu0 %v81
    %6746 = vmatprep.subr.mxu0 0.0
    %6747 = vmatpush1.msra.mxu0 %v82
    %6748 = vmatprep.subr.mxu0 0.0
    %6749 = vmatpush1.msra.mxu0 0.0
    %6750 = vmatprep.subr.mxu0 0.0
    %6751 = vmatpush1.msra.mxu0 0.0
    %6752 = vmatprep.subr.mxu0 0.0
    %6753 = vmatpush1.msra.mxu0 0.0
    %6754 = vmatprep.subr.mxu0 0.0
    %6755 = vmatpush1.msra.mxu0 0.0
    %6756 = vmatprep.subr.mxu0 0.0
    %6757 = vmatpush1.msra.mxu0 0.0
    %6758 = vmatprep.subr.mxu0 0.0
    %6759 = vmatpush1.msra.mxu0 0.0
    %6760 = vmatprep.subr.mxu0 0.0
    %6761 = vmatpush1.msra.mxu0 0.0
    %6762 = vmatprep.subr.mxu0 0.0
    %6763 = vmatpush1.msra.mxu0 0.0
    %6764 = vmatprep.subr.mxu0 0.0
    %6765 = vmatpush1.msra.mxu0 0.0
    %6766 = vmatprep.subr.mxu0 0.0
    %6767 = vmatpush1.msra.mxu0 0.0
    %6768 = vmatprep.subr.mxu0 0.0
    %6769 = vmatpush1.msra.mxu0 0.0
    %6770 = vmatprep.subr.mxu0 0.0
    %6771 = vmatpush1.msra.mxu0 0.0
    %6772 = vmatprep.subr.mxu0 0.0
    %6773 = vmatpush1.msra.mxu0 0.0
    %6774 = vmatprep.subr.mxu0 0.0
    %6775 = vmatpush1.msra.mxu0 0.0
    %6776 = vmatprep.subr.mxu0 0.0
    %6777 = vmatpush1.msra.mxu0 0.0
    %6778 = vmatprep.subr.mxu0 0.0
    %6779 = vmatpush1.msra.mxu0 0.0
    %6780 = vmatprep.subr.mxu0 0.0
    %6781 = vmatpush1.msra.mxu0 0.0
    %6782 = vmatprep.subr.mxu0 0.0
    %6783 = vmatpush1.msra.mxu0 0.0
    %6784 = vmatprep.subr.mxu0 0.0
    %6785 = vmatpush1.msra.mxu0 0.0
    %6786 = vmatprep.subr.mxu0 0.0
    %6787 = vmatpush1.msra.mxu0 0.0
    %6788 = vmatprep.subr.mxu0 0.0
    %6789 = vmatpush1.msra.mxu0 0.0
    %6790 = vmatprep.subr.mxu0 0.0
    %6791 = vmatpush1.msra.mxu0 0.0
    %6792 = vmatprep.subr.mxu0 0.0
    %6793 = vmatpush1.msra.mxu0 0.0
    %6794 = vmatprep.subr.mxu0 0.0
    %6795 = vmatpush1.msra.mxu0 0.0
    %6796 = vmatprep.subr.mxu0 0.0
    %6797 = vmatpush1.msra.mxu0 0.0
    %6798 = vmatprep.subr.mxu0 0.0
    %6799 = vmatpush1.msra.mxu0 0.0
    %6800 = vmatprep.subr.mxu0 0.0
    %6801 = vmatpush1.msra.mxu0 0.0
    %6802 = vmatprep.subr.mxu0 0.0
    %6803 = vmatpush1.msra.mxu0 0.0
    %6804 = vmatprep.mubr.f32.mxu0 0.0
    %6805 = vmatmul.mubr.f32.gmra.mrb[0].mxu0 %v6576
    %v6806 = vpop.f32.mrb[0].mxu0
    %v6807 = vadd.f32 %v102, %v6806
    %v6808 = vpop.f32.mrb[0].mxu0
    %6809 = vdwg.mxu0
    %v6811 = vrot.slane %v6807, 2
    %v6813 = vmul.f32 %v6727, %v6811
    %6815 = vrot.lane.b32.xlu0 %v6813, 64
    %v6816 = vpop.permute.xlu0 %6815
    %v6818 = vadd.f32 %v4537, %v6816
    %v6819 = vtanh.pop %v6818
    %v6820 = vsub.f32 1.0, %v6739
    %6822 = vrot.lane.b32.xlu0 %v6819, 96
    %v6823 = vpop.permute.xlu0 %6822
    %v6825 = vmul.f32 %v6820, %v6823
    %v6826 = vrot.slane %v6571, 6
    %v6828 = vmul.f32 %v6739, %v6826
    %v6829 = vadd.f32 %v6825, %v6828
    %v6830 = vld [vmem:[%s7] sm:$0xff]
    %v6831 = vld [vmem:[%s7 + $0x8] sm:$0xff]
    %v6832 = vld [vmem:[%s7 + $0x10] sm:$0xff]
    %v6833 = vld [vmem:[%s7 + $0x18] sm:$0xff]
    %s6834 = scalar_lea.vmem %s7, 32
    %v6835 = vld [vmem:[%s6834] sm:$0xff]
    %v6836 = vld [vmem:[%s6834 + $0x8] sm:$0xff]
    %v6837 = vld [vmem:[%s6834 + $0x10] sm:$0xff]
    %v6838 = vld [vmem:[%s6834 + $0x18] sm:$0xff]
    %v6840 = vrot.slane %v4790, 6
    %v6841 = vsel %vm127, %v6840, 0
    %6843 = vmatprep.subr.mxu0 0.0
    %6844 = vmatpush1.msra.mxu0 %v6835
    %6845 = vmatprep.subr.mxu0 0.0
    %6846 = vmatpush1.msra.mxu0 %v6836
    %6847 = vmatprep.subr.mxu0 0.0
    %6848 = vmatpush1.msra.mxu0 %v6837
    %6849 = vmatprep.subr.mxu0 0.0
    %6850 = vmatpush1.msra.mxu0 %v6838
    %6851 = vmatprep.subr.mxu0 0.0
    %6852 = vmatpush1.msra.mxu0 0.0
    %6853 = vmatprep.subr.mxu0 0.0
    %6854 = vmatpush1.msra.mxu0 0.0
    %6855 = vmatprep.subr.mxu0 0.0
    %6856 = vmatpush1.msra.mxu0 0.0
    %6857 = vmatprep.subr.mxu0 0.0
    %6858 = vmatpush1.msra.mxu0 0.0
    %6859 = vmatprep.subr.mxu0 0.0
    %6860 = vmatpush1.msra.mxu0 0.0
    %6861 = vmatprep.subr.mxu0 0.0
    %6862 = vmatpush1.msra.mxu0 0.0
    %6863 = vmatprep.subr.mxu0 0.0
    %6864 = vmatpush1.msra.mxu0 0.0
    %6865 = vmatprep.subr.mxu0 0.0
    %6866 = vmatpush1.msra.mxu0 0.0
    %6867 = vmatprep.subr.mxu0 0.0
    %6868 = vmatpush1.msra.mxu0 0.0
    %6869 = vmatprep.subr.mxu0 0.0
    %6870 = vmatpush1.msra.mxu0 0.0
    %6871 = vmatprep.subr.mxu0 0.0
    %6872 = vmatpush1.msra.mxu0 0.0
    %6873 = vmatprep.subr.mxu0 0.0
    %6874 = vmatpush1.msra.mxu0 0.0
    %6875 = vmatprep.subr.mxu0 0.0
    %6876 = vmatpush1.msra.mxu0 0.0
    %6877 = vmatprep.subr.mxu0 0.0
    %6878 = vmatpush1.msra.mxu0 0.0
    %6879 = vmatprep.subr.mxu0 0.0
    %6880 = vmatpush1.msra.mxu0 0.0
    %6881 = vmatprep.subr.mxu0 0.0
    %6882 = vmatpush1.msra.mxu0 0.0
    %6883 = vmatprep.subr.mxu0 0.0
    %6884 = vmatpush1.msra.mxu0 0.0
    %6885 = vmatprep.subr.mxu0 0.0
    %6886 = vmatpush1.msra.mxu0 0.0
    %6887 = vmatprep.subr.mxu0 0.0
    %6888 = vmatpush1.msra.mxu0 0.0
    %6889 = vmatprep.subr.mxu0 0.0
    %6890 = vmatpush1.msra.mxu0 0.0
    %6891 = vmatprep.subr.mxu0 0.0
    %6892 = vmatpush1.msra.mxu0 0.0
    %6893 = vmatprep.subr.mxu0 0.0
    %6894 = vmatpush1.msra.mxu0 0.0
    %6895 = vmatprep.subr.mxu0 0.0
    %6896 = vmatpush1.msra.mxu0 0.0
    %6897 = vmatprep.subr.mxu0 0.0
    %6898 = vmatpush1.msra.mxu0 0.0
    %6899 = vmatprep.subr.mxu0 0.0
    %6900 = vmatpush1.msra.mxu0 0.0
    %6901 = vmatprep.subr.mxu0 0.0
    %6902 = vmatpush1.msra.mxu0 0.0
    %6903 = vmatprep.subr.mxu0 0.0
    %6904 = vmatpush1.msra.mxu0 0.0
    %6905 = vmatprep.subr.mxu0 0.0
    %6906 = vmatpush1.msra.mxu0 0.0
    %6907 = vmatprep.mubr.f32.mxu0 0.0
    %6908 = vmatmul.mubr.f32.gmra.mrb[0].mxu0 %v6841
    %v6909 = vpop.f32.mrb[0].mxu0
    %v6910 = vadd.f32 0.0, %v6909
    %v6911 = vpop.f32.mrb[0].mxu0
    %6912 = vdwg.mxu0
    %v6914 = vrot.slane %v6829, 6
    %6915 = vrot.lane.b32.xlu0 %v6914, 96
    %v6916 = vpop.permute.xlu0 %6915
    %v6917 = vsel %vm127, %v6916, 0
    %6919 = vmatprep.subr.mxu0 0.0
    %6920 = vmatpush1.msra.mxu0 %v6830
    %6921 = vmatprep.subr.mxu0 0.0
    %6922 = vmatpush1.msra.mxu0 %v6831
    %6923 = vmatprep.subr.mxu0 0.0
    %6924 = vmatpush1.msra.mxu0 %v6832
    %6925 = vmatprep.subr.mxu0 0.0
    %6926 = vmatpush1.msra.mxu0 %v6833
    %6927 = vmatprep.subr.mxu0 0.0
    %6928 = vmatpush1.msra.mxu0 0.0
    %6929 = vmatprep.subr.mxu0 0.0
    %6930 = vmatpush1.msra.mxu0 0.0
    %6931 = vmatprep.subr.mxu0 0.0
    %6932 = vmatpush1.msra.mxu0 0.0
    %6933 = vmatprep.subr.mxu0 0.0
    %6934 = vmatpush1.msra.mxu0 0.0
    %6935 = vmatprep.subr.mxu0 0.0
    %6936 = vmatpush1.msra.mxu0 0.0
    %6937 = vmatprep.subr.mxu0 0.0
    %6938 = vmatpush1.msra.mxu0 0.0
    %6939 = vmatprep.subr.mxu0 0.0
    %6940 = vmatpush1.msra.mxu0 0.0
    %6941 = vmatprep.subr.mxu0 0.0
    %6942 = vmatpush1.msra.mxu0 0.0
    %6943 = vmatprep.subr.mxu0 0.0
    %6944 = vmatpush1.msra.mxu0 0.0
    %6945 = vmatprep.subr.mxu0 0.0
    %6946 = vmatpush1.msra.mxu0 0.0
    %6947 = vmatprep.subr.mxu0 0.0
    %6948 = vmatpush1.msra.mxu0 0.0
    %6949 = vmatprep.subr.mxu0 0.0
    %6950 = vmatpush1.msra.mxu0 0.0
    %6951 = vmatprep.subr.mxu0 0.0
    %6952 = vmatpush1.msra.mxu0 0.0
    %6953 = vmatprep.subr.mxu0 0.0
    %6954 = vmatpush1.msra.mxu0 0.0
    %6955 = vmatprep.subr.mxu0 0.0
    %6956 = vmatpush1.msra.mxu0 0.0
    %6957 = vmatprep.subr.mxu0 0.0
    %6958 = vmatpush1.msra.mxu0 0.0
    %6959 = vmatprep.subr.mxu0 0.0
    %6960 = vmatpush1.msra.mxu0 0.0
    %6961 = vmatprep.subr.mxu0 0.0
    %6962 = vmatpush1.msra.mxu0 0.0
    %6963 = vmatprep.subr.mxu0 0.0
    %6964 = vmatpush1.msra.mxu0 0.0
    %6965 = vmatprep.subr.mxu0 0.0
    %6966 = vmatpush1.msra.mxu0 0.0
    %6967 = vmatprep.subr.mxu0 0.0
    %6968 = vmatpush1.msra.mxu0 0.0
    %6969 = vmatprep.subr.mxu0 0.0
    %6970 = vmatpush1.msra.mxu0 0.0
    %6971 = vmatprep.subr.mxu0 0.0
    %6972 = vmatpush1.msra.mxu0 0.0
    %6973 = vmatprep.subr.mxu0 0.0
    %6974 = vmatpush1.msra.mxu0 0.0
    %6975 = vmatprep.subr.mxu0 0.0
    %6976 = vmatpush1.msra.mxu0 0.0
    %6977 = vmatprep.subr.mxu0 0.0
    %6978 = vmatpush1.msra.mxu0 0.0
    %6979 = vmatprep.subr.mxu0 0.0
    %6980 = vmatpush1.msra.mxu0 0.0
    %6981 = vmatprep.subr.mxu0 0.0
    %6982 = vmatpush1.msra.mxu0 0.0
    %6983 = vmatprep.mubr.f32.mxu0 0.0
    %6984 = vmatmul.mubr.f32.gmra.mrb[0].mxu0 %v6917
    %v6985 = vpop.f32.mrb[0].mxu0
    %v6986 = vadd.f32 %v6910, %v6985
    %v6987 = vpop.f32.mrb[0].mxu0
    %6988 = vdwg.mxu0
    %v6989 = vld [vmem:[%s8] sm:$0x1]
    %v6991 = vlaneseq
    %v6992 = vshrl.u32 %v6991, 7
    %v6993 = vsub.s32 0, %v6992
    %v6994 = vrot.slane %v6989, %v6993
    %v6996 = vadd.f32 %v6986, %v6994
    %v6997 = vmax.f32 %v6996, 0.0
    %v6998 = vld [vmem:[%s9] sm:$0xff]
    %v6999 = vld [vmem:[%s9 + $0x8] sm:$0xff]
    %v7000 = vld [vmem:[%s9 + $0x10] sm:$0xff]
    %v7001 = vld [vmem:[%s9 + $0x18] sm:$0xff]
    %v7002 = vld [vmem:[%s9 + $0x20] sm:$0xff]
    %v7003 = vld [vmem:[%s9 + $0x28] sm:$0xff]
    %v7004 = vld [vmem:[%s9 + $0x30] sm:$0xff]
    %v7005 = vld [vmem:[%s9 + $0x38] sm:$0xff]
    %v7006 = vld [vmem:[%s10] sm:$0x1]
    %v7008 = vlaneseq
    %v7009 = vshrl.u32 %v7008, 7
    %v7010 = vsub.s32 0, %v7009
    %v7011 = vrot.slane %v7006, %v7010
    %vm7013 = vcmask 523264
    %v7015 = vsel %vm7013, %v6997, 0
    %7017 = vmatprep.subr.mxu0 0.0
    %7018 = vmatpush1.msra.mxu0 %v6998
    %7019 = vmatprep.subr.mxu0 0.0
    %7020 = vmatpush1.msra.mxu0 %v6999
    %7021 = vmatprep.subr.mxu0 0.0
    %7022 = vmatpush1.msra.mxu0 %v7000
    %7023 = vmatprep.subr.mxu0 0.0
    %7024 = vmatpush1.msra.mxu0 %v7001
    %7025 = vmatprep.subr.mxu0 0.0
    %7026 = vmatpush1.msra.mxu0 %v7002
    %7027 = vmatprep.subr.mxu0 0.0
    %7028 = vmatpush1.msra.mxu0 %v7003
    %7029 = vmatprep.subr.mxu0 0.0
    %7030 = vmatpush1.msra.mxu0 %v7004
    %7031 = vmatprep.subr.mxu0 0.0
    %7032 = vmatpush1.msra.mxu0 %v7005
    %7033 = vmatprep.subr.mxu0 0.0
    %7034 = vmatpush1.msra.mxu0 0.0
    %7035 = vmatprep.subr.mxu0 0.0
    %7036 = vmatpush1.msra.mxu0 0.0
    %7037 = vmatprep.subr.mxu0 0.0
    %7038 = vmatpush1.msra.mxu0 0.0
    %7039 = vmatprep.subr.mxu0 0.0
    %7040 = vmatpush1.msra.mxu0 0.0
    %7041 = vmatprep.subr.mxu0 0.0
    %7042 = vmatpush1.msra.mxu0 0.0
    %7043 = vmatprep.subr.mxu0 0.0
    %7044 = vmatpush1.msra.mxu0 0.0
    %7045 = vmatprep.subr.mxu0 0.0
    %7046 = vmatpush1.msra.mxu0 0.0
    %7047 = vmatprep.subr.mxu0 0.0
    %7048 = vmatpush1.msra.mxu0 0.0
    %7049 = vmatprep.subr.mxu0 0.0
    %7050 = vmatpush1.msra.mxu0 0.0
    %7051 = vmatprep.subr.mxu0 0.0
    %7052 = vmatpush1.msra.mxu0 0.0
    %7053 = vmatprep.subr.mxu0 0.0
    %7054 = vmatpush1.msra.mxu0 0.0
    %7055 = vmatprep.subr.mxu0 0.0
    %7056 = vmatpush1.msra.mxu0 0.0
    %7057 = vmatprep.subr.mxu0 0.0
    %7058 = vmatpush1.msra.mxu0 0.0
    %7059 = vmatprep.subr.mxu0 0.0
    %7060 = vmatpush1.msra.mxu0 0.0
    %7061 = vmatprep.subr.mxu0 0.0
    %7062 = vmatpush1.msra.mxu0 0.0
    %7063 = vmatprep.subr.mxu0 0.0
    %7064 = vmatpush1.msra.mxu0 0.0
    %7065 = vmatprep.subr.mxu0 0.0
    %7066 = vmatpush1.msra.mxu0 0.0
    %7067 = vmatprep.subr.mxu0 0.0
    %7068 = vmatpush1.msra.mxu0 0.0
    %7069 = vmatprep.subr.mxu0 0.0
    %7070 = vmatpush1.msra.mxu0 0.0
    %7071 = vmatprep.subr.mxu0 0.0
    %7072 = vmatpush1.msra.mxu0 0.0
    %7073 = vmatprep.subr.mxu0 0.0
    %7074 = vmatpush1.msra.mxu0 0.0
    %7075 = vmatprep.subr.mxu0 0.0
    %7076 = vmatpush1.msra.mxu0 0.0
    %7077 = vmatprep.subr.mxu0 0.0
    %7078 = vmatpush1.msra.mxu0 0.0
    %7079 = vmatprep.subr.mxu0 0.0
    %7080 = vmatpush1.msra.mxu0 0.0
    %7081 = vmatprep.mubr.f32.mxu0 0.0
    %7082 = vmatmul.mubr.f32.gmra.mrb[0].mxu0 %v7015
    %v7083 = vpop.f32.mrb[0].mxu0
    %v7084 = vadd.f32 %v7011, %v7083
    %v7085 = vpop.f32.mrb[0].mxu0
    %7086 = vdwg.mxu0
    %7087 = vst [vmem:[#allocation4] sm:$0x3] %v7084
    // Predicated region
    $region46: #{leonard_bigru_forward.1} parent=1 // pred_check
      _
    $region47: #{leonard_bigru_forward.1} parent=1 // pred_check_branch
      %7089 = sbr.rel (0) target = $region49
    $region48: #{leonard_bigru_forward.1} parent=1 // pred_region
      %s7091 = ssub.s32 32, 32
      %7092 = vsyncadd [#allocation5], %s7091
      %s7094 = sshll.u32 [#allocation4], 4
      %s7095 = int_to_ptr.vmem [resolvable:$true] %s7094
      %7097 = dma.vmem_to_hbm [thread:$0]  %s7095, 32, %s11, [#allocation5]
    $region49: #{leonard_bigru_forward.1} parent=1 // pred_fallthru
      _
    // Predicated region
    $region50: #{leonard_bigru_forward.1} parent=1 // pred_check
      _
    $region51: #{leonard_bigru_forward.1} parent=1 // pred_check_branch
      %7099 = sbr.rel (0) target = $region53
    $region52: #{leonard_bigru_forward.1} parent=1 // pred_region
      %7100 = dma.done [#allocation5], 32
    $region53: #{leonard_bigru_forward.1} parent=1 // pred_fallthru
      _
    %7101 = vsyncpa [#allocation5], 1

</llo_original>
